<compile_context>
chip_gen: v6e
topology: v6e:2x2x1
jax: 0.10.0
libtpu: 0.0.40
codegen_flags: <defaults>
</compile_context>

<pallas_src>
import functools
import math

import jax
import jax.numpy as jnp
from jax import lax
from jax.experimental import pallas as pl
from jax.experimental.pallas import tpu as pltpu

# ----------------------------- configuration --------------------------------
LAYERS = 2
HEADS = 4
DK = 8                      # keys_dimension
DV = 8                      # values_dimension (== DK so concat -> d_model)
D_MODEL = HEADS * DK        # 32
D_FF = 4 * D_MODEL          # 128
OUTPUT_SIZE = 16
SEQ = 8                     # n == m (square attention, required by the mask)


# ------------------------------- fused kernel --------------------------------
def transformer_kernel(
    x_ref,
    e_wq, e_bq, e_wk, e_bk, e_wv, e_bv, e_wo, e_bo, e_w1, e_b1, e_w2, e_b2,
    d_wq, d_bq, d_wk, d_bk, d_wv, d_bv, d_wo, d_bo, d_w1, d_b1, d_w2, d_b2,
    out_w, out_b,
    o_ref,
    *, layers, heads, dk):
    f32 = jnp.float32
    x = x_ref[...]
    n = x.shape[0]
    scale = 1.0 / math.sqrt(dk)

    # Look-ahead mask (self.words == 1): additive -1e9 only where
    # row + col >= 2*(n-1).  Built ONCE for the whole kernel.
    row = lax.broadcasted_iota(jnp.int32, (n, n), 0)
    col = lax.broadcasted_iota(jnp.int32, (n, n), 1)
    neg_mask = jnp.where(row + col >= 2 * (n - 1), 1.0e9, 0.0).astype(f32)

    def layer_norm_all(z):
        # layer_norm over ALL elements of the (n, d_model) matrix, eps=1e-5.
        mean = jnp.mean(z)
        var = jnp.mean((z - mean) ** 2)
        return (z - mean) * lax.rsqrt(var + 1e-5)

    def mha(q, k, v, wq, bq, wk, bk, wv, bv, wo, bo, masked):
        # Head-packed projections: ONE matmul each for Q, K, V.
        qp = jnp.dot(q, wq, preferred_element_type=f32) + bq
        kp = jnp.dot(k, wk, preferred_element_type=f32) + bk
        vp = jnp.dot(v, wv, preferred_element_type=f32) + bv
        head_outs = []
        for h in range(heads):              # heads small & static -> unrolled
            lo = h * dk
            qh = qp[:, lo:lo + dk]
            kh = kp[:, lo:lo + dk]
            vh = vp[:, lo:lo + dk]
            # q @ k.T expressed as a (last, last) contraction -> no transpose.
            s = lax.dot_general(qh, kh, (((1,), (1,)), ((), ())),
                                preferred_element_type=f32) * scale
            if masked:
                s = s - neg_mask
            s_max = jnp.max(s, axis=1, keepdims=True)
            e = jnp.exp(s - s_max)
            p = e / jnp.sum(e, axis=1, keepdims=True)
            head_outs.append(jnp.dot(p, vh, preferred_element_type=f32))
        concat = jnp.concatenate(head_outs, axis=1)     # (n, heads*dv)
        return jnp.dot(concat, wo, preferred_element_type=f32) + bo

    def ffn(z, w1, b1, w2, b2):
        h = jnp.maximum(jnp.dot(z, w1, preferred_element_type=f32) + b1, 0.0)
        return jnp.dot(h, w2, preferred_element_type=f32) + b2

    # ------------------------------ encoder stack ----------------------------
    enc = x
    for l in range(layers):
        a = mha(enc, enc, enc,
                e_wq[l], e_bq[l], e_wk[l], e_bk[l], e_wv[l], e_bv[l],
                e_wo[l], e_bo[l], masked=False)
        h1 = layer_norm_all(a + enc)
        f = ffn(h1, e_w1[l], e_b1[l], e_w2[l], e_b2[l])
        enc = layer_norm_all(f + h1)

    # ------------------------------ decoder stack ----------------------------
    # Reference overwrites `result` each iteration; each layer sees the
    # original input, only the last layer's output survives.
    result = x
    for l in range(layers):
        # Load the (shared) attention weights once per layer; reused for both
        # self- and cross-attention, exactly like the reference DecoderLayer.
        wq = d_wq[l]; bq = d_bq[l]; wk = d_wk[l]; bk = d_bk[l]
        wv = d_wv[l]; bv = d_bv[l]; wo = d_wo[l]; bo = d_bo[l]

        a = mha(x, x, x, wq, bq, wk, bk, wv, bv, wo, bo, masked=True)
        h1 = layer_norm_all(a + x)
        a2 = mha(h1, enc, enc, wq, bq, wk, bk, wv, bv, wo, bo, masked=True)
        h2 = layer_norm_all(a2 + h1)
        f = ffn(h2, d_w1[l], d_b1[l], d_w2[l], d_b2[l])
        result = layer_norm_all(f + h2)

    # ------------------------ final projection + softmax ---------------------
    logits = (jnp.dot(result, out_w[...], preferred_element_type=f32)
              + out_b[...])
    m = jnp.max(logits, axis=1, keepdims=True)
    e = jnp.exp(logits - m)
    o_ref[...] = e / jnp.sum(e, axis=1, keepdims=True)


# ----------------------------- pallas wrapper --------------------------------
PARAM_ORDER = (
    "e_wq", "e_bq", "e_wk", "e_bk", "e_wv", "e_bv", "e_wo", "e_bo",
    "e_w1", "e_b1", "e_w2", "e_b2",
    "d_wq", "d_bq", "d_wk", "d_bk", "d_wv", "d_bv", "d_wo", "d_bo",
    "d_w1", "d_b1", "d_w2", "d_b2",
    "out_w", "out_b",
)


def _cost_estimate(n, args, out_bytes):
    mha_flops = 3 * 2 * n * D_MODEL * D_MODEL                 # packed Q/K/V proj
    mha_flops += HEADS * (2 * n * n * DK + 2 * n * n * DV)    # scores + p @ v
    mha_flops += 2 * n * D_MODEL * D_MODEL                    # output projection
    ffn_flops = 2 * n * D_MODEL * D_FF + 2 * n * D_FF * D_MODEL
    flops = LAYERS * ((mha_flops + ffn_flops) + (2 * mha_flops + ffn_flops))
    flops += 2 * n * D_MODEL * OUTPUT_SIZE
    trans = LAYERS * 3 * HEADS * n * n + n * OUTPUT_SIZE      # exp() calls
    bytes_accessed = sum(int(a.size) * a.dtype.itemsize for a in args) + out_bytes
    return pl.CostEstimate(flops=int(flops), transcendentals=int(trans),
                           bytes_accessed=int(bytes_accessed))


@jax.jit
def transformer(params, x):
    args = (x,) + tuple(params[k] for k in PARAM_ORDER)
    kern = functools.partial(transformer_kernel,
                             layers=LAYERS, heads=HEADS, dk=DK)
    return pl.pallas_call(
        kern,
        out_shape=jax.ShapeDtypeStruct((x.shape[0], OUTPUT_SIZE), jnp.float32),
        in_specs=[pl.BlockSpec(memory_space=pltpu.MemorySpace.VMEM)] * len(args),
        out_specs=pl.BlockSpec(memory_space=pltpu.MemorySpace.VMEM),
        cost_estimate=_cost_estimate(x.shape[0], args,
                                     x.shape[0] * OUTPUT_SIZE * 4),
    )(*args)


# --------------------------- parameter creation ------------------------------
def _init_linear(key, in_f, out_f):
    kw, kb = jax.random.split(key)
    bound = 1.0 / math.sqrt(in_f)
    w = jax.random.uniform(kw, (in_f, out_f), jnp.float32, -bound, bound)
    b = jax.random.uniform(kb, (1, out_f), jnp.float32, -bound, bound)
    return w, b


def _init_mha(key):
    keys = jax.random.split(key, 3 * HEADS + 1)
    wq, bq, wk, bk, wv, bv = [], [], [], [], [], []
    for h in range(HEADS):
        w, b = _init_linear(keys[3 * h + 0], D_MODEL, DK); wq.append(w); bq.append(b)
        w, b = _init_linear(keys[3 * h + 1], D_MODEL, DK); wk.append(w); bk.append(b)
        w, b = _init_linear(keys[3 * h + 2], D_MODEL, DV); wv.append(w); bv.append(b)
    wo, bo = _init_linear(keys[-1], D_MODEL, D_MODEL)
    # Pack the per-head projection weights along the output (lane) dimension so
    # the kernel does a single head-packed matmul per Q/K/V.
    return {
        "wq": jnp.concatenate(wq, axis=1), "bq": jnp.concatenate(bq, axis=1),
        "wk": jnp.concatenate(wk, axis=1), "bk": jnp.concatenate(bk, axis=1),
        "wv": jnp.concatenate(wv, axis=1), "bv": jnp.concatenate(bv, axis=1),
        "wo": wo, "bo": bo,
    }


def _init_layer(key):
    k_attn, k1, k2 = jax.random.split(key, 3)
    attn = _init_mha(k_attn)
    w1, b1 = _init_linear(k1, D_MODEL, D_FF)
    w2, b2 = _init_linear(k2, D_FF, D_MODEL)
    return {**attn, "w1": w1, "b1": b1, "w2": w2, "b2": b2}


def init_transformer(key):
    keys = jax.random.split(key, 2 * LAYERS + 1)
    enc_layers = [_init_layer(keys[i]) for i in range(LAYERS)]
    dec_layers = [_init_layer(keys[LAYERS + i]) for i in range(LAYERS)]
    out_w, out_b = _init_linear(keys[-1], D_MODEL, OUTPUT_SIZE)

    params = {}
    for name in ("wq", "bq", "wk", "bk", "wv", "bv", "wo", "bo",
                 "w1", "b1", "w2", "b2"):
        params["e_" + name] = jnp.stack([lyr[name] for lyr in enc_layers])
        params["d_" + name] = jnp.stack([lyr[name] for lyr in dec_layers])
    params["out_w"] = out_w
    params["out_b"] = out_b
    return params


# ---------------------------------- main --------------------------------------
if __name__ == "__main__":
    root = jax.random.PRNGKey(0)
    k_params, k_input = jax.random.split(root)

    params = init_transformer(k_params)
    x = jax.random.normal(k_input, (SEQ, D_MODEL), jnp.float32)

    out = transformer(params, x)
    out = jax.block_until_ready(out)

    assert out.shape == (SEQ, OUTPUT_SIZE)
    assert bool(jnp.all(jnp.isfinite(out)))
    # rows of the final softmax must sum to 1
    assert bool(jnp.allclose(jnp.sum(out, axis=1), 1.0, atol=1e-5))
    print("KERNEL_OK")
</pallas_src>

<mosaic_0001>
module attributes {stable_mosaic.version = 11 : i64} {
  func.func @transformer_kernel(%arg0: memref<8x32xf32, #tpu.memory_space<vmem>>, %arg1: memref<2x32x32xf32, #tpu.memory_space<vmem>>, %arg2: memref<2x1x32xf32, #tpu.memory_space<vmem>>, %arg3: memref<2x32x32xf32, #tpu.memory_space<vmem>>, %arg4: memref<2x1x32xf32, #tpu.memory_space<vmem>>, %arg5: memref<2x32x32xf32, #tpu.memory_space<vmem>>, %arg6: memref<2x1x32xf32, #tpu.memory_space<vmem>>, %arg7: memref<2x32x32xf32, #tpu.memory_space<vmem>>, %arg8: memref<2x1x32xf32, #tpu.memory_space<vmem>>, %arg9: memref<2x32x128xf32, #tpu.memory_space<vmem>>, %arg10: memref<2x1x128xf32, #tpu.memory_space<vmem>>, %arg11: memref<2x128x32xf32, #tpu.memory_space<vmem>>, %arg12: memref<2x1x32xf32, #tpu.memory_space<vmem>>, %arg13: memref<2x32x32xf32, #tpu.memory_space<vmem>>, %arg14: memref<2x1x32xf32, #tpu.memory_space<vmem>>, %arg15: memref<2x32x32xf32, #tpu.memory_space<vmem>>, %arg16: memref<2x1x32xf32, #tpu.memory_space<vmem>>, %arg17: memref<2x32x32xf32, #tpu.memory_space<vmem>>, %arg18: memref<2x1x32xf32, #tpu.memory_space<vmem>>, %arg19: memref<2x32x32xf32, #tpu.memory_space<vmem>>, %arg20: memref<2x1x32xf32, #tpu.memory_space<vmem>>, %arg21: memref<2x32x128xf32, #tpu.memory_space<vmem>>, %arg22: memref<2x1x128xf32, #tpu.memory_space<vmem>>, %arg23: memref<2x128x32xf32, #tpu.memory_space<vmem>>, %arg24: memref<2x1x32xf32, #tpu.memory_space<vmem>>, %arg25: memref<32x16xf32, #tpu.memory_space<vmem>>, %arg26: memref<1x16xf32, #tpu.memory_space<vmem>>, %arg27: memref<8x16xf32, #tpu.memory_space<vmem>>) attributes {dimension_semantics = [], scalar_prefetch = 0 : i64, scratch_operands = 0 : i64, tpu.core_type = #tpu.core_type<tc>} {
    %c0 = arith.constant 0 : index
    %c0_0 = arith.constant 0 : index
    %0 = vector.load %arg0[%c0, %c0_0] : memref<8x32xf32, #tpu.memory_space<vmem>>, vector<8x32xf32>
    %1 = tpu.iota {dimensions = array<i32: 0>} : vector<8x8xi32>
    %2 = tpu.iota {dimensions = array<i32: 1>} : vector<8x8xi32>
    %3 = arith.addi %1, %2 : vector<8x8xi32>
    %c14_i32 = arith.constant 14 : i32
    %4 = vector.broadcast %c14_i32 : i32 to vector<8x8xi32>
    %5 = arith.cmpi sge, %3, %4 : vector<8x8xi32>
    %cst = arith.constant 1.000000e+09 : f32
    %cst_1 = arith.constant 0.000000e+00 : f32
    %6 = vector.broadcast %cst : f32 to vector<8x8xf32>
    %7 = vector.broadcast %cst_1 : f32 to vector<8x8xf32>
    %8 = arith.select %5, %6, %7 : vector<8x8xi1>, vector<8x8xf32>
    %c0_2 = arith.constant 0 : index
    %c0_3 = arith.constant 0 : index
    %c0_4 = arith.constant 0 : index
    %9 = vector.load %arg1[%c0_2, %c0_3, %c0_4] : memref<2x32x32xf32, #tpu.memory_space<vmem>>, vector<1x32x32xf32>
    %10 = vector.shape_cast %9 : vector<1x32x32xf32> to vector<32x32xf32>
    %c0_5 = arith.constant 0 : index
    %c0_6 = arith.constant 0 : index
    %c0_7 = arith.constant 0 : index
    %11 = vector.load %arg2[%c0_5, %c0_6, %c0_7] : memref<2x1x32xf32, #tpu.memory_space<vmem>>, vector<1x1x32xf32>
    %12 = vector.shape_cast %11 : vector<1x1x32xf32> to vector<1x32xf32>
    %c0_8 = arith.constant 0 : index
    %c0_9 = arith.constant 0 : index
    %c0_10 = arith.constant 0 : index
    %13 = vector.load %arg3[%c0_8, %c0_9, %c0_10] : memref<2x32x32xf32, #tpu.memory_space<vmem>>, vector<1x32x32xf32>
    %14 = vector.shape_cast %13 : vector<1x32x32xf32> to vector<32x32xf32>
    %c0_11 = arith.constant 0 : index
    %c0_12 = arith.constant 0 : index
    %c0_13 = arith.constant 0 : index
    %15 = vector.load %arg4[%c0_11, %c0_12, %c0_13] : memref<2x1x32xf32, #tpu.memory_space<vmem>>, vector<1x1x32xf32>
    %16 = vector.shape_cast %15 : vector<1x1x32xf32> to vector<1x32xf32>
    %c0_14 = arith.constant 0 : index
    %c0_15 = arith.constant 0 : index
    %c0_16 = arith.constant 0 : index
    %17 = vector.load %arg5[%c0_14, %c0_15, %c0_16] : memref<2x32x32xf32, #tpu.memory_space<vmem>>, vector<1x32x32xf32>
    %18 = vector.shape_cast %17 : vector<1x32x32xf32> to vector<32x32xf32>
    %c0_17 = arith.constant 0 : index
    %c0_18 = arith.constant 0 : index
    %c0_19 = arith.constant 0 : index
    %19 = vector.load %arg6[%c0_17, %c0_18, %c0_19] : memref<2x1x32xf32, #tpu.memory_space<vmem>>, vector<1x1x32xf32>
    %20 = vector.shape_cast %19 : vector<1x1x32xf32> to vector<1x32xf32>
    %c0_20 = arith.constant 0 : index
    %c0_21 = arith.constant 0 : index
    %c0_22 = arith.constant 0 : index
    %21 = vector.load %arg7[%c0_20, %c0_21, %c0_22] : memref<2x32x32xf32, #tpu.memory_space<vmem>>, vector<1x32x32xf32>
    %22 = vector.shape_cast %21 : vector<1x32x32xf32> to vector<32x32xf32>
    %c0_23 = arith.constant 0 : index
    %c0_24 = arith.constant 0 : index
    %c0_25 = arith.constant 0 : index
    %23 = vector.load %arg8[%c0_23, %c0_24, %c0_25] : memref<2x1x32xf32, #tpu.memory_space<vmem>>, vector<1x1x32xf32>
    %24 = vector.shape_cast %23 : vector<1x1x32xf32> to vector<1x32xf32>
    %cst_26 = arith.constant dense<0.000000e+00> : vector<8x32xf32>
    %25 = tpu.matmul %0, %10, %cst_26 {dimension_numbers = #tpu.dot_dimension_numbers<[1], [0], [0], [1], [0, 0, 1, 1], [], []>} : vector<8x32xf32>, vector<32x32xf32>, vector<8x32xf32> -> vector<8x32xf32>
    %26 = vector.broadcast %12 : vector<1x32xf32> to vector<8x32xf32>
    %27 = arith.addf %25, %26 : vector<8x32xf32>
    %cst_27 = arith.constant dense<0.000000e+00> : vector<8x32xf32>
    %28 = tpu.matmul %0, %14, %cst_27 {dimension_numbers = #tpu.dot_dimension_numbers<[1], [0], [0], [1], [0, 0, 1, 1], [], []>} : vector<8x32xf32>, vector<32x32xf32>, vector<8x32xf32> -> vector<8x32xf32>
    %29 = vector.broadcast %16 : vector<1x32xf32> to vector<8x32xf32>
    %30 = arith.addf %28, %29 : vector<8x32xf32>
    %cst_28 = arith.constant dense<0.000000e+00> : vector<8x32xf32>
    %31 = tpu.matmul %0, %18, %cst_28 {dimension_numbers = #tpu.dot_dimension_numbers<[1], [0], [0], [1], [0, 0, 1, 1], [], []>} : vector<8x32xf32>, vector<32x32xf32>, vector<8x32xf32> -> vector<8x32xf32>
    %32 = vector.broadcast %20 : vector<1x32xf32> to vector<8x32xf32>
    %33 = arith.addf %31, %32 : vector<8x32xf32>
    %34 = vector.extract_strided_slice %27 {offsets = [0, 0], sizes = [8, 8], strides = [1, 1]} : vector<8x32xf32> to vector<8x8xf32>
    %35 = vector.extract_strided_slice %30 {offsets = [0, 0], sizes = [8, 8], strides = [1, 1]} : vector<8x32xf32> to vector<8x8xf32>
    %36 = vector.extract_strided_slice %33 {offsets = [0, 0], sizes = [8, 8], strides = [1, 1]} : vector<8x32xf32> to vector<8x8xf32>
    %cst_29 = arith.constant dense<0.000000e+00> : vector<8x8xf32>
    %37 = tpu.matmul %34, %35, %cst_29 {dimension_numbers = #tpu.dot_dimension_numbers<[1], [1], [0], [0], [0, 0, 1, 0], [], []>} : vector<8x8xf32>, vector<8x8xf32>, vector<8x8xf32> -> vector<8x8xf32>
    %cst_30 = arith.constant 0.353553385 : f32
    %38 = vector.broadcast %cst_30 : f32 to vector<8x8xf32>
    %39 = arith.mulf %37, %38 : vector<8x8xf32>
    %cst_31 = arith.constant dense<0xFF800000> : vector<8xf32>
    %40 = vector.multi_reduction <maximumf>, %39, %cst_31 [1] : vector<8x8xf32> to vector<8xf32>
    %41 = vector.shape_cast %40 : vector<8xf32> to vector<8x1xf32>
    %42 = vector.broadcast %41 : vector<8x1xf32> to vector<8x8xf32>
    %43 = arith.subf %39, %42 : vector<8x8xf32>
    %44 = math.exp %43 : vector<8x8xf32>
    %cst_32 = arith.constant dense<0.000000e+00> : vector<8xf32>
    %45 = vector.multi_reduction <add>, %44, %cst_32 [1] : vector<8x8xf32> to vector<8xf32>
    %46 = vector.shape_cast %45 : vector<8xf32> to vector<8x1xf32>
    %47 = vector.broadcast %46 : vector<8x1xf32> to vector<8x8xf32>
    %48 = arith.divf %44, %47 : vector<8x8xf32>
    %cst_33 = arith.constant dense<0.000000e+00> : vector<8x8xf32>
    %49 = tpu.matmul %48, %36, %cst_33 {dimension_numbers = #tpu.dot_dimension_numbers<[1], [0], [0], [1], [0, 0, 1, 1], [], []>} : vector<8x8xf32>, vector<8x8xf32>, vector<8x8xf32> -> vector<8x8xf32>
    %50 = vector.extract_strided_slice %27 {offsets = [0, 8], sizes = [8, 8], strides = [1, 1]} : vector<8x32xf32> to vector<8x8xf32>
    %51 = vector.extract_strided_slice %30 {offsets = [0, 8], sizes = [8, 8], strides = [1, 1]} : vector<8x32xf32> to vector<8x8xf32>
    %52 = vector.extract_strided_slice %33 {offsets = [0, 8], sizes = [8, 8], strides = [1, 1]} : vector<8x32xf32> to vector<8x8xf32>
    %cst_34 = arith.constant dense<0.000000e+00> : vector<8x8xf32>
    %53 = tpu.matmul %50, %51, %cst_34 {dimension_numbers = #tpu.dot_dimension_numbers<[1], [1], [0], [0], [0, 0, 1, 0], [], []>} : vector<8x8xf32>, vector<8x8xf32>, vector<8x8xf32> -> vector<8x8xf32>
    %cst_35 = arith.constant 0.353553385 : f32
    %54 = vector.broadcast %cst_35 : f32 to vector<8x8xf32>
    %55 = arith.mulf %53, %54 : vector<8x8xf32>
    %cst_36 = arith.constant dense<0xFF800000> : vector<8xf32>
    %56 = vector.multi_reduction <maximumf>, %55, %cst_36 [1] : vector<8x8xf32> to vector<8xf32>
    %57 = vector.shape_cast %56 : vector<8xf32> to vector<8x1xf32>
    %58 = vector.broadcast %57 : vector<8x1xf32> to vector<8x8xf32>
    %59 = arith.subf %55, %58 : vector<8x8xf32>
    %60 = math.exp %59 : vector<8x8xf32>
    %cst_37 = arith.constant dense<0.000000e+00> : vector<8xf32>
    %61 = vector.multi_reduction <add>, %60, %cst_37 [1] : vector<8x8xf32> to vector<8xf32>
    %62 = vector.shape_cast %61 : vector<8xf32> to vector<8x1xf32>
    %63 = vector.broadcast %62 : vector<8x1xf32> to vector<8x8xf32>
    %64 = arith.divf %60, %63 : vector<8x8xf32>
    %cst_38 = arith.constant dense<0.000000e+00> : vector<8x8xf32>
    %65 = tpu.matmul %64, %52, %cst_38 {dimension_numbers = #tpu.dot_dimension_numbers<[1], [0], [0], [1], [0, 0, 1, 1], [], []>} : vector<8x8xf32>, vector<8x8xf32>, vector<8x8xf32> -> vector<8x8xf32>
    %66 = vector.extract_strided_slice %27 {offsets = [0, 16], sizes = [8, 8], strides = [1, 1]} : vector<8x32xf32> to vector<8x8xf32>
    %67 = vector.extract_strided_slice %30 {offsets = [0, 16], sizes = [8, 8], strides = [1, 1]} : vector<8x32xf32> to vector<8x8xf32>
    %68 = vector.extract_strided_slice %33 {offsets = [0, 16], sizes = [8, 8], strides = [1, 1]} : vector<8x32xf32> to vector<8x8xf32>
    %cst_39 = arith.constant dense<0.000000e+00> : vector<8x8xf32>
    %69 = tpu.matmul %66, %67, %cst_39 {dimension_numbers = #tpu.dot_dimension_numbers<[1], [1], [0], [0], [0, 0, 1, 0], [], []>} : vector<8x8xf32>, vector<8x8xf32>, vector<8x8xf32> -> vector<8x8xf32>
    %cst_40 = arith.constant 0.353553385 : f32
    %70 = vector.broadcast %cst_40 : f32 to vector<8x8xf32>
    %71 = arith.mulf %69, %70 : vector<8x8xf32>
    %cst_41 = arith.constant dense<0xFF800000> : vector<8xf32>
    %72 = vector.multi_reduction <maximumf>, %71, %cst_41 [1] : vector<8x8xf32> to vector<8xf32>
    %73 = vector.shape_cast %72 : vector<8xf32> to vector<8x1xf32>
    %74 = vector.broadcast %73 : vector<8x1xf32> to vector<8x8xf32>
    %75 = arith.subf %71, %74 : vector<8x8xf32>
    %76 = math.exp %75 : vector<8x8xf32>
    %cst_42 = arith.constant dense<0.000000e+00> : vector<8xf32>
    %77 = vector.multi_reduction <add>, %76, %cst_42 [1] : vector<8x8xf32> to vector<8xf32>
    %78 = vector.shape_cast %77 : vector<8xf32> to vector<8x1xf32>
    %79 = vector.broadcast %78 : vector<8x1xf32> to vector<8x8xf32>
    %80 = arith.divf %76, %79 : vector<8x8xf32>
    %cst_43 = arith.constant dense<0.000000e+00> : vector<8x8xf32>
    %81 = tpu.matmul %80, %68, %cst_43 {dimension_numbers = #tpu.dot_dimension_numbers<[1], [0], [0], [1], [0, 0, 1, 1], [], []>} : vector<8x8xf32>, vector<8x8xf32>, vector<8x8xf32> -> vector<8x8xf32>
    %82 = vector.extract_strided_slice %27 {offsets = [0, 24], sizes = [8, 8], strides = [1, 1]} : vector<8x32xf32> to vector<8x8xf32>
    %83 = vector.extract_strided_slice %30 {offsets = [0, 24], sizes = [8, 8], strides = [1, 1]} : vector<8x32xf32> to vector<8x8xf32>
    %84 = vector.extract_strided_slice %33 {offsets = [0, 24], sizes = [8, 8], strides = [1, 1]} : vector<8x32xf32> to vector<8x8xf32>
    %cst_44 = arith.constant dense<0.000000e+00> : vector<8x8xf32>
    %85 = tpu.matmul %82, %83, %cst_44 {dimension_numbers = #tpu.dot_dimension_numbers<[1], [1], [0], [0], [0, 0, 1, 0], [], []>} : vector<8x8xf32>, vector<8x8xf32>, vector<8x8xf32> -> vector<8x8xf32>
    %cst_45 = arith.constant 0.353553385 : f32
    %86 = vector.broadcast %cst_45 : f32 to vector<8x8xf32>
    %87 = arith.mulf %85, %86 : vector<8x8xf32>
    %cst_46 = arith.constant dense<0xFF800000> : vector<8xf32>
    %88 = vector.multi_reduction <maximumf>, %87, %cst_46 [1] : vector<8x8xf32> to vector<8xf32>
    %89 = vector.shape_cast %88 : vector<8xf32> to vector<8x1xf32>
    %90 = vector.broadcast %89 : vector<8x1xf32> to vector<8x8xf32>
    %91 = arith.subf %87, %90 : vector<8x8xf32>
    %92 = math.exp %91 : vector<8x8xf32>
    %cst_47 = arith.constant dense<0.000000e+00> : vector<8xf32>
    %93 = vector.multi_reduction <add>, %92, %cst_47 [1] : vector<8x8xf32> to vector<8xf32>
    %94 = vector.shape_cast %93 : vector<8xf32> to vector<8x1xf32>
    %95 = vector.broadcast %94 : vector<8x1xf32> to vector<8x8xf32>
    %96 = arith.divf %92, %95 : vector<8x8xf32>
    %cst_48 = arith.constant dense<0.000000e+00> : vector<8x8xf32>
    %97 = tpu.matmul %96, %84, %cst_48 {dimension_numbers = #tpu.dot_dimension_numbers<[1], [0], [0], [1], [0, 0, 1, 1], [], []>} : vector<8x8xf32>, vector<8x8xf32>, vector<8x8xf32> -> vector<8x8xf32>
    %98 = tpu.concatenate %49, %65, %81, %97 in 1 : vector<8x8xf32>, vector<8x8xf32>, vector<8x8xf32>, vector<8x8xf32> -> vector<8x32xf32>
    %cst_49 = arith.constant dense<0.000000e+00> : vector<8x32xf32>
    %99 = tpu.matmul %98, %22, %cst_49 {dimension_numbers = #tpu.dot_dimension_numbers<[1], [0], [0], [1], [0, 0, 1, 1], [], []>} : vector<8x32xf32>, vector<32x32xf32>, vector<8x32xf32> -> vector<8x32xf32>
    %100 = vector.broadcast %24 : vector<1x32xf32> to vector<8x32xf32>
    %101 = arith.addf %99, %100 : vector<8x32xf32>
    %102 = arith.addf %101, %0 : vector<8x32xf32>
    %103 = vector.shape_cast %102 : vector<8x32xf32> to vector<1x8x32xf32>
    %cst_50 = arith.constant dense<0.000000e+00> : vector<1xf32>
    %104 = vector.multi_reduction <add>, %103, %cst_50 [1, 2] : vector<1x8x32xf32> to vector<1xf32>
    %105 = vector.shape_cast %104 : vector<1xf32> to vector<1x1x1xf32>
    %106 = vector.extract %105[0, 0, 0] : f32 from vector<1x1x1xf32>
    %cst_51 = arith.constant 2.560000e+02 : f32
    %107 = arith.divf %106, %cst_51 : f32
    %108 = vector.broadcast %107 : f32 to vector<8x32xf32>
    %109 = arith.subf %102, %108 : vector<8x32xf32>
    %110 = arith.mulf %109, %109 : vector<8x32xf32>
    %111 = vector.shape_cast %110 : vector<8x32xf32> to vector<1x8x32xf32>
    %cst_52 = arith.constant dense<0.000000e+00> : vector<1xf32>
    %112 = vector.multi_reduction <add>, %111, %cst_52 [1, 2] : vector<1x8x32xf32> to vector<1xf32>
    %113 = vector.shape_cast %112 : vector<1xf32> to vector<1x1x1xf32>
    %114 = vector.extract %113[0, 0, 0] : f32 from vector<1x1x1xf32>
    %cst_53 = arith.constant 2.560000e+02 : f32
    %115 = arith.divf %114, %cst_53 : f32
    %116 = vector.broadcast %107 : f32 to vector<8x32xf32>
    %117 = arith.subf %102, %116 : vector<8x32xf32>
    %cst_54 = arith.constant 9.99999974E-6 : f32
    %118 = arith.addf %115, %cst_54 : f32
    %119 = math.rsqrt %118 : f32
    %120 = vector.broadcast %119 : f32 to vector<8x32xf32>
    %121 = arith.mulf %117, %120 : vector<8x32xf32>
    %c0_55 = arith.constant 0 : index
    %c0_56 = arith.constant 0 : index
    %c0_57 = arith.constant 0 : index
    %122 = vector.load %arg9[%c0_55, %c0_56, %c0_57] : memref<2x32x128xf32, #tpu.memory_space<vmem>>, vector<1x32x128xf32>
    %123 = vector.shape_cast %122 : vector<1x32x128xf32> to vector<32x128xf32>
    %c0_58 = arith.constant 0 : index
    %c0_59 = arith.constant 0 : index
    %c0_60 = arith.constant 0 : index
    %124 = vector.load %arg10[%c0_58, %c0_59, %c0_60] : memref<2x1x128xf32, #tpu.memory_space<vmem>>, vector<1x1x128xf32>
    %125 = vector.shape_cast %124 : vector<1x1x128xf32> to vector<1x128xf32>
    %c0_61 = arith.constant 0 : index
    %c0_62 = arith.constant 0 : index
    %c0_63 = arith.constant 0 : index
    %126 = vector.load %arg11[%c0_61, %c0_62, %c0_63] : memref<2x128x32xf32, #tpu.memory_space<vmem>>, vector<1x128x32xf32>
    %127 = vector.shape_cast %126 : vector<1x128x32xf32> to vector<128x32xf32>
    %c0_64 = arith.constant 0 : index
    %c0_65 = arith.constant 0 : index
    %c0_66 = arith.constant 0 : index
    %128 = vector.load %arg12[%c0_64, %c0_65, %c0_66] : memref<2x1x32xf32, #tpu.memory_space<vmem>>, vector<1x1x32xf32>
    %129 = vector.shape_cast %128 : vector<1x1x32xf32> to vector<1x32xf32>
    %cst_67 = arith.constant dense<0.000000e+00> : vector<8x128xf32>
    %130 = tpu.matmul %121, %123, %cst_67 {dimension_numbers = #tpu.dot_dimension_numbers<[1], [0], [0], [1], [0, 0, 1, 1], [], []>} : vector<8x32xf32>, vector<32x128xf32>, vector<8x128xf32> -> vector<8x128xf32>
    %131 = vector.broadcast %125 : vector<1x128xf32> to vector<8x128xf32>
    %132 = arith.addf %130, %131 : vector<8x128xf32>
    %cst_68 = arith.constant 0.000000e+00 : f32
    %133 = vector.broadcast %cst_68 : f32 to vector<8x128xf32>
    %134 = arith.maximumf %132, %133 : vector<8x128xf32>
    %cst_69 = arith.constant dense<0.000000e+00> : vector<8x32xf32>
    %135 = tpu.matmul %134, %127, %cst_69 {dimension_numbers = #tpu.dot_dimension_numbers<[1], [0], [0], [1], [0, 0, 1, 1], [], []>} : vector<8x128xf32>, vector<128x32xf32>, vector<8x32xf32> -> vector<8x32xf32>
    %136 = vector.broadcast %129 : vector<1x32xf32> to vector<8x32xf32>
    %137 = arith.addf %135, %136 : vector<8x32xf32>
    %138 = arith.addf %137, %121 : vector<8x32xf32>
    %139 = vector.shape_cast %138 : vector<8x32xf32> to vector<1x8x32xf32>
    %cst_70 = arith.constant dense<0.000000e+00> : vector<1xf32>
    %140 = vector.multi_reduction <add>, %139, %cst_70 [1, 2] : vector<1x8x32xf32> to vector<1xf32>
    %141 = vector.shape_cast %140 : vector<1xf32> to vector<1x1x1xf32>
    %142 = vector.extract %141[0, 0, 0] : f32 from vector<1x1x1xf32>
    %cst_71 = arith.constant 2.560000e+02 : f32
    %143 = arith.divf %142, %cst_71 : f32
    %144 = vector.broadcast %143 : f32 to vector<8x32xf32>
    %145 = arith.subf %138, %144 : vector<8x32xf32>
    %146 = arith.mulf %145, %145 : vector<8x32xf32>
    %147 = vector.shape_cast %146 : vector<8x32xf32> to vector<1x8x32xf32>
    %cst_72 = arith.constant dense<0.000000e+00> : vector<1xf32>
    %148 = vector.multi_reduction <add>, %147, %cst_72 [1, 2] : vector<1x8x32xf32> to vector<1xf32>
    %149 = vector.shape_cast %148 : vector<1xf32> to vector<1x1x1xf32>
    %150 = vector.extract %149[0, 0, 0] : f32 from vector<1x1x1xf32>
    %cst_73 = arith.constant 2.560000e+02 : f32
    %151 = arith.divf %150, %cst_73 : f32
    %152 = vector.broadcast %143 : f32 to vector<8x32xf32>
    %153 = arith.subf %138, %152 : vector<8x32xf32>
    %cst_74 = arith.constant 9.99999974E-6 : f32
    %154 = arith.addf %151, %cst_74 : f32
    %155 = math.rsqrt %154 : f32
    %156 = vector.broadcast %155 : f32 to vector<8x32xf32>
    %157 = arith.mulf %153, %156 : vector<8x32xf32>
    %c1 = arith.constant 1 : index
    %c0_75 = arith.constant 0 : index
    %c0_76 = arith.constant 0 : index
    %158 = vector.load %arg1[%c1, %c0_75, %c0_76] : memref<2x32x32xf32, #tpu.memory_space<vmem>>, vector<1x32x32xf32>
    %159 = vector.shape_cast %158 : vector<1x32x32xf32> to vector<32x32xf32>
    %c1_77 = arith.constant 1 : index
    %c0_78 = arith.constant 0 : index
    %c0_79 = arith.constant 0 : index
    %160 = vector.load %arg2[%c1_77, %c0_78, %c0_79] : memref<2x1x32xf32, #tpu.memory_space<vmem>>, vector<1x1x32xf32>
    %161 = vector.shape_cast %160 : vector<1x1x32xf32> to vector<1x32xf32>
    %c1_80 = arith.constant 1 : index
    %c0_81 = arith.constant 0 : index
    %c0_82 = arith.constant 0 : index
    %162 = vector.load %arg3[%c1_80, %c0_81, %c0_82] : memref<2x32x32xf32, #tpu.memory_space<vmem>>, vector<1x32x32xf32>
    %163 = vector.shape_cast %162 : vector<1x32x32xf32> to vector<32x32xf32>
    %c1_83 = arith.constant 1 : index
    %c0_84 = arith.constant 0 : index
    %c0_85 = arith.constant 0 : index
    %164 = vector.load %arg4[%c1_83, %c0_84, %c0_85] : memref<2x1x32xf32, #tpu.memory_space<vmem>>, vector<1x1x32xf32>
    %165 = vector.shape_cast %164 : vector<1x1x32xf32> to vector<1x32xf32>
    %c1_86 = arith.constant 1 : index
    %c0_87 = arith.constant 0 : index
    %c0_88 = arith.constant 0 : index
    %166 = vector.load %arg5[%c1_86, %c0_87, %c0_88] : memref<2x32x32xf32, #tpu.memory_space<vmem>>, vector<1x32x32xf32>
    %167 = vector.shape_cast %166 : vector<1x32x32xf32> to vector<32x32xf32>
    %c1_89 = arith.constant 1 : index
    %c0_90 = arith.constant 0 : index
    %c0_91 = arith.constant 0 : index
    %168 = vector.load %arg6[%c1_89, %c0_90, %c0_91] : memref<2x1x32xf32, #tpu.memory_space<vmem>>, vector<1x1x32xf32>
    %169 = vector.shape_cast %168 : vector<1x1x32xf32> to vector<1x32xf32>
    %c1_92 = arith.constant 1 : index
    %c0_93 = arith.constant 0 : index
    %c0_94 = arith.constant 0 : index
    %170 = vector.load %arg7[%c1_92, %c0_93, %c0_94] : memref<2x32x32xf32, #tpu.memory_space<vmem>>, vector<1x32x32xf32>
    %171 = vector.shape_cast %170 : vector<1x32x32xf32> to vector<32x32xf32>
    %c1_95 = arith.constant 1 : index
    %c0_96 = arith.constant 0 : index
    %c0_97 = arith.constant 0 : index
    %172 = vector.load %arg8[%c1_95, %c0_96, %c0_97] : memref<2x1x32xf32, #tpu.memory_space<vmem>>, vector<1x1x32xf32>
    %173 = vector.shape_cast %172 : vector<1x1x32xf32> to vector<1x32xf32>
    %cst_98 = arith.constant dense<0.000000e+00> : vector<8x32xf32>
    %174 = tpu.matmul %157, %159, %cst_98 {dimension_numbers = #tpu.dot_dimension_numbers<[1], [0], [0], [1], [0, 0, 1, 1], [], []>} : vector<8x32xf32>, vector<32x32xf32>, vector<8x32xf32> -> vector<8x32xf32>
    %175 = vector.broadcast %161 : vector<1x32xf32> to vector<8x32xf32>
    %176 = arith.addf %174, %175 : vector<8x32xf32>
    %cst_99 = arith.constant dense<0.000000e+00> : vector<8x32xf32>
    %177 = tpu.matmul %157, %163, %cst_99 {dimension_numbers = #tpu.dot_dimension_numbers<[1], [0], [0], [1], [0, 0, 1, 1], [], []>} : vector<8x32xf32>, vector<32x32xf32>, vector<8x32xf32> -> vector<8x32xf32>
    %178 = vector.broadcast %165 : vector<1x32xf32> to vector<8x32xf32>
    %179 = arith.addf %177, %178 : vector<8x32xf32>
    %cst_100 = arith.constant dense<0.000000e+00> : vector<8x32xf32>
    %180 = tpu.matmul %157, %167, %cst_100 {dimension_numbers = #tpu.dot_dimension_numbers<[1], [0], [0], [1], [0, 0, 1, 1], [], []>} : vector<8x32xf32>, vector<32x32xf32>, vector<8x32xf32> -> vector<8x32xf32>
    %181 = vector.broadcast %169 : vector<1x32xf32> to vector<8x32xf32>
    %182 = arith.addf %180, %181 : vector<8x32xf32>
    %183 = vector.extract_strided_slice %176 {offsets = [0, 0], sizes = [8, 8], strides = [1, 1]} : vector<8x32xf32> to vector<8x8xf32>
    %184 = vector.extract_strided_slice %179 {offsets = [0, 0], sizes = [8, 8], strides = [1, 1]} : vector<8x32xf32> to vector<8x8xf32>
    %185 = vector.extract_strided_slice %182 {offsets = [0, 0], sizes = [8, 8], strides = [1, 1]} : vector<8x32xf32> to vector<8x8xf32>
    %cst_101 = arith.constant dense<0.000000e+00> : vector<8x8xf32>
    %186 = tpu.matmul %183, %184, %cst_101 {dimension_numbers = #tpu.dot_dimension_numbers<[1], [1], [0], [0], [0, 0, 1, 0], [], []>} : vector<8x8xf32>, vector<8x8xf32>, vector<8x8xf32> -> vector<8x8xf32>
    %cst_102 = arith.constant 0.353553385 : f32
    %187 = vector.broadcast %cst_102 : f32 to vector<8x8xf32>
    %188 = arith.mulf %186, %187 : vector<8x8xf32>
    %cst_103 = arith.constant dense<0xFF800000> : vector<8xf32>
    %189 = vector.multi_reduction <maximumf>, %188, %cst_103 [1] : vector<8x8xf32> to vector<8xf32>
    %190 = vector.shape_cast %189 : vector<8xf32> to vector<8x1xf32>
    %191 = vector.broadcast %190 : vector<8x1xf32> to vector<8x8xf32>
    %192 = arith.subf %188, %191 : vector<8x8xf32>
    %193 = math.exp %192 : vector<8x8xf32>
    %cst_104 = arith.constant dense<0.000000e+00> : vector<8xf32>
    %194 = vector.multi_reduction <add>, %193, %cst_104 [1] : vector<8x8xf32> to vector<8xf32>
    %195 = vector.shape_cast %194 : vector<8xf32> to vector<8x1xf32>
    %196 = vector.broadcast %195 : vector<8x1xf32> to vector<8x8xf32>
    %197 = arith.divf %193, %196 : vector<8x8xf32>
    %cst_105 = arith.constant dense<0.000000e+00> : vector<8x8xf32>
    %198 = tpu.matmul %197, %185, %cst_105 {dimension_numbers = #tpu.dot_dimension_numbers<[1], [0], [0], [1], [0, 0, 1, 1], [], []>} : vector<8x8xf32>, vector<8x8xf32>, vector<8x8xf32> -> vector<8x8xf32>
    %199 = vector.extract_strided_slice %176 {offsets = [0, 8], sizes = [8, 8], strides = [1, 1]} : vector<8x32xf32> to vector<8x8xf32>
    %200 = vector.extract_strided_slice %179 {offsets = [0, 8], sizes = [8, 8], strides = [1, 1]} : vector<8x32xf32> to vector<8x8xf32>
    %201 = vector.extract_strided_slice %182 {offsets = [0, 8], sizes = [8, 8], strides = [1, 1]} : vector<8x32xf32> to vector<8x8xf32>
    %cst_106 = arith.constant dense<0.000000e+00> : vector<8x8xf32>
    %202 = tpu.matmul %199, %200, %cst_106 {dimension_numbers = #tpu.dot_dimension_numbers<[1], [1], [0], [0], [0, 0, 1, 0], [], []>} : vector<8x8xf32>, vector<8x8xf32>, vector<8x8xf32> -> vector<8x8xf32>
    %cst_107 = arith.constant 0.353553385 : f32
    %203 = vector.broadcast %cst_107 : f32 to vector<8x8xf32>
    %204 = arith.mulf %202, %203 : vector<8x8xf32>
    %cst_108 = arith.constant dense<0xFF800000> : vector<8xf32>
    %205 = vector.multi_reduction <maximumf>, %204, %cst_108 [1] : vector<8x8xf32> to vector<8xf32>
    %206 = vector.shape_cast %205 : vector<8xf32> to vector<8x1xf32>
    %207 = vector.broadcast %206 : vector<8x1xf32> to vector<8x8xf32>
    %208 = arith.subf %204, %207 : vector<8x8xf32>
    %209 = math.exp %208 : vector<8x8xf32>
    %cst_109 = arith.constant dense<0.000000e+00> : vector<8xf32>
    %210 = vector.multi_reduction <add>, %209, %cst_109 [1] : vector<8x8xf32> to vector<8xf32>
    %211 = vector.shape_cast %210 : vector<8xf32> to vector<8x1xf32>
    %212 = vector.broadcast %211 : vector<8x1xf32> to vector<8x8xf32>
    %213 = arith.divf %209, %212 : vector<8x8xf32>
    %cst_110 = arith.constant dense<0.000000e+00> : vector<8x8xf32>
    %214 = tpu.matmul %213, %201, %cst_110 {dimension_numbers = #tpu.dot_dimension_numbers<[1], [0], [0], [1], [0, 0, 1, 1], [], []>} : vector<8x8xf32>, vector<8x8xf32>, vector<8x8xf32> -> vector<8x8xf32>
    %215 = vector.extract_strided_slice %176 {offsets = [0, 16], sizes = [8, 8], strides = [1, 1]} : vector<8x32xf32> to vector<8x8xf32>
    %216 = vector.extract_strided_slice %179 {offsets = [0, 16], sizes = [8, 8], strides = [1, 1]} : vector<8x32xf32> to vector<8x8xf32>
    %217 = vector.extract_strided_slice %182 {offsets = [0, 16], sizes = [8, 8], strides = [1, 1]} : vector<8x32xf32> to vector<8x8xf32>
    %cst_111 = arith.constant dense<0.000000e+00> : vector<8x8xf32>
    %218 = tpu.matmul %215, %216, %cst_111 {dimension_numbers = #tpu.dot_dimension_numbers<[1], [1], [0], [0], [0, 0, 1, 0], [], []>} : vector<8x8xf32>, vector<8x8xf32>, vector<8x8xf32> -> vector<8x8xf32>
    %cst_112 = arith.constant 0.353553385 : f32
    %219 = vector.broadcast %cst_112 : f32 to vector<8x8xf32>
    %220 = arith.mulf %218, %219 : vector<8x8xf32>
    %cst_113 = arith.constant dense<0xFF800000> : vector<8xf32>
    %221 = vector.multi_reduction <maximumf>, %220, %cst_113 [1] : vector<8x8xf32> to vector<8xf32>
    %222 = vector.shape_cast %221 : vector<8xf32> to vector<8x1xf32>
    %223 = vector.broadcast %222 : vector<8x1xf32> to vector<8x8xf32>
    %224 = arith.subf %220, %223 : vector<8x8xf32>
    %225 = math.exp %224 : vector<8x8xf32>
    %cst_114 = arith.constant dense<0.000000e+00> : vector<8xf32>
    %226 = vector.multi_reduction <add>, %225, %cst_114 [1] : vector<8x8xf32> to vector<8xf32>
    %227 = vector.shape_cast %226 : vector<8xf32> to vector<8x1xf32>
    %228 = vector.broadcast %227 : vector<8x1xf32> to vector<8x8xf32>
    %229 = arith.divf %225, %228 : vector<8x8xf32>
    %cst_115 = arith.constant dense<0.000000e+00> : vector<8x8xf32>
    %230 = tpu.matmul %229, %217, %cst_115 {dimension_numbers = #tpu.dot_dimension_numbers<[1], [0], [0], [1], [0, 0, 1, 1], [], []>} : vector<8x8xf32>, vector<8x8xf32>, vector<8x8xf32> -> vector<8x8xf32>
    %231 = vector.extract_strided_slice %176 {offsets = [0, 24], sizes = [8, 8], strides = [1, 1]} : vector<8x32xf32> to vector<8x8xf32>
    %232 = vector.extract_strided_slice %179 {offsets = [0, 24], sizes = [8, 8], strides = [1, 1]} : vector<8x32xf32> to vector<8x8xf32>
    %233 = vector.extract_strided_slice %182 {offsets = [0, 24], sizes = [8, 8], strides = [1, 1]} : vector<8x32xf32> to vector<8x8xf32>
    %cst_116 = arith.constant dense<0.000000e+00> : vector<8x8xf32>
    %234 = tpu.matmul %231, %232, %cst_116 {dimension_numbers = #tpu.dot_dimension_numbers<[1], [1], [0], [0], [0, 0, 1, 0], [], []>} : vector<8x8xf32>, vector<8x8xf32>, vector<8x8xf32> -> vector<8x8xf32>
    %cst_117 = arith.constant 0.353553385 : f32
    %235 = vector.broadcast %cst_117 : f32 to vector<8x8xf32>
    %236 = arith.mulf %234, %235 : vector<8x8xf32>
    %cst_118 = arith.constant dense<0xFF800000> : vector<8xf32>
    %237 = vector.multi_reduction <maximumf>, %236, %cst_118 [1] : vector<8x8xf32> to vector<8xf32>
    %238 = vector.shape_cast %237 : vector<8xf32> to vector<8x1xf32>
    %239 = vector.broadcast %238 : vector<8x1xf32> to vector<8x8xf32>
    %240 = arith.subf %236, %239 : vector<8x8xf32>
    %241 = math.exp %240 : vector<8x8xf32>
    %cst_119 = arith.constant dense<0.000000e+00> : vector<8xf32>
    %242 = vector.multi_reduction <add>, %241, %cst_119 [1] : vector<8x8xf32> to vector<8xf32>
    %243 = vector.shape_cast %242 : vector<8xf32> to vector<8x1xf32>
    %244 = vector.broadcast %243 : vector<8x1xf32> to vector<8x8xf32>
    %245 = arith.divf %241, %244 : vector<8x8xf32>
    %cst_120 = arith.constant dense<0.000000e+00> : vector<8x8xf32>
    %246 = tpu.matmul %245, %233, %cst_120 {dimension_numbers = #tpu.dot_dimension_numbers<[1], [0], [0], [1], [0, 0, 1, 1], [], []>} : vector<8x8xf32>, vector<8x8xf32>, vector<8x8xf32> -> vector<8x8xf32>
    %247 = tpu.concatenate %198, %214, %230, %246 in 1 : vector<8x8xf32>, vector<8x8xf32>, vector<8x8xf32>, vector<8x8xf32> -> vector<8x32xf32>
    %cst_121 = arith.constant dense<0.000000e+00> : vector<8x32xf32>
    %248 = tpu.matmul %247, %171, %cst_121 {dimension_numbers = #tpu.dot_dimension_numbers<[1], [0], [0], [1], [0, 0, 1, 1], [], []>} : vector<8x32xf32>, vector<32x32xf32>, vector<8x32xf32> -> vector<8x32xf32>
    %249 = vector.broadcast %173 : vector<1x32xf32> to vector<8x32xf32>
    %250 = arith.addf %248, %249 : vector<8x32xf32>
    %251 = arith.addf %250, %157 : vector<8x32xf32>
    %252 = vector.shape_cast %251 : vector<8x32xf32> to vector<1x8x32xf32>
    %cst_122 = arith.constant dense<0.000000e+00> : vector<1xf32>
    %253 = vector.multi_reduction <add>, %252, %cst_122 [1, 2] : vector<1x8x32xf32> to vector<1xf32>
    %254 = vector.shape_cast %253 : vector<1xf32> to vector<1x1x1xf32>
    %255 = vector.extract %254[0, 0, 0] : f32 from vector<1x1x1xf32>
    %cst_123 = arith.constant 2.560000e+02 : f32
    %256 = arith.divf %255, %cst_123 : f32
    %257 = vector.broadcast %256 : f32 to vector<8x32xf32>
    %258 = arith.subf %251, %257 : vector<8x32xf32>
    %259 = arith.mulf %258, %258 : vector<8x32xf32>
    %260 = vector.shape_cast %259 : vector<8x32xf32> to vector<1x8x32xf32>
    %cst_124 = arith.constant dense<0.000000e+00> : vector<1xf32>
    %261 = vector.multi_reduction <add>, %260, %cst_124 [1, 2] : vector<1x8x32xf32> to vector<1xf32>
    %262 = vector.shape_cast %261 : vector<1xf32> to vector<1x1x1xf32>
    %263 = vector.extract %262[0, 0, 0] : f32 from vector<1x1x1xf32>
    %cst_125 = arith.constant 2.560000e+02 : f32
    %264 = arith.divf %263, %cst_125 : f32
    %265 = vector.broadcast %256 : f32 to vector<8x32xf32>
    %266 = arith.subf %251, %265 : vector<8x32xf32>
    %cst_126 = arith.constant 9.99999974E-6 : f32
    %267 = arith.addf %264, %cst_126 : f32
    %268 = math.rsqrt %267 : f32
    %269 = vector.broadcast %268 : f32 to vector<8x32xf32>
    %270 = arith.mulf %266, %269 : vector<8x32xf32>
    %c1_127 = arith.constant 1 : index
    %c0_128 = arith.constant 0 : index
    %c0_129 = arith.constant 0 : index
    %271 = vector.load %arg9[%c1_127, %c0_128, %c0_129] : memref<2x32x128xf32, #tpu.memory_space<vmem>>, vector<1x32x128xf32>
    %272 = vector.shape_cast %271 : vector<1x32x128xf32> to vector<32x128xf32>
    %c1_130 = arith.constant 1 : index
    %c0_131 = arith.constant 0 : index
    %c0_132 = arith.constant 0 : index
    %273 = vector.load %arg10[%c1_130, %c0_131, %c0_132] : memref<2x1x128xf32, #tpu.memory_space<vmem>>, vector<1x1x128xf32>
    %274 = vector.shape_cast %273 : vector<1x1x128xf32> to vector<1x128xf32>
    %c1_133 = arith.constant 1 : index
    %c0_134 = arith.constant 0 : index
    %c0_135 = arith.constant 0 : index
    %275 = vector.load %arg11[%c1_133, %c0_134, %c0_135] : memref<2x128x32xf32, #tpu.memory_space<vmem>>, vector<1x128x32xf32>
    %276 = vector.shape_cast %275 : vector<1x128x32xf32> to vector<128x32xf32>
    %c1_136 = arith.constant 1 : index
    %c0_137 = arith.constant 0 : index
    %c0_138 = arith.constant 0 : index
    %277 = vector.load %arg12[%c1_136, %c0_137, %c0_138] : memref<2x1x32xf32, #tpu.memory_space<vmem>>, vector<1x1x32xf32>
    %278 = vector.shape_cast %277 : vector<1x1x32xf32> to vector<1x32xf32>
    %cst_139 = arith.constant dense<0.000000e+00> : vector<8x128xf32>
    %279 = tpu.matmul %270, %272, %cst_139 {dimension_numbers = #tpu.dot_dimension_numbers<[1], [0], [0], [1], [0, 0, 1, 1], [], []>} : vector<8x32xf32>, vector<32x128xf32>, vector<8x128xf32> -> vector<8x128xf32>
    %280 = vector.broadcast %274 : vector<1x128xf32> to vector<8x128xf32>
    %281 = arith.addf %279, %280 : vector<8x128xf32>
    %cst_140 = arith.constant 0.000000e+00 : f32
    %282 = vector.broadcast %cst_140 : f32 to vector<8x128xf32>
    %283 = arith.maximumf %281, %282 : vector<8x128xf32>
    %cst_141 = arith.constant dense<0.000000e+00> : vector<8x32xf32>
    %284 = tpu.matmul %283, %276, %cst_141 {dimension_numbers = #tpu.dot_dimension_numbers<[1], [0], [0], [1], [0, 0, 1, 1], [], []>} : vector<8x128xf32>, vector<128x32xf32>, vector<8x32xf32> -> vector<8x32xf32>
    %285 = vector.broadcast %278 : vector<1x32xf32> to vector<8x32xf32>
    %286 = arith.addf %284, %285 : vector<8x32xf32>
    %287 = arith.addf %286, %270 : vector<8x32xf32>
    %288 = vector.shape_cast %287 : vector<8x32xf32> to vector<1x8x32xf32>
    %cst_142 = arith.constant dense<0.000000e+00> : vector<1xf32>
    %289 = vector.multi_reduction <add>, %288, %cst_142 [1, 2] : vector<1x8x32xf32> to vector<1xf32>
    %290 = vector.shape_cast %289 : vector<1xf32> to vector<1x1x1xf32>
    %291 = vector.extract %290[0, 0, 0] : f32 from vector<1x1x1xf32>
    %cst_143 = arith.constant 2.560000e+02 : f32
    %292 = arith.divf %291, %cst_143 : f32
    %293 = vector.broadcast %292 : f32 to vector<8x32xf32>
    %294 = arith.subf %287, %293 : vector<8x32xf32>
    %295 = arith.mulf %294, %294 : vector<8x32xf32>
    %296 = vector.shape_cast %295 : vector<8x32xf32> to vector<1x8x32xf32>
    %cst_144 = arith.constant dense<0.000000e+00> : vector<1xf32>
    %297 = vector.multi_reduction <add>, %296, %cst_144 [1, 2] : vector<1x8x32xf32> to vector<1xf32>
    %298 = vector.shape_cast %297 : vector<1xf32> to vector<1x1x1xf32>
    %299 = vector.extract %298[0, 0, 0] : f32 from vector<1x1x1xf32>
    %cst_145 = arith.constant 2.560000e+02 : f32
    %300 = arith.divf %299, %cst_145 : f32
    %301 = vector.broadcast %292 : f32 to vector<8x32xf32>
    %302 = arith.subf %287, %301 : vector<8x32xf32>
    %cst_146 = arith.constant 9.99999974E-6 : f32
    %303 = arith.addf %300, %cst_146 : f32
    %304 = math.rsqrt %303 : f32
    %305 = vector.broadcast %304 : f32 to vector<8x32xf32>
    %306 = arith.mulf %302, %305 : vector<8x32xf32>
    %c1_147 = arith.constant 1 : index
    %c0_148 = arith.constant 0 : index
    %c0_149 = arith.constant 0 : index
    %307 = vector.load %arg13[%c1_147, %c0_148, %c0_149] : memref<2x32x32xf32, #tpu.memory_space<vmem>>, vector<1x32x32xf32>
    %308 = vector.shape_cast %307 : vector<1x32x32xf32> to vector<32x32xf32>
    %c1_150 = arith.constant 1 : index
    %c0_151 = arith.constant 0 : index
    %c0_152 = arith.constant 0 : index
    %309 = vector.load %arg14[%c1_150, %c0_151, %c0_152] : memref<2x1x32xf32, #tpu.memory_space<vmem>>, vector<1x1x32xf32>
    %310 = vector.shape_cast %309 : vector<1x1x32xf32> to vector<1x32xf32>
    %c1_153 = arith.constant 1 : index
    %c0_154 = arith.constant 0 : index
    %c0_155 = arith.constant 0 : index
    %311 = vector.load %arg15[%c1_153, %c0_154, %c0_155] : memref<2x32x32xf32, #tpu.memory_space<vmem>>, vector<1x32x32xf32>
    %312 = vector.shape_cast %311 : vector<1x32x32xf32> to vector<32x32xf32>
    %c1_156 = arith.constant 1 : index
    %c0_157 = arith.constant 0 : index
    %c0_158 = arith.constant 0 : index
    %313 = vector.load %arg16[%c1_156, %c0_157, %c0_158] : memref<2x1x32xf32, #tpu.memory_space<vmem>>, vector<1x1x32xf32>
    %314 = vector.shape_cast %313 : vector<1x1x32xf32> to vector<1x32xf32>
    %c1_159 = arith.constant 1 : index
    %c0_160 = arith.constant 0 : index
    %c0_161 = arith.constant 0 : index
    %315 = vector.load %arg17[%c1_159, %c0_160, %c0_161] : memref<2x32x32xf32, #tpu.memory_space<vmem>>, vector<1x32x32xf32>
    %316 = vector.shape_cast %315 : vector<1x32x32xf32> to vector<32x32xf32>
    %c1_162 = arith.constant 1 : index
    %c0_163 = arith.constant 0 : index
    %c0_164 = arith.constant 0 : index
    %317 = vector.load %arg18[%c1_162, %c0_163, %c0_164] : memref<2x1x32xf32, #tpu.memory_space<vmem>>, vector<1x1x32xf32>
    %318 = vector.shape_cast %317 : vector<1x1x32xf32> to vector<1x32xf32>
    %c1_165 = arith.constant 1 : index
    %c0_166 = arith.constant 0 : index
    %c0_167 = arith.constant 0 : index
    %319 = vector.load %arg19[%c1_165, %c0_166, %c0_167] : memref<2x32x32xf32, #tpu.memory_space<vmem>>, vector<1x32x32xf32>
    %320 = vector.shape_cast %319 : vector<1x32x32xf32> to vector<32x32xf32>
    %c1_168 = arith.constant 1 : index
    %c0_169 = arith.constant 0 : index
    %c0_170 = arith.constant 0 : index
    %321 = vector.load %arg20[%c1_168, %c0_169, %c0_170] : memref<2x1x32xf32, #tpu.memory_space<vmem>>, vector<1x1x32xf32>
    %322 = vector.shape_cast %321 : vector<1x1x32xf32> to vector<1x32xf32>
    %cst_171 = arith.constant dense<0.000000e+00> : vector<8x32xf32>
    %323 = tpu.matmul %0, %308, %cst_171 {dimension_numbers = #tpu.dot_dimension_numbers<[1], [0], [0], [1], [0, 0, 1, 1], [], []>} : vector<8x32xf32>, vector<32x32xf32>, vector<8x32xf32> -> vector<8x32xf32>
    %324 = vector.broadcast %310 : vector<1x32xf32> to vector<8x32xf32>
    %325 = arith.addf %323, %324 : vector<8x32xf32>
    %cst_172 = arith.constant dense<0.000000e+00> : vector<8x32xf32>
    %326 = tpu.matmul %0, %312, %cst_172 {dimension_numbers = #tpu.dot_dimension_numbers<[1], [0], [0], [1], [0, 0, 1, 1], [], []>} : vector<8x32xf32>, vector<32x32xf32>, vector<8x32xf32> -> vector<8x32xf32>
    %327 = vector.broadcast %314 : vector<1x32xf32> to vector<8x32xf32>
    %328 = arith.addf %326, %327 : vector<8x32xf32>
    %cst_173 = arith.constant dense<0.000000e+00> : vector<8x32xf32>
    %329 = tpu.matmul %0, %316, %cst_173 {dimension_numbers = #tpu.dot_dimension_numbers<[1], [0], [0], [1], [0, 0, 1, 1], [], []>} : vector<8x32xf32>, vector<32x32xf32>, vector<8x32xf32> -> vector<8x32xf32>
    %330 = vector.broadcast %318 : vector<1x32xf32> to vector<8x32xf32>
    %331 = arith.addf %329, %330 : vector<8x32xf32>
    %332 = vector.extract_strided_slice %325 {offsets = [0, 0], sizes = [8, 8], strides = [1, 1]} : vector<8x32xf32> to vector<8x8xf32>
    %333 = vector.extract_strided_slice %328 {offsets = [0, 0], sizes = [8, 8], strides = [1, 1]} : vector<8x32xf32> to vector<8x8xf32>
    %334 = vector.extract_strided_slice %331 {offsets = [0, 0], sizes = [8, 8], strides = [1, 1]} : vector<8x32xf32> to vector<8x8xf32>
    %cst_174 = arith.constant dense<0.000000e+00> : vector<8x8xf32>
    %335 = tpu.matmul %332, %333, %cst_174 {dimension_numbers = #tpu.dot_dimension_numbers<[1], [1], [0], [0], [0, 0, 1, 0], [], []>} : vector<8x8xf32>, vector<8x8xf32>, vector<8x8xf32> -> vector<8x8xf32>
    %cst_175 = arith.constant 0.353553385 : f32
    %336 = vector.broadcast %cst_175 : f32 to vector<8x8xf32>
    %337 = arith.mulf %335, %336 : vector<8x8xf32>
    %338 = arith.subf %337, %8 : vector<8x8xf32>
    %cst_176 = arith.constant dense<0xFF800000> : vector<8xf32>
    %339 = vector.multi_reduction <maximumf>, %338, %cst_176 [1] : vector<8x8xf32> to vector<8xf32>
    %340 = vector.shape_cast %339 : vector<8xf32> to vector<8x1xf32>
    %341 = vector.broadcast %340 : vector<8x1xf32> to vector<8x8xf32>
    %342 = arith.subf %338, %341 : vector<8x8xf32>
    %343 = math.exp %342 : vector<8x8xf32>
    %cst_177 = arith.constant dense<0.000000e+00> : vector<8xf32>
    %344 = vector.multi_reduction <add>, %343, %cst_177 [1] : vector<8x8xf32> to vector<8xf32>
    %345 = vector.shape_cast %344 : vector<8xf32> to vector<8x1xf32>
    %346 = vector.broadcast %345 : vector<8x1xf32> to vector<8x8xf32>
    %347 = arith.divf %343, %346 : vector<8x8xf32>
    %cst_178 = arith.constant dense<0.000000e+00> : vector<8x8xf32>
    %348 = tpu.matmul %347, %334, %cst_178 {dimension_numbers = #tpu.dot_dimension_numbers<[1], [0], [0], [1], [0, 0, 1, 1], [], []>} : vector<8x8xf32>, vector<8x8xf32>, vector<8x8xf32> -> vector<8x8xf32>
    %349 = vector.extract_strided_slice %325 {offsets = [0, 8], sizes = [8, 8], strides = [1, 1]} : vector<8x32xf32> to vector<8x8xf32>
    %350 = vector.extract_strided_slice %328 {offsets = [0, 8], sizes = [8, 8], strides = [1, 1]} : vector<8x32xf32> to vector<8x8xf32>
    %351 = vector.extract_strided_slice %331 {offsets = [0, 8], sizes = [8, 8], strides = [1, 1]} : vector<8x32xf32> to vector<8x8xf32>
    %cst_179 = arith.constant dense<0.000000e+00> : vector<8x8xf32>
    %352 = tpu.matmul %349, %350, %cst_179 {dimension_numbers = #tpu.dot_dimension_numbers<[1], [1], [0], [0], [0, 0, 1, 0], [], []>} : vector<8x8xf32>, vector<8x8xf32>, vector<8x8xf32> -> vector<8x8xf32>
    %cst_180 = arith.constant 0.353553385 : f32
    %353 = vector.broadcast %cst_180 : f32 to vector<8x8xf32>
    %354 = arith.mulf %352, %353 : vector<8x8xf32>
    %355 = arith.subf %354, %8 : vector<8x8xf32>
    %cst_181 = arith.constant dense<0xFF800000> : vector<8xf32>
    %356 = vector.multi_reduction <maximumf>, %355, %cst_181 [1] : vector<8x8xf32> to vector<8xf32>
    %357 = vector.shape_cast %356 : vector<8xf32> to vector<8x1xf32>
    %358 = vector.broadcast %357 : vector<8x1xf32> to vector<8x8xf32>
    %359 = arith.subf %355, %358 : vector<8x8xf32>
    %360 = math.exp %359 : vector<8x8xf32>
    %cst_182 = arith.constant dense<0.000000e+00> : vector<8xf32>
    %361 = vector.multi_reduction <add>, %360, %cst_182 [1] : vector<8x8xf32> to vector<8xf32>
    %362 = vector.shape_cast %361 : vector<8xf32> to vector<8x1xf32>
    %363 = vector.broadcast %362 : vector<8x1xf32> to vector<8x8xf32>
    %364 = arith.divf %360, %363 : vector<8x8xf32>
    %cst_183 = arith.constant dense<0.000000e+00> : vector<8x8xf32>
    %365 = tpu.matmul %364, %351, %cst_183 {dimension_numbers = #tpu.dot_dimension_numbers<[1], [0], [0], [1], [0, 0, 1, 1], [], []>} : vector<8x8xf32>, vector<8x8xf32>, vector<8x8xf32> -> vector<8x8xf32>
    %366 = vector.extract_strided_slice %325 {offsets = [0, 16], sizes = [8, 8], strides = [1, 1]} : vector<8x32xf32> to vector<8x8xf32>
    %367 = vector.extract_strided_slice %328 {offsets = [0, 16], sizes = [8, 8], strides = [1, 1]} : vector<8x32xf32> to vector<8x8xf32>
    %368 = vector.extract_strided_slice %331 {offsets = [0, 16], sizes = [8, 8], strides = [1, 1]} : vector<8x32xf32> to vector<8x8xf32>
    %cst_184 = arith.constant dense<0.000000e+00> : vector<8x8xf32>
    %369 = tpu.matmul %366, %367, %cst_184 {dimension_numbers = #tpu.dot_dimension_numbers<[1], [1], [0], [0], [0, 0, 1, 0], [], []>} : vector<8x8xf32>, vector<8x8xf32>, vector<8x8xf32> -> vector<8x8xf32>
    %cst_185 = arith.constant 0.353553385 : f32
    %370 = vector.broadcast %cst_185 : f32 to vector<8x8xf32>
    %371 = arith.mulf %369, %370 : vector<8x8xf32>
    %372 = arith.subf %371, %8 : vector<8x8xf32>
    %cst_186 = arith.constant dense<0xFF800000> : vector<8xf32>
    %373 = vector.multi_reduction <maximumf>, %372, %cst_186 [1] : vector<8x8xf32> to vector<8xf32>
    %374 = vector.shape_cast %373 : vector<8xf32> to vector<8x1xf32>
    %375 = vector.broadcast %374 : vector<8x1xf32> to vector<8x8xf32>
    %376 = arith.subf %372, %375 : vector<8x8xf32>
    %377 = math.exp %376 : vector<8x8xf32>
    %cst_187 = arith.constant dense<0.000000e+00> : vector<8xf32>
    %378 = vector.multi_reduction <add>, %377, %cst_187 [1] : vector<8x8xf32> to vector<8xf32>
    %379 = vector.shape_cast %378 : vector<8xf32> to vector<8x1xf32>
    %380 = vector.broadcast %379 : vector<8x1xf32> to vector<8x8xf32>
    %381 = arith.divf %377, %380 : vector<8x8xf32>
    %cst_188 = arith.constant dense<0.000000e+00> : vector<8x8xf32>
    %382 = tpu.matmul %381, %368, %cst_188 {dimension_numbers = #tpu.dot_dimension_numbers<[1], [0], [0], [1], [0, 0, 1, 1], [], []>} : vector<8x8xf32>, vector<8x8xf32>, vector<8x8xf32> -> vector<8x8xf32>
    %383 = vector.extract_strided_slice %325 {offsets = [0, 24], sizes = [8, 8], strides = [1, 1]} : vector<8x32xf32> to vector<8x8xf32>
    %384 = vector.extract_strided_slice %328 {offsets = [0, 24], sizes = [8, 8], strides = [1, 1]} : vector<8x32xf32> to vector<8x8xf32>
    %385 = vector.extract_strided_slice %331 {offsets = [0, 24], sizes = [8, 8], strides = [1, 1]} : vector<8x32xf32> to vector<8x8xf32>
    %cst_189 = arith.constant dense<0.000000e+00> : vector<8x8xf32>
    %386 = tpu.matmul %383, %384, %cst_189 {dimension_numbers = #tpu.dot_dimension_numbers<[1], [1], [0], [0], [0, 0, 1, 0], [], []>} : vector<8x8xf32>, vector<8x8xf32>, vector<8x8xf32> -> vector<8x8xf32>
    %cst_190 = arith.constant 0.353553385 : f32
    %387 = vector.broadcast %cst_190 : f32 to vector<8x8xf32>
    %388 = arith.mulf %386, %387 : vector<8x8xf32>
    %389 = arith.subf %388, %8 : vector<8x8xf32>
    %cst_191 = arith.constant dense<0xFF800000> : vector<8xf32>
    %390 = vector.multi_reduction <maximumf>, %389, %cst_191 [1] : vector<8x8xf32> to vector<8xf32>
    %391 = vector.shape_cast %390 : vector<8xf32> to vector<8x1xf32>
    %392 = vector.broadcast %391 : vector<8x1xf32> to vector<8x8xf32>
    %393 = arith.subf %389, %392 : vector<8x8xf32>
    %394 = math.exp %393 : vector<8x8xf32>
    %cst_192 = arith.constant dense<0.000000e+00> : vector<8xf32>
    %395 = vector.multi_reduction <add>, %394, %cst_192 [1] : vector<8x8xf32> to vector<8xf32>
    %396 = vector.shape_cast %395 : vector<8xf32> to vector<8x1xf32>
    %397 = vector.broadcast %396 : vector<8x1xf32> to vector<8x8xf32>
    %398 = arith.divf %394, %397 : vector<8x8xf32>
    %cst_193 = arith.constant dense<0.000000e+00> : vector<8x8xf32>
    %399 = tpu.matmul %398, %385, %cst_193 {dimension_numbers = #tpu.dot_dimension_numbers<[1], [0], [0], [1], [0, 0, 1, 1], [], []>} : vector<8x8xf32>, vector<8x8xf32>, vector<8x8xf32> -> vector<8x8xf32>
    %400 = tpu.concatenate %348, %365, %382, %399 in 1 : vector<8x8xf32>, vector<8x8xf32>, vector<8x8xf32>, vector<8x8xf32> -> vector<8x32xf32>
    %cst_194 = arith.constant dense<0.000000e+00> : vector<8x32xf32>
    %401 = tpu.matmul %400, %320, %cst_194 {dimension_numbers = #tpu.dot_dimension_numbers<[1], [0], [0], [1], [0, 0, 1, 1], [], []>} : vector<8x32xf32>, vector<32x32xf32>, vector<8x32xf32> -> vector<8x32xf32>
    %402 = vector.broadcast %322 : vector<1x32xf32> to vector<8x32xf32>
    %403 = arith.addf %401, %402 : vector<8x32xf32>
    %404 = arith.addf %403, %0 : vector<8x32xf32>
    %405 = vector.shape_cast %404 : vector<8x32xf32> to vector<1x8x32xf32>
    %cst_195 = arith.constant dense<0.000000e+00> : vector<1xf32>
    %406 = vector.multi_reduction <add>, %405, %cst_195 [1, 2] : vector<1x8x32xf32> to vector<1xf32>
    %407 = vector.shape_cast %406 : vector<1xf32> to vector<1x1x1xf32>
    %408 = vector.extract %407[0, 0, 0] : f32 from vector<1x1x1xf32>
    %cst_196 = arith.constant 2.560000e+02 : f32
    %409 = arith.divf %408, %cst_196 : f32
    %410 = vector.broadcast %409 : f32 to vector<8x32xf32>
    %411 = arith.subf %404, %410 : vector<8x32xf32>
    %412 = arith.mulf %411, %411 : vector<8x32xf32>
    %413 = vector.shape_cast %412 : vector<8x32xf32> to vector<1x8x32xf32>
    %cst_197 = arith.constant dense<0.000000e+00> : vector<1xf32>
    %414 = vector.multi_reduction <add>, %413, %cst_197 [1, 2] : vector<1x8x32xf32> to vector<1xf32>
    %415 = vector.shape_cast %414 : vector<1xf32> to vector<1x1x1xf32>
    %416 = vector.extract %415[0, 0, 0] : f32 from vector<1x1x1xf32>
    %cst_198 = arith.constant 2.560000e+02 : f32
    %417 = arith.divf %416, %cst_198 : f32
    %418 = vector.broadcast %409 : f32 to vector<8x32xf32>
    %419 = arith.subf %404, %418 : vector<8x32xf32>
    %cst_199 = arith.constant 9.99999974E-6 : f32
    %420 = arith.addf %417, %cst_199 : f32
    %421 = math.rsqrt %420 : f32
    %422 = vector.broadcast %421 : f32 to vector<8x32xf32>
    %423 = arith.mulf %419, %422 : vector<8x32xf32>
    %cst_200 = arith.constant dense<0.000000e+00> : vector<8x32xf32>
    %424 = tpu.matmul %423, %308, %cst_200 {dimension_numbers = #tpu.dot_dimension_numbers<[1], [0], [0], [1], [0, 0, 1, 1], [], []>} : vector<8x32xf32>, vector<32x32xf32>, vector<8x32xf32> -> vector<8x32xf32>
    %425 = vector.broadcast %310 : vector<1x32xf32> to vector<8x32xf32>
    %426 = arith.addf %424, %425 : vector<8x32xf32>
    %cst_201 = arith.constant dense<0.000000e+00> : vector<8x32xf32>
    %427 = tpu.matmul %306, %312, %cst_201 {dimension_numbers = #tpu.dot_dimension_numbers<[1], [0], [0], [1], [0, 0, 1, 1], [], []>} : vector<8x32xf32>, vector<32x32xf32>, vector<8x32xf32> -> vector<8x32xf32>
    %428 = vector.broadcast %314 : vector<1x32xf32> to vector<8x32xf32>
    %429 = arith.addf %427, %428 : vector<8x32xf32>
    %cst_202 = arith.constant dense<0.000000e+00> : vector<8x32xf32>
    %430 = tpu.matmul %306, %316, %cst_202 {dimension_numbers = #tpu.dot_dimension_numbers<[1], [0], [0], [1], [0, 0, 1, 1], [], []>} : vector<8x32xf32>, vector<32x32xf32>, vector<8x32xf32> -> vector<8x32xf32>
    %431 = vector.broadcast %318 : vector<1x32xf32> to vector<8x32xf32>
    %432 = arith.addf %430, %431 : vector<8x32xf32>
    %433 = vector.extract_strided_slice %426 {offsets = [0, 0], sizes = [8, 8], strides = [1, 1]} : vector<8x32xf32> to vector<8x8xf32>
    %434 = vector.extract_strided_slice %429 {offsets = [0, 0], sizes = [8, 8], strides = [1, 1]} : vector<8x32xf32> to vector<8x8xf32>
    %435 = vector.extract_strided_slice %432 {offsets = [0, 0], sizes = [8, 8], strides = [1, 1]} : vector<8x32xf32> to vector<8x8xf32>
    %cst_203 = arith.constant dense<0.000000e+00> : vector<8x8xf32>
    %436 = tpu.matmul %433, %434, %cst_203 {dimension_numbers = #tpu.dot_dimension_numbers<[1], [1], [0], [0], [0, 0, 1, 0], [], []>} : vector<8x8xf32>, vector<8x8xf32>, vector<8x8xf32> -> vector<8x8xf32>
    %cst_204 = arith.constant 0.353553385 : f32
    %437 = vector.broadcast %cst_204 : f32 to vector<8x8xf32>
    %438 = arith.mulf %436, %437 : vector<8x8xf32>
    %439 = arith.subf %438, %8 : vector<8x8xf32>
    %cst_205 = arith.constant dense<0xFF800000> : vector<8xf32>
    %440 = vector.multi_reduction <maximumf>, %439, %cst_205 [1] : vector<8x8xf32> to vector<8xf32>
    %441 = vector.shape_cast %440 : vector<8xf32> to vector<8x1xf32>
    %442 = vector.broadcast %441 : vector<8x1xf32> to vector<8x8xf32>
    %443 = arith.subf %439, %442 : vector<8x8xf32>
    %444 = math.exp %443 : vector<8x8xf32>
    %cst_206 = arith.constant dense<0.000000e+00> : vector<8xf32>
    %445 = vector.multi_reduction <add>, %444, %cst_206 [1] : vector<8x8xf32> to vector<8xf32>
    %446 = vector.shape_cast %445 : vector<8xf32> to vector<8x1xf32>
    %447 = vector.broadcast %446 : vector<8x1xf32> to vector<8x8xf32>
    %448 = arith.divf %444, %447 : vector<8x8xf32>
    %cst_207 = arith.constant dense<0.000000e+00> : vector<8x8xf32>
    %449 = tpu.matmul %448, %435, %cst_207 {dimension_numbers = #tpu.dot_dimension_numbers<[1], [0], [0], [1], [0, 0, 1, 1], [], []>} : vector<8x8xf32>, vector<8x8xf32>, vector<8x8xf32> -> vector<8x8xf32>
    %450 = vector.extract_strided_slice %426 {offsets = [0, 8], sizes = [8, 8], strides = [1, 1]} : vector<8x32xf32> to vector<8x8xf32>
    %451 = vector.extract_strided_slice %429 {offsets = [0, 8], sizes = [8, 8], strides = [1, 1]} : vector<8x32xf32> to vector<8x8xf32>
    %452 = vector.extract_strided_slice %432 {offsets = [0, 8], sizes = [8, 8], strides = [1, 1]} : vector<8x32xf32> to vector<8x8xf32>
    %cst_208 = arith.constant dense<0.000000e+00> : vector<8x8xf32>
    %453 = tpu.matmul %450, %451, %cst_208 {dimension_numbers = #tpu.dot_dimension_numbers<[1], [1], [0], [0], [0, 0, 1, 0], [], []>} : vector<8x8xf32>, vector<8x8xf32>, vector<8x8xf32> -> vector<8x8xf32>
    %cst_209 = arith.constant 0.353553385 : f32
    %454 = vector.broadcast %cst_209 : f32 to vector<8x8xf32>
    %455 = arith.mulf %453, %454 : vector<8x8xf32>
    %456 = arith.subf %455, %8 : vector<8x8xf32>
    %cst_210 = arith.constant dense<0xFF800000> : vector<8xf32>
    %457 = vector.multi_reduction <maximumf>, %456, %cst_210 [1] : vector<8x8xf32> to vector<8xf32>
    %458 = vector.shape_cast %457 : vector<8xf32> to vector<8x1xf32>
    %459 = vector.broadcast %458 : vector<8x1xf32> to vector<8x8xf32>
    %460 = arith.subf %456, %459 : vector<8x8xf32>
    %461 = math.exp %460 : vector<8x8xf32>
    %cst_211 = arith.constant dense<0.000000e+00> : vector<8xf32>
    %462 = vector.multi_reduction <add>, %461, %cst_211 [1] : vector<8x8xf32> to vector<8xf32>
    %463 = vector.shape_cast %462 : vector<8xf32> to vector<8x1xf32>
    %464 = vector.broadcast %463 : vector<8x1xf32> to vector<8x8xf32>
    %465 = arith.divf %461, %464 : vector<8x8xf32>
    %cst_212 = arith.constant dense<0.000000e+00> : vector<8x8xf32>
    %466 = tpu.matmul %465, %452, %cst_212 {dimension_numbers = #tpu.dot_dimension_numbers<[1], [0], [0], [1], [0, 0, 1, 1], [], []>} : vector<8x8xf32>, vector<8x8xf32>, vector<8x8xf32> -> vector<8x8xf32>
    %467 = vector.extract_strided_slice %426 {offsets = [0, 16], sizes = [8, 8], strides = [1, 1]} : vector<8x32xf32> to vector<8x8xf32>
    %468 = vector.extract_strided_slice %429 {offsets = [0, 16], sizes = [8, 8], strides = [1, 1]} : vector<8x32xf32> to vector<8x8xf32>
    %469 = vector.extract_strided_slice %432 {offsets = [0, 16], sizes = [8, 8], strides = [1, 1]} : vector<8x32xf32> to vector<8x8xf32>
    %cst_213 = arith.constant dense<0.000000e+00> : vector<8x8xf32>
    %470 = tpu.matmul %467, %468, %cst_213 {dimension_numbers = #tpu.dot_dimension_numbers<[1], [1], [0], [0], [0, 0, 1, 0], [], []>} : vector<8x8xf32>, vector<8x8xf32>, vector<8x8xf32> -> vector<8x8xf32>
    %cst_214 = arith.constant 0.353553385 : f32
    %471 = vector.broadcast %cst_214 : f32 to vector<8x8xf32>
    %472 = arith.mulf %470, %471 : vector<8x8xf32>
    %473 = arith.subf %472, %8 : vector<8x8xf32>
    %cst_215 = arith.constant dense<0xFF800000> : vector<8xf32>
    %474 = vector.multi_reduction <maximumf>, %473, %cst_215 [1] : vector<8x8xf32> to vector<8xf32>
    %475 = vector.shape_cast %474 : vector<8xf32> to vector<8x1xf32>
    %476 = vector.broadcast %475 : vector<8x1xf32> to vector<8x8xf32>
    %477 = arith.subf %473, %476 : vector<8x8xf32>
    %478 = math.exp %477 : vector<8x8xf32>
    %cst_216 = arith.constant dense<0.000000e+00> : vector<8xf32>
    %479 = vector.multi_reduction <add>, %478, %cst_216 [1] : vector<8x8xf32> to vector<8xf32>
    %480 = vector.shape_cast %479 : vector<8xf32> to vector<8x1xf32>
    %481 = vector.broadcast %480 : vector<8x1xf32> to vector<8x8xf32>
    %482 = arith.divf %478, %481 : vector<8x8xf32>
    %cst_217 = arith.constant dense<0.000000e+00> : vector<8x8xf32>
    %483 = tpu.matmul %482, %469, %cst_217 {dimension_numbers = #tpu.dot_dimension_numbers<[1], [0], [0], [1], [0, 0, 1, 1], [], []>} : vector<8x8xf32>, vector<8x8xf32>, vector<8x8xf32> -> vector<8x8xf32>
    %484 = vector.extract_strided_slice %426 {offsets = [0, 24], sizes = [8, 8], strides = [1, 1]} : vector<8x32xf32> to vector<8x8xf32>
    %485 = vector.extract_strided_slice %429 {offsets = [0, 24], sizes = [8, 8], strides = [1, 1]} : vector<8x32xf32> to vector<8x8xf32>
    %486 = vector.extract_strided_slice %432 {offsets = [0, 24], sizes = [8, 8], strides = [1, 1]} : vector<8x32xf32> to vector<8x8xf32>
    %cst_218 = arith.constant dense<0.000000e+00> : vector<8x8xf32>
    %487 = tpu.matmul %484, %485, %cst_218 {dimension_numbers = #tpu.dot_dimension_numbers<[1], [1], [0], [0], [0, 0, 1, 0], [], []>} : vector<8x8xf32>, vector<8x8xf32>, vector<8x8xf32> -> vector<8x8xf32>
    %cst_219 = arith.constant 0.353553385 : f32
    %488 = vector.broadcast %cst_219 : f32 to vector<8x8xf32>
    %489 = arith.mulf %487, %488 : vector<8x8xf32>
    %490 = arith.subf %489, %8 : vector<8x8xf32>
    %cst_220 = arith.constant dense<0xFF800000> : vector<8xf32>
    %491 = vector.multi_reduction <maximumf>, %490, %cst_220 [1] : vector<8x8xf32> to vector<8xf32>
    %492 = vector.shape_cast %491 : vector<8xf32> to vector<8x1xf32>
    %493 = vector.broadcast %492 : vector<8x1xf32> to vector<8x8xf32>
    %494 = arith.subf %490, %493 : vector<8x8xf32>
    %495 = math.exp %494 : vector<8x8xf32>
    %cst_221 = arith.constant dense<0.000000e+00> : vector<8xf32>
    %496 = vector.multi_reduction <add>, %495, %cst_221 [1] : vector<8x8xf32> to vector<8xf32>
    %497 = vector.shape_cast %496 : vector<8xf32> to vector<8x1xf32>
    %498 = vector.broadcast %497 : vector<8x1xf32> to vector<8x8xf32>
    %499 = arith.divf %495, %498 : vector<8x8xf32>
    %cst_222 = arith.constant dense<0.000000e+00> : vector<8x8xf32>
    %500 = tpu.matmul %499, %486, %cst_222 {dimension_numbers = #tpu.dot_dimension_numbers<[1], [0], [0], [1], [0, 0, 1, 1], [], []>} : vector<8x8xf32>, vector<8x8xf32>, vector<8x8xf32> -> vector<8x8xf32>
    %501 = tpu.concatenate %449, %466, %483, %500 in 1 : vector<8x8xf32>, vector<8x8xf32>, vector<8x8xf32>, vector<8x8xf32> -> vector<8x32xf32>
    %cst_223 = arith.constant dense<0.000000e+00> : vector<8x32xf32>
    %502 = tpu.matmul %501, %320, %cst_223 {dimension_numbers = #tpu.dot_dimension_numbers<[1], [0], [0], [1], [0, 0, 1, 1], [], []>} : vector<8x32xf32>, vector<32x32xf32>, vector<8x32xf32> -> vector<8x32xf32>
    %503 = vector.broadcast %322 : vector<1x32xf32> to vector<8x32xf32>
    %504 = arith.addf %502, %503 : vector<8x32xf32>
    %505 = arith.addf %504, %423 : vector<8x32xf32>
    %506 = vector.shape_cast %505 : vector<8x32xf32> to vector<1x8x32xf32>
    %cst_224 = arith.constant dense<0.000000e+00> : vector<1xf32>
    %507 = vector.multi_reduction <add>, %506, %cst_224 [1, 2] : vector<1x8x32xf32> to vector<1xf32>
    %508 = vector.shape_cast %507 : vector<1xf32> to vector<1x1x1xf32>
    %509 = vector.extract %508[0, 0, 0] : f32 from vector<1x1x1xf32>
    %cst_225 = arith.constant 2.560000e+02 : f32
    %510 = arith.divf %509, %cst_225 : f32
    %511 = vector.broadcast %510 : f32 to vector<8x32xf32>
    %512 = arith.subf %505, %511 : vector<8x32xf32>
    %513 = arith.mulf %512, %512 : vector<8x32xf32>
    %514 = vector.shape_cast %513 : vector<8x32xf32> to vector<1x8x32xf32>
    %cst_226 = arith.constant dense<0.000000e+00> : vector<1xf32>
    %515 = vector.multi_reduction <add>, %514, %cst_226 [1, 2] : vector<1x8x32xf32> to vector<1xf32>
    %516 = vector.shape_cast %515 : vector<1xf32> to vector<1x1x1xf32>
    %517 = vector.extract %516[0, 0, 0] : f32 from vector<1x1x1xf32>
    %cst_227 = arith.constant 2.560000e+02 : f32
    %518 = arith.divf %517, %cst_227 : f32
    %519 = vector.broadcast %510 : f32 to vector<8x32xf32>
    %520 = arith.subf %505, %519 : vector<8x32xf32>
    %cst_228 = arith.constant 9.99999974E-6 : f32
    %521 = arith.addf %518, %cst_228 : f32
    %522 = math.rsqrt %521 : f32
    %523 = vector.broadcast %522 : f32 to vector<8x32xf32>
    %524 = arith.mulf %520, %523 : vector<8x32xf32>
    %c1_229 = arith.constant 1 : index
    %c0_230 = arith.constant 0 : index
    %c0_231 = arith.constant 0 : index
    %525 = vector.load %arg21[%c1_229, %c0_230, %c0_231] : memref<2x32x128xf32, #tpu.memory_space<vmem>>, vector<1x32x128xf32>
    %526 = vector.shape_cast %525 : vector<1x32x128xf32> to vector<32x128xf32>
    %c1_232 = arith.constant 1 : index
    %c0_233 = arith.constant 0 : index
    %c0_234 = arith.constant 0 : index
    %527 = vector.load %arg22[%c1_232, %c0_233, %c0_234] : memref<2x1x128xf32, #tpu.memory_space<vmem>>, vector<1x1x128xf32>
    %528 = vector.shape_cast %527 : vector<1x1x128xf32> to vector<1x128xf32>
    %c1_235 = arith.constant 1 : index
    %c0_236 = arith.constant 0 : index
    %c0_237 = arith.constant 0 : index
    %529 = vector.load %arg23[%c1_235, %c0_236, %c0_237] : memref<2x128x32xf32, #tpu.memory_space<vmem>>, vector<1x128x32xf32>
    %530 = vector.shape_cast %529 : vector<1x128x32xf32> to vector<128x32xf32>
    %c1_238 = arith.constant 1 : index
    %c0_239 = arith.constant 0 : index
    %c0_240 = arith.constant 0 : index
    %531 = vector.load %arg24[%c1_238, %c0_239, %c0_240] : memref<2x1x32xf32, #tpu.memory_space<vmem>>, vector<1x1x32xf32>
    %532 = vector.shape_cast %531 : vector<1x1x32xf32> to vector<1x32xf32>
    %cst_241 = arith.constant dense<0.000000e+00> : vector<8x128xf32>
    %533 = tpu.matmul %524, %526, %cst_241 {dimension_numbers = #tpu.dot_dimension_numbers<[1], [0], [0], [1], [0, 0, 1, 1], [], []>} : vector<8x32xf32>, vector<32x128xf32>, vector<8x128xf32> -> vector<8x128xf32>
    %534 = vector.broadcast %528 : vector<1x128xf32> to vector<8x128xf32>
    %535 = arith.addf %533, %534 : vector<8x128xf32>
    %cst_242 = arith.constant 0.000000e+00 : f32
    %536 = vector.broadcast %cst_242 : f32 to vector<8x128xf32>
    %537 = arith.maximumf %535, %536 : vector<8x128xf32>
    %cst_243 = arith.constant dense<0.000000e+00> : vector<8x32xf32>
    %538 = tpu.matmul %537, %530, %cst_243 {dimension_numbers = #tpu.dot_dimension_numbers<[1], [0], [0], [1], [0, 0, 1, 1], [], []>} : vector<8x128xf32>, vector<128x32xf32>, vector<8x32xf32> -> vector<8x32xf32>
    %539 = vector.broadcast %532 : vector<1x32xf32> to vector<8x32xf32>
    %540 = arith.addf %538, %539 : vector<8x32xf32>
    %541 = arith.addf %540, %524 : vector<8x32xf32>
    %542 = vector.shape_cast %541 : vector<8x32xf32> to vector<1x8x32xf32>
    %cst_244 = arith.constant dense<0.000000e+00> : vector<1xf32>
    %543 = vector.multi_reduction <add>, %542, %cst_244 [1, 2] : vector<1x8x32xf32> to vector<1xf32>
    %544 = vector.shape_cast %543 : vector<1xf32> to vector<1x1x1xf32>
    %545 = vector.extract %544[0, 0, 0] : f32 from vector<1x1x1xf32>
    %cst_245 = arith.constant 2.560000e+02 : f32
    %546 = arith.divf %545, %cst_245 : f32
    %547 = vector.broadcast %546 : f32 to vector<8x32xf32>
    %548 = arith.subf %541, %547 : vector<8x32xf32>
    %549 = arith.mulf %548, %548 : vector<8x32xf32>
    %550 = vector.shape_cast %549 : vector<8x32xf32> to vector<1x8x32xf32>
    %cst_246 = arith.constant dense<0.000000e+00> : vector<1xf32>
    %551 = vector.multi_reduction <add>, %550, %cst_246 [1, 2] : vector<1x8x32xf32> to vector<1xf32>
    %552 = vector.shape_cast %551 : vector<1xf32> to vector<1x1x1xf32>
    %553 = vector.extract %552[0, 0, 0] : f32 from vector<1x1x1xf32>
    %cst_247 = arith.constant 2.560000e+02 : f32
    %554 = arith.divf %553, %cst_247 : f32
    %555 = vector.broadcast %546 : f32 to vector<8x32xf32>
    %556 = arith.subf %541, %555 : vector<8x32xf32>
    %cst_248 = arith.constant 9.99999974E-6 : f32
    %557 = arith.addf %554, %cst_248 : f32
    %558 = math.rsqrt %557 : f32
    %559 = vector.broadcast %558 : f32 to vector<8x32xf32>
    %560 = arith.mulf %556, %559 : vector<8x32xf32>
    %c0_249 = arith.constant 0 : index
    %c0_250 = arith.constant 0 : index
    %561 = vector.load %arg25[%c0_249, %c0_250] : memref<32x16xf32, #tpu.memory_space<vmem>>, vector<32x16xf32>
    %cst_251 = arith.constant dense<0.000000e+00> : vector<8x16xf32>
    %562 = tpu.matmul %560, %561, %cst_251 {dimension_numbers = #tpu.dot_dimension_numbers<[1], [0], [0], [1], [0, 0, 1, 1], [], []>} : vector<8x32xf32>, vector<32x16xf32>, vector<8x16xf32> -> vector<8x16xf32>
    %c0_252 = arith.constant 0 : index
    %c0_253 = arith.constant 0 : index
    %563 = vector.load %arg26[%c0_252, %c0_253] : memref<1x16xf32, #tpu.memory_space<vmem>>, vector<1x16xf32>
    %564 = vector.broadcast %563 : vector<1x16xf32> to vector<8x16xf32>
    %565 = arith.addf %562, %564 : vector<8x16xf32>
    %cst_254 = arith.constant dense<0xFF800000> : vector<8xf32>
    %566 = vector.multi_reduction <maximumf>, %565, %cst_254 [1] : vector<8x16xf32> to vector<8xf32>
    %567 = vector.shape_cast %566 : vector<8xf32> to vector<8x1xf32>
    %568 = vector.broadcast %567 : vector<8x1xf32> to vector<8x16xf32>
    %569 = arith.subf %565, %568 : vector<8x16xf32>
    %570 = math.exp %569 : vector<8x16xf32>
    %cst_255 = arith.constant dense<0.000000e+00> : vector<8xf32>
    %571 = vector.multi_reduction <add>, %570, %cst_255 [1] : vector<8x16xf32> to vector<8xf32>
    %572 = vector.shape_cast %571 : vector<8xf32> to vector<8x1xf32>
    %573 = vector.broadcast %572 : vector<8x1xf32> to vector<8x16xf32>
    %574 = arith.divf %570, %573 : vector<8x16xf32>
    %c0_256 = arith.constant 0 : index
    %c0_257 = arith.constant 0 : index
    %575 = vector.load %arg27[%c0_256, %c0_257] : memref<8x16xf32, #tpu.memory_space<vmem>>, vector<8x16xf32>
    tpu.vector_store %arg27[%c0_256, %c0_257], %574 {strides = array<i32>} : memref<8x16xf32, #tpu.memory_space<vmem>>, vector<8x16xf32>,
    return
  }
}

</mosaic_0001>

<llo_original>
// kernel: transformer.1
$region0: #{transformer.1}
  #allocation0 [shape = 'u32[]', space=smem, size = 0x4, offset = 0x4, fixed_abs, tag = 'smem constant byte address 0x4 - core index']
  #allocation1 [shape = 'u32[144,128]{1,0:T(1,128)}', space=vmem, size = 0x12000, scoped, tag = 'internal scratch']
  %s0 = inlined_call_operand.vmem [shape: f32[8,32], index: 0, kind: input, shape index: {}]
  %s1 = inlined_call_operand.vmem [shape: f32[2,32,32], index: 1, kind: input, shape index: {}]
  %s2 = inlined_call_operand.hbm [shape: f32[2,1,32], index: 2, kind: input, shape index: {}]
  %s3 = inlined_call_operand.vmem [shape: f32[2,32,32], index: 3, kind: input, shape index: {}]
  %s4 = inlined_call_operand.hbm [shape: f32[2,1,32], index: 4, kind: input, shape index: {}]
  %s5 = inlined_call_operand.vmem [shape: f32[2,32,32], index: 5, kind: input, shape index: {}]
  %s6 = inlined_call_operand.hbm [shape: f32[2,1,32], index: 6, kind: input, shape index: {}]
  %s7 = inlined_call_operand.vmem [shape: f32[2,32,32], index: 7, kind: input, shape index: {}]
  %s8 = inlined_call_operand.hbm [shape: f32[2,1,32], index: 8, kind: input, shape index: {}]
  %s9 = inlined_call_operand.vmem [shape: f32[2,32,128], index: 9, kind: input, shape index: {}]
  %s10 = inlined_call_operand.hbm [shape: f32[2,1,128], index: 10, kind: input, shape index: {}]
  %s11 = inlined_call_operand.vmem [shape: f32[2,128,32], index: 11, kind: input, shape index: {}]
  %s12 = inlined_call_operand.hbm [shape: f32[2,1,32], index: 12, kind: input, shape index: {}]
  %s13 = inlined_call_operand.vmem [shape: f32[2,32,32], index: 13, kind: input, shape index: {}]
  %s14 = inlined_call_operand.hbm [shape: f32[2,1,32], index: 14, kind: input, shape index: {}]
  %s15 = inlined_call_operand.vmem [shape: f32[2,32,32], index: 15, kind: input, shape index: {}]
  %s16 = inlined_call_operand.hbm [shape: f32[2,1,32], index: 16, kind: input, shape index: {}]
  %s17 = inlined_call_operand.vmem [shape: f32[2,32,32], index: 17, kind: input, shape index: {}]
  %s18 = inlined_call_operand.hbm [shape: f32[2,1,32], index: 18, kind: input, shape index: {}]
  %s19 = inlined_call_operand.vmem [shape: f32[2,32,32], index: 19, kind: input, shape index: {}]
  %s20 = inlined_call_operand.hbm [shape: f32[2,1,32], index: 20, kind: input, shape index: {}]
  %s21 = inlined_call_operand.vmem [shape: f32[2,32,128], index: 21, kind: input, shape index: {}]
  %s22 = inlined_call_operand.hbm [shape: f32[2,1,128], index: 22, kind: input, shape index: {}]
  %s23 = inlined_call_operand.vmem [shape: f32[2,128,32], index: 23, kind: input, shape index: {}]
  %s24 = inlined_call_operand.hbm [shape: f32[2,1,32], index: 24, kind: input, shape index: {}]
  %s25 = inlined_call_operand.vmem [shape: f32[32,16], index: 25, kind: input, shape index: {}]
  %s26 = inlined_call_operand.vmem [shape: f32[1,16], index: 26, kind: input, shape index: {}]
  %s27 = inlined_call_operand.hbm [shape: f32[8,16], index: 27, kind: output, shape index: {}]
  %s28 = sld [smem:[#allocation0]]
  $region166: #{transformer.1} parent=0
    _
  %s30 = ssub.s32 1, %s28
  %s31 = scalar_select 0, %s30, %s28
  $region1: #{transformer.1} parent=0
    #allocation2 [shape = 'u8[1024]{0}', space=vmem, size = 0x400, scoped, tag = 'input window, operand 2, single buffered']
    #allocation3 [shape = 's32[1]{0}', space=sflag, size = 0x4, scoped, tag = 'scoped memory for transformer.1']
    #allocation4 [shape = 's32[1]{0}', space=sflag, size = 0x4, scoped, tag = 'scoped memory for transformer.1']
    #allocation5 [shape = 'u8[1024]{0}', space=vmem, size = 0x400, scoped, tag = 'input window, operand 4, single buffered']
    #allocation6 [shape = 's32[1]{0}', space=sflag, size = 0x4, scoped, tag = 'scoped memory for transformer.1']
    #allocation7 [shape = 'u8[1024]{0}', space=vmem, size = 0x400, scoped, tag = 'input window, operand 6, single buffered']
    #allocation8 [shape = 'u8[1024]{0}', space=vmem, size = 0x400, scoped, tag = 'input window, operand 8, single buffered']
    #allocation9 [shape = 's32[1]{0}', space=sflag, size = 0x4, scoped, tag = 'scoped memory for transformer.1']
    #allocation10 [shape = 'u8[1024]{0}', space=vmem, size = 0x400, scoped, tag = 'input window, operand 10, single buffered']
    #allocation11 [shape = 'u8[1024]{0}', space=vmem, size = 0x400, scoped, tag = 'input window, operand 12, single buffered']
    #allocation12 [shape = 's32[1]{0}', space=sflag, size = 0x4, scoped, tag = 'scoped memory for transformer.1']
    #allocation13 [shape = 'u8[1024]{0}', space=vmem, size = 0x400, scoped, tag = 'input window, operand 14, single buffered']
    #allocation14 [shape = 'u8[1024]{0}', space=vmem, size = 0x400, scoped, tag = 'input window, operand 16, single buffered']
    #allocation15 [shape = 's32[1]{0}', space=sflag, size = 0x4, scoped, tag = 'scoped memory for transformer.1']
    #allocation16 [shape = 'u8[1024]{0}', space=vmem, size = 0x400, scoped, tag = 'input window, operand 18, single buffered']
    #allocation17 [shape = 'u8[1024]{0}', space=vmem, size = 0x400, scoped, tag = 'input window, operand 20, single buffered']
    #allocation18 [shape = 's32[1]{0}', space=sflag, size = 0x4, scoped, tag = 'scoped memory for transformer.1']
    #allocation19 [shape = 'u8[1024]{0}', space=vmem, size = 0x400, scoped, tag = 'input window, operand 22, single buffered']
    #allocation20 [shape = 'u8[1024]{0}', space=vmem, size = 0x400, scoped, tag = 'input window, operand 24, single buffered']
    #allocation21 [shape = 's32[1]{0}', space=sflag, size = 0x4, scoped, tag = 'scoped memory for transformer.1']
    #allocation22 [shape = 'u8[4096]{0}', space=vmem, size = 0x1000, scoped, tag = 'output window, operand 0, single buffered']
    %32 = vsyncpa [#allocation3], 0
    %33 = vsyncpa [#allocation6], 0
    %34 = vsyncpa [#allocation9], 0
    %35 = vsyncpa [#allocation12], 0
    %36 = vsyncpa [#allocation15], 0
    %37 = vsyncpa [#allocation18], 0
    %38 = vsyncpa [#allocation21], 0
    %39 = vsyncpa [#allocation4], 0
    // Predicated region
    $region2: #{transformer.1} parent=1 // pred_check
      _
    $region3: #{transformer.1} parent=1 // pred_check_branch
      %41 = sbr.rel (0) target = $region5
    $region4: #{transformer.1} parent=1 // pred_region
      _
    $region5: #{transformer.1} parent=1 // pred_fallthru
      _
    // Predicated region
    $region6: #{transformer.1} parent=1 // pred_check
      _
    $region7: #{transformer.1} parent=1 // pred_check_branch
      %43 = sbr.rel (0) target = $region9
    $region8: #{transformer.1} parent=1 // pred_region
      _
    $region9: #{transformer.1} parent=1 // pred_fallthru
      _
    // Predicated region
    $region10: #{transformer.1} parent=1 // pred_check
      _
    $region11: #{transformer.1} parent=1 // pred_check_branch
      %45 = sbr.rel (0) target = $region13
    $region12: #{transformer.1} parent=1 // pred_region
      %s47 = ssub.s32 32, 32
      %48 = vsyncadd [#allocation3], %s47
      %s49 = sshll.u32 [#allocation2], 4
      %s50 = int_to_ptr.vmem [resolvable:$true] %s49
      %55 = dma.hbm_to_vmem [thread:$0]  %s2, 32, %s50, [#allocation3], 16, 16, 1
    $region13: #{transformer.1} parent=1 // pred_fallthru
      _
    // Predicated region
    $region14: #{transformer.1} parent=1 // pred_check
      _
    $region15: #{transformer.1} parent=1 // pred_check_branch
      %57 = sbr.rel (0) target = $region17
    $region16: #{transformer.1} parent=1 // pred_region
      _
    $region17: #{transformer.1} parent=1 // pred_fallthru
      _
    // Predicated region
    $region18: #{transformer.1} parent=1 // pred_check
      _
    $region19: #{transformer.1} parent=1 // pred_check_branch
      %59 = sbr.rel (0) target = $region21
    $region20: #{transformer.1} parent=1 // pred_region
      %s61 = ssub.s32 32, 32
      %62 = vsyncadd [#allocation6], %s61
      %s63 = sshll.u32 [#allocation5], 4
      %s64 = int_to_ptr.vmem [resolvable:$true] %s63
      %69 = dma.hbm_to_vmem [thread:$0]  %s4, 32, %s64, [#allocation6], 16, 16, 1
    $region21: #{transformer.1} parent=1 // pred_fallthru
      _
    // Predicated region
    $region22: #{transformer.1} parent=1 // pred_check
      _
    $region23: #{transformer.1} parent=1 // pred_check_branch
      %71 = sbr.rel (0) target = $region25
    $region24: #{transformer.1} parent=1 // pred_region
      _
    $region25: #{transformer.1} parent=1 // pred_fallthru
      _
    // Predicated region
    $region26: #{transformer.1} parent=1 // pred_check
      _
    $region27: #{transformer.1} parent=1 // pred_check_branch
      %73 = sbr.rel (0) target = $region29
    $region28: #{transformer.1} parent=1 // pred_region
      %s75 = ssub.s32 32, 32
      %76 = vsyncadd [#allocation6], %s75
      %s77 = sshll.u32 [#allocation7], 4
      %s78 = int_to_ptr.vmem [resolvable:$true] %s77
      %83 = dma.hbm_to_vmem [thread:$0]  %s6, 32, %s78, [#allocation6], 16, 16, 1
    $region29: #{transformer.1} parent=1 // pred_fallthru
      _
    // Predicated region
    $region30: #{transformer.1} parent=1 // pred_check
      _
    $region31: #{transformer.1} parent=1 // pred_check_branch
      %85 = sbr.rel (0) target = $region33
    $region32: #{transformer.1} parent=1 // pred_region
      _
    $region33: #{transformer.1} parent=1 // pred_fallthru
      _
    // Predicated region
    $region34: #{transformer.1} parent=1 // pred_check
      _
    $region35: #{transformer.1} parent=1 // pred_check_branch
      %87 = sbr.rel (0) target = $region37
    $region36: #{transformer.1} parent=1 // pred_region
      %s89 = ssub.s32 32, 32
      %90 = vsyncadd [#allocation9], %s89
      %s91 = sshll.u32 [#allocation8], 4
      %s92 = int_to_ptr.vmem [resolvable:$true] %s91
      %97 = dma.hbm_to_vmem [thread:$0]  %s8, 32, %s92, [#allocation9], 16, 16, 1
    $region37: #{transformer.1} parent=1 // pred_fallthru
      _
    // Predicated region
    $region38: #{transformer.1} parent=1 // pred_check
      _
    $region39: #{transformer.1} parent=1 // pred_check_branch
      %99 = sbr.rel (0) target = $region41
    $region40: #{transformer.1} parent=1 // pred_region
      _
    $region41: #{transformer.1} parent=1 // pred_fallthru
      _
    // Predicated region
    $region42: #{transformer.1} parent=1 // pred_check
      _
    $region43: #{transformer.1} parent=1 // pred_check_branch
      %101 = sbr.rel (0) target = $region45
    $region44: #{transformer.1} parent=1 // pred_region
      %s103 = ssub.s32 32, 32
      %104 = vsyncadd [#allocation9], %s103
      %s105 = sshll.u32 [#allocation10], 4
      %s106 = int_to_ptr.vmem [resolvable:$true] %s105
      %111 = dma.hbm_to_vmem [thread:$0]  %s10, 32, %s106, [#allocation9], 16, 16, 1
    $region45: #{transformer.1} parent=1 // pred_fallthru
      _
    // Predicated region
    $region46: #{transformer.1} parent=1 // pred_check
      _
    $region47: #{transformer.1} parent=1 // pred_check_branch
      %113 = sbr.rel (0) target = $region49
    $region48: #{transformer.1} parent=1 // pred_region
      _
    $region49: #{transformer.1} parent=1 // pred_fallthru
      _
    // Predicated region
    $region50: #{transformer.1} parent=1 // pred_check
      _
    $region51: #{transformer.1} parent=1 // pred_check_branch
      %115 = sbr.rel (0) target = $region53
    $region52: #{transformer.1} parent=1 // pred_region
      %s117 = ssub.s32 32, 32
      %118 = vsyncadd [#allocation12], %s117
      %s119 = sshll.u32 [#allocation11], 4
      %s120 = int_to_ptr.vmem [resolvable:$true] %s119
      %125 = dma.hbm_to_vmem [thread:$0]  %s12, 32, %s120, [#allocation12], 16, 16, 1
    $region53: #{transformer.1} parent=1 // pred_fallthru
      _
    // Predicated region
    $region54: #{transformer.1} parent=1 // pred_check
      _
    $region55: #{transformer.1} parent=1 // pred_check_branch
      %127 = sbr.rel (0) target = $region57
    $region56: #{transformer.1} parent=1 // pred_region
      _
    $region57: #{transformer.1} parent=1 // pred_fallthru
      _
    // Predicated region
    $region58: #{transformer.1} parent=1 // pred_check
      _
    $region59: #{transformer.1} parent=1 // pred_check_branch
      %129 = sbr.rel (0) target = $region61
    $region60: #{transformer.1} parent=1 // pred_region
      %s131 = ssub.s32 32, 32
      %132 = vsyncadd [#allocation12], %s131
      %s133 = sshll.u32 [#allocation13], 4
      %s134 = int_to_ptr.vmem [resolvable:$true] %s133
      %139 = dma.hbm_to_vmem [thread:$0]  %s14, 32, %s134, [#allocation12], 16, 16, 1
    $region61: #{transformer.1} parent=1 // pred_fallthru
      _
    // Predicated region
    $region62: #{transformer.1} parent=1 // pred_check
      _
    $region63: #{transformer.1} parent=1 // pred_check_branch
      %141 = sbr.rel (0) target = $region65
    $region64: #{transformer.1} parent=1 // pred_region
      _
    $region65: #{transformer.1} parent=1 // pred_fallthru
      _
    // Predicated region
    $region66: #{transformer.1} parent=1 // pred_check
      _
    $region67: #{transformer.1} parent=1 // pred_check_branch
      %143 = sbr.rel (0) target = $region69
    $region68: #{transformer.1} parent=1 // pred_region
      %s145 = ssub.s32 32, 32
      %146 = vsyncadd [#allocation15], %s145
      %s147 = sshll.u32 [#allocation14], 4
      %s148 = int_to_ptr.vmem [resolvable:$true] %s147
      %153 = dma.hbm_to_vmem [thread:$0]  %s16, 32, %s148, [#allocation15], 16, 16, 1
    $region69: #{transformer.1} parent=1 // pred_fallthru
      _
    // Predicated region
    $region70: #{transformer.1} parent=1 // pred_check
      _
    $region71: #{transformer.1} parent=1 // pred_check_branch
      %155 = sbr.rel (0) target = $region73
    $region72: #{transformer.1} parent=1 // pred_region
      _
    $region73: #{transformer.1} parent=1 // pred_fallthru
      _
    // Predicated region
    $region74: #{transformer.1} parent=1 // pred_check
      _
    $region75: #{transformer.1} parent=1 // pred_check_branch
      %157 = sbr.rel (0) target = $region77
    $region76: #{transformer.1} parent=1 // pred_region
      %s159 = ssub.s32 32, 32
      %160 = vsyncadd [#allocation15], %s159
      %s161 = sshll.u32 [#allocation16], 4
      %s162 = int_to_ptr.vmem [resolvable:$true] %s161
      %167 = dma.hbm_to_vmem [thread:$0]  %s18, 32, %s162, [#allocation15], 16, 16, 1
    $region77: #{transformer.1} parent=1 // pred_fallthru
      _
    // Predicated region
    $region78: #{transformer.1} parent=1 // pred_check
      _
    $region79: #{transformer.1} parent=1 // pred_check_branch
      %169 = sbr.rel (0) target = $region81
    $region80: #{transformer.1} parent=1 // pred_region
      _
    $region81: #{transformer.1} parent=1 // pred_fallthru
      _
    // Predicated region
    $region82: #{transformer.1} parent=1 // pred_check
      _
    $region83: #{transformer.1} parent=1 // pred_check_branch
      %171 = sbr.rel (0) target = $region85
    $region84: #{transformer.1} parent=1 // pred_region
      %s173 = ssub.s32 32, 32
      %174 = vsyncadd [#allocation18], %s173
      %s175 = sshll.u32 [#allocation17], 4
      %s176 = int_to_ptr.vmem [resolvable:$true] %s175
      %181 = dma.hbm_to_vmem [thread:$0]  %s20, 32, %s176, [#allocation18], 16, 16, 1
    $region85: #{transformer.1} parent=1 // pred_fallthru
      _
    // Predicated region
    $region86: #{transformer.1} parent=1 // pred_check
      _
    $region87: #{transformer.1} parent=1 // pred_check_branch
      %183 = sbr.rel (0) target = $region89
    $region88: #{transformer.1} parent=1 // pred_region
      _
    $region89: #{transformer.1} parent=1 // pred_fallthru
      _
    // Predicated region
    $region90: #{transformer.1} parent=1 // pred_check
      _
    $region91: #{transformer.1} parent=1 // pred_check_branch
      %185 = sbr.rel (0) target = $region93
    $region92: #{transformer.1} parent=1 // pred_region
      %s187 = ssub.s32 32, 32
      %188 = vsyncadd [#allocation18], %s187
      %s189 = sshll.u32 [#allocation19], 4
      %s190 = int_to_ptr.vmem [resolvable:$true] %s189
      %195 = dma.hbm_to_vmem [thread:$0]  %s22, 32, %s190, [#allocation18], 16, 16, 1
    $region93: #{transformer.1} parent=1 // pred_fallthru
      _
    // Predicated region
    $region94: #{transformer.1} parent=1 // pred_check
      _
    $region95: #{transformer.1} parent=1 // pred_check_branch
      %197 = sbr.rel (0) target = $region97
    $region96: #{transformer.1} parent=1 // pred_region
      _
    $region97: #{transformer.1} parent=1 // pred_fallthru
      _
    // Predicated region
    $region98: #{transformer.1} parent=1 // pred_check
      _
    $region99: #{transformer.1} parent=1 // pred_check_branch
      %199 = sbr.rel (0) target = $region101
    $region100: #{transformer.1} parent=1 // pred_region
      %s201 = ssub.s32 32, 32
      %202 = vsyncadd [#allocation21], %s201
      %s203 = sshll.u32 [#allocation20], 4
      %s204 = int_to_ptr.vmem [resolvable:$true] %s203
      %209 = dma.hbm_to_vmem [thread:$0]  %s24, 32, %s204, [#allocation21], 16, 16, 1
    $region101: #{transformer.1} parent=1 // pred_fallthru
      _
    // Predicated region
    $region102: #{transformer.1} parent=1 // pred_check
      _
    $region103: #{transformer.1} parent=1 // pred_check_branch
      %211 = sbr.rel (0) target = $region105
    $region104: #{transformer.1} parent=1 // pred_region
      _
    $region105: #{transformer.1} parent=1 // pred_fallthru
      _
    // Predicated region
    $region106: #{transformer.1} parent=1 // pred_check
      _
    $region107: #{transformer.1} parent=1 // pred_check_branch
      %213 = sbr.rel (0) target = $region109
    $region108: #{transformer.1} parent=1 // pred_region
      _
    $region109: #{transformer.1} parent=1 // pred_fallthru
      _
    // Predicated region
    $region110: #{transformer.1} parent=1 // pred_check
      _
    $region111: #{transformer.1} parent=1 // pred_check_branch
      %215 = sbr.rel (0) target = $region113
    $region112: #{transformer.1} parent=1 // pred_region
      %216 = dma.done [#allocation3], 32
    $region113: #{transformer.1} parent=1 // pred_fallthru
      _
    // Predicated region
    $region114: #{transformer.1} parent=1 // pred_check
      _
    $region115: #{transformer.1} parent=1 // pred_check_branch
      %218 = sbr.rel (0) target = $region117
    $region116: #{transformer.1} parent=1 // pred_region
      %219 = dma.done [#allocation6], 32
    $region117: #{transformer.1} parent=1 // pred_fallthru
      _
    // Predicated region
    $region118: #{transformer.1} parent=1 // pred_check
      _
    $region119: #{transformer.1} parent=1 // pred_check_branch
      %221 = sbr.rel (0) target = $region121
    $region120: #{transformer.1} parent=1 // pred_region
      %222 = dma.done [#allocation6], 32
    $region121: #{transformer.1} parent=1 // pred_fallthru
      _
    // Predicated region
    $region122: #{transformer.1} parent=1 // pred_check
      _
    $region123: #{transformer.1} parent=1 // pred_check_branch
      %224 = sbr.rel (0) target = $region125
    $region124: #{transformer.1} parent=1 // pred_region
      %225 = dma.done [#allocation9], 32
    $region125: #{transformer.1} parent=1 // pred_fallthru
      _
    // Predicated region
    $region126: #{transformer.1} parent=1 // pred_check
      _
    $region127: #{transformer.1} parent=1 // pred_check_branch
      %227 = sbr.rel (0) target = $region129
    $region128: #{transformer.1} parent=1 // pred_region
      %228 = dma.done [#allocation9], 32
    $region129: #{transformer.1} parent=1 // pred_fallthru
      _
    // Predicated region
    $region130: #{transformer.1} parent=1 // pred_check
      _
    $region131: #{transformer.1} parent=1 // pred_check_branch
      %230 = sbr.rel (0) target = $region133
    $region132: #{transformer.1} parent=1 // pred_region
      %231 = dma.done [#allocation12], 32
    $region133: #{transformer.1} parent=1 // pred_fallthru
      _
    // Predicated region
    $region134: #{transformer.1} parent=1 // pred_check
      _
    $region135: #{transformer.1} parent=1 // pred_check_branch
      %233 = sbr.rel (0) target = $region137
    $region136: #{transformer.1} parent=1 // pred_region
      %234 = dma.done [#allocation12], 32
    $region137: #{transformer.1} parent=1 // pred_fallthru
      _
    // Predicated region
    $region138: #{transformer.1} parent=1 // pred_check
      _
    $region139: #{transformer.1} parent=1 // pred_check_branch
      %236 = sbr.rel (0) target = $region141
    $region140: #{transformer.1} parent=1 // pred_region
      %237 = dma.done [#allocation15], 32
    $region141: #{transformer.1} parent=1 // pred_fallthru
      _
    // Predicated region
    $region142: #{transformer.1} parent=1 // pred_check
      _
    $region143: #{transformer.1} parent=1 // pred_check_branch
      %239 = sbr.rel (0) target = $region145
    $region144: #{transformer.1} parent=1 // pred_region
      %240 = dma.done [#allocation15], 32
    $region145: #{transformer.1} parent=1 // pred_fallthru
      _
    // Predicated region
    $region146: #{transformer.1} parent=1 // pred_check
      _
    $region147: #{transformer.1} parent=1 // pred_check_branch
      %242 = sbr.rel (0) target = $region149
    $region148: #{transformer.1} parent=1 // pred_region
      %243 = dma.done [#allocation18], 32
    $region149: #{transformer.1} parent=1 // pred_fallthru
      _
    // Predicated region
    $region150: #{transformer.1} parent=1 // pred_check
      _
    $region151: #{transformer.1} parent=1 // pred_check_branch
      %245 = sbr.rel (0) target = $region153
    $region152: #{transformer.1} parent=1 // pred_region
      %246 = dma.done [#allocation18], 32
    $region153: #{transformer.1} parent=1 // pred_fallthru
      _
    // Predicated region
    $region154: #{transformer.1} parent=1 // pred_check
      _
    $region155: #{transformer.1} parent=1 // pred_check_branch
      %248 = sbr.rel (0) target = $region157
    $region156: #{transformer.1} parent=1 // pred_region
      %249 = dma.done [#allocation21], 32
    $region157: #{transformer.1} parent=1 // pred_fallthru
      _
    %v250 = vld [vmem:[%s0] sm:$0xff]
    %v251 = vlaneseq
    %v252 = vshrl.u32 %v251, 7
    %v253 = vlaneseq
    %v254 = vand.u32 %v253, 127
    %v255 = vadd.s32 %v252, %v254
    %vm256 = vcmp.ge.s32.totalorder %v255, 14
    %v257 = vsel %vm256, 1e+09, 0.0
    %v258 = vld [vmem:[%s1] sm:$0xff]
    %v259 = vld [vmem:[%s1 + $0x8] sm:$0xff]
    %v260 = vld [vmem:[%s1 + $0x10] sm:$0xff]
    %v261 = vld [vmem:[%s1 + $0x18] sm:$0xff]
    %v262 = vld [vmem:[#allocation2] sm:$0x1]
    %v263 = vld [vmem:[%s3] sm:$0xff]
    %v264 = vld [vmem:[%s3 + $0x8] sm:$0xff]
    %v265 = vld [vmem:[%s3 + $0x10] sm:$0xff]
    %v266 = vld [vmem:[%s3 + $0x18] sm:$0xff]
    %v267 = vld [vmem:[#allocation5] sm:$0x1]
    %v268 = vld [vmem:[%s5] sm:$0xff]
    %v269 = vld [vmem:[%s5 + $0x8] sm:$0xff]
    %v270 = vld [vmem:[%s5 + $0x10] sm:$0xff]
    %v271 = vld [vmem:[%s5 + $0x18] sm:$0xff]
    %v272 = vld [vmem:[#allocation7] sm:$0x1]
    %v273 = vld [vmem:[%s7] sm:$0xff]
    %v274 = vld [vmem:[%s7 + $0x8] sm:$0xff]
    %v275 = vld [vmem:[%s7 + $0x10] sm:$0xff]
    %v276 = vld [vmem:[%s7 + $0x18] sm:$0xff]
    %v277 = vld [vmem:[#allocation8] sm:$0x1]
    %v279 = vlaneseq
    %v280 = vshrl.u32 %v279, 7
    %v281 = vsub.s32 0, %v280
    %v282 = vrot.slane %v262, %v281
    %vm284 = vcmask 261120
    %v286 = vsel %vm284, %v250, 0
    %288 = vmatprep.subr.mxu0 0.0
    %289 = vmatpush1.msra.mxu0 0.0
    %290 = vmatprep.subr.mxu0 0.0
    %291 = vmatpush1.msra.mxu0 0.0
    %292 = vmatprep.subr.mxu0 0.0
    %293 = vmatpush1.msra.mxu0 0.0
    %294 = vmatprep.subr.mxu0 0.0
    %295 = vmatpush1.msra.mxu0 0.0
    %296 = vmatprep.subr.mxu0 0.0
    %297 = vmatpush1.msra.mxu0 0.0
    %298 = vmatprep.subr.mxu0 0.0
    %299 = vmatpush1.msra.mxu0 0.0
    %300 = vmatprep.subr.mxu0 0.0
    %301 = vmatpush1.msra.mxu0 0.0
    %302 = vmatprep.subr.mxu0 0.0
    %303 = vmatpush1.msra.mxu0 0.0
    %304 = vmatprep.subr.mxu0 0.0
    %305 = vmatpush1.msra.mxu0 0.0
    %306 = vmatprep.subr.mxu0 0.0
    %307 = vmatpush1.msra.mxu0 0.0
    %308 = vmatprep.subr.mxu0 0.0
    %309 = vmatpush1.msra.mxu0 0.0
    %310 = vmatprep.subr.mxu0 0.0
    %311 = vmatpush1.msra.mxu0 0.0
    %312 = vmatprep.subr.mxu0 0.0
    %313 = vmatpush1.msra.mxu0 %v261
    %314 = vmatprep.subr.mxu0 0.0
    %315 = vmatpush1.msra.mxu0 %v260
    %316 = vmatprep.subr.mxu0 0.0
    %317 = vmatpush1.msra.mxu0 %v259
    %318 = vmatprep.subr.mxu0 0.0
    %319 = vmatpush1.msra.mxu0 %v258
    %320 = vmatprep.subr.mxu0 0.0
    %321 = vmatpush2.msra.mxu0 0.0
    %322 = vmatprep.subr.mxu0 0.0
    %323 = vmatpush2.msra.mxu0 0.0
    %324 = vmatprep.subr.mxu0 0.0
    %325 = vmatpush2.msra.mxu0 0.0
    %326 = vmatprep.subr.mxu0 0.0
    %327 = vmatpush2.msra.mxu0 0.0
    %328 = vmatprep.subr.mxu0 0.0
    %329 = vmatpush2.msra.mxu0 0.0
    %330 = vmatprep.subr.mxu0 0.0
    %331 = vmatpush2.msra.mxu0 0.0
    %332 = vmatprep.subr.mxu0 0.0
    %333 = vmatpush2.msra.mxu0 0.0
    %334 = vmatprep.subr.mxu0 0.0
    %335 = vmatpush2.msra.mxu0 0.0
    %336 = vmatprep.subr.mxu0 0.0
    %337 = vmatpush2.msra.mxu0 0.0
    %338 = vmatprep.subr.mxu0 0.0
    %339 = vmatpush2.msra.mxu0 0.0
    %340 = vmatprep.subr.mxu0 0.0
    %341 = vmatpush2.msra.mxu0 0.0
    %342 = vmatprep.subr.mxu0 0.0
    %343 = vmatpush2.msra.mxu0 0.0
    %344 = vmatprep.subr.mxu0 0.0
    %345 = vmatpush2.msra.mxu0 0.0
    %346 = vmatprep.subr.mxu0 0.0
    %347 = vmatpush2.msra.mxu0 0.0
    %348 = vmatprep.subr.mxu0 0.0
    %349 = vmatpush2.msra.mxu0 0.0
    %350 = vmatprep.subr.mxu0 0.0
    %351 = vmatpush2.msra.mxu0 0.0
    %352 = vmatprep.mubr.f32.mxu0 0.0
    %353 = vmatmul.mubr.f32.gmra.mxu0 %v286
    %v354 = vpop.f32.mrf.mxu0
    %v355 = vadd.f32 %v282, %v354
    %v356 = vpop.f32.mrf.mxu0
    %357 = vdwg.mxu0
    %v359 = vlaneseq
    %v360 = vshrl.u32 %v359, 7
    %v361 = vsub.s32 0, %v360
    %v362 = vrot.slane %v267, %v361
    %364 = vmatprep.subr.mxu0 0.0
    %365 = vmatpush1.msra.mxu0 0.0
    %366 = vmatprep.subr.mxu0 0.0
    %367 = vmatpush1.msra.mxu0 0.0
    %368 = vmatprep.subr.mxu0 0.0
    %369 = vmatpush1.msra.mxu0 0.0
    %370 = vmatprep.subr.mxu0 0.0
    %371 = vmatpush1.msra.mxu0 0.0
    %372 = vmatprep.subr.mxu0 0.0
    %373 = vmatpush1.msra.mxu0 0.0
    %374 = vmatprep.subr.mxu0 0.0
    %375 = vmatpush1.msra.mxu0 0.0
    %376 = vmatprep.subr.mxu0 0.0
    %377 = vmatpush1.msra.mxu0 0.0
    %378 = vmatprep.subr.mxu0 0.0
    %379 = vmatpush1.msra.mxu0 0.0
    %380 = vmatprep.subr.mxu0 0.0
    %381 = vmatpush1.msra.mxu0 0.0
    %382 = vmatprep.subr.mxu0 0.0
    %383 = vmatpush1.msra.mxu0 0.0
    %384 = vmatprep.subr.mxu0 0.0
    %385 = vmatpush1.msra.mxu0 0.0
    %386 = vmatprep.subr.mxu0 0.0
    %387 = vmatpush1.msra.mxu0 0.0
    %388 = vmatprep.subr.mxu0 0.0
    %389 = vmatpush1.msra.mxu0 %v266
    %390 = vmatprep.subr.mxu0 0.0
    %391 = vmatpush1.msra.mxu0 %v265
    %392 = vmatprep.subr.mxu0 0.0
    %393 = vmatpush1.msra.mxu0 %v264
    %394 = vmatprep.subr.mxu0 0.0
    %395 = vmatpush1.msra.mxu0 %v263
    %396 = vmatprep.subr.mxu0 0.0
    %397 = vmatpush2.msra.mxu0 0.0
    %398 = vmatprep.subr.mxu0 0.0
    %399 = vmatpush2.msra.mxu0 0.0
    %400 = vmatprep.subr.mxu0 0.0
    %401 = vmatpush2.msra.mxu0 0.0
    %402 = vmatprep.subr.mxu0 0.0
    %403 = vmatpush2.msra.mxu0 0.0
    %404 = vmatprep.subr.mxu0 0.0
    %405 = vmatpush2.msra.mxu0 0.0
    %406 = vmatprep.subr.mxu0 0.0
    %407 = vmatpush2.msra.mxu0 0.0
    %408 = vmatprep.subr.mxu0 0.0
    %409 = vmatpush2.msra.mxu0 0.0
    %410 = vmatprep.subr.mxu0 0.0
    %411 = vmatpush2.msra.mxu0 0.0
    %412 = vmatprep.subr.mxu0 0.0
    %413 = vmatpush2.msra.mxu0 0.0
    %414 = vmatprep.subr.mxu0 0.0
    %415 = vmatpush2.msra.mxu0 0.0
    %416 = vmatprep.subr.mxu0 0.0
    %417 = vmatpush2.msra.mxu0 0.0
    %418 = vmatprep.subr.mxu0 0.0
    %419 = vmatpush2.msra.mxu0 0.0
    %420 = vmatprep.subr.mxu0 0.0
    %421 = vmatpush2.msra.mxu0 0.0
    %422 = vmatprep.subr.mxu0 0.0
    %423 = vmatpush2.msra.mxu0 0.0
    %424 = vmatprep.subr.mxu0 0.0
    %425 = vmatpush2.msra.mxu0 0.0
    %426 = vmatprep.subr.mxu0 0.0
    %427 = vmatpush2.msra.mxu0 0.0
    %428 = vmatprep.mubr.f32.mxu0 0.0
    %429 = vmatmul.mubr.f32.gmra.mxu0 %v286
    %v430 = vpop.f32.mrf.mxu0
    %v431 = vadd.f32 %v362, %v430
    %v432 = vpop.f32.mrf.mxu0
    %433 = vdwg.mxu0
    %v435 = vlaneseq
    %v436 = vshrl.u32 %v435, 7
    %v437 = vsub.s32 0, %v436
    %v438 = vrot.slane %v272, %v437
    %440 = vmatprep.subr.mxu0 0.0
    %441 = vmatpush1.msra.mxu0 0.0
    %442 = vmatprep.subr.mxu0 0.0
    %443 = vmatpush1.msra.mxu0 0.0
    %444 = vmatprep.subr.mxu0 0.0
    %445 = vmatpush1.msra.mxu0 0.0
    %446 = vmatprep.subr.mxu0 0.0
    %447 = vmatpush1.msra.mxu0 0.0
    %448 = vmatprep.subr.mxu0 0.0
    %449 = vmatpush1.msra.mxu0 0.0
    %450 = vmatprep.subr.mxu0 0.0
    %451 = vmatpush1.msra.mxu0 0.0
    %452 = vmatprep.subr.mxu0 0.0
    %453 = vmatpush1.msra.mxu0 0.0
    %454 = vmatprep.subr.mxu0 0.0
    %455 = vmatpush1.msra.mxu0 0.0
    %456 = vmatprep.subr.mxu0 0.0
    %457 = vmatpush1.msra.mxu0 0.0
    %458 = vmatprep.subr.mxu0 0.0
    %459 = vmatpush1.msra.mxu0 0.0
    %460 = vmatprep.subr.mxu0 0.0
    %461 = vmatpush1.msra.mxu0 0.0
    %462 = vmatprep.subr.mxu0 0.0
    %463 = vmatpush1.msra.mxu0 0.0
    %464 = vmatprep.subr.mxu0 0.0
    %465 = vmatpush1.msra.mxu0 %v271
    %466 = vmatprep.subr.mxu0 0.0
    %467 = vmatpush1.msra.mxu0 %v270
    %468 = vmatprep.subr.mxu0 0.0
    %469 = vmatpush1.msra.mxu0 %v269
    %470 = vmatprep.subr.mxu0 0.0
    %471 = vmatpush1.msra.mxu0 %v268
    %472 = vmatprep.subr.mxu0 0.0
    %473 = vmatpush2.msra.mxu0 0.0
    %474 = vmatprep.subr.mxu0 0.0
    %475 = vmatpush2.msra.mxu0 0.0
    %476 = vmatprep.subr.mxu0 0.0
    %477 = vmatpush2.msra.mxu0 0.0
    %478 = vmatprep.subr.mxu0 0.0
    %479 = vmatpush2.msra.mxu0 0.0
    %480 = vmatprep.subr.mxu0 0.0
    %481 = vmatpush2.msra.mxu0 0.0
    %482 = vmatprep.subr.mxu0 0.0
    %483 = vmatpush2.msra.mxu0 0.0
    %484 = vmatprep.subr.mxu0 0.0
    %485 = vmatpush2.msra.mxu0 0.0
    %486 = vmatprep.subr.mxu0 0.0
    %487 = vmatpush2.msra.mxu0 0.0
    %488 = vmatprep.subr.mxu0 0.0
    %489 = vmatpush2.msra.mxu0 0.0
    %490 = vmatprep.subr.mxu0 0.0
    %491 = vmatpush2.msra.mxu0 0.0
    %492 = vmatprep.subr.mxu0 0.0
    %493 = vmatpush2.msra.mxu0 0.0
    %494 = vmatprep.subr.mxu0 0.0
    %495 = vmatpush2.msra.mxu0 0.0
    %496 = vmatprep.subr.mxu0 0.0
    %497 = vmatpush2.msra.mxu0 0.0
    %498 = vmatprep.subr.mxu0 0.0
    %499 = vmatpush2.msra.mxu0 0.0
    %500 = vmatprep.subr.mxu0 0.0
    %501 = vmatpush2.msra.mxu0 0.0
    %502 = vmatprep.subr.mxu0 0.0
    %503 = vmatpush2.msra.mxu0 0.0
    %504 = vmatprep.mubr.f32.mxu0 0.0
    %505 = vmatmul.mubr.f32.gmra.mxu0 %v286
    %v506 = vpop.f32.mrf.mxu0
    %v507 = vadd.f32 %v438, %v506
    %v508 = vpop.f32.mrf.mxu0
    %509 = vdwg.mxu0
    %vm510 = vcmask 64512
    %v512 = vsel %vm510, %v355, 0
    %v515 = vsel %vm510, %v431, 0
    %517 = vmatprep.subr.mxu0 0.0
    %518 = vmatpush1.xpose.msra.mxu0 0.0
    %519 = vmatprep.subr.mxu0 0.0
    %520 = vmatpush1.xpose.msra.mxu0 0.0
    %521 = vmatprep.subr.mxu0 0.0
    %522 = vmatpush1.xpose.msra.mxu0 0.0
    %523 = vmatprep.subr.mxu0 0.0
    %524 = vmatpush1.xpose.msra.mxu0 0.0
    %525 = vmatprep.subr.mxu0 0.0
    %526 = vmatpush1.xpose.msra.mxu0 0.0
    %527 = vmatprep.subr.mxu0 0.0
    %528 = vmatpush1.xpose.msra.mxu0 0.0
    %529 = vmatprep.subr.mxu0 0.0
    %530 = vmatpush1.xpose.msra.mxu0 0.0
    %531 = vmatprep.subr.mxu0 0.0
    %532 = vmatpush1.xpose.msra.mxu0 0.0
    %533 = vmatprep.subr.mxu0 0.0
    %534 = vmatpush1.xpose.msra.mxu0 0.0
    %535 = vmatprep.subr.mxu0 0.0
    %536 = vmatpush1.xpose.msra.mxu0 0.0
    %537 = vmatprep.subr.mxu0 0.0
    %538 = vmatpush1.xpose.msra.mxu0 0.0
    %539 = vmatprep.subr.mxu0 0.0
    %540 = vmatpush1.xpose.msra.mxu0 0.0
    %541 = vmatprep.subr.mxu0 0.0
    %542 = vmatpush1.xpose.msra.mxu0 0.0
    %543 = vmatprep.subr.mxu0 0.0
    %544 = vmatpush1.xpose.msra.mxu0 0.0
    %545 = vmatprep.subr.mxu0 0.0
    %546 = vmatpush1.xpose.msra.mxu0 0.0
    %547 = vmatprep.subr.mxu0 0.0
    %548 = vmatpush1.xpose.msra.mxu0 %v515
    %549 = vmatprep.subr.mxu0 0.0
    %550 = vmatpush2.xpose.msra.mxu0 0.0
    %551 = vmatprep.subr.mxu0 0.0
    %552 = vmatpush2.xpose.msra.mxu0 0.0
    %553 = vmatprep.subr.mxu0 0.0
    %554 = vmatpush2.xpose.msra.mxu0 0.0
    %555 = vmatprep.subr.mxu0 0.0
    %556 = vmatpush2.xpose.msra.mxu0 0.0
    %557 = vmatprep.subr.mxu0 0.0
    %558 = vmatpush2.xpose.msra.mxu0 0.0
    %559 = vmatprep.subr.mxu0 0.0
    %560 = vmatpush2.xpose.msra.mxu0 0.0
    %561 = vmatprep.subr.mxu0 0.0
    %562 = vmatpush2.xpose.msra.mxu0 0.0
    %563 = vmatprep.subr.mxu0 0.0
    %564 = vmatpush2.xpose.msra.mxu0 0.0
    %565 = vmatprep.subr.mxu0 0.0
    %566 = vmatpush2.xpose.msra.mxu0 0.0
    %567 = vmatprep.subr.mxu0 0.0
    %568 = vmatpush2.xpose.msra.mxu0 0.0
    %569 = vmatprep.subr.mxu0 0.0
    %570 = vmatpush2.xpose.msra.mxu0 0.0
    %571 = vmatprep.subr.mxu0 0.0
    %572 = vmatpush2.xpose.msra.mxu0 0.0
    %573 = vmatprep.subr.mxu0 0.0
    %574 = vmatpush2.xpose.msra.mxu0 0.0
    %575 = vmatprep.subr.mxu0 0.0
    %576 = vmatpush2.xpose.msra.mxu0 0.0
    %577 = vmatprep.subr.mxu0 0.0
    %578 = vmatpush2.xpose.msra.mxu0 0.0
    %579 = vmatprep.subr.mxu0 0.0
    %580 = vmatpush2.xpose.msra.mxu0 0.0
    %581 = vmatprep.mubr.f32.mxu0 0.0
    %582 = vmatmul.mubr.f32.gmra.mxu0 %v512
    %v583 = vpop.f32.mrf.mxu0
    %v584 = vadd.f32 0.0, %v583
    %v585 = vpop.f32.mrf.mxu0
    %586 = vdwg.mxu0
    %v587 = vmul.f32 %v584, 0.35355338
    %v588 = vsel %vm510, %v587, -inf
    %589 = vmax.xlane.f32.xlu0 %v588
    %v590 = vpop.xlane.xlu0 %589
    %v591 = vsub.f32 %v587, %v590
    %v592 = vmul.f32 %v591, 1.442695
    %v593 = vpow.pop %v592
    %v594 = vsel %vm510, %v593, 0.0
    %595 = vadd.xlane.f32.xlu0 %v594
    %v596 = vpop.xlane.xlu0 %595
    %v597 = vrcp.pop %v596
    %v598 = vmul.f32 %v593, %v597
    %v600 = vsel %vm510, %v598, 0
    %602 = vmatprep.subr.mxu0 0.0
    %603 = vmatpush1.msra.mxu0 0.0
    %604 = vmatprep.subr.mxu0 0.0
    %605 = vmatpush1.msra.mxu0 0.0
    %606 = vmatprep.subr.mxu0 0.0
    %607 = vmatpush1.msra.mxu0 0.0
    %608 = vmatprep.subr.mxu0 0.0
    %609 = vmatpush1.msra.mxu0 0.0
    %610 = vmatprep.subr.mxu0 0.0
    %611 = vmatpush1.msra.mxu0 0.0
    %612 = vmatprep.subr.mxu0 0.0
    %613 = vmatpush1.msra.mxu0 0.0
    %614 = vmatprep.subr.mxu0 0.0
    %615 = vmatpush1.msra.mxu0 0.0
    %616 = vmatprep.subr.mxu0 0.0
    %617 = vmatpush1.msra.mxu0 0.0
    %618 = vmatprep.subr.mxu0 0.0
    %619 = vmatpush1.msra.mxu0 0.0
    %620 = vmatprep.subr.mxu0 0.0
    %621 = vmatpush1.msra.mxu0 0.0
    %622 = vmatprep.subr.mxu0 0.0
    %623 = vmatpush1.msra.mxu0 0.0
    %624 = vmatprep.subr.mxu0 0.0
    %625 = vmatpush1.msra.mxu0 0.0
    %626 = vmatprep.subr.mxu0 0.0
    %627 = vmatpush1.msra.mxu0 0.0
    %628 = vmatprep.subr.mxu0 0.0
    %629 = vmatpush1.msra.mxu0 0.0
    %630 = vmatprep.subr.mxu0 0.0
    %631 = vmatpush1.msra.mxu0 0.0
    %632 = vmatprep.subr.mxu0 0.0
    %633 = vmatpush1.msra.mxu0 %v507
    %634 = vmatprep.subr.mxu0 0.0
    %635 = vmatpush2.msra.mxu0 0.0
    %636 = vmatprep.subr.mxu0 0.0
    %637 = vmatpush2.msra.mxu0 0.0
    %638 = vmatprep.subr.mxu0 0.0
    %639 = vmatpush2.msra.mxu0 0.0
    %640 = vmatprep.subr.mxu0 0.0
    %641 = vmatpush2.msra.mxu0 0.0
    %642 = vmatprep.subr.mxu0 0.0
    %643 = vmatpush2.msra.mxu0 0.0
    %644 = vmatprep.subr.mxu0 0.0
    %645 = vmatpush2.msra.mxu0 0.0
    %646 = vmatprep.subr.mxu0 0.0
    %647 = vmatpush2.msra.mxu0 0.0
    %648 = vmatprep.subr.mxu0 0.0
    %649 = vmatpush2.msra.mxu0 0.0
    %650 = vmatprep.subr.mxu0 0.0
    %651 = vmatpush2.msra.mxu0 0.0
    %652 = vmatprep.subr.mxu0 0.0
    %653 = vmatpush2.msra.mxu0 0.0
    %654 = vmatprep.subr.mxu0 0.0
    %655 = vmatpush2.msra.mxu0 0.0
    %656 = vmatprep.subr.mxu0 0.0
    %657 = vmatpush2.msra.mxu0 0.0
    %658 = vmatprep.subr.mxu0 0.0
    %659 = vmatpush2.msra.mxu0 0.0
    %660 = vmatprep.subr.mxu0 0.0
    %661 = vmatpush2.msra.mxu0 0.0
    %662 = vmatprep.subr.mxu0 0.0
    %663 = vmatpush2.msra.mxu0 0.0
    %664 = vmatprep.subr.mxu0 0.0
    %665 = vmatpush2.msra.mxu0 0.0
    %666 = vmatprep.mubr.f32.mxu0 0.0
    %667 = vmatmul.mubr.f32.gmra.mxu0 %v600
    %v668 = vpop.f32.mrf.mxu0
    %v669 = vadd.f32 0.0, %v668
    %v670 = vpop.f32.mrf.mxu0
    %671 = vdwg.mxu0
    %672 = vrot.lane.b32.xlu0 %v355, 120
    %v673 = vpop.permute.xlu0 %672
    %674 = vrot.lane.b32.xlu0 %v431, 120
    %v675 = vpop.permute.xlu0 %674
    %v676 = vsel %vm510, %v673, 0
    %v678 = vsel %vm510, %v675, 0
    %680 = vmatprep.subr.mxu0 0.0
    %681 = vmatpush1.xpose.msra.mxu0 0.0
    %682 = vmatprep.subr.mxu0 0.0
    %683 = vmatpush1.xpose.msra.mxu0 0.0
    %684 = vmatprep.subr.mxu0 0.0
    %685 = vmatpush1.xpose.msra.mxu0 0.0
    %686 = vmatprep.subr.mxu0 0.0
    %687 = vmatpush1.xpose.msra.mxu0 0.0
    %688 = vmatprep.subr.mxu0 0.0
    %689 = vmatpush1.xpose.msra.mxu0 0.0
    %690 = vmatprep.subr.mxu0 0.0
    %691 = vmatpush1.xpose.msra.mxu0 0.0
    %692 = vmatprep.subr.mxu0 0.0
    %693 = vmatpush1.xpose.msra.mxu0 0.0
    %694 = vmatprep.subr.mxu0 0.0
    %695 = vmatpush1.xpose.msra.mxu0 0.0
    %696 = vmatprep.subr.mxu0 0.0
    %697 = vmatpush1.xpose.msra.mxu0 0.0
    %698 = vmatprep.subr.mxu0 0.0
    %699 = vmatpush1.xpose.msra.mxu0 0.0
    %700 = vmatprep.subr.mxu0 0.0
    %701 = vmatpush1.xpose.msra.mxu0 0.0
    %702 = vmatprep.subr.mxu0 0.0
    %703 = vmatpush1.xpose.msra.mxu0 0.0
    %704 = vmatprep.subr.mxu0 0.0
    %705 = vmatpush1.xpose.msra.mxu0 0.0
    %706 = vmatprep.subr.mxu0 0.0
    %707 = vmatpush1.xpose.msra.mxu0 0.0
    %708 = vmatprep.subr.mxu0 0.0
    %709 = vmatpush1.xpose.msra.mxu0 0.0
    %710 = vmatprep.subr.mxu0 0.0
    %711 = vmatpush1.xpose.msra.mxu0 %v678
    %712 = vmatprep.subr.mxu0 0.0
    %713 = vmatpush2.xpose.msra.mxu0 0.0
    %714 = vmatprep.subr.mxu0 0.0
    %715 = vmatpush2.xpose.msra.mxu0 0.0
    %716 = vmatprep.subr.mxu0 0.0
    %717 = vmatpush2.xpose.msra.mxu0 0.0
    %718 = vmatprep.subr.mxu0 0.0
    %719 = vmatpush2.xpose.msra.mxu0 0.0
    %720 = vmatprep.subr.mxu0 0.0
    %721 = vmatpush2.xpose.msra.mxu0 0.0
    %722 = vmatprep.subr.mxu0 0.0
    %723 = vmatpush2.xpose.msra.mxu0 0.0
    %724 = vmatprep.subr.mxu0 0.0
    %725 = vmatpush2.xpose.msra.mxu0 0.0
    %726 = vmatprep.subr.mxu0 0.0
    %727 = vmatpush2.xpose.msra.mxu0 0.0
    %728 = vmatprep.subr.mxu0 0.0
    %729 = vmatpush2.xpose.msra.mxu0 0.0
    %730 = vmatprep.subr.mxu0 0.0
    %731 = vmatpush2.xpose.msra.mxu0 0.0
    %732 = vmatprep.subr.mxu0 0.0
    %733 = vmatpush2.xpose.msra.mxu0 0.0
    %734 = vmatprep.subr.mxu0 0.0
    %735 = vmatpush2.xpose.msra.mxu0 0.0
    %736 = vmatprep.subr.mxu0 0.0
    %737 = vmatpush2.xpose.msra.mxu0 0.0
    %738 = vmatprep.subr.mxu0 0.0
    %739 = vmatpush2.xpose.msra.mxu0 0.0
    %740 = vmatprep.subr.mxu0 0.0
    %741 = vmatpush2.xpose.msra.mxu0 0.0
    %742 = vmatprep.subr.mxu0 0.0
    %743 = vmatpush2.xpose.msra.mxu0 0.0
    %744 = vmatprep.mubr.f32.mxu0 0.0
    %745 = vmatmul.mubr.f32.gmra.mxu0 %v676
    %v746 = vpop.f32.mrf.mxu0
    %v747 = vadd.f32 0.0, %v746
    %v748 = vpop.f32.mrf.mxu0
    %749 = vdwg.mxu0
    %v750 = vmul.f32 %v747, 0.35355338
    %v751 = vsel %vm510, %v750, -inf
    %752 = vmax.xlane.f32.xlu0 %v751
    %v753 = vpop.xlane.xlu0 %752
    %v754 = vsub.f32 %v750, %v753
    %v755 = vmul.f32 %v754, 1.442695
    %v756 = vpow.pop %v755
    %v757 = vsel %vm510, %v756, 0.0
    %758 = vadd.xlane.f32.xlu0 %v757
    %v759 = vpop.xlane.xlu0 %758
    %v760 = vrcp.pop %v759
    %v761 = vmul.f32 %v756, %v760
    %763 = vrot.lane.b32.xlu0 %v507, 120
    %v764 = vpop.permute.xlu0 %763
    %v767 = vsel %vm510, %v761, 0
    %769 = vmatprep.subr.mxu0 0.0
    %770 = vmatpush1.msra.mxu0 0.0
    %771 = vmatprep.subr.mxu0 0.0
    %772 = vmatpush1.msra.mxu0 0.0
    %773 = vmatprep.subr.mxu0 0.0
    %774 = vmatpush1.msra.mxu0 0.0
    %775 = vmatprep.subr.mxu0 0.0
    %776 = vmatpush1.msra.mxu0 0.0
    %777 = vmatprep.subr.mxu0 0.0
    %778 = vmatpush1.msra.mxu0 0.0
    %779 = vmatprep.subr.mxu0 0.0
    %780 = vmatpush1.msra.mxu0 0.0
    %781 = vmatprep.subr.mxu0 0.0
    %782 = vmatpush1.msra.mxu0 0.0
    %783 = vmatprep.subr.mxu0 0.0
    %784 = vmatpush1.msra.mxu0 0.0
    %785 = vmatprep.subr.mxu0 0.0
    %786 = vmatpush1.msra.mxu0 0.0
    %787 = vmatprep.subr.mxu0 0.0
    %788 = vmatpush1.msra.mxu0 0.0
    %789 = vmatprep.subr.mxu0 0.0
    %790 = vmatpush1.msra.mxu0 0.0
    %791 = vmatprep.subr.mxu0 0.0
    %792 = vmatpush1.msra.mxu0 0.0
    %793 = vmatprep.subr.mxu0 0.0
    %794 = vmatpush1.msra.mxu0 0.0
    %795 = vmatprep.subr.mxu0 0.0
    %796 = vmatpush1.msra.mxu0 0.0
    %797 = vmatprep.subr.mxu0 0.0
    %798 = vmatpush1.msra.mxu0 0.0
    %799 = vmatprep.subr.mxu0 0.0
    %800 = vmatpush1.msra.mxu0 %v764
    %801 = vmatprep.subr.mxu0 0.0
    %802 = vmatpush2.msra.mxu0 0.0
    %803 = vmatprep.subr.mxu0 0.0
    %804 = vmatpush2.msra.mxu0 0.0
    %805 = vmatprep.subr.mxu0 0.0
    %806 = vmatpush2.msra.mxu0 0.0
    %807 = vmatprep.subr.mxu0 0.0
    %808 = vmatpush2.msra.mxu0 0.0
    %809 = vmatprep.subr.mxu0 0.0
    %810 = vmatpush2.msra.mxu0 0.0
    %811 = vmatprep.subr.mxu0 0.0
    %812 = vmatpush2.msra.mxu0 0.0
    %813 = vmatprep.subr.mxu0 0.0
    %814 = vmatpush2.msra.mxu0 0.0
    %815 = vmatprep.subr.mxu0 0.0
    %816 = vmatpush2.msra.mxu0 0.0
    %817 = vmatprep.subr.mxu0 0.0
    %818 = vmatpush2.msra.mxu0 0.0
    %819 = vmatprep.subr.mxu0 0.0
    %820 = vmatpush2.msra.mxu0 0.0
    %821 = vmatprep.subr.mxu0 0.0
    %822 = vmatpush2.msra.mxu0 0.0
    %823 = vmatprep.subr.mxu0 0.0
    %824 = vmatpush2.msra.mxu0 0.0
    %825 = vmatprep.subr.mxu0 0.0
    %826 = vmatpush2.msra.mxu0 0.0
    %827 = vmatprep.subr.mxu0 0.0
    %828 = vmatpush2.msra.mxu0 0.0
    %829 = vmatprep.subr.mxu0 0.0
    %830 = vmatpush2.msra.mxu0 0.0
    %831 = vmatprep.subr.mxu0 0.0
    %832 = vmatpush2.msra.mxu0 0.0
    %833 = vmatprep.mubr.f32.mxu0 0.0
    %834 = vmatmul.mubr.f32.gmra.mxu0 %v767
    %v835 = vpop.f32.mrf.mxu0
    %v836 = vadd.f32 0.0, %v835
    %v837 = vpop.f32.mrf.mxu0
    %838 = vdwg.mxu0
    %839 = vrot.lane.b32.xlu0 %v355, 112
    %v840 = vpop.permute.xlu0 %839
    %841 = vrot.lane.b32.xlu0 %v431, 112
    %v842 = vpop.permute.xlu0 %841
    %v843 = vsel %vm510, %v840, 0
    %v845 = vsel %vm510, %v842, 0
    %847 = vmatprep.subr.mxu0 0.0
    %848 = vmatpush1.xpose.msra.mxu0 0.0
    %849 = vmatprep.subr.mxu0 0.0
    %850 = vmatpush1.xpose.msra.mxu0 0.0
    %851 = vmatprep.subr.mxu0 0.0
    %852 = vmatpush1.xpose.msra.mxu0 0.0
    %853 = vmatprep.subr.mxu0 0.0
    %854 = vmatpush1.xpose.msra.mxu0 0.0
    %855 = vmatprep.subr.mxu0 0.0
    %856 = vmatpush1.xpose.msra.mxu0 0.0
    %857 = vmatprep.subr.mxu0 0.0
    %858 = vmatpush1.xpose.msra.mxu0 0.0
    %859 = vmatprep.subr.mxu0 0.0
    %860 = vmatpush1.xpose.msra.mxu0 0.0
    %861 = vmatprep.subr.mxu0 0.0
    %862 = vmatpush1.xpose.msra.mxu0 0.0
    %863 = vmatprep.subr.mxu0 0.0
    %864 = vmatpush1.xpose.msra.mxu0 0.0
    %865 = vmatprep.subr.mxu0 0.0
    %866 = vmatpush1.xpose.msra.mxu0 0.0
    %867 = vmatprep.subr.mxu0 0.0
    %868 = vmatpush1.xpose.msra.mxu0 0.0
    %869 = vmatprep.subr.mxu0 0.0
    %870 = vmatpush1.xpose.msra.mxu0 0.0
    %871 = vmatprep.subr.mxu0 0.0
    %872 = vmatpush1.xpose.msra.mxu0 0.0
    %873 = vmatprep.subr.mxu0 0.0
    %874 = vmatpush1.xpose.msra.mxu0 0.0
    %875 = vmatprep.subr.mxu0 0.0
    %876 = vmatpush1.xpose.msra.mxu0 0.0
    %877 = vmatprep.subr.mxu0 0.0
    %878 = vmatpush1.xpose.msra.mxu0 %v845
    %879 = vmatprep.subr.mxu0 0.0
    %880 = vmatpush2.xpose.msra.mxu0 0.0
    %881 = vmatprep.subr.mxu0 0.0
    %882 = vmatpush2.xpose.msra.mxu0 0.0
    %883 = vmatprep.subr.mxu0 0.0
    %884 = vmatpush2.xpose.msra.mxu0 0.0
    %885 = vmatprep.subr.mxu0 0.0
    %886 = vmatpush2.xpose.msra.mxu0 0.0
    %887 = vmatprep.subr.mxu0 0.0
    %888 = vmatpush2.xpose.msra.mxu0 0.0
    %889 = vmatprep.subr.mxu0 0.0
    %890 = vmatpush2.xpose.msra.mxu0 0.0
    %891 = vmatprep.subr.mxu0 0.0
    %892 = vmatpush2.xpose.msra.mxu0 0.0
    %893 = vmatprep.subr.mxu0 0.0
    %894 = vmatpush2.xpose.msra.mxu0 0.0
    %895 = vmatprep.subr.mxu0 0.0
    %896 = vmatpush2.xpose.msra.mxu0 0.0
    %897 = vmatprep.subr.mxu0 0.0
    %898 = vmatpush2.xpose.msra.mxu0 0.0
    %899 = vmatprep.subr.mxu0 0.0
    %900 = vmatpush2.xpose.msra.mxu0 0.0
    %901 = vmatprep.subr.mxu0 0.0
    %902 = vmatpush2.xpose.msra.mxu0 0.0
    %903 = vmatprep.subr.mxu0 0.0
    %904 = vmatpush2.xpose.msra.mxu0 0.0
    %905 = vmatprep.subr.mxu0 0.0
    %906 = vmatpush2.xpose.msra.mxu0 0.0
    %907 = vmatprep.subr.mxu0 0.0
    %908 = vmatpush2.xpose.msra.mxu0 0.0
    %909 = vmatprep.subr.mxu0 0.0
    %910 = vmatpush2.xpose.msra.mxu0 0.0
    %911 = vmatprep.mubr.f32.mxu0 0.0
    %912 = vmatmul.mubr.f32.gmra.mxu0 %v843
    %v913 = vpop.f32.mrf.mxu0
    %v914 = vadd.f32 0.0, %v913
    %v915 = vpop.f32.mrf.mxu0
    %916 = vdwg.mxu0
    %v917 = vmul.f32 %v914, 0.35355338
    %v918 = vsel %vm510, %v917, -inf
    %919 = vmax.xlane.f32.xlu0 %v918
    %v920 = vpop.xlane.xlu0 %919
    %v921 = vsub.f32 %v917, %v920
    %v922 = vmul.f32 %v921, 1.442695
    %v923 = vpow.pop %v922
    %v924 = vsel %vm510, %v923, 0.0
    %925 = vadd.xlane.f32.xlu0 %v924
    %v926 = vpop.xlane.xlu0 %925
    %v927 = vrcp.pop %v926
    %v928 = vmul.f32 %v923, %v927
    %929 = vrot.lane.b32.xlu0 %v507, 112
    %v930 = vpop.permute.xlu0 %929
    %v933 = vsel %vm510, %v928, 0
    %935 = vmatprep.subr.mxu0 0.0
    %936 = vmatpush1.msra.mxu0 0.0
    %937 = vmatprep.subr.mxu0 0.0
    %938 = vmatpush1.msra.mxu0 0.0
    %939 = vmatprep.subr.mxu0 0.0
    %940 = vmatpush1.msra.mxu0 0.0
    %941 = vmatprep.subr.mxu0 0.0
    %942 = vmatpush1.msra.mxu0 0.0
    %943 = vmatprep.subr.mxu0 0.0
    %944 = vmatpush1.msra.mxu0 0.0
    %945 = vmatprep.subr.mxu0 0.0
    %946 = vmatpush1.msra.mxu0 0.0
    %947 = vmatprep.subr.mxu0 0.0
    %948 = vmatpush1.msra.mxu0 0.0
    %949 = vmatprep.subr.mxu0 0.0
    %950 = vmatpush1.msra.mxu0 0.0
    %951 = vmatprep.subr.mxu0 0.0
    %952 = vmatpush1.msra.mxu0 0.0
    %953 = vmatprep.subr.mxu0 0.0
    %954 = vmatpush1.msra.mxu0 0.0
    %955 = vmatprep.subr.mxu0 0.0
    %956 = vmatpush1.msra.mxu0 0.0
    %957 = vmatprep.subr.mxu0 0.0
    %958 = vmatpush1.msra.mxu0 0.0
    %959 = vmatprep.subr.mxu0 0.0
    %960 = vmatpush1.msra.mxu0 0.0
    %961 = vmatprep.subr.mxu0 0.0
    %962 = vmatpush1.msra.mxu0 0.0
    %963 = vmatprep.subr.mxu0 0.0
    %964 = vmatpush1.msra.mxu0 0.0
    %965 = vmatprep.subr.mxu0 0.0
    %966 = vmatpush1.msra.mxu0 %v930
    %967 = vmatprep.subr.mxu0 0.0
    %968 = vmatpush2.msra.mxu0 0.0
    %969 = vmatprep.subr.mxu0 0.0
    %970 = vmatpush2.msra.mxu0 0.0
    %971 = vmatprep.subr.mxu0 0.0
    %972 = vmatpush2.msra.mxu0 0.0
    %973 = vmatprep.subr.mxu0 0.0
    %974 = vmatpush2.msra.mxu0 0.0
    %975 = vmatprep.subr.mxu0 0.0
    %976 = vmatpush2.msra.mxu0 0.0
    %977 = vmatprep.subr.mxu0 0.0
    %978 = vmatpush2.msra.mxu0 0.0
    %979 = vmatprep.subr.mxu0 0.0
    %980 = vmatpush2.msra.mxu0 0.0
    %981 = vmatprep.subr.mxu0 0.0
    %982 = vmatpush2.msra.mxu0 0.0
    %983 = vmatprep.subr.mxu0 0.0
    %984 = vmatpush2.msra.mxu0 0.0
    %985 = vmatprep.subr.mxu0 0.0
    %986 = vmatpush2.msra.mxu0 0.0
    %987 = vmatprep.subr.mxu0 0.0
    %988 = vmatpush2.msra.mxu0 0.0
    %989 = vmatprep.subr.mxu0 0.0
    %990 = vmatpush2.msra.mxu0 0.0
    %991 = vmatprep.subr.mxu0 0.0
    %992 = vmatpush2.msra.mxu0 0.0
    %993 = vmatprep.subr.mxu0 0.0
    %994 = vmatpush2.msra.mxu0 0.0
    %995 = vmatprep.subr.mxu0 0.0
    %996 = vmatpush2.msra.mxu0 0.0
    %997 = vmatprep.subr.mxu0 0.0
    %998 = vmatpush2.msra.mxu0 0.0
    %999 = vmatprep.mubr.f32.mxu0 0.0
    %1000 = vmatmul.mubr.f32.gmra.mxu0 %v933
    %v1001 = vpop.f32.mrf.mxu0
    %v1002 = vadd.f32 0.0, %v1001
    %v1003 = vpop.f32.mrf.mxu0
    %1004 = vdwg.mxu0
    %1005 = vrot.lane.b32.xlu0 %v355, 104
    %v1006 = vpop.permute.xlu0 %1005
    %1007 = vrot.lane.b32.xlu0 %v431, 104
    %v1008 = vpop.permute.xlu0 %1007
    %v1009 = vsel %vm510, %v1006, 0
    %v1011 = vsel %vm510, %v1008, 0
    %1013 = vmatprep.subr.mxu0 0.0
    %1014 = vmatpush1.xpose.msra.mxu0 0.0
    %1015 = vmatprep.subr.mxu0 0.0
    %1016 = vmatpush1.xpose.msra.mxu0 0.0
    %1017 = vmatprep.subr.mxu0 0.0
    %1018 = vmatpush1.xpose.msra.mxu0 0.0
    %1019 = vmatprep.subr.mxu0 0.0
    %1020 = vmatpush1.xpose.msra.mxu0 0.0
    %1021 = vmatprep.subr.mxu0 0.0
    %1022 = vmatpush1.xpose.msra.mxu0 0.0
    %1023 = vmatprep.subr.mxu0 0.0
    %1024 = vmatpush1.xpose.msra.mxu0 0.0
    %1025 = vmatprep.subr.mxu0 0.0
    %1026 = vmatpush1.xpose.msra.mxu0 0.0
    %1027 = vmatprep.subr.mxu0 0.0
    %1028 = vmatpush1.xpose.msra.mxu0 0.0
    %1029 = vmatprep.subr.mxu0 0.0
    %1030 = vmatpush1.xpose.msra.mxu0 0.0
    %1031 = vmatprep.subr.mxu0 0.0
    %1032 = vmatpush1.xpose.msra.mxu0 0.0
    %1033 = vmatprep.subr.mxu0 0.0
    %1034 = vmatpush1.xpose.msra.mxu0 0.0
    %1035 = vmatprep.subr.mxu0 0.0
    %1036 = vmatpush1.xpose.msra.mxu0 0.0
    %1037 = vmatprep.subr.mxu0 0.0
    %1038 = vmatpush1.xpose.msra.mxu0 0.0
    %1039 = vmatprep.subr.mxu0 0.0
    %1040 = vmatpush1.xpose.msra.mxu0 0.0
    %1041 = vmatprep.subr.mxu0 0.0
    %1042 = vmatpush1.xpose.msra.mxu0 0.0
    %1043 = vmatprep.subr.mxu0 0.0
    %1044 = vmatpush1.xpose.msra.mxu0 %v1011
    %1045 = vmatprep.subr.mxu0 0.0
    %1046 = vmatpush2.xpose.msra.mxu0 0.0
    %1047 = vmatprep.subr.mxu0 0.0
    %1048 = vmatpush2.xpose.msra.mxu0 0.0
    %1049 = vmatprep.subr.mxu0 0.0
    %1050 = vmatpush2.xpose.msra.mxu0 0.0
    %1051 = vmatprep.subr.mxu0 0.0
    %1052 = vmatpush2.xpose.msra.mxu0 0.0
    %1053 = vmatprep.subr.mxu0 0.0
    %1054 = vmatpush2.xpose.msra.mxu0 0.0
    %1055 = vmatprep.subr.mxu0 0.0
    %1056 = vmatpush2.xpose.msra.mxu0 0.0
    %1057 = vmatprep.subr.mxu0 0.0
    %1058 = vmatpush2.xpose.msra.mxu0 0.0
    %1059 = vmatprep.subr.mxu0 0.0
    %1060 = vmatpush2.xpose.msra.mxu0 0.0
    %1061 = vmatprep.subr.mxu0 0.0
    %1062 = vmatpush2.xpose.msra.mxu0 0.0
    %1063 = vmatprep.subr.mxu0 0.0
    %1064 = vmatpush2.xpose.msra.mxu0 0.0
    %1065 = vmatprep.subr.mxu0 0.0
    %1066 = vmatpush2.xpose.msra.mxu0 0.0
    %1067 = vmatprep.subr.mxu0 0.0
    %1068 = vmatpush2.xpose.msra.mxu0 0.0
    %1069 = vmatprep.subr.mxu0 0.0
    %1070 = vmatpush2.xpose.msra.mxu0 0.0
    %1071 = vmatprep.subr.mxu0 0.0
    %1072 = vmatpush2.xpose.msra.mxu0 0.0
    %1073 = vmatprep.subr.mxu0 0.0
    %1074 = vmatpush2.xpose.msra.mxu0 0.0
    %1075 = vmatprep.subr.mxu0 0.0
    %1076 = vmatpush2.xpose.msra.mxu0 0.0
    %1077 = vmatprep.mubr.f32.mxu0 0.0
    %1078 = vmatmul.mubr.f32.gmra.mxu0 %v1009
    %v1079 = vpop.f32.mrf.mxu0
    %v1080 = vadd.f32 0.0, %v1079
    %v1081 = vpop.f32.mrf.mxu0
    %1082 = vdwg.mxu0
    %v1083 = vmul.f32 %v1080, 0.35355338
    %v1084 = vsel %vm510, %v1083, -inf
    %1085 = vmax.xlane.f32.xlu0 %v1084
    %v1086 = vpop.xlane.xlu0 %1085
    %v1087 = vsub.f32 %v1083, %v1086
    %v1088 = vmul.f32 %v1087, 1.442695
    %v1089 = vpow.pop %v1088
    %v1090 = vsel %vm510, %v1089, 0.0
    %1091 = vadd.xlane.f32.xlu0 %v1090
    %v1092 = vpop.xlane.xlu0 %1091
    %v1093 = vrcp.pop %v1092
    %v1094 = vmul.f32 %v1089, %v1093
    %1095 = vrot.lane.b32.xlu0 %v507, 104
    %v1096 = vpop.permute.xlu0 %1095
    %v1099 = vsel %vm510, %v1094, 0
    %1101 = vmatprep.subr.mxu0 0.0
    %1102 = vmatpush1.msra.mxu0 0.0
    %1103 = vmatprep.subr.mxu0 0.0
    %1104 = vmatpush1.msra.mxu0 0.0
    %1105 = vmatprep.subr.mxu0 0.0
    %1106 = vmatpush1.msra.mxu0 0.0
    %1107 = vmatprep.subr.mxu0 0.0
    %1108 = vmatpush1.msra.mxu0 0.0
    %1109 = vmatprep.subr.mxu0 0.0
    %1110 = vmatpush1.msra.mxu0 0.0
    %1111 = vmatprep.subr.mxu0 0.0
    %1112 = vmatpush1.msra.mxu0 0.0
    %1113 = vmatprep.subr.mxu0 0.0
    %1114 = vmatpush1.msra.mxu0 0.0
    %1115 = vmatprep.subr.mxu0 0.0
    %1116 = vmatpush1.msra.mxu0 0.0
    %1117 = vmatprep.subr.mxu0 0.0
    %1118 = vmatpush1.msra.mxu0 0.0
    %1119 = vmatprep.subr.mxu0 0.0
    %1120 = vmatpush1.msra.mxu0 0.0
    %1121 = vmatprep.subr.mxu0 0.0
    %1122 = vmatpush1.msra.mxu0 0.0
    %1123 = vmatprep.subr.mxu0 0.0
    %1124 = vmatpush1.msra.mxu0 0.0
    %1125 = vmatprep.subr.mxu0 0.0
    %1126 = vmatpush1.msra.mxu0 0.0
    %1127 = vmatprep.subr.mxu0 0.0
    %1128 = vmatpush1.msra.mxu0 0.0
    %1129 = vmatprep.subr.mxu0 0.0
    %1130 = vmatpush1.msra.mxu0 0.0
    %1131 = vmatprep.subr.mxu0 0.0
    %1132 = vmatpush1.msra.mxu0 %v1096
    %1133 = vmatprep.subr.mxu0 0.0
    %1134 = vmatpush2.msra.mxu0 0.0
    %1135 = vmatprep.subr.mxu0 0.0
    %1136 = vmatpush2.msra.mxu0 0.0
    %1137 = vmatprep.subr.mxu0 0.0
    %1138 = vmatpush2.msra.mxu0 0.0
    %1139 = vmatprep.subr.mxu0 0.0
    %1140 = vmatpush2.msra.mxu0 0.0
    %1141 = vmatprep.subr.mxu0 0.0
    %1142 = vmatpush2.msra.mxu0 0.0
    %1143 = vmatprep.subr.mxu0 0.0
    %1144 = vmatpush2.msra.mxu0 0.0
    %1145 = vmatprep.subr.mxu0 0.0
    %1146 = vmatpush2.msra.mxu0 0.0
    %1147 = vmatprep.subr.mxu0 0.0
    %1148 = vmatpush2.msra.mxu0 0.0
    %1149 = vmatprep.subr.mxu0 0.0
    %1150 = vmatpush2.msra.mxu0 0.0
    %1151 = vmatprep.subr.mxu0 0.0
    %1152 = vmatpush2.msra.mxu0 0.0
    %1153 = vmatprep.subr.mxu0 0.0
    %1154 = vmatpush2.msra.mxu0 0.0
    %1155 = vmatprep.subr.mxu0 0.0
    %1156 = vmatpush2.msra.mxu0 0.0
    %1157 = vmatprep.subr.mxu0 0.0
    %1158 = vmatpush2.msra.mxu0 0.0
    %1159 = vmatprep.subr.mxu0 0.0
    %1160 = vmatpush2.msra.mxu0 0.0
    %1161 = vmatprep.subr.mxu0 0.0
    %1162 = vmatpush2.msra.mxu0 0.0
    %1163 = vmatprep.subr.mxu0 0.0
    %1164 = vmatpush2.msra.mxu0 0.0
    %1165 = vmatprep.mubr.f32.mxu0 0.0
    %1166 = vmatmul.mubr.f32.gmra.mxu0 %v1099
    %v1167 = vpop.f32.mrf.mxu0
    %v1168 = vadd.f32 0.0, %v1167
    %v1169 = vpop.f32.mrf.mxu0
    %1170 = vdwg.mxu0
    %1172 = vrot.lane.b32.xlu0 %v836, 8
    %v1173 = vpop.permute.xlu0 %1172
    %1176 = vrot.lane.b32.xlu0 %v1002, 16
    %v1177 = vpop.permute.xlu0 %1176
    %1180 = vrot.lane.b32.xlu0 %v1168, 24
    %v1181 = vpop.permute.xlu0 %1180
    %v1183 = vsel %vm510, %v669, %v1173
    %vm1184 = vcmask 130048
    %v1185 = vsel %vm1184, %v1183, %v1177
    %vm1186 = vcmask 195584
    %v1187 = vsel %vm1186, %v1185, %v1181
    %v1189 = vlaneseq
    %v1190 = vshrl.u32 %v1189, 7
    %v1191 = vsub.s32 0, %v1190
    %v1192 = vrot.slane %v277, %v1191
    %v1195 = vsel %vm284, %v1187, 0
    %1197 = vmatprep.subr.mxu0 0.0
    %1198 = vmatpush1.msra.mxu0 0.0
    %1199 = vmatprep.subr.mxu0 0.0
    %1200 = vmatpush1.msra.mxu0 0.0
    %1201 = vmatprep.subr.mxu0 0.0
    %1202 = vmatpush1.msra.mxu0 0.0
    %1203 = vmatprep.subr.mxu0 0.0
    %1204 = vmatpush1.msra.mxu0 0.0
    %1205 = vmatprep.subr.mxu0 0.0
    %1206 = vmatpush1.msra.mxu0 0.0
    %1207 = vmatprep.subr.mxu0 0.0
    %1208 = vmatpush1.msra.mxu0 0.0
    %1209 = vmatprep.subr.mxu0 0.0
    %1210 = vmatpush1.msra.mxu0 0.0
    %1211 = vmatprep.subr.mxu0 0.0
    %1212 = vmatpush1.msra.mxu0 0.0
    %1213 = vmatprep.subr.mxu0 0.0
    %1214 = vmatpush1.msra.mxu0 0.0
    %1215 = vmatprep.subr.mxu0 0.0
    %1216 = vmatpush1.msra.mxu0 0.0
    %1217 = vmatprep.subr.mxu0 0.0
    %1218 = vmatpush1.msra.mxu0 0.0
    %1219 = vmatprep.subr.mxu0 0.0
    %1220 = vmatpush1.msra.mxu0 0.0
    %1221 = vmatprep.subr.mxu0 0.0
    %1222 = vmatpush1.msra.mxu0 %v276
    %1223 = vmatprep.subr.mxu0 0.0
    %1224 = vmatpush1.msra.mxu0 %v275
    %1225 = vmatprep.subr.mxu0 0.0
    %1226 = vmatpush1.msra.mxu0 %v274
    %1227 = vmatprep.subr.mxu0 0.0
    %1228 = vmatpush1.msra.mxu0 %v273
    %1229 = vmatprep.subr.mxu0 0.0
    %1230 = vmatpush2.msra.mxu0 0.0
    %1231 = vmatprep.subr.mxu0 0.0
    %1232 = vmatpush2.msra.mxu0 0.0
    %1233 = vmatprep.subr.mxu0 0.0
    %1234 = vmatpush2.msra.mxu0 0.0
    %1235 = vmatprep.subr.mxu0 0.0
    %1236 = vmatpush2.msra.mxu0 0.0
    %1237 = vmatprep.subr.mxu0 0.0
    %1238 = vmatpush2.msra.mxu0 0.0
    %1239 = vmatprep.subr.mxu0 0.0
    %1240 = vmatpush2.msra.mxu0 0.0
    %1241 = vmatprep.subr.mxu0 0.0
    %1242 = vmatpush2.msra.mxu0 0.0
    %1243 = vmatprep.subr.mxu0 0.0
    %1244 = vmatpush2.msra.mxu0 0.0
    %1245 = vmatprep.subr.mxu0 0.0
    %1246 = vmatpush2.msra.mxu0 0.0
    %1247 = vmatprep.subr.mxu0 0.0
    %1248 = vmatpush2.msra.mxu0 0.0
    %1249 = vmatprep.subr.mxu0 0.0
    %1250 = vmatpush2.msra.mxu0 0.0
    %1251 = vmatprep.subr.mxu0 0.0
    %1252 = vmatpush2.msra.mxu0 0.0
    %1253 = vmatprep.subr.mxu0 0.0
    %1254 = vmatpush2.msra.mxu0 0.0
    %1255 = vmatprep.subr.mxu0 0.0
    %1256 = vmatpush2.msra.mxu0 0.0
    %1257 = vmatprep.subr.mxu0 0.0
    %1258 = vmatpush2.msra.mxu0 0.0
    %1259 = vmatprep.subr.mxu0 0.0
    %1260 = vmatpush2.msra.mxu0 0.0
    %1261 = vmatprep.mubr.f32.mxu0 0.0
    %1262 = vmatmul.mubr.f32.gmra.mxu0 %v1195
    %v1263 = vpop.f32.mrf.mxu0
    %v1264 = vadd.f32 %v1192, %v1263
    %v1265 = vpop.f32.mrf.mxu0
    %1266 = vdwg.mxu0
    %v1267 = vadd.f32 %v1264, %v250
    %v1268 = vsel %vm284, %v1267, 0.0
    %1269 = vadd.xlane.f32.xlu0 %v1268
    %v1270 = vpop.xlane.xlu0 %1269
    %v1271 = vrot.slane %v1270, 4
    %v1272 = vadd.f32 %v1270, %v1271
    %v1273 = vrot.slane %v1272, 2
    %v1274 = vadd.f32 %v1272, %v1273
    %v1275 = vrot.slane %v1274, 1
    %v1276 = vadd.f32 %v1274, %v1275
    %s1277 = vtos %v1276
    %v1278 = vrcp.pop 256.0
    %s1279 = vtos %v1278
    %s1280 = smul.f32 %s1277, %s1279
    %v1281 = vstv %s1280
    %v1282 = vsub.f32 %v1267, %v1281
    %v1283 = vmul.f32 %v1282, %v1282
    %v1284 = vsel %vm284, %v1283, 0.0
    %1285 = vadd.xlane.f32.xlu0 %v1284
    %v1286 = vpop.xlane.xlu0 %1285
    %v1287 = vrot.slane %v1286, 4
    %v1288 = vadd.f32 %v1286, %v1287
    %v1289 = vrot.slane %v1288, 2
    %v1290 = vadd.f32 %v1288, %v1289
    %v1291 = vrot.slane %v1290, 1
    %v1292 = vadd.f32 %v1290, %v1291
    %s1293 = vtos %v1292
    %v1294 = vrcp.pop 256.0
    %s1295 = vtos %v1294
    %s1296 = smul.f32 %s1293, %s1295
    %s1297 = sadd.f32 %s1296, 1e-05
    %v1298 = vstv %s1297
    %v1299 = vrsqrt.pop %v1298
    %s1300 = vtos %v1299
    %v1301 = vstv %s1300
    %v1302 = vmul.f32 %v1282, %v1301
    %v1303 = vld [vmem:[%s9] sm:$0xff]
    %v1304 = vld [vmem:[%s9 + $0x8] sm:$0xff]
    %v1305 = vld [vmem:[%s9 + $0x10] sm:$0xff]
    %v1306 = vld [vmem:[%s9 + $0x18] sm:$0xff]
    %v1307 = vld [vmem:[#allocation10] sm:$0x1]
    %v1308 = vld [vmem:[%s11] sm:$0xff]
    %v1309 = vld [vmem:[%s11 + $0x8] sm:$0xff]
    %v1310 = vld [vmem:[%s11 + $0x10] sm:$0xff]
    %v1311 = vld [vmem:[%s11 + $0x18] sm:$0xff]
    %v1312 = vld [vmem:[%s11 + $0x20] sm:$0xff]
    %v1313 = vld [vmem:[%s11 + $0x28] sm:$0xff]
    %v1314 = vld [vmem:[%s11 + $0x30] sm:$0xff]
    %v1315 = vld [vmem:[%s11 + $0x38] sm:$0xff]
    %v1316 = vld [vmem:[%s11 + $0x40] sm:$0xff]
    %v1317 = vld [vmem:[%s11 + $0x48] sm:$0xff]
    %v1318 = vld [vmem:[%s11 + $0x50] sm:$0xff]
    %v1319 = vld [vmem:[%s11 + $0x58] sm:$0xff]
    %v1320 = vld [vmem:[%s11 + $0x60] sm:$0xff]
    %v1321 = vld [vmem:[%s11 + $0x68] sm:$0xff]
    %v1322 = vld [vmem:[%s11 + $0x70] sm:$0xff]
    %v1323 = vld [vmem:[%s11 + $0x78] sm:$0xff]
    %v1324 = vld [vmem:[#allocation11] sm:$0x1]
    %v1326 = vlaneseq
    %v1327 = vshrl.u32 %v1326, 7
    %v1328 = vsub.s32 0, %v1327
    %v1329 = vrot.slane %v1307, %v1328
    %v1332 = vsel %vm284, %v1302, 0
    %1334 = vmatprep.subr.mxu0 0.0
    %1335 = vmatpush1.msra.mxu0 0.0
    %1336 = vmatprep.subr.mxu0 0.0
    %1337 = vmatpush1.msra.mxu0 0.0
    %1338 = vmatprep.subr.mxu0 0.0
    %1339 = vmatpush1.msra.mxu0 0.0
    %1340 = vmatprep.subr.mxu0 0.0
    %1341 = vmatpush1.msra.mxu0 0.0
    %1342 = vmatprep.subr.mxu0 0.0
    %1343 = vmatpush1.msra.mxu0 0.0
    %1344 = vmatprep.subr.mxu0 0.0
    %1345 = vmatpush1.msra.mxu0 0.0
    %1346 = vmatprep.subr.mxu0 0.0
    %1347 = vmatpush1.msra.mxu0 0.0
    %1348 = vmatprep.subr.mxu0 0.0
    %1349 = vmatpush1.msra.mxu0 0.0
    %1350 = vmatprep.subr.mxu0 0.0
    %1351 = vmatpush1.msra.mxu0 0.0
    %1352 = vmatprep.subr.mxu0 0.0
    %1353 = vmatpush1.msra.mxu0 0.0
    %1354 = vmatprep.subr.mxu0 0.0
    %1355 = vmatpush1.msra.mxu0 0.0
    %1356 = vmatprep.subr.mxu0 0.0
    %1357 = vmatpush1.msra.mxu0 0.0
    %1358 = vmatprep.subr.mxu0 0.0
    %1359 = vmatpush1.msra.mxu0 %v1306
    %1360 = vmatprep.subr.mxu0 0.0
    %1361 = vmatpush1.msra.mxu0 %v1305
    %1362 = vmatprep.subr.mxu0 0.0
    %1363 = vmatpush1.msra.mxu0 %v1304
    %1364 = vmatprep.subr.mxu0 0.0
    %1365 = vmatpush1.msra.mxu0 %v1303
    %1366 = vmatprep.subr.mxu0 0.0
    %1367 = vmatpush2.msra.mxu0 0.0
    %1368 = vmatprep.subr.mxu0 0.0
    %1369 = vmatpush2.msra.mxu0 0.0
    %1370 = vmatprep.subr.mxu0 0.0
    %1371 = vmatpush2.msra.mxu0 0.0
    %1372 = vmatprep.subr.mxu0 0.0
    %1373 = vmatpush2.msra.mxu0 0.0
    %1374 = vmatprep.subr.mxu0 0.0
    %1375 = vmatpush2.msra.mxu0 0.0
    %1376 = vmatprep.subr.mxu0 0.0
    %1377 = vmatpush2.msra.mxu0 0.0
    %1378 = vmatprep.subr.mxu0 0.0
    %1379 = vmatpush2.msra.mxu0 0.0
    %1380 = vmatprep.subr.mxu0 0.0
    %1381 = vmatpush2.msra.mxu0 0.0
    %1382 = vmatprep.subr.mxu0 0.0
    %1383 = vmatpush2.msra.mxu0 0.0
    %1384 = vmatprep.subr.mxu0 0.0
    %1385 = vmatpush2.msra.mxu0 0.0
    %1386 = vmatprep.subr.mxu0 0.0
    %1387 = vmatpush2.msra.mxu0 0.0
    %1388 = vmatprep.subr.mxu0 0.0
    %1389 = vmatpush2.msra.mxu0 0.0
    %1390 = vmatprep.subr.mxu0 0.0
    %1391 = vmatpush2.msra.mxu0 0.0
    %1392 = vmatprep.subr.mxu0 0.0
    %1393 = vmatpush2.msra.mxu0 0.0
    %1394 = vmatprep.subr.mxu0 0.0
    %1395 = vmatpush2.msra.mxu0 0.0
    %1396 = vmatprep.subr.mxu0 0.0
    %1397 = vmatpush2.msra.mxu0 0.0
    %1398 = vmatprep.mubr.f32.mxu0 0.0
    %1399 = vmatmul.mubr.f32.gmra.mxu0 %v1332
    %v1400 = vpop.f32.mrf.mxu0
    %v1401 = vadd.f32 %v1329, %v1400
    %v1402 = vpop.f32.mrf.mxu0
    %1403 = vdwg.mxu0
    %v1404 = vmax.f32 %v1401, 0.0
    %v1406 = vlaneseq
    %v1407 = vshrl.u32 %v1406, 7
    %v1408 = vsub.s32 0, %v1407
    %v1409 = vrot.slane %v1324, %v1408
    %1411 = vmatprep.subr.mxu0 0.0
    %1412 = vmatpush1.msra.mxu0 %v1323
    %1413 = vmatprep.subr.mxu0 0.0
    %1414 = vmatpush1.msra.mxu0 %v1322
    %1415 = vmatprep.subr.mxu0 0.0
    %1416 = vmatpush1.msra.mxu0 %v1321
    %1417 = vmatprep.subr.mxu0 0.0
    %1418 = vmatpush1.msra.mxu0 %v1320
    %1419 = vmatprep.subr.mxu0 0.0
    %1420 = vmatpush1.msra.mxu0 %v1319
    %1421 = vmatprep.subr.mxu0 0.0
    %1422 = vmatpush1.msra.mxu0 %v1318
    %1423 = vmatprep.subr.mxu0 0.0
    %1424 = vmatpush1.msra.mxu0 %v1317
    %1425 = vmatprep.subr.mxu0 0.0
    %1426 = vmatpush1.msra.mxu0 %v1316
    %1427 = vmatprep.subr.mxu0 0.0
    %1428 = vmatpush1.msra.mxu0 %v1315
    %1429 = vmatprep.subr.mxu0 0.0
    %1430 = vmatpush1.msra.mxu0 %v1314
    %1431 = vmatprep.subr.mxu0 0.0
    %1432 = vmatpush1.msra.mxu0 %v1313
    %1433 = vmatprep.subr.mxu0 0.0
    %1434 = vmatpush1.msra.mxu0 %v1312
    %1435 = vmatprep.subr.mxu0 0.0
    %1436 = vmatpush1.msra.mxu0 %v1311
    %1437 = vmatprep.subr.mxu0 0.0
    %1438 = vmatpush1.msra.mxu0 %v1310
    %1439 = vmatprep.subr.mxu0 0.0
    %1440 = vmatpush1.msra.mxu0 %v1309
    %1441 = vmatprep.subr.mxu0 0.0
    %1442 = vmatpush1.msra.mxu0 %v1308
    %1443 = vmatprep.subr.mxu0 0.0
    %1444 = vmatpush2.msra.mxu0 0.0
    %1445 = vmatprep.subr.mxu0 0.0
    %1446 = vmatpush2.msra.mxu0 0.0
    %1447 = vmatprep.subr.mxu0 0.0
    %1448 = vmatpush2.msra.mxu0 0.0
    %1449 = vmatprep.subr.mxu0 0.0
    %1450 = vmatpush2.msra.mxu0 0.0
    %1451 = vmatprep.subr.mxu0 0.0
    %1452 = vmatpush2.msra.mxu0 0.0
    %1453 = vmatprep.subr.mxu0 0.0
    %1454 = vmatpush2.msra.mxu0 0.0
    %1455 = vmatprep.subr.mxu0 0.0
    %1456 = vmatpush2.msra.mxu0 0.0
    %1457 = vmatprep.subr.mxu0 0.0
    %1458 = vmatpush2.msra.mxu0 0.0
    %1459 = vmatprep.subr.mxu0 0.0
    %1460 = vmatpush2.msra.mxu0 0.0
    %1461 = vmatprep.subr.mxu0 0.0
    %1462 = vmatpush2.msra.mxu0 0.0
    %1463 = vmatprep.subr.mxu0 0.0
    %1464 = vmatpush2.msra.mxu0 0.0
    %1465 = vmatprep.subr.mxu0 0.0
    %1466 = vmatpush2.msra.mxu0 0.0
    %1467 = vmatprep.subr.mxu0 0.0
    %1468 = vmatpush2.msra.mxu0 0.0
    %1469 = vmatprep.subr.mxu0 0.0
    %1470 = vmatpush2.msra.mxu0 0.0
    %1471 = vmatprep.subr.mxu0 0.0
    %1472 = vmatpush2.msra.mxu0 0.0
    %1473 = vmatprep.subr.mxu0 0.0
    %1474 = vmatpush2.msra.mxu0 0.0
    %1475 = vmatprep.mubr.f32.mxu0 0.0
    %1476 = vmatmul.mubr.f32.gmra.mxu0 %v1404
    %v1477 = vpop.f32.mrf.mxu0
    %v1478 = vadd.f32 %v1409, %v1477
    %v1479 = vpop.f32.mrf.mxu0
    %1480 = vdwg.mxu0
    %v1481 = vadd.f32 %v1478, %v1302
    %v1482 = vsel %vm284, %v1481, 0.0
    %1483 = vadd.xlane.f32.xlu0 %v1482
    %v1484 = vpop.xlane.xlu0 %1483
    %v1485 = vrot.slane %v1484, 4
    %v1486 = vadd.f32 %v1484, %v1485
    %v1487 = vrot.slane %v1486, 2
    %v1488 = vadd.f32 %v1486, %v1487
    %v1489 = vrot.slane %v1488, 1
    %v1490 = vadd.f32 %v1488, %v1489
    %s1491 = vtos %v1490
    %v1492 = vrcp.pop 256.0
    %s1493 = vtos %v1492
    %s1494 = smul.f32 %s1491, %s1493
    %v1495 = vstv %s1494
    %v1496 = vsub.f32 %v1481, %v1495
    %v1497 = vmul.f32 %v1496, %v1496
    %v1498 = vsel %vm284, %v1497, 0.0
    %1499 = vadd.xlane.f32.xlu0 %v1498
    %v1500 = vpop.xlane.xlu0 %1499
    %v1501 = vrot.slane %v1500, 4
    %v1502 = vadd.f32 %v1500, %v1501
    %v1503 = vrot.slane %v1502, 2
    %v1504 = vadd.f32 %v1502, %v1503
    %v1505 = vrot.slane %v1504, 1
    %v1506 = vadd.f32 %v1504, %v1505
    %s1507 = vtos %v1506
    %v1508 = vrcp.pop 256.0
    %s1509 = vtos %v1508
    %s1510 = smul.f32 %s1507, %s1509
    %s1511 = sadd.f32 %s1510, 1e-05
    %v1512 = vstv %s1511
    %v1513 = vrsqrt.pop %v1512
    %s1514 = vtos %v1513
    %v1515 = vstv %s1514
    %v1516 = vmul.f32 %v1496, %v1515
    %s1517 = scalar_lea.vmem %s1, 32
    %v1518 = vld [vmem:[%s1517] sm:$0xff]
    %v1519 = vld [vmem:[%s1517 + $0x8] sm:$0xff]
    %v1520 = vld [vmem:[%s1517 + $0x10] sm:$0xff]
    %v1521 = vld [vmem:[%s1517 + $0x18] sm:$0xff]
    %s1522 = scalar_lea.vmem [#allocation2], 1
    %v1523 = vld [vmem:[%s1522] sm:$0x1]
    %s1524 = scalar_lea.vmem %s3, 32
    %v1525 = vld [vmem:[%s1524] sm:$0xff]
    %v1526 = vld [vmem:[%s1524 + $0x8] sm:$0xff]
    %v1527 = vld [vmem:[%s1524 + $0x10] sm:$0xff]
    %v1528 = vld [vmem:[%s1524 + $0x18] sm:$0xff]
    %s1529 = scalar_lea.vmem [#allocation5], 1
    %v1530 = vld [vmem:[%s1529] sm:$0x1]
    %s1531 = scalar_lea.vmem %s5, 32
    %v1532 = vld [vmem:[%s1531] sm:$0xff]
    %v1533 = vld [vmem:[%s1531 + $0x8] sm:$0xff]
    %v1534 = vld [vmem:[%s1531 + $0x10] sm:$0xff]
    %v1535 = vld [vmem:[%s1531 + $0x18] sm:$0xff]
    %s1536 = scalar_lea.vmem [#allocation7], 1
    %v1537 = vld [vmem:[%s1536] sm:$0x1]
    %s1538 = scalar_lea.vmem %s7, 32
    %v1539 = vld [vmem:[%s1538] sm:$0xff]
    %v1540 = vld [vmem:[%s1538 + $0x8] sm:$0xff]
    %v1541 = vld [vmem:[%s1538 + $0x10] sm:$0xff]
    %v1542 = vld [vmem:[%s1538 + $0x18] sm:$0xff]
    %s1543 = scalar_lea.vmem [#allocation8], 1
    %v1544 = vld [vmem:[%s1543] sm:$0x1]
    %v1546 = vlaneseq
    %v1547 = vshrl.u32 %v1546, 7
    %v1548 = vsub.s32 0, %v1547
    %v1549 = vrot.slane %v1523, %v1548
    %v1552 = vsel %vm284, %v1516, 0
    %1554 = vmatprep.subr.mxu0 0.0
    %1555 = vmatpush1.msra.mxu0 0.0
    %1556 = vmatprep.subr.mxu0 0.0
    %1557 = vmatpush1.msra.mxu0 0.0
    %1558 = vmatprep.subr.mxu0 0.0
    %1559 = vmatpush1.msra.mxu0 0.0
    %1560 = vmatprep.subr.mxu0 0.0
    %1561 = vmatpush1.msra.mxu0 0.0
    %1562 = vmatprep.subr.mxu0 0.0
    %1563 = vmatpush1.msra.mxu0 0.0
    %1564 = vmatprep.subr.mxu0 0.0
    %1565 = vmatpush1.msra.mxu0 0.0
    %1566 = vmatprep.subr.mxu0 0.0
    %1567 = vmatpush1.msra.mxu0 0.0
    %1568 = vmatprep.subr.mxu0 0.0
    %1569 = vmatpush1.msra.mxu0 0.0
    %1570 = vmatprep.subr.mxu0 0.0
    %1571 = vmatpush1.msra.mxu0 0.0
    %1572 = vmatprep.subr.mxu0 0.0
    %1573 = vmatpush1.msra.mxu0 0.0
    %1574 = vmatprep.subr.mxu0 0.0
    %1575 = vmatpush1.msra.mxu0 0.0
    %1576 = vmatprep.subr.mxu0 0.0
    %1577 = vmatpush1.msra.mxu0 0.0
    %1578 = vmatprep.subr.mxu0 0.0
    %1579 = vmatpush1.msra.mxu0 %v1521
    %1580 = vmatprep.subr.mxu0 0.0
    %1581 = vmatpush1.msra.mxu0 %v1520
    %1582 = vmatprep.subr.mxu0 0.0
    %1583 = vmatpush1.msra.mxu0 %v1519
    %1584 = vmatprep.subr.mxu0 0.0
    %1585 = vmatpush1.msra.mxu0 %v1518
    %1586 = vmatprep.subr.mxu0 0.0
    %1587 = vmatpush2.msra.mxu0 0.0
    %1588 = vmatprep.subr.mxu0 0.0
    %1589 = vmatpush2.msra.mxu0 0.0
    %1590 = vmatprep.subr.mxu0 0.0
    %1591 = vmatpush2.msra.mxu0 0.0
    %1592 = vmatprep.subr.mxu0 0.0
    %1593 = vmatpush2.msra.mxu0 0.0
    %1594 = vmatprep.subr.mxu0 0.0
    %1595 = vmatpush2.msra.mxu0 0.0
    %1596 = vmatprep.subr.mxu0 0.0
    %1597 = vmatpush2.msra.mxu0 0.0
    %1598 = vmatprep.subr.mxu0 0.0
    %1599 = vmatpush2.msra.mxu0 0.0
    %1600 = vmatprep.subr.mxu0 0.0
    %1601 = vmatpush2.msra.mxu0 0.0
    %1602 = vmatprep.subr.mxu0 0.0
    %1603 = vmatpush2.msra.mxu0 0.0
    %1604 = vmatprep.subr.mxu0 0.0
    %1605 = vmatpush2.msra.mxu0 0.0
    %1606 = vmatprep.subr.mxu0 0.0
    %1607 = vmatpush2.msra.mxu0 0.0
    %1608 = vmatprep.subr.mxu0 0.0
    %1609 = vmatpush2.msra.mxu0 0.0
    %1610 = vmatprep.subr.mxu0 0.0
    %1611 = vmatpush2.msra.mxu0 0.0
    %1612 = vmatprep.subr.mxu0 0.0
    %1613 = vmatpush2.msra.mxu0 0.0
    %1614 = vmatprep.subr.mxu0 0.0
    %1615 = vmatpush2.msra.mxu0 0.0
    %1616 = vmatprep.subr.mxu0 0.0
    %1617 = vmatpush2.msra.mxu0 0.0
    %1618 = vmatprep.mubr.f32.mxu0 0.0
    %1619 = vmatmul.mubr.f32.gmra.mxu0 %v1552
    %v1620 = vpop.f32.mrf.mxu0
    %v1621 = vadd.f32 %v1549, %v1620
    %v1622 = vpop.f32.mrf.mxu0
    %1623 = vdwg.mxu0
    %v1625 = vlaneseq
    %v1626 = vshrl.u32 %v1625, 7
    %v1627 = vsub.s32 0, %v1626
    %v1628 = vrot.slane %v1530, %v1627
    %1630 = vmatprep.subr.mxu0 0.0
    %1631 = vmatpush1.msra.mxu0 0.0
    %1632 = vmatprep.subr.mxu0 0.0
    %1633 = vmatpush1.msra.mxu0 0.0
    %1634 = vmatprep.subr.mxu0 0.0
    %1635 = vmatpush1.msra.mxu0 0.0
    %1636 = vmatprep.subr.mxu0 0.0
    %1637 = vmatpush1.msra.mxu0 0.0
    %1638 = vmatprep.subr.mxu0 0.0
    %1639 = vmatpush1.msra.mxu0 0.0
    %1640 = vmatprep.subr.mxu0 0.0
    %1641 = vmatpush1.msra.mxu0 0.0
    %1642 = vmatprep.subr.mxu0 0.0
    %1643 = vmatpush1.msra.mxu0 0.0
    %1644 = vmatprep.subr.mxu0 0.0
    %1645 = vmatpush1.msra.mxu0 0.0
    %1646 = vmatprep.subr.mxu0 0.0
    %1647 = vmatpush1.msra.mxu0 0.0
    %1648 = vmatprep.subr.mxu0 0.0
    %1649 = vmatpush1.msra.mxu0 0.0
    %1650 = vmatprep.subr.mxu0 0.0
    %1651 = vmatpush1.msra.mxu0 0.0
    %1652 = vmatprep.subr.mxu0 0.0
    %1653 = vmatpush1.msra.mxu0 0.0
    %1654 = vmatprep.subr.mxu0 0.0
    %1655 = vmatpush1.msra.mxu0 %v1528
    %1656 = vmatprep.subr.mxu0 0.0
    %1657 = vmatpush1.msra.mxu0 %v1527
    %1658 = vmatprep.subr.mxu0 0.0
    %1659 = vmatpush1.msra.mxu0 %v1526
    %1660 = vmatprep.subr.mxu0 0.0
    %1661 = vmatpush1.msra.mxu0 %v1525
    %1662 = vmatprep.subr.mxu0 0.0
    %1663 = vmatpush2.msra.mxu0 0.0
    %1664 = vmatprep.subr.mxu0 0.0
    %1665 = vmatpush2.msra.mxu0 0.0
    %1666 = vmatprep.subr.mxu0 0.0
    %1667 = vmatpush2.msra.mxu0 0.0
    %1668 = vmatprep.subr.mxu0 0.0
    %1669 = vmatpush2.msra.mxu0 0.0
    %1670 = vmatprep.subr.mxu0 0.0
    %1671 = vmatpush2.msra.mxu0 0.0
    %1672 = vmatprep.subr.mxu0 0.0
    %1673 = vmatpush2.msra.mxu0 0.0
    %1674 = vmatprep.subr.mxu0 0.0
    %1675 = vmatpush2.msra.mxu0 0.0
    %1676 = vmatprep.subr.mxu0 0.0
    %1677 = vmatpush2.msra.mxu0 0.0
    %1678 = vmatprep.subr.mxu0 0.0
    %1679 = vmatpush2.msra.mxu0 0.0
    %1680 = vmatprep.subr.mxu0 0.0
    %1681 = vmatpush2.msra.mxu0 0.0
    %1682 = vmatprep.subr.mxu0 0.0
    %1683 = vmatpush2.msra.mxu0 0.0
    %1684 = vmatprep.subr.mxu0 0.0
    %1685 = vmatpush2.msra.mxu0 0.0
    %1686 = vmatprep.subr.mxu0 0.0
    %1687 = vmatpush2.msra.mxu0 0.0
    %1688 = vmatprep.subr.mxu0 0.0
    %1689 = vmatpush2.msra.mxu0 0.0
    %1690 = vmatprep.subr.mxu0 0.0
    %1691 = vmatpush2.msra.mxu0 0.0
    %1692 = vmatprep.subr.mxu0 0.0
    %1693 = vmatpush2.msra.mxu0 0.0
    %1694 = vmatprep.mubr.f32.mxu0 0.0
    %1695 = vmatmul.mubr.f32.gmra.mxu0 %v1552
    %v1696 = vpop.f32.mrf.mxu0
    %v1697 = vadd.f32 %v1628, %v1696
    %v1698 = vpop.f32.mrf.mxu0
    %1699 = vdwg.mxu0
    %v1701 = vlaneseq
    %v1702 = vshrl.u32 %v1701, 7
    %v1703 = vsub.s32 0, %v1702
    %v1704 = vrot.slane %v1537, %v1703
    %1706 = vmatprep.subr.mxu0 0.0
    %1707 = vmatpush1.msra.mxu0 0.0
    %1708 = vmatprep.subr.mxu0 0.0
    %1709 = vmatpush1.msra.mxu0 0.0
    %1710 = vmatprep.subr.mxu0 0.0
    %1711 = vmatpush1.msra.mxu0 0.0
    %1712 = vmatprep.subr.mxu0 0.0
    %1713 = vmatpush1.msra.mxu0 0.0
    %1714 = vmatprep.subr.mxu0 0.0
    %1715 = vmatpush1.msra.mxu0 0.0
    %1716 = vmatprep.subr.mxu0 0.0
    %1717 = vmatpush1.msra.mxu0 0.0
    %1718 = vmatprep.subr.mxu0 0.0
    %1719 = vmatpush1.msra.mxu0 0.0
    %1720 = vmatprep.subr.mxu0 0.0
    %1721 = vmatpush1.msra.mxu0 0.0
    %1722 = vmatprep.subr.mxu0 0.0
    %1723 = vmatpush1.msra.mxu0 0.0
    %1724 = vmatprep.subr.mxu0 0.0
    %1725 = vmatpush1.msra.mxu0 0.0
    %1726 = vmatprep.subr.mxu0 0.0
    %1727 = vmatpush1.msra.mxu0 0.0
    %1728 = vmatprep.subr.mxu0 0.0
    %1729 = vmatpush1.msra.mxu0 0.0
    %1730 = vmatprep.subr.mxu0 0.0
    %1731 = vmatpush1.msra.mxu0 %v1535
    %1732 = vmatprep.subr.mxu0 0.0
    %1733 = vmatpush1.msra.mxu0 %v1534
    %1734 = vmatprep.subr.mxu0 0.0
    %1735 = vmatpush1.msra.mxu0 %v1533
    %1736 = vmatprep.subr.mxu0 0.0
    %1737 = vmatpush1.msra.mxu0 %v1532
    %1738 = vmatprep.subr.mxu0 0.0
    %1739 = vmatpush2.msra.mxu0 0.0
    %1740 = vmatprep.subr.mxu0 0.0
    %1741 = vmatpush2.msra.mxu0 0.0
    %1742 = vmatprep.subr.mxu0 0.0
    %1743 = vmatpush2.msra.mxu0 0.0
    %1744 = vmatprep.subr.mxu0 0.0
    %1745 = vmatpush2.msra.mxu0 0.0
    %1746 = vmatprep.subr.mxu0 0.0
    %1747 = vmatpush2.msra.mxu0 0.0
    %1748 = vmatprep.subr.mxu0 0.0
    %1749 = vmatpush2.msra.mxu0 0.0
    %1750 = vmatprep.subr.mxu0 0.0
    %1751 = vmatpush2.msra.mxu0 0.0
    %1752 = vmatprep.subr.mxu0 0.0
    %1753 = vmatpush2.msra.mxu0 0.0
    %1754 = vmatprep.subr.mxu0 0.0
    %1755 = vmatpush2.msra.mxu0 0.0
    %1756 = vmatprep.subr.mxu0 0.0
    %1757 = vmatpush2.msra.mxu0 0.0
    %1758 = vmatprep.subr.mxu0 0.0
    %1759 = vmatpush2.msra.mxu0 0.0
    %1760 = vmatprep.subr.mxu0 0.0
    %1761 = vmatpush2.msra.mxu0 0.0
    %1762 = vmatprep.subr.mxu0 0.0
    %1763 = vmatpush2.msra.mxu0 0.0
    %1764 = vmatprep.subr.mxu0 0.0
    %1765 = vmatpush2.msra.mxu0 0.0
    %1766 = vmatprep.subr.mxu0 0.0
    %1767 = vmatpush2.msra.mxu0 0.0
    %1768 = vmatprep.subr.mxu0 0.0
    %1769 = vmatpush2.msra.mxu0 0.0
    %1770 = vmatprep.mubr.f32.mxu0 0.0
    %1771 = vmatmul.mubr.f32.gmra.mxu0 %v1552
    %v1772 = vpop.f32.mrf.mxu0
    %v1773 = vadd.f32 %v1704, %v1772
    %v1774 = vpop.f32.mrf.mxu0
    %1775 = vdwg.mxu0
    %v1777 = vsel %vm510, %v1621, 0
    %v1780 = vsel %vm510, %v1697, 0
    %1782 = vmatprep.subr.mxu0 0.0
    %1783 = vmatpush1.xpose.msra.mxu0 0.0
    %1784 = vmatprep.subr.mxu0 0.0
    %1785 = vmatpush1.xpose.msra.mxu0 0.0
    %1786 = vmatprep.subr.mxu0 0.0
    %1787 = vmatpush1.xpose.msra.mxu0 0.0
    %1788 = vmatprep.subr.mxu0 0.0
    %1789 = vmatpush1.xpose.msra.mxu0 0.0
    %1790 = vmatprep.subr.mxu0 0.0
    %1791 = vmatpush1.xpose.msra.mxu0 0.0
    %1792 = vmatprep.subr.mxu0 0.0
    %1793 = vmatpush1.xpose.msra.mxu0 0.0
    %1794 = vmatprep.subr.mxu0 0.0
    %1795 = vmatpush1.xpose.msra.mxu0 0.0
    %1796 = vmatprep.subr.mxu0 0.0
    %1797 = vmatpush1.xpose.msra.mxu0 0.0
    %1798 = vmatprep.subr.mxu0 0.0
    %1799 = vmatpush1.xpose.msra.mxu0 0.0
    %1800 = vmatprep.subr.mxu0 0.0
    %1801 = vmatpush1.xpose.msra.mxu0 0.0
    %1802 = vmatprep.subr.mxu0 0.0
    %1803 = vmatpush1.xpose.msra.mxu0 0.0
    %1804 = vmatprep.subr.mxu0 0.0
    %1805 = vmatpush1.xpose.msra.mxu0 0.0
    %1806 = vmatprep.subr.mxu0 0.0
    %1807 = vmatpush1.xpose.msra.mxu0 0.0
    %1808 = vmatprep.subr.mxu0 0.0
    %1809 = vmatpush1.xpose.msra.mxu0 0.0
    %1810 = vmatprep.subr.mxu0 0.0
    %1811 = vmatpush1.xpose.msra.mxu0 0.0
    %1812 = vmatprep.subr.mxu0 0.0
    %1813 = vmatpush1.xpose.msra.mxu0 %v1780
    %1814 = vmatprep.subr.mxu0 0.0
    %1815 = vmatpush2.xpose.msra.mxu0 0.0
    %1816 = vmatprep.subr.mxu0 0.0
    %1817 = vmatpush2.xpose.msra.mxu0 0.0
    %1818 = vmatprep.subr.mxu0 0.0
    %1819 = vmatpush2.xpose.msra.mxu0 0.0
    %1820 = vmatprep.subr.mxu0 0.0
    %1821 = vmatpush2.xpose.msra.mxu0 0.0
    %1822 = vmatprep.subr.mxu0 0.0
    %1823 = vmatpush2.xpose.msra.mxu0 0.0
    %1824 = vmatprep.subr.mxu0 0.0
    %1825 = vmatpush2.xpose.msra.mxu0 0.0
    %1826 = vmatprep.subr.mxu0 0.0
    %1827 = vmatpush2.xpose.msra.mxu0 0.0
    %1828 = vmatprep.subr.mxu0 0.0
    %1829 = vmatpush2.xpose.msra.mxu0 0.0
    %1830 = vmatprep.subr.mxu0 0.0
    %1831 = vmatpush2.xpose.msra.mxu0 0.0
    %1832 = vmatprep.subr.mxu0 0.0
    %1833 = vmatpush2.xpose.msra.mxu0 0.0
    %1834 = vmatprep.subr.mxu0 0.0
    %1835 = vmatpush2.xpose.msra.mxu0 0.0
    %1836 = vmatprep.subr.mxu0 0.0
    %1837 = vmatpush2.xpose.msra.mxu0 0.0
    %1838 = vmatprep.subr.mxu0 0.0
    %1839 = vmatpush2.xpose.msra.mxu0 0.0
    %1840 = vmatprep.subr.mxu0 0.0
    %1841 = vmatpush2.xpose.msra.mxu0 0.0
    %1842 = vmatprep.subr.mxu0 0.0
    %1843 = vmatpush2.xpose.msra.mxu0 0.0
    %1844 = vmatprep.subr.mxu0 0.0
    %1845 = vmatpush2.xpose.msra.mxu0 0.0
    %1846 = vmatprep.mubr.f32.mxu0 0.0
    %1847 = vmatmul.mubr.f32.gmra.mxu0 %v1777
    %v1848 = vpop.f32.mrf.mxu0
    %v1849 = vadd.f32 0.0, %v1848
    %v1850 = vpop.f32.mrf.mxu0
    %1851 = vdwg.mxu0
    %v1852 = vmul.f32 %v1849, 0.35355338
    %v1853 = vsel %vm510, %v1852, -inf
    %1854 = vmax.xlane.f32.xlu0 %v1853
    %v1855 = vpop.xlane.xlu0 %1854
    %v1856 = vsub.f32 %v1852, %v1855
    %v1857 = vmul.f32 %v1856, 1.442695
    %v1858 = vpow.pop %v1857
    %v1859 = vsel %vm510, %v1858, 0.0
    %1860 = vadd.xlane.f32.xlu0 %v1859
    %v1861 = vpop.xlane.xlu0 %1860
    %v1862 = vrcp.pop %v1861
    %v1863 = vmul.f32 %v1858, %v1862
    %v1865 = vsel %vm510, %v1863, 0
    %1867 = vmatprep.subr.mxu0 0.0
    %1868 = vmatpush1.msra.mxu0 0.0
    %1869 = vmatprep.subr.mxu0 0.0
    %1870 = vmatpush1.msra.mxu0 0.0
    %1871 = vmatprep.subr.mxu0 0.0
    %1872 = vmatpush1.msra.mxu0 0.0
    %1873 = vmatprep.subr.mxu0 0.0
    %1874 = vmatpush1.msra.mxu0 0.0
    %1875 = vmatprep.subr.mxu0 0.0
    %1876 = vmatpush1.msra.mxu0 0.0
    %1877 = vmatprep.subr.mxu0 0.0
    %1878 = vmatpush1.msra.mxu0 0.0
    %1879 = vmatprep.subr.mxu0 0.0
    %1880 = vmatpush1.msra.mxu0 0.0
    %1881 = vmatprep.subr.mxu0 0.0
    %1882 = vmatpush1.msra.mxu0 0.0
    %1883 = vmatprep.subr.mxu0 0.0
    %1884 = vmatpush1.msra.mxu0 0.0
    %1885 = vmatprep.subr.mxu0 0.0
    %1886 = vmatpush1.msra.mxu0 0.0
    %1887 = vmatprep.subr.mxu0 0.0
    %1888 = vmatpush1.msra.mxu0 0.0
    %1889 = vmatprep.subr.mxu0 0.0
    %1890 = vmatpush1.msra.mxu0 0.0
    %1891 = vmatprep.subr.mxu0 0.0
    %1892 = vmatpush1.msra.mxu0 0.0
    %1893 = vmatprep.subr.mxu0 0.0
    %1894 = vmatpush1.msra.mxu0 0.0
    %1895 = vmatprep.subr.mxu0 0.0
    %1896 = vmatpush1.msra.mxu0 0.0
    %1897 = vmatprep.subr.mxu0 0.0
    %1898 = vmatpush1.msra.mxu0 %v1773
    %1899 = vmatprep.subr.mxu0 0.0
    %1900 = vmatpush2.msra.mxu0 0.0
    %1901 = vmatprep.subr.mxu0 0.0
    %1902 = vmatpush2.msra.mxu0 0.0
    %1903 = vmatprep.subr.mxu0 0.0
    %1904 = vmatpush2.msra.mxu0 0.0
    %1905 = vmatprep.subr.mxu0 0.0
    %1906 = vmatpush2.msra.mxu0 0.0
    %1907 = vmatprep.subr.mxu0 0.0
    %1908 = vmatpush2.msra.mxu0 0.0
    %1909 = vmatprep.subr.mxu0 0.0
    %1910 = vmatpush2.msra.mxu0 0.0
    %1911 = vmatprep.subr.mxu0 0.0
    %1912 = vmatpush2.msra.mxu0 0.0
    %1913 = vmatprep.subr.mxu0 0.0
    %1914 = vmatpush2.msra.mxu0 0.0
    %1915 = vmatprep.subr.mxu0 0.0
    %1916 = vmatpush2.msra.mxu0 0.0
    %1917 = vmatprep.subr.mxu0 0.0
    %1918 = vmatpush2.msra.mxu0 0.0
    %1919 = vmatprep.subr.mxu0 0.0
    %1920 = vmatpush2.msra.mxu0 0.0
    %1921 = vmatprep.subr.mxu0 0.0
    %1922 = vmatpush2.msra.mxu0 0.0
    %1923 = vmatprep.subr.mxu0 0.0
    %1924 = vmatpush2.msra.mxu0 0.0
    %1925 = vmatprep.subr.mxu0 0.0
    %1926 = vmatpush2.msra.mxu0 0.0
    %1927 = vmatprep.subr.mxu0 0.0
    %1928 = vmatpush2.msra.mxu0 0.0
    %1929 = vmatprep.subr.mxu0 0.0
    %1930 = vmatpush2.msra.mxu0 0.0
    %1931 = vmatprep.mubr.f32.mxu0 0.0
    %1932 = vmatmul.mubr.f32.gmra.mxu0 %v1865
    %v1933 = vpop.f32.mrf.mxu0
    %v1934 = vadd.f32 0.0, %v1933
    %v1935 = vpop.f32.mrf.mxu0
    %1936 = vdwg.mxu0
    %1937 = vrot.lane.b32.xlu0 %v1621, 120
    %v1938 = vpop.permute.xlu0 %1937
    %1939 = vrot.lane.b32.xlu0 %v1697, 120
    %v1940 = vpop.permute.xlu0 %1939
    %v1941 = vsel %vm510, %v1938, 0
    %v1943 = vsel %vm510, %v1940, 0
    %1945 = vmatprep.subr.mxu0 0.0
    %1946 = vmatpush1.xpose.msra.mxu0 0.0
    %1947 = vmatprep.subr.mxu0 0.0
    %1948 = vmatpush1.xpose.msra.mxu0 0.0
    %1949 = vmatprep.subr.mxu0 0.0
    %1950 = vmatpush1.xpose.msra.mxu0 0.0
    %1951 = vmatprep.subr.mxu0 0.0
    %1952 = vmatpush1.xpose.msra.mxu0 0.0
    %1953 = vmatprep.subr.mxu0 0.0
    %1954 = vmatpush1.xpose.msra.mxu0 0.0
    %1955 = vmatprep.subr.mxu0 0.0
    %1956 = vmatpush1.xpose.msra.mxu0 0.0
    %1957 = vmatprep.subr.mxu0 0.0
    %1958 = vmatpush1.xpose.msra.mxu0 0.0
    %1959 = vmatprep.subr.mxu0 0.0
    %1960 = vmatpush1.xpose.msra.mxu0 0.0
    %1961 = vmatprep.subr.mxu0 0.0
    %1962 = vmatpush1.xpose.msra.mxu0 0.0
    %1963 = vmatprep.subr.mxu0 0.0
    %1964 = vmatpush1.xpose.msra.mxu0 0.0
    %1965 = vmatprep.subr.mxu0 0.0
    %1966 = vmatpush1.xpose.msra.mxu0 0.0
    %1967 = vmatprep.subr.mxu0 0.0
    %1968 = vmatpush1.xpose.msra.mxu0 0.0
    %1969 = vmatprep.subr.mxu0 0.0
    %1970 = vmatpush1.xpose.msra.mxu0 0.0
    %1971 = vmatprep.subr.mxu0 0.0
    %1972 = vmatpush1.xpose.msra.mxu0 0.0
    %1973 = vmatprep.subr.mxu0 0.0
    %1974 = vmatpush1.xpose.msra.mxu0 0.0
    %1975 = vmatprep.subr.mxu0 0.0
    %1976 = vmatpush1.xpose.msra.mxu0 %v1943
    %1977 = vmatprep.subr.mxu0 0.0
    %1978 = vmatpush2.xpose.msra.mxu0 0.0
    %1979 = vmatprep.subr.mxu0 0.0
    %1980 = vmatpush2.xpose.msra.mxu0 0.0
    %1981 = vmatprep.subr.mxu0 0.0
    %1982 = vmatpush2.xpose.msra.mxu0 0.0
    %1983 = vmatprep.subr.mxu0 0.0
    %1984 = vmatpush2.xpose.msra.mxu0 0.0
    %1985 = vmatprep.subr.mxu0 0.0
    %1986 = vmatpush2.xpose.msra.mxu0 0.0
    %1987 = vmatprep.subr.mxu0 0.0
    %1988 = vmatpush2.xpose.msra.mxu0 0.0
    %1989 = vmatprep.subr.mxu0 0.0
    %1990 = vmatpush2.xpose.msra.mxu0 0.0
    %1991 = vmatprep.subr.mxu0 0.0
    %1992 = vmatpush2.xpose.msra.mxu0 0.0
    %1993 = vmatprep.subr.mxu0 0.0
    %1994 = vmatpush2.xpose.msra.mxu0 0.0
    %1995 = vmatprep.subr.mxu0 0.0
    %1996 = vmatpush2.xpose.msra.mxu0 0.0
    %1997 = vmatprep.subr.mxu0 0.0
    %1998 = vmatpush2.xpose.msra.mxu0 0.0
    %1999 = vmatprep.subr.mxu0 0.0
    %2000 = vmatpush2.xpose.msra.mxu0 0.0
    %2001 = vmatprep.subr.mxu0 0.0
    %2002 = vmatpush2.xpose.msra.mxu0 0.0
    %2003 = vmatprep.subr.mxu0 0.0
    %2004 = vmatpush2.xpose.msra.mxu0 0.0
    %2005 = vmatprep.subr.mxu0 0.0
    %2006 = vmatpush2.xpose.msra.mxu0 0.0
    %2007 = vmatprep.subr.mxu0 0.0
    %2008 = vmatpush2.xpose.msra.mxu0 0.0
    %2009 = vmatprep.mubr.f32.mxu0 0.0
    %2010 = vmatmul.mubr.f32.gmra.mxu0 %v1941
    %v2011 = vpop.f32.mrf.mxu0
    %v2012 = vadd.f32 0.0, %v2011
    %v2013 = vpop.f32.mrf.mxu0
    %2014 = vdwg.mxu0
    %v2015 = vmul.f32 %v2012, 0.35355338
    %v2016 = vsel %vm510, %v2015, -inf
    %2017 = vmax.xlane.f32.xlu0 %v2016
    %v2018 = vpop.xlane.xlu0 %2017
    %v2019 = vsub.f32 %v2015, %v2018
    %v2020 = vmul.f32 %v2019, 1.442695
    %v2021 = vpow.pop %v2020
    %v2022 = vsel %vm510, %v2021, 0.0
    %2023 = vadd.xlane.f32.xlu0 %v2022
    %v2024 = vpop.xlane.xlu0 %2023
    %v2025 = vrcp.pop %v2024
    %v2026 = vmul.f32 %v2021, %v2025
    %2028 = vrot.lane.b32.xlu0 %v1773, 120
    %v2029 = vpop.permute.xlu0 %2028
    %v2032 = vsel %vm510, %v2026, 0
    %2034 = vmatprep.subr.mxu0 0.0
    %2035 = vmatpush1.msra.mxu0 0.0
    %2036 = vmatprep.subr.mxu0 0.0
    %2037 = vmatpush1.msra.mxu0 0.0
    %2038 = vmatprep.subr.mxu0 0.0
    %2039 = vmatpush1.msra.mxu0 0.0
    %2040 = vmatprep.subr.mxu0 0.0
    %2041 = vmatpush1.msra.mxu0 0.0
    %2042 = vmatprep.subr.mxu0 0.0
    %2043 = vmatpush1.msra.mxu0 0.0
    %2044 = vmatprep.subr.mxu0 0.0
    %2045 = vmatpush1.msra.mxu0 0.0
    %2046 = vmatprep.subr.mxu0 0.0
    %2047 = vmatpush1.msra.mxu0 0.0
    %2048 = vmatprep.subr.mxu0 0.0
    %2049 = vmatpush1.msra.mxu0 0.0
    %2050 = vmatprep.subr.mxu0 0.0
    %2051 = vmatpush1.msra.mxu0 0.0
    %2052 = vmatprep.subr.mxu0 0.0
    %2053 = vmatpush1.msra.mxu0 0.0
    %2054 = vmatprep.subr.mxu0 0.0
    %2055 = vmatpush1.msra.mxu0 0.0
    %2056 = vmatprep.subr.mxu0 0.0
    %2057 = vmatpush1.msra.mxu0 0.0
    %2058 = vmatprep.subr.mxu0 0.0
    %2059 = vmatpush1.msra.mxu0 0.0
    %2060 = vmatprep.subr.mxu0 0.0
    %2061 = vmatpush1.msra.mxu0 0.0
    %2062 = vmatprep.subr.mxu0 0.0
    %2063 = vmatpush1.msra.mxu0 0.0
    %2064 = vmatprep.subr.mxu0 0.0
    %2065 = vmatpush1.msra.mxu0 %v2029
    %2066 = vmatprep.subr.mxu0 0.0
    %2067 = vmatpush2.msra.mxu0 0.0
    %2068 = vmatprep.subr.mxu0 0.0
    %2069 = vmatpush2.msra.mxu0 0.0
    %2070 = vmatprep.subr.mxu0 0.0
    %2071 = vmatpush2.msra.mxu0 0.0
    %2072 = vmatprep.subr.mxu0 0.0
    %2073 = vmatpush2.msra.mxu0 0.0
    %2074 = vmatprep.subr.mxu0 0.0
    %2075 = vmatpush2.msra.mxu0 0.0
    %2076 = vmatprep.subr.mxu0 0.0
    %2077 = vmatpush2.msra.mxu0 0.0
    %2078 = vmatprep.subr.mxu0 0.0
    %2079 = vmatpush2.msra.mxu0 0.0
    %2080 = vmatprep.subr.mxu0 0.0
    %2081 = vmatpush2.msra.mxu0 0.0
    %2082 = vmatprep.subr.mxu0 0.0
    %2083 = vmatpush2.msra.mxu0 0.0
    %2084 = vmatprep.subr.mxu0 0.0
    %2085 = vmatpush2.msra.mxu0 0.0
    %2086 = vmatprep.subr.mxu0 0.0
    %2087 = vmatpush2.msra.mxu0 0.0
    %2088 = vmatprep.subr.mxu0 0.0
    %2089 = vmatpush2.msra.mxu0 0.0
    %2090 = vmatprep.subr.mxu0 0.0
    %2091 = vmatpush2.msra.mxu0 0.0
    %2092 = vmatprep.subr.mxu0 0.0
    %2093 = vmatpush2.msra.mxu0 0.0
    %2094 = vmatprep.subr.mxu0 0.0
    %2095 = vmatpush2.msra.mxu0 0.0
    %2096 = vmatprep.subr.mxu0 0.0
    %2097 = vmatpush2.msra.mxu0 0.0
    %2098 = vmatprep.mubr.f32.mxu0 0.0
    %2099 = vmatmul.mubr.f32.gmra.mxu0 %v2032
    %v2100 = vpop.f32.mrf.mxu0
    %v2101 = vadd.f32 0.0, %v2100
    %v2102 = vpop.f32.mrf.mxu0
    %2103 = vdwg.mxu0
    %2104 = vrot.lane.b32.xlu0 %v1621, 112
    %v2105 = vpop.permute.xlu0 %2104
    %2106 = vrot.lane.b32.xlu0 %v1697, 112
    %v2107 = vpop.permute.xlu0 %2106
    %v2108 = vsel %vm510, %v2105, 0
    %v2110 = vsel %vm510, %v2107, 0
    %2112 = vmatprep.subr.mxu0 0.0
    %2113 = vmatpush1.xpose.msra.mxu0 0.0
    %2114 = vmatprep.subr.mxu0 0.0
    %2115 = vmatpush1.xpose.msra.mxu0 0.0
    %2116 = vmatprep.subr.mxu0 0.0
    %2117 = vmatpush1.xpose.msra.mxu0 0.0
    %2118 = vmatprep.subr.mxu0 0.0
    %2119 = vmatpush1.xpose.msra.mxu0 0.0
    %2120 = vmatprep.subr.mxu0 0.0
    %2121 = vmatpush1.xpose.msra.mxu0 0.0
    %2122 = vmatprep.subr.mxu0 0.0
    %2123 = vmatpush1.xpose.msra.mxu0 0.0
    %2124 = vmatprep.subr.mxu0 0.0
    %2125 = vmatpush1.xpose.msra.mxu0 0.0
    %2126 = vmatprep.subr.mxu0 0.0
    %2127 = vmatpush1.xpose.msra.mxu0 0.0
    %2128 = vmatprep.subr.mxu0 0.0
    %2129 = vmatpush1.xpose.msra.mxu0 0.0
    %2130 = vmatprep.subr.mxu0 0.0
    %2131 = vmatpush1.xpose.msra.mxu0 0.0
    %2132 = vmatprep.subr.mxu0 0.0
    %2133 = vmatpush1.xpose.msra.mxu0 0.0
    %2134 = vmatprep.subr.mxu0 0.0
    %2135 = vmatpush1.xpose.msra.mxu0 0.0
    %2136 = vmatprep.subr.mxu0 0.0
    %2137 = vmatpush1.xpose.msra.mxu0 0.0
    %2138 = vmatprep.subr.mxu0 0.0
    %2139 = vmatpush1.xpose.msra.mxu0 0.0
    %2140 = vmatprep.subr.mxu0 0.0
    %2141 = vmatpush1.xpose.msra.mxu0 0.0
    %2142 = vmatprep.subr.mxu0 0.0
    %2143 = vmatpush1.xpose.msra.mxu0 %v2110
    %2144 = vmatprep.subr.mxu0 0.0
    %2145 = vmatpush2.xpose.msra.mxu0 0.0
    %2146 = vmatprep.subr.mxu0 0.0
    %2147 = vmatpush2.xpose.msra.mxu0 0.0
    %2148 = vmatprep.subr.mxu0 0.0
    %2149 = vmatpush2.xpose.msra.mxu0 0.0
    %2150 = vmatprep.subr.mxu0 0.0
    %2151 = vmatpush2.xpose.msra.mxu0 0.0
    %2152 = vmatprep.subr.mxu0 0.0
    %2153 = vmatpush2.xpose.msra.mxu0 0.0
    %2154 = vmatprep.subr.mxu0 0.0
    %2155 = vmatpush2.xpose.msra.mxu0 0.0
    %2156 = vmatprep.subr.mxu0 0.0
    %2157 = vmatpush2.xpose.msra.mxu0 0.0
    %2158 = vmatprep.subr.mxu0 0.0
    %2159 = vmatpush2.xpose.msra.mxu0 0.0
    %2160 = vmatprep.subr.mxu0 0.0
    %2161 = vmatpush2.xpose.msra.mxu0 0.0
    %2162 = vmatprep.subr.mxu0 0.0
    %2163 = vmatpush2.xpose.msra.mxu0 0.0
    %2164 = vmatprep.subr.mxu0 0.0
    %2165 = vmatpush2.xpose.msra.mxu0 0.0
    %2166 = vmatprep.subr.mxu0 0.0
    %2167 = vmatpush2.xpose.msra.mxu0 0.0
    %2168 = vmatprep.subr.mxu0 0.0
    %2169 = vmatpush2.xpose.msra.mxu0 0.0
    %2170 = vmatprep.subr.mxu0 0.0
    %2171 = vmatpush2.xpose.msra.mxu0 0.0
    %2172 = vmatprep.subr.mxu0 0.0
    %2173 = vmatpush2.xpose.msra.mxu0 0.0
    %2174 = vmatprep.subr.mxu0 0.0
    %2175 = vmatpush2.xpose.msra.mxu0 0.0
    %2176 = vmatprep.mubr.f32.mxu0 0.0
    %2177 = vmatmul.mubr.f32.gmra.mxu0 %v2108
    %v2178 = vpop.f32.mrf.mxu0
    %v2179 = vadd.f32 0.0, %v2178
    %v2180 = vpop.f32.mrf.mxu0
    %2181 = vdwg.mxu0
    %v2182 = vmul.f32 %v2179, 0.35355338
    %v2183 = vsel %vm510, %v2182, -inf
    %2184 = vmax.xlane.f32.xlu0 %v2183
    %v2185 = vpop.xlane.xlu0 %2184
    %v2186 = vsub.f32 %v2182, %v2185
    %v2187 = vmul.f32 %v2186, 1.442695
    %v2188 = vpow.pop %v2187
    %v2189 = vsel %vm510, %v2188, 0.0
    %2190 = vadd.xlane.f32.xlu0 %v2189
    %v2191 = vpop.xlane.xlu0 %2190
    %v2192 = vrcp.pop %v2191
    %v2193 = vmul.f32 %v2188, %v2192
    %2194 = vrot.lane.b32.xlu0 %v1773, 112
    %v2195 = vpop.permute.xlu0 %2194
    %v2198 = vsel %vm510, %v2193, 0
    %2200 = vmatprep.subr.mxu0 0.0
    %2201 = vmatpush1.msra.mxu0 0.0
    %2202 = vmatprep.subr.mxu0 0.0
    %2203 = vmatpush1.msra.mxu0 0.0
    %2204 = vmatprep.subr.mxu0 0.0
    %2205 = vmatpush1.msra.mxu0 0.0
    %2206 = vmatprep.subr.mxu0 0.0
    %2207 = vmatpush1.msra.mxu0 0.0
    %2208 = vmatprep.subr.mxu0 0.0
    %2209 = vmatpush1.msra.mxu0 0.0
    %2210 = vmatprep.subr.mxu0 0.0
    %2211 = vmatpush1.msra.mxu0 0.0
    %2212 = vmatprep.subr.mxu0 0.0
    %2213 = vmatpush1.msra.mxu0 0.0
    %2214 = vmatprep.subr.mxu0 0.0
    %2215 = vmatpush1.msra.mxu0 0.0
    %2216 = vmatprep.subr.mxu0 0.0
    %2217 = vmatpush1.msra.mxu0 0.0
    %2218 = vmatprep.subr.mxu0 0.0
    %2219 = vmatpush1.msra.mxu0 0.0
    %2220 = vmatprep.subr.mxu0 0.0
    %2221 = vmatpush1.msra.mxu0 0.0
    %2222 = vmatprep.subr.mxu0 0.0
    %2223 = vmatpush1.msra.mxu0 0.0
    %2224 = vmatprep.subr.mxu0 0.0
    %2225 = vmatpush1.msra.mxu0 0.0
    %2226 = vmatprep.subr.mxu0 0.0
    %2227 = vmatpush1.msra.mxu0 0.0
    %2228 = vmatprep.subr.mxu0 0.0
    %2229 = vmatpush1.msra.mxu0 0.0
    %2230 = vmatprep.subr.mxu0 0.0
    %2231 = vmatpush1.msra.mxu0 %v2195
    %2232 = vmatprep.subr.mxu0 0.0
    %2233 = vmatpush2.msra.mxu0 0.0
    %2234 = vmatprep.subr.mxu0 0.0
    %2235 = vmatpush2.msra.mxu0 0.0
    %2236 = vmatprep.subr.mxu0 0.0
    %2237 = vmatpush2.msra.mxu0 0.0
    %2238 = vmatprep.subr.mxu0 0.0
    %2239 = vmatpush2.msra.mxu0 0.0
    %2240 = vmatprep.subr.mxu0 0.0
    %2241 = vmatpush2.msra.mxu0 0.0
    %2242 = vmatprep.subr.mxu0 0.0
    %2243 = vmatpush2.msra.mxu0 0.0
    %2244 = vmatprep.subr.mxu0 0.0
    %2245 = vmatpush2.msra.mxu0 0.0
    %2246 = vmatprep.subr.mxu0 0.0
    %2247 = vmatpush2.msra.mxu0 0.0
    %2248 = vmatprep.subr.mxu0 0.0
    %2249 = vmatpush2.msra.mxu0 0.0
    %2250 = vmatprep.subr.mxu0 0.0
    %2251 = vmatpush2.msra.mxu0 0.0
    %2252 = vmatprep.subr.mxu0 0.0
    %2253 = vmatpush2.msra.mxu0 0.0
    %2254 = vmatprep.subr.mxu0 0.0
    %2255 = vmatpush2.msra.mxu0 0.0
    %2256 = vmatprep.subr.mxu0 0.0
    %2257 = vmatpush2.msra.mxu0 0.0
    %2258 = vmatprep.subr.mxu0 0.0
    %2259 = vmatpush2.msra.mxu0 0.0
    %2260 = vmatprep.subr.mxu0 0.0
    %2261 = vmatpush2.msra.mxu0 0.0
    %2262 = vmatprep.subr.mxu0 0.0
    %2263 = vmatpush2.msra.mxu0 0.0
    %2264 = vmatprep.mubr.f32.mxu0 0.0
    %2265 = vmatmul.mubr.f32.gmra.mxu0 %v2198
    %v2266 = vpop.f32.mrf.mxu0
    %v2267 = vadd.f32 0.0, %v2266
    %v2268 = vpop.f32.mrf.mxu0
    %2269 = vdwg.mxu0
    %2270 = vrot.lane.b32.xlu0 %v1621, 104
    %v2271 = vpop.permute.xlu0 %2270
    %2272 = vrot.lane.b32.xlu0 %v1697, 104
    %v2273 = vpop.permute.xlu0 %2272
    %v2274 = vsel %vm510, %v2271, 0
    %v2276 = vsel %vm510, %v2273, 0
    %2278 = vmatprep.subr.mxu0 0.0
    %2279 = vmatpush1.xpose.msra.mxu0 0.0
    %2280 = vmatprep.subr.mxu0 0.0
    %2281 = vmatpush1.xpose.msra.mxu0 0.0
    %2282 = vmatprep.subr.mxu0 0.0
    %2283 = vmatpush1.xpose.msra.mxu0 0.0
    %2284 = vmatprep.subr.mxu0 0.0
    %2285 = vmatpush1.xpose.msra.mxu0 0.0
    %2286 = vmatprep.subr.mxu0 0.0
    %2287 = vmatpush1.xpose.msra.mxu0 0.0
    %2288 = vmatprep.subr.mxu0 0.0
    %2289 = vmatpush1.xpose.msra.mxu0 0.0
    %2290 = vmatprep.subr.mxu0 0.0
    %2291 = vmatpush1.xpose.msra.mxu0 0.0
    %2292 = vmatprep.subr.mxu0 0.0
    %2293 = vmatpush1.xpose.msra.mxu0 0.0
    %2294 = vmatprep.subr.mxu0 0.0
    %2295 = vmatpush1.xpose.msra.mxu0 0.0
    %2296 = vmatprep.subr.mxu0 0.0
    %2297 = vmatpush1.xpose.msra.mxu0 0.0
    %2298 = vmatprep.subr.mxu0 0.0
    %2299 = vmatpush1.xpose.msra.mxu0 0.0
    %2300 = vmatprep.subr.mxu0 0.0
    %2301 = vmatpush1.xpose.msra.mxu0 0.0
    %2302 = vmatprep.subr.mxu0 0.0
    %2303 = vmatpush1.xpose.msra.mxu0 0.0
    %2304 = vmatprep.subr.mxu0 0.0
    %2305 = vmatpush1.xpose.msra.mxu0 0.0
    %2306 = vmatprep.subr.mxu0 0.0
    %2307 = vmatpush1.xpose.msra.mxu0 0.0
    %2308 = vmatprep.subr.mxu0 0.0
    %2309 = vmatpush1.xpose.msra.mxu0 %v2276
    %2310 = vmatprep.subr.mxu0 0.0
    %2311 = vmatpush2.xpose.msra.mxu0 0.0
    %2312 = vmatprep.subr.mxu0 0.0
    %2313 = vmatpush2.xpose.msra.mxu0 0.0
    %2314 = vmatprep.subr.mxu0 0.0
    %2315 = vmatpush2.xpose.msra.mxu0 0.0
    %2316 = vmatprep.subr.mxu0 0.0
    %2317 = vmatpush2.xpose.msra.mxu0 0.0
    %2318 = vmatprep.subr.mxu0 0.0
    %2319 = vmatpush2.xpose.msra.mxu0 0.0
    %2320 = vmatprep.subr.mxu0 0.0
    %2321 = vmatpush2.xpose.msra.mxu0 0.0
    %2322 = vmatprep.subr.mxu0 0.0
    %2323 = vmatpush2.xpose.msra.mxu0 0.0
    %2324 = vmatprep.subr.mxu0 0.0
    %2325 = vmatpush2.xpose.msra.mxu0 0.0
    %2326 = vmatprep.subr.mxu0 0.0
    %2327 = vmatpush2.xpose.msra.mxu0 0.0
    %2328 = vmatprep.subr.mxu0 0.0
    %2329 = vmatpush2.xpose.msra.mxu0 0.0
    %2330 = vmatprep.subr.mxu0 0.0
    %2331 = vmatpush2.xpose.msra.mxu0 0.0
    %2332 = vmatprep.subr.mxu0 0.0
    %2333 = vmatpush2.xpose.msra.mxu0 0.0
    %2334 = vmatprep.subr.mxu0 0.0
    %2335 = vmatpush2.xpose.msra.mxu0 0.0
    %2336 = vmatprep.subr.mxu0 0.0
    %2337 = vmatpush2.xpose.msra.mxu0 0.0
    %2338 = vmatprep.subr.mxu0 0.0
    %2339 = vmatpush2.xpose.msra.mxu0 0.0
    %2340 = vmatprep.subr.mxu0 0.0
    %2341 = vmatpush2.xpose.msra.mxu0 0.0
    %2342 = vmatprep.mubr.f32.mxu0 0.0
    %2343 = vmatmul.mubr.f32.gmra.mxu0 %v2274
    %v2344 = vpop.f32.mrf.mxu0
    %v2345 = vadd.f32 0.0, %v2344
    %v2346 = vpop.f32.mrf.mxu0
    %2347 = vdwg.mxu0
    %v2348 = vmul.f32 %v2345, 0.35355338
    %v2349 = vsel %vm510, %v2348, -inf
    %2350 = vmax.xlane.f32.xlu0 %v2349
    %v2351 = vpop.xlane.xlu0 %2350
    %v2352 = vsub.f32 %v2348, %v2351
    %v2353 = vmul.f32 %v2352, 1.442695
    %v2354 = vpow.pop %v2353
    %v2355 = vsel %vm510, %v2354, 0.0
    %2356 = vadd.xlane.f32.xlu0 %v2355
    %v2357 = vpop.xlane.xlu0 %2356
    %v2358 = vrcp.pop %v2357
    %v2359 = vmul.f32 %v2354, %v2358
    %2360 = vrot.lane.b32.xlu0 %v1773, 104
    %v2361 = vpop.permute.xlu0 %2360
    %v2364 = vsel %vm510, %v2359, 0
    %2366 = vmatprep.subr.mxu0 0.0
    %2367 = vmatpush1.msra.mxu0 0.0
    %2368 = vmatprep.subr.mxu0 0.0
    %2369 = vmatpush1.msra.mxu0 0.0
    %2370 = vmatprep.subr.mxu0 0.0
    %2371 = vmatpush1.msra.mxu0 0.0
    %2372 = vmatprep.subr.mxu0 0.0
    %2373 = vmatpush1.msra.mxu0 0.0
    %2374 = vmatprep.subr.mxu0 0.0
    %2375 = vmatpush1.msra.mxu0 0.0
    %2376 = vmatprep.subr.mxu0 0.0
    %2377 = vmatpush1.msra.mxu0 0.0
    %2378 = vmatprep.subr.mxu0 0.0
    %2379 = vmatpush1.msra.mxu0 0.0
    %2380 = vmatprep.subr.mxu0 0.0
    %2381 = vmatpush1.msra.mxu0 0.0
    %2382 = vmatprep.subr.mxu0 0.0
    %2383 = vmatpush1.msra.mxu0 0.0
    %2384 = vmatprep.subr.mxu0 0.0
    %2385 = vmatpush1.msra.mxu0 0.0
    %2386 = vmatprep.subr.mxu0 0.0
    %2387 = vmatpush1.msra.mxu0 0.0
    %2388 = vmatprep.subr.mxu0 0.0
    %2389 = vmatpush1.msra.mxu0 0.0
    %2390 = vmatprep.subr.mxu0 0.0
    %2391 = vmatpush1.msra.mxu0 0.0
    %2392 = vmatprep.subr.mxu0 0.0
    %2393 = vmatpush1.msra.mxu0 0.0
    %2394 = vmatprep.subr.mxu0 0.0
    %2395 = vmatpush1.msra.mxu0 0.0
    %2396 = vmatprep.subr.mxu0 0.0
    %2397 = vmatpush1.msra.mxu0 %v2361
    %2398 = vmatprep.subr.mxu0 0.0
    %2399 = vmatpush2.msra.mxu0 0.0
    %2400 = vmatprep.subr.mxu0 0.0
    %2401 = vmatpush2.msra.mxu0 0.0
    %2402 = vmatprep.subr.mxu0 0.0
    %2403 = vmatpush2.msra.mxu0 0.0
    %2404 = vmatprep.subr.mxu0 0.0
    %2405 = vmatpush2.msra.mxu0 0.0
    %2406 = vmatprep.subr.mxu0 0.0
    %2407 = vmatpush2.msra.mxu0 0.0
    %2408 = vmatprep.subr.mxu0 0.0
    %2409 = vmatpush2.msra.mxu0 0.0
    %2410 = vmatprep.subr.mxu0 0.0
    %2411 = vmatpush2.msra.mxu0 0.0
    %2412 = vmatprep.subr.mxu0 0.0
    %2413 = vmatpush2.msra.mxu0 0.0
    %2414 = vmatprep.subr.mxu0 0.0
    %2415 = vmatpush2.msra.mxu0 0.0
    %2416 = vmatprep.subr.mxu0 0.0
    %2417 = vmatpush2.msra.mxu0 0.0
    %2418 = vmatprep.subr.mxu0 0.0
    %2419 = vmatpush2.msra.mxu0 0.0
    %2420 = vmatprep.subr.mxu0 0.0
    %2421 = vmatpush2.msra.mxu0 0.0
    %2422 = vmatprep.subr.mxu0 0.0
    %2423 = vmatpush2.msra.mxu0 0.0
    %2424 = vmatprep.subr.mxu0 0.0
    %2425 = vmatpush2.msra.mxu0 0.0
    %2426 = vmatprep.subr.mxu0 0.0
    %2427 = vmatpush2.msra.mxu0 0.0
    %2428 = vmatprep.subr.mxu0 0.0
    %2429 = vmatpush2.msra.mxu0 0.0
    %2430 = vmatprep.mubr.f32.mxu0 0.0
    %2431 = vmatmul.mubr.f32.gmra.mxu0 %v2364
    %v2432 = vpop.f32.mrf.mxu0
    %v2433 = vadd.f32 0.0, %v2432
    %v2434 = vpop.f32.mrf.mxu0
    %2435 = vdwg.mxu0
    %2437 = vrot.lane.b32.xlu0 %v2101, 8
    %v2438 = vpop.permute.xlu0 %2437
    %2441 = vrot.lane.b32.xlu0 %v2267, 16
    %v2442 = vpop.permute.xlu0 %2441
    %2445 = vrot.lane.b32.xlu0 %v2433, 24
    %v2446 = vpop.permute.xlu0 %2445
    %v2448 = vsel %vm510, %v1934, %v2438
    %v2449 = vsel %vm1184, %v2448, %v2442
    %v2450 = vsel %vm1186, %v2449, %v2446
    %v2452 = vlaneseq
    %v2453 = vshrl.u32 %v2452, 7
    %v2454 = vsub.s32 0, %v2453
    %v2455 = vrot.slane %v1544, %v2454
    %v2458 = vsel %vm284, %v2450, 0
    %2460 = vmatprep.subr.mxu0 0.0
    %2461 = vmatpush1.msra.mxu0 0.0
    %2462 = vmatprep.subr.mxu0 0.0
    %2463 = vmatpush1.msra.mxu0 0.0
    %2464 = vmatprep.subr.mxu0 0.0
    %2465 = vmatpush1.msra.mxu0 0.0
    %2466 = vmatprep.subr.mxu0 0.0
    %2467 = vmatpush1.msra.mxu0 0.0
    %2468 = vmatprep.subr.mxu0 0.0
    %2469 = vmatpush1.msra.mxu0 0.0
    %2470 = vmatprep.subr.mxu0 0.0
    %2471 = vmatpush1.msra.mxu0 0.0
    %2472 = vmatprep.subr.mxu0 0.0
    %2473 = vmatpush1.msra.mxu0 0.0
    %2474 = vmatprep.subr.mxu0 0.0
    %2475 = vmatpush1.msra.mxu0 0.0
    %2476 = vmatprep.subr.mxu0 0.0
    %2477 = vmatpush1.msra.mxu0 0.0
    %2478 = vmatprep.subr.mxu0 0.0
    %2479 = vmatpush1.msra.mxu0 0.0
    %2480 = vmatprep.subr.mxu0 0.0
    %2481 = vmatpush1.msra.mxu0 0.0
    %2482 = vmatprep.subr.mxu0 0.0
    %2483 = vmatpush1.msra.mxu0 0.0
    %2484 = vmatprep.subr.mxu0 0.0
    %2485 = vmatpush1.msra.mxu0 %v1542
    %2486 = vmatprep.subr.mxu0 0.0
    %2487 = vmatpush1.msra.mxu0 %v1541
    %2488 = vmatprep.subr.mxu0 0.0
    %2489 = vmatpush1.msra.mxu0 %v1540
    %2490 = vmatprep.subr.mxu0 0.0
    %2491 = vmatpush1.msra.mxu0 %v1539
    %2492 = vmatprep.subr.mxu0 0.0
    %2493 = vmatpush2.msra.mxu0 0.0
    %2494 = vmatprep.subr.mxu0 0.0
    %2495 = vmatpush2.msra.mxu0 0.0
    %2496 = vmatprep.subr.mxu0 0.0
    %2497 = vmatpush2.msra.mxu0 0.0
    %2498 = vmatprep.subr.mxu0 0.0
    %2499 = vmatpush2.msra.mxu0 0.0
    %2500 = vmatprep.subr.mxu0 0.0
    %2501 = vmatpush2.msra.mxu0 0.0
    %2502 = vmatprep.subr.mxu0 0.0
    %2503 = vmatpush2.msra.mxu0 0.0
    %2504 = vmatprep.subr.mxu0 0.0
    %2505 = vmatpush2.msra.mxu0 0.0
    %2506 = vmatprep.subr.mxu0 0.0
    %2507 = vmatpush2.msra.mxu0 0.0
    %2508 = vmatprep.subr.mxu0 0.0
    %2509 = vmatpush2.msra.mxu0 0.0
    %2510 = vmatprep.subr.mxu0 0.0
    %2511 = vmatpush2.msra.mxu0 0.0
    %2512 = vmatprep.subr.mxu0 0.0
    %2513 = vmatpush2.msra.mxu0 0.0
    %2514 = vmatprep.subr.mxu0 0.0
    %2515 = vmatpush2.msra.mxu0 0.0
    %2516 = vmatprep.subr.mxu0 0.0
    %2517 = vmatpush2.msra.mxu0 0.0
    %2518 = vmatprep.subr.mxu0 0.0
    %2519 = vmatpush2.msra.mxu0 0.0
    %2520 = vmatprep.subr.mxu0 0.0
    %2521 = vmatpush2.msra.mxu0 0.0
    %2522 = vmatprep.subr.mxu0 0.0
    %2523 = vmatpush2.msra.mxu0 0.0
    %2524 = vmatprep.mubr.f32.mxu0 0.0
    %2525 = vmatmul.mubr.f32.gmra.mxu0 %v2458
    %v2526 = vpop.f32.mrf.mxu0
    %v2527 = vadd.f32 %v2455, %v2526
    %v2528 = vpop.f32.mrf.mxu0
    %2529 = vdwg.mxu0
    %v2530 = vadd.f32 %v2527, %v1516
    %v2531 = vsel %vm284, %v2530, 0.0
    %2532 = vadd.xlane.f32.xlu0 %v2531
    %v2533 = vpop.xlane.xlu0 %2532
    %v2534 = vrot.slane %v2533, 4
    %v2535 = vadd.f32 %v2533, %v2534
    %v2536 = vrot.slane %v2535, 2
    %v2537 = vadd.f32 %v2535, %v2536
    %v2538 = vrot.slane %v2537, 1
    %v2539 = vadd.f32 %v2537, %v2538
    %s2540 = vtos %v2539
    %v2541 = vrcp.pop 256.0
    %s2542 = vtos %v2541
    %s2543 = smul.f32 %s2540, %s2542
    %v2544 = vstv %s2543
    %v2545 = vsub.f32 %v2530, %v2544
    %v2546 = vmul.f32 %v2545, %v2545
    %v2547 = vsel %vm284, %v2546, 0.0
    %2548 = vadd.xlane.f32.xlu0 %v2547
    %v2549 = vpop.xlane.xlu0 %2548
    %v2550 = vrot.slane %v2549, 4
    %v2551 = vadd.f32 %v2549, %v2550
    %v2552 = vrot.slane %v2551, 2
    %v2553 = vadd.f32 %v2551, %v2552
    %v2554 = vrot.slane %v2553, 1
    %v2555 = vadd.f32 %v2553, %v2554
    %s2556 = vtos %v2555
    %v2557 = vrcp.pop 256.0
    %s2558 = vtos %v2557
    %s2559 = smul.f32 %s2556, %s2558
    %s2560 = sadd.f32 %s2559, 1e-05
    %v2561 = vstv %s2560
    %v2562 = vrsqrt.pop %v2561
    %s2563 = vtos %v2562
    %v2564 = vstv %s2563
    %v2565 = vmul.f32 %v2545, %v2564
    %s2566 = scalar_lea.vmem %s9, 32
    %v2567 = vld [vmem:[%s2566] sm:$0xff]
    %v2568 = vld [vmem:[%s2566 + $0x8] sm:$0xff]
    %v2569 = vld [vmem:[%s2566 + $0x10] sm:$0xff]
    %v2570 = vld [vmem:[%s2566 + $0x18] sm:$0xff]
    %s2571 = scalar_lea.vmem [#allocation10], 1
    %v2572 = vld [vmem:[%s2571] sm:$0x1]
    %s2573 = scalar_lea.vmem %s11, 128
    %v2574 = vld [vmem:[%s2573] sm:$0xff]
    %v2575 = vld [vmem:[%s2573 + $0x8] sm:$0xff]
    %v2576 = vld [vmem:[%s2573 + $0x10] sm:$0xff]
    %v2577 = vld [vmem:[%s2573 + $0x18] sm:$0xff]
    %v2578 = vld [vmem:[%s2573 + $0x20] sm:$0xff]
    %v2579 = vld [vmem:[%s2573 + $0x28] sm:$0xff]
    %v2580 = vld [vmem:[%s2573 + $0x30] sm:$0xff]
    %v2581 = vld [vmem:[%s2573 + $0x38] sm:$0xff]
    %v2582 = vld [vmem:[%s2573 + $0x40] sm:$0xff]
    %v2583 = vld [vmem:[%s2573 + $0x48] sm:$0xff]
    %v2584 = vld [vmem:[%s2573 + $0x50] sm:$0xff]
    %v2585 = vld [vmem:[%s2573 + $0x58] sm:$0xff]
    %v2586 = vld [vmem:[%s2573 + $0x60] sm:$0xff]
    %v2587 = vld [vmem:[%s2573 + $0x68] sm:$0xff]
    %v2588 = vld [vmem:[%s2573 + $0x70] sm:$0xff]
    %v2589 = vld [vmem:[%s2573 + $0x78] sm:$0xff]
    %s2590 = scalar_lea.vmem [#allocation11], 1
    %v2591 = vld [vmem:[%s2590] sm:$0x1]
    %v2593 = vlaneseq
    %v2594 = vshrl.u32 %v2593, 7
    %v2595 = vsub.s32 0, %v2594
    %v2596 = vrot.slane %v2572, %v2595
    %v2599 = vsel %vm284, %v2565, 0
    %2601 = vmatprep.subr.mxu0 0.0
    %2602 = vmatpush1.msra.mxu0 0.0
    %2603 = vmatprep.subr.mxu0 0.0
    %2604 = vmatpush1.msra.mxu0 0.0
    %2605 = vmatprep.subr.mxu0 0.0
    %2606 = vmatpush1.msra.mxu0 0.0
    %2607 = vmatprep.subr.mxu0 0.0
    %2608 = vmatpush1.msra.mxu0 0.0
    %2609 = vmatprep.subr.mxu0 0.0
    %2610 = vmatpush1.msra.mxu0 0.0
    %2611 = vmatprep.subr.mxu0 0.0
    %2612 = vmatpush1.msra.mxu0 0.0
    %2613 = vmatprep.subr.mxu0 0.0
    %2614 = vmatpush1.msra.mxu0 0.0
    %2615 = vmatprep.subr.mxu0 0.0
    %2616 = vmatpush1.msra.mxu0 0.0
    %2617 = vmatprep.subr.mxu0 0.0
    %2618 = vmatpush1.msra.mxu0 0.0
    %2619 = vmatprep.subr.mxu0 0.0
    %2620 = vmatpush1.msra.mxu0 0.0
    %2621 = vmatprep.subr.mxu0 0.0
    %2622 = vmatpush1.msra.mxu0 0.0
    %2623 = vmatprep.subr.mxu0 0.0
    %2624 = vmatpush1.msra.mxu0 0.0
    %2625 = vmatprep.subr.mxu0 0.0
    %2626 = vmatpush1.msra.mxu0 %v2570
    %2627 = vmatprep.subr.mxu0 0.0
    %2628 = vmatpush1.msra.mxu0 %v2569
    %2629 = vmatprep.subr.mxu0 0.0
    %2630 = vmatpush1.msra.mxu0 %v2568
    %2631 = vmatprep.subr.mxu0 0.0
    %2632 = vmatpush1.msra.mxu0 %v2567
    %2633 = vmatprep.subr.mxu0 0.0
    %2634 = vmatpush2.msra.mxu0 0.0
    %2635 = vmatprep.subr.mxu0 0.0
    %2636 = vmatpush2.msra.mxu0 0.0
    %2637 = vmatprep.subr.mxu0 0.0
    %2638 = vmatpush2.msra.mxu0 0.0
    %2639 = vmatprep.subr.mxu0 0.0
    %2640 = vmatpush2.msra.mxu0 0.0
    %2641 = vmatprep.subr.mxu0 0.0
    %2642 = vmatpush2.msra.mxu0 0.0
    %2643 = vmatprep.subr.mxu0 0.0
    %2644 = vmatpush2.msra.mxu0 0.0
    %2645 = vmatprep.subr.mxu0 0.0
    %2646 = vmatpush2.msra.mxu0 0.0
    %2647 = vmatprep.subr.mxu0 0.0
    %2648 = vmatpush2.msra.mxu0 0.0
    %2649 = vmatprep.subr.mxu0 0.0
    %2650 = vmatpush2.msra.mxu0 0.0
    %2651 = vmatprep.subr.mxu0 0.0
    %2652 = vmatpush2.msra.mxu0 0.0
    %2653 = vmatprep.subr.mxu0 0.0
    %2654 = vmatpush2.msra.mxu0 0.0
    %2655 = vmatprep.subr.mxu0 0.0
    %2656 = vmatpush2.msra.mxu0 0.0
    %2657 = vmatprep.subr.mxu0 0.0
    %2658 = vmatpush2.msra.mxu0 0.0
    %2659 = vmatprep.subr.mxu0 0.0
    %2660 = vmatpush2.msra.mxu0 0.0
    %2661 = vmatprep.subr.mxu0 0.0
    %2662 = vmatpush2.msra.mxu0 0.0
    %2663 = vmatprep.subr.mxu0 0.0
    %2664 = vmatpush2.msra.mxu0 0.0
    %2665 = vmatprep.mubr.f32.mxu0 0.0
    %2666 = vmatmul.mubr.f32.gmra.mxu0 %v2599
    %v2667 = vpop.f32.mrf.mxu0
    %v2668 = vadd.f32 %v2596, %v2667
    %v2669 = vpop.f32.mrf.mxu0
    %2670 = vdwg.mxu0
    %v2671 = vmax.f32 %v2668, 0.0
    %v2673 = vlaneseq
    %v2674 = vshrl.u32 %v2673, 7
    %v2675 = vsub.s32 0, %v2674
    %v2676 = vrot.slane %v2591, %v2675
    %2678 = vmatprep.subr.mxu0 0.0
    %2679 = vmatpush1.msra.mxu0 %v2589
    %2680 = vmatprep.subr.mxu0 0.0
    %2681 = vmatpush1.msra.mxu0 %v2588
    %2682 = vmatprep.subr.mxu0 0.0
    %2683 = vmatpush1.msra.mxu0 %v2587
    %2684 = vmatprep.subr.mxu0 0.0
    %2685 = vmatpush1.msra.mxu0 %v2586
    %2686 = vmatprep.subr.mxu0 0.0
    %2687 = vmatpush1.msra.mxu0 %v2585
    %2688 = vmatprep.subr.mxu0 0.0
    %2689 = vmatpush1.msra.mxu0 %v2584
    %2690 = vmatprep.subr.mxu0 0.0
    %2691 = vmatpush1.msra.mxu0 %v2583
    %2692 = vmatprep.subr.mxu0 0.0
    %2693 = vmatpush1.msra.mxu0 %v2582
    %2694 = vmatprep.subr.mxu0 0.0
    %2695 = vmatpush1.msra.mxu0 %v2581
    %2696 = vmatprep.subr.mxu0 0.0
    %2697 = vmatpush1.msra.mxu0 %v2580
    %2698 = vmatprep.subr.mxu0 0.0
    %2699 = vmatpush1.msra.mxu0 %v2579
    %2700 = vmatprep.subr.mxu0 0.0
    %2701 = vmatpush1.msra.mxu0 %v2578
    %2702 = vmatprep.subr.mxu0 0.0
    %2703 = vmatpush1.msra.mxu0 %v2577
    %2704 = vmatprep.subr.mxu0 0.0
    %2705 = vmatpush1.msra.mxu0 %v2576
    %2706 = vmatprep.subr.mxu0 0.0
    %2707 = vmatpush1.msra.mxu0 %v2575
    %2708 = vmatprep.subr.mxu0 0.0
    %2709 = vmatpush1.msra.mxu0 %v2574
    %2710 = vmatprep.subr.mxu0 0.0
    %2711 = vmatpush2.msra.mxu0 0.0
    %2712 = vmatprep.subr.mxu0 0.0
    %2713 = vmatpush2.msra.mxu0 0.0
    %2714 = vmatprep.subr.mxu0 0.0
    %2715 = vmatpush2.msra.mxu0 0.0
    %2716 = vmatprep.subr.mxu0 0.0
    %2717 = vmatpush2.msra.mxu0 0.0
    %2718 = vmatprep.subr.mxu0 0.0
    %2719 = vmatpush2.msra.mxu0 0.0
    %2720 = vmatprep.subr.mxu0 0.0
    %2721 = vmatpush2.msra.mxu0 0.0
    %2722 = vmatprep.subr.mxu0 0.0
    %2723 = vmatpush2.msra.mxu0 0.0
    %2724 = vmatprep.subr.mxu0 0.0
    %2725 = vmatpush2.msra.mxu0 0.0
    %2726 = vmatprep.subr.mxu0 0.0
    %2727 = vmatpush2.msra.mxu0 0.0
    %2728 = vmatprep.subr.mxu0 0.0
    %2729 = vmatpush2.msra.mxu0 0.0
    %2730 = vmatprep.subr.mxu0 0.0
    %2731 = vmatpush2.msra.mxu0 0.0
    %2732 = vmatprep.subr.mxu0 0.0
    %2733 = vmatpush2.msra.mxu0 0.0
    %2734 = vmatprep.subr.mxu0 0.0
    %2735 = vmatpush2.msra.mxu0 0.0
    %2736 = vmatprep.subr.mxu0 0.0
    %2737 = vmatpush2.msra.mxu0 0.0
    %2738 = vmatprep.subr.mxu0 0.0
    %2739 = vmatpush2.msra.mxu0 0.0
    %2740 = vmatprep.subr.mxu0 0.0
    %2741 = vmatpush2.msra.mxu0 0.0
    %2742 = vmatprep.mubr.f32.mxu0 0.0
    %2743 = vmatmul.mubr.f32.gmra.mxu0 %v2671
    %v2744 = vpop.f32.mrf.mxu0
    %v2745 = vadd.f32 %v2676, %v2744
    %v2746 = vpop.f32.mrf.mxu0
    %2747 = vdwg.mxu0
    %v2748 = vadd.f32 %v2745, %v2565
    %v2749 = vsel %vm284, %v2748, 0.0
    %2750 = vadd.xlane.f32.xlu0 %v2749
    %v2751 = vpop.xlane.xlu0 %2750
    %v2752 = vrot.slane %v2751, 4
    %v2753 = vadd.f32 %v2751, %v2752
    %v2754 = vrot.slane %v2753, 2
    %v2755 = vadd.f32 %v2753, %v2754
    %v2756 = vrot.slane %v2755, 1
    %v2757 = vadd.f32 %v2755, %v2756
    %s2758 = vtos %v2757
    %v2759 = vrcp.pop 256.0
    %s2760 = vtos %v2759
    %s2761 = smul.f32 %s2758, %s2760
    %v2762 = vstv %s2761
    %v2763 = vsub.f32 %v2748, %v2762
    %v2764 = vmul.f32 %v2763, %v2763
    %v2765 = vsel %vm284, %v2764, 0.0
    %2766 = vadd.xlane.f32.xlu0 %v2765
    %v2767 = vpop.xlane.xlu0 %2766
    %v2768 = vrot.slane %v2767, 4
    %v2769 = vadd.f32 %v2767, %v2768
    %v2770 = vrot.slane %v2769, 2
    %v2771 = vadd.f32 %v2769, %v2770
    %v2772 = vrot.slane %v2771, 1
    %v2773 = vadd.f32 %v2771, %v2772
    %s2774 = vtos %v2773
    %v2775 = vrcp.pop 256.0
    %s2776 = vtos %v2775
    %s2777 = smul.f32 %s2774, %s2776
    %s2778 = sadd.f32 %s2777, 1e-05
    %v2779 = vstv %s2778
    %v2780 = vrsqrt.pop %v2779
    %s2781 = vtos %v2780
    %v2782 = vstv %s2781
    %v2783 = vmul.f32 %v2763, %v2782
    %s2784 = scalar_lea.vmem %s13, 32
    %v2785 = vld [vmem:[%s2784] sm:$0xff]
    %v2786 = vld [vmem:[%s2784 + $0x8] sm:$0xff]
    %v2787 = vld [vmem:[%s2784 + $0x10] sm:$0xff]
    %v2788 = vld [vmem:[%s2784 + $0x18] sm:$0xff]
    %s2789 = scalar_lea.vmem [#allocation13], 1
    %v2790 = vld [vmem:[%s2789] sm:$0x1]
    %s2791 = scalar_lea.vmem %s15, 32
    %v2792 = vld [vmem:[%s2791] sm:$0xff]
    %v2793 = vld [vmem:[%s2791 + $0x8] sm:$0xff]
    %v2794 = vld [vmem:[%s2791 + $0x10] sm:$0xff]
    %v2795 = vld [vmem:[%s2791 + $0x18] sm:$0xff]
    %s2796 = scalar_lea.vmem [#allocation14], 1
    %v2797 = vld [vmem:[%s2796] sm:$0x1]
    %s2798 = scalar_lea.vmem %s17, 32
    %v2799 = vld [vmem:[%s2798] sm:$0xff]
    %v2800 = vld [vmem:[%s2798 + $0x8] sm:$0xff]
    %v2801 = vld [vmem:[%s2798 + $0x10] sm:$0xff]
    %v2802 = vld [vmem:[%s2798 + $0x18] sm:$0xff]
    %s2803 = scalar_lea.vmem [#allocation16], 1
    %v2804 = vld [vmem:[%s2803] sm:$0x1]
    %s2805 = scalar_lea.vmem %s19, 32
    %v2806 = vld [vmem:[%s2805] sm:$0xff]
    %v2807 = vld [vmem:[%s2805 + $0x8] sm:$0xff]
    %v2808 = vld [vmem:[%s2805 + $0x10] sm:$0xff]
    %v2809 = vld [vmem:[%s2805 + $0x18] sm:$0xff]
    %s2810 = scalar_lea.vmem [#allocation17], 1
    %v2811 = vld [vmem:[%s2810] sm:$0x1]
    %v2813 = vlaneseq
    %v2814 = vshrl.u32 %v2813, 7
    %v2815 = vsub.s32 0, %v2814
    %v2816 = vrot.slane %v2790, %v2815
    %2818 = vmatprep.subr.mxu0 0.0
    %2819 = vmatpush1.msra.mxu0 0.0
    %2820 = vmatprep.subr.mxu0 0.0
    %2821 = vmatpush1.msra.mxu0 0.0
    %2822 = vmatprep.subr.mxu0 0.0
    %2823 = vmatpush1.msra.mxu0 0.0
    %2824 = vmatprep.subr.mxu0 0.0
    %2825 = vmatpush1.msra.mxu0 0.0
    %2826 = vmatprep.subr.mxu0 0.0
    %2827 = vmatpush1.msra.mxu0 0.0
    %2828 = vmatprep.subr.mxu0 0.0
    %2829 = vmatpush1.msra.mxu0 0.0
    %2830 = vmatprep.subr.mxu0 0.0
    %2831 = vmatpush1.msra.mxu0 0.0
    %2832 = vmatprep.subr.mxu0 0.0
    %2833 = vmatpush1.msra.mxu0 0.0
    %2834 = vmatprep.subr.mxu0 0.0
    %2835 = vmatpush1.msra.mxu0 0.0
    %2836 = vmatprep.subr.mxu0 0.0
    %2837 = vmatpush1.msra.mxu0 0.0
    %2838 = vmatprep.subr.mxu0 0.0
    %2839 = vmatpush1.msra.mxu0 0.0
    %2840 = vmatprep.subr.mxu0 0.0
    %2841 = vmatpush1.msra.mxu0 0.0
    %2842 = vmatprep.subr.mxu0 0.0
    %2843 = vmatpush1.msra.mxu0 %v2788
    %2844 = vmatprep.subr.mxu0 0.0
    %2845 = vmatpush1.msra.mxu0 %v2787
    %2846 = vmatprep.subr.mxu0 0.0
    %2847 = vmatpush1.msra.mxu0 %v2786
    %2848 = vmatprep.subr.mxu0 0.0
    %2849 = vmatpush1.msra.mxu0 %v2785
    %2850 = vmatprep.subr.mxu0 0.0
    %2851 = vmatpush2.msra.mxu0 0.0
    %2852 = vmatprep.subr.mxu0 0.0
    %2853 = vmatpush2.msra.mxu0 0.0
    %2854 = vmatprep.subr.mxu0 0.0
    %2855 = vmatpush2.msra.mxu0 0.0
    %2856 = vmatprep.subr.mxu0 0.0
    %2857 = vmatpush2.msra.mxu0 0.0
    %2858 = vmatprep.subr.mxu0 0.0
    %2859 = vmatpush2.msra.mxu0 0.0
    %2860 = vmatprep.subr.mxu0 0.0
    %2861 = vmatpush2.msra.mxu0 0.0
    %2862 = vmatprep.subr.mxu0 0.0
    %2863 = vmatpush2.msra.mxu0 0.0
    %2864 = vmatprep.subr.mxu0 0.0
    %2865 = vmatpush2.msra.mxu0 0.0
    %2866 = vmatprep.subr.mxu0 0.0
    %2867 = vmatpush2.msra.mxu0 0.0
    %2868 = vmatprep.subr.mxu0 0.0
    %2869 = vmatpush2.msra.mxu0 0.0
    %2870 = vmatprep.subr.mxu0 0.0
    %2871 = vmatpush2.msra.mxu0 0.0
    %2872 = vmatprep.subr.mxu0 0.0
    %2873 = vmatpush2.msra.mxu0 0.0
    %2874 = vmatprep.subr.mxu0 0.0
    %2875 = vmatpush2.msra.mxu0 0.0
    %2876 = vmatprep.subr.mxu0 0.0
    %2877 = vmatpush2.msra.mxu0 0.0
    %2878 = vmatprep.subr.mxu0 0.0
    %2879 = vmatpush2.msra.mxu0 0.0
    %2880 = vmatprep.subr.mxu0 0.0
    %2881 = vmatpush2.msra.mxu0 0.0
    %2882 = vmatprep.mubr.f32.mxu0 0.0
    %2883 = vmatmul.mubr.f32.gmra.mxu0 %v286
    %v2884 = vpop.f32.mrf.mxu0
    %v2885 = vadd.f32 %v2816, %v2884
    %v2886 = vpop.f32.mrf.mxu0
    %2887 = vdwg.mxu0
    %v2889 = vlaneseq
    %v2890 = vshrl.u32 %v2889, 7
    %v2891 = vsub.s32 0, %v2890
    %v2892 = vrot.slane %v2797, %v2891
    %2894 = vmatprep.subr.mxu0 0.0
    %2895 = vmatpush1.msra.mxu0 0.0
    %2896 = vmatprep.subr.mxu0 0.0
    %2897 = vmatpush1.msra.mxu0 0.0
    %2898 = vmatprep.subr.mxu0 0.0
    %2899 = vmatpush1.msra.mxu0 0.0
    %2900 = vmatprep.subr.mxu0 0.0
    %2901 = vmatpush1.msra.mxu0 0.0
    %2902 = vmatprep.subr.mxu0 0.0
    %2903 = vmatpush1.msra.mxu0 0.0
    %2904 = vmatprep.subr.mxu0 0.0
    %2905 = vmatpush1.msra.mxu0 0.0
    %2906 = vmatprep.subr.mxu0 0.0
    %2907 = vmatpush1.msra.mxu0 0.0
    %2908 = vmatprep.subr.mxu0 0.0
    %2909 = vmatpush1.msra.mxu0 0.0
    %2910 = vmatprep.subr.mxu0 0.0
    %2911 = vmatpush1.msra.mxu0 0.0
    %2912 = vmatprep.subr.mxu0 0.0
    %2913 = vmatpush1.msra.mxu0 0.0
    %2914 = vmatprep.subr.mxu0 0.0
    %2915 = vmatpush1.msra.mxu0 0.0
    %2916 = vmatprep.subr.mxu0 0.0
    %2917 = vmatpush1.msra.mxu0 0.0
    %2918 = vmatprep.subr.mxu0 0.0
    %2919 = vmatpush1.msra.mxu0 %v2795
    %2920 = vmatprep.subr.mxu0 0.0
    %2921 = vmatpush1.msra.mxu0 %v2794
    %2922 = vmatprep.subr.mxu0 0.0
    %2923 = vmatpush1.msra.mxu0 %v2793
    %2924 = vmatprep.subr.mxu0 0.0
    %2925 = vmatpush1.msra.mxu0 %v2792
    %2926 = vmatprep.subr.mxu0 0.0
    %2927 = vmatpush2.msra.mxu0 0.0
    %2928 = vmatprep.subr.mxu0 0.0
    %2929 = vmatpush2.msra.mxu0 0.0
    %2930 = vmatprep.subr.mxu0 0.0
    %2931 = vmatpush2.msra.mxu0 0.0
    %2932 = vmatprep.subr.mxu0 0.0
    %2933 = vmatpush2.msra.mxu0 0.0
    %2934 = vmatprep.subr.mxu0 0.0
    %2935 = vmatpush2.msra.mxu0 0.0
    %2936 = vmatprep.subr.mxu0 0.0
    %2937 = vmatpush2.msra.mxu0 0.0
    %2938 = vmatprep.subr.mxu0 0.0
    %2939 = vmatpush2.msra.mxu0 0.0
    %2940 = vmatprep.subr.mxu0 0.0
    %2941 = vmatpush2.msra.mxu0 0.0
    %2942 = vmatprep.subr.mxu0 0.0
    %2943 = vmatpush2.msra.mxu0 0.0
    %2944 = vmatprep.subr.mxu0 0.0
    %2945 = vmatpush2.msra.mxu0 0.0
    %2946 = vmatprep.subr.mxu0 0.0
    %2947 = vmatpush2.msra.mxu0 0.0
    %2948 = vmatprep.subr.mxu0 0.0
    %2949 = vmatpush2.msra.mxu0 0.0
    %2950 = vmatprep.subr.mxu0 0.0
    %2951 = vmatpush2.msra.mxu0 0.0
    %2952 = vmatprep.subr.mxu0 0.0
    %2953 = vmatpush2.msra.mxu0 0.0
    %2954 = vmatprep.subr.mxu0 0.0
    %2955 = vmatpush2.msra.mxu0 0.0
    %2956 = vmatprep.subr.mxu0 0.0
    %2957 = vmatpush2.msra.mxu0 0.0
    %2958 = vmatprep.mubr.f32.mxu0 0.0
    %2959 = vmatmul.mubr.f32.gmra.mxu0 %v286
    %v2960 = vpop.f32.mrf.mxu0
    %v2961 = vadd.f32 %v2892, %v2960
    %v2962 = vpop.f32.mrf.mxu0
    %2963 = vdwg.mxu0
    %v2965 = vlaneseq
    %v2966 = vshrl.u32 %v2965, 7
    %v2967 = vsub.s32 0, %v2966
    %v2968 = vrot.slane %v2804, %v2967
    %2970 = vmatprep.subr.mxu0 0.0
    %2971 = vmatpush1.msra.mxu0 0.0
    %2972 = vmatprep.subr.mxu0 0.0
    %2973 = vmatpush1.msra.mxu0 0.0
    %2974 = vmatprep.subr.mxu0 0.0
    %2975 = vmatpush1.msra.mxu0 0.0
    %2976 = vmatprep.subr.mxu0 0.0
    %2977 = vmatpush1.msra.mxu0 0.0
    %2978 = vmatprep.subr.mxu0 0.0
    %2979 = vmatpush1.msra.mxu0 0.0
    %2980 = vmatprep.subr.mxu0 0.0
    %2981 = vmatpush1.msra.mxu0 0.0
    %2982 = vmatprep.subr.mxu0 0.0
    %2983 = vmatpush1.msra.mxu0 0.0
    %2984 = vmatprep.subr.mxu0 0.0
    %2985 = vmatpush1.msra.mxu0 0.0
    %2986 = vmatprep.subr.mxu0 0.0
    %2987 = vmatpush1.msra.mxu0 0.0
    %2988 = vmatprep.subr.mxu0 0.0
    %2989 = vmatpush1.msra.mxu0 0.0
    %2990 = vmatprep.subr.mxu0 0.0
    %2991 = vmatpush1.msra.mxu0 0.0
    %2992 = vmatprep.subr.mxu0 0.0
    %2993 = vmatpush1.msra.mxu0 0.0
    %2994 = vmatprep.subr.mxu0 0.0
    %2995 = vmatpush1.msra.mxu0 %v2802
    %2996 = vmatprep.subr.mxu0 0.0
    %2997 = vmatpush1.msra.mxu0 %v2801
    %2998 = vmatprep.subr.mxu0 0.0
    %2999 = vmatpush1.msra.mxu0 %v2800
    %3000 = vmatprep.subr.mxu0 0.0
    %3001 = vmatpush1.msra.mxu0 %v2799
    %3002 = vmatprep.subr.mxu0 0.0
    %3003 = vmatpush2.msra.mxu0 0.0
    %3004 = vmatprep.subr.mxu0 0.0
    %3005 = vmatpush2.msra.mxu0 0.0
    %3006 = vmatprep.subr.mxu0 0.0
    %3007 = vmatpush2.msra.mxu0 0.0
    %3008 = vmatprep.subr.mxu0 0.0
    %3009 = vmatpush2.msra.mxu0 0.0
    %3010 = vmatprep.subr.mxu0 0.0
    %3011 = vmatpush2.msra.mxu0 0.0
    %3012 = vmatprep.subr.mxu0 0.0
    %3013 = vmatpush2.msra.mxu0 0.0
    %3014 = vmatprep.subr.mxu0 0.0
    %3015 = vmatpush2.msra.mxu0 0.0
    %3016 = vmatprep.subr.mxu0 0.0
    %3017 = vmatpush2.msra.mxu0 0.0
    %3018 = vmatprep.subr.mxu0 0.0
    %3019 = vmatpush2.msra.mxu0 0.0
    %3020 = vmatprep.subr.mxu0 0.0
    %3021 = vmatpush2.msra.mxu0 0.0
    %3022 = vmatprep.subr.mxu0 0.0
    %3023 = vmatpush2.msra.mxu0 0.0
    %3024 = vmatprep.subr.mxu0 0.0
    %3025 = vmatpush2.msra.mxu0 0.0
    %3026 = vmatprep.subr.mxu0 0.0
    %3027 = vmatpush2.msra.mxu0 0.0
    %3028 = vmatprep.subr.mxu0 0.0
    %3029 = vmatpush2.msra.mxu0 0.0
    %3030 = vmatprep.subr.mxu0 0.0
    %3031 = vmatpush2.msra.mxu0 0.0
    %3032 = vmatprep.subr.mxu0 0.0
    %3033 = vmatpush2.msra.mxu0 0.0
    %3034 = vmatprep.mubr.f32.mxu0 0.0
    %3035 = vmatmul.mubr.f32.gmra.mxu0 %v286
    %v3036 = vpop.f32.mrf.mxu0
    %v3037 = vadd.f32 %v2968, %v3036
    %v3038 = vpop.f32.mrf.mxu0
    %3039 = vdwg.mxu0
    %v3041 = vsel %vm510, %v2885, 0
    %v3044 = vsel %vm510, %v2961, 0
    %3046 = vmatprep.subr.mxu0 0.0
    %3047 = vmatpush1.xpose.msra.mxu0 0.0
    %3048 = vmatprep.subr.mxu0 0.0
    %3049 = vmatpush1.xpose.msra.mxu0 0.0
    %3050 = vmatprep.subr.mxu0 0.0
    %3051 = vmatpush1.xpose.msra.mxu0 0.0
    %3052 = vmatprep.subr.mxu0 0.0
    %3053 = vmatpush1.xpose.msra.mxu0 0.0
    %3054 = vmatprep.subr.mxu0 0.0
    %3055 = vmatpush1.xpose.msra.mxu0 0.0
    %3056 = vmatprep.subr.mxu0 0.0
    %3057 = vmatpush1.xpose.msra.mxu0 0.0
    %3058 = vmatprep.subr.mxu0 0.0
    %3059 = vmatpush1.xpose.msra.mxu0 0.0
    %3060 = vmatprep.subr.mxu0 0.0
    %3061 = vmatpush1.xpose.msra.mxu0 0.0
    %3062 = vmatprep.subr.mxu0 0.0
    %3063 = vmatpush1.xpose.msra.mxu0 0.0
    %3064 = vmatprep.subr.mxu0 0.0
    %3065 = vmatpush1.xpose.msra.mxu0 0.0
    %3066 = vmatprep.subr.mxu0 0.0
    %3067 = vmatpush1.xpose.msra.mxu0 0.0
    %3068 = vmatprep.subr.mxu0 0.0
    %3069 = vmatpush1.xpose.msra.mxu0 0.0
    %3070 = vmatprep.subr.mxu0 0.0
    %3071 = vmatpush1.xpose.msra.mxu0 0.0
    %3072 = vmatprep.subr.mxu0 0.0
    %3073 = vmatpush1.xpose.msra.mxu0 0.0
    %3074 = vmatprep.subr.mxu0 0.0
    %3075 = vmatpush1.xpose.msra.mxu0 0.0
    %3076 = vmatprep.subr.mxu0 0.0
    %3077 = vmatpush1.xpose.msra.mxu0 %v3044
    %3078 = vmatprep.subr.mxu0 0.0
    %3079 = vmatpush2.xpose.msra.mxu0 0.0
    %3080 = vmatprep.subr.mxu0 0.0
    %3081 = vmatpush2.xpose.msra.mxu0 0.0
    %3082 = vmatprep.subr.mxu0 0.0
    %3083 = vmatpush2.xpose.msra.mxu0 0.0
    %3084 = vmatprep.subr.mxu0 0.0
    %3085 = vmatpush2.xpose.msra.mxu0 0.0
    %3086 = vmatprep.subr.mxu0 0.0
    %3087 = vmatpush2.xpose.msra.mxu0 0.0
    %3088 = vmatprep.subr.mxu0 0.0
    %3089 = vmatpush2.xpose.msra.mxu0 0.0
    %3090 = vmatprep.subr.mxu0 0.0
    %3091 = vmatpush2.xpose.msra.mxu0 0.0
    %3092 = vmatprep.subr.mxu0 0.0
    %3093 = vmatpush2.xpose.msra.mxu0 0.0
    %3094 = vmatprep.subr.mxu0 0.0
    %3095 = vmatpush2.xpose.msra.mxu0 0.0
    %3096 = vmatprep.subr.mxu0 0.0
    %3097 = vmatpush2.xpose.msra.mxu0 0.0
    %3098 = vmatprep.subr.mxu0 0.0
    %3099 = vmatpush2.xpose.msra.mxu0 0.0
    %3100 = vmatprep.subr.mxu0 0.0
    %3101 = vmatpush2.xpose.msra.mxu0 0.0
    %3102 = vmatprep.subr.mxu0 0.0
    %3103 = vmatpush2.xpose.msra.mxu0 0.0
    %3104 = vmatprep.subr.mxu0 0.0
    %3105 = vmatpush2.xpose.msra.mxu0 0.0
    %3106 = vmatprep.subr.mxu0 0.0
    %3107 = vmatpush2.xpose.msra.mxu0 0.0
    %3108 = vmatprep.subr.mxu0 0.0
    %3109 = vmatpush2.xpose.msra.mxu0 0.0
    %3110 = vmatprep.mubr.f32.mxu0 0.0
    %3111 = vmatmul.mubr.f32.gmra.mxu0 %v3041
    %v3112 = vpop.f32.mrf.mxu0
    %v3113 = vadd.f32 0.0, %v3112
    %v3114 = vpop.f32.mrf.mxu0
    %3115 = vdwg.mxu0
    %v3116 = vmul.f32 %v3113, 0.35355338
    %v3117 = vsub.f32 %v3116, %v257
    %v3118 = vsel %vm510, %v3117, -inf
    %3119 = vmax.xlane.f32.xlu0 %v3118
    %v3120 = vpop.xlane.xlu0 %3119
    %v3121 = vsub.f32 %v3117, %v3120
    %v3122 = vmul.f32 %v3121, 1.442695
    %v3123 = vpow.pop %v3122
    %v3124 = vsel %vm510, %v3123, 0.0
    %3125 = vadd.xlane.f32.xlu0 %v3124
    %v3126 = vpop.xlane.xlu0 %3125
    %v3127 = vrcp.pop %v3126
    %v3128 = vmul.f32 %v3123, %v3127
    %v3130 = vsel %vm510, %v3128, 0
    %3132 = vmatprep.subr.mxu0 0.0
    %3133 = vmatpush1.msra.mxu0 0.0
    %3134 = vmatprep.subr.mxu0 0.0
    %3135 = vmatpush1.msra.mxu0 0.0
    %3136 = vmatprep.subr.mxu0 0.0
    %3137 = vmatpush1.msra.mxu0 0.0
    %3138 = vmatprep.subr.mxu0 0.0
    %3139 = vmatpush1.msra.mxu0 0.0
    %3140 = vmatprep.subr.mxu0 0.0
    %3141 = vmatpush1.msra.mxu0 0.0
    %3142 = vmatprep.subr.mxu0 0.0
    %3143 = vmatpush1.msra.mxu0 0.0
    %3144 = vmatprep.subr.mxu0 0.0
    %3145 = vmatpush1.msra.mxu0 0.0
    %3146 = vmatprep.subr.mxu0 0.0
    %3147 = vmatpush1.msra.mxu0 0.0
    %3148 = vmatprep.subr.mxu0 0.0
    %3149 = vmatpush1.msra.mxu0 0.0
    %3150 = vmatprep.subr.mxu0 0.0
    %3151 = vmatpush1.msra.mxu0 0.0
    %3152 = vmatprep.subr.mxu0 0.0
    %3153 = vmatpush1.msra.mxu0 0.0
    %3154 = vmatprep.subr.mxu0 0.0
    %3155 = vmatpush1.msra.mxu0 0.0
    %3156 = vmatprep.subr.mxu0 0.0
    %3157 = vmatpush1.msra.mxu0 0.0
    %3158 = vmatprep.subr.mxu0 0.0
    %3159 = vmatpush1.msra.mxu0 0.0
    %3160 = vmatprep.subr.mxu0 0.0
    %3161 = vmatpush1.msra.mxu0 0.0
    %3162 = vmatprep.subr.mxu0 0.0
    %3163 = vmatpush1.msra.mxu0 %v3037
    %3164 = vmatprep.subr.mxu0 0.0
    %3165 = vmatpush2.msra.mxu0 0.0
    %3166 = vmatprep.subr.mxu0 0.0
    %3167 = vmatpush2.msra.mxu0 0.0
    %3168 = vmatprep.subr.mxu0 0.0
    %3169 = vmatpush2.msra.mxu0 0.0
    %3170 = vmatprep.subr.mxu0 0.0
    %3171 = vmatpush2.msra.mxu0 0.0
    %3172 = vmatprep.subr.mxu0 0.0
    %3173 = vmatpush2.msra.mxu0 0.0
    %3174 = vmatprep.subr.mxu0 0.0
    %3175 = vmatpush2.msra.mxu0 0.0
    %3176 = vmatprep.subr.mxu0 0.0
    %3177 = vmatpush2.msra.mxu0 0.0
    %3178 = vmatprep.subr.mxu0 0.0
    %3179 = vmatpush2.msra.mxu0 0.0
    %3180 = vmatprep.subr.mxu0 0.0
    %3181 = vmatpush2.msra.mxu0 0.0
    %3182 = vmatprep.subr.mxu0 0.0
    %3183 = vmatpush2.msra.mxu0 0.0
    %3184 = vmatprep.subr.mxu0 0.0
    %3185 = vmatpush2.msra.mxu0 0.0
    %3186 = vmatprep.subr.mxu0 0.0
    %3187 = vmatpush2.msra.mxu0 0.0
    %3188 = vmatprep.subr.mxu0 0.0
    %3189 = vmatpush2.msra.mxu0 0.0
    %3190 = vmatprep.subr.mxu0 0.0
    %3191 = vmatpush2.msra.mxu0 0.0
    %3192 = vmatprep.subr.mxu0 0.0
    %3193 = vmatpush2.msra.mxu0 0.0
    %3194 = vmatprep.subr.mxu0 0.0
    %3195 = vmatpush2.msra.mxu0 0.0
    %3196 = vmatprep.mubr.f32.mxu0 0.0
    %3197 = vmatmul.mubr.f32.gmra.mxu0 %v3130
    %v3198 = vpop.f32.mrf.mxu0
    %v3199 = vadd.f32 0.0, %v3198
    %v3200 = vpop.f32.mrf.mxu0
    %3201 = vdwg.mxu0
    %3202 = vrot.lane.b32.xlu0 %v2885, 120
    %v3203 = vpop.permute.xlu0 %3202
    %3204 = vrot.lane.b32.xlu0 %v2961, 120
    %v3205 = vpop.permute.xlu0 %3204
    %v3206 = vsel %vm510, %v3203, 0
    %v3208 = vsel %vm510, %v3205, 0
    %3210 = vmatprep.subr.mxu0 0.0
    %3211 = vmatpush1.xpose.msra.mxu0 0.0
    %3212 = vmatprep.subr.mxu0 0.0
    %3213 = vmatpush1.xpose.msra.mxu0 0.0
    %3214 = vmatprep.subr.mxu0 0.0
    %3215 = vmatpush1.xpose.msra.mxu0 0.0
    %3216 = vmatprep.subr.mxu0 0.0
    %3217 = vmatpush1.xpose.msra.mxu0 0.0
    %3218 = vmatprep.subr.mxu0 0.0
    %3219 = vmatpush1.xpose.msra.mxu0 0.0
    %3220 = vmatprep.subr.mxu0 0.0
    %3221 = vmatpush1.xpose.msra.mxu0 0.0
    %3222 = vmatprep.subr.mxu0 0.0
    %3223 = vmatpush1.xpose.msra.mxu0 0.0
    %3224 = vmatprep.subr.mxu0 0.0
    %3225 = vmatpush1.xpose.msra.mxu0 0.0
    %3226 = vmatprep.subr.mxu0 0.0
    %3227 = vmatpush1.xpose.msra.mxu0 0.0
    %3228 = vmatprep.subr.mxu0 0.0
    %3229 = vmatpush1.xpose.msra.mxu0 0.0
    %3230 = vmatprep.subr.mxu0 0.0
    %3231 = vmatpush1.xpose.msra.mxu0 0.0
    %3232 = vmatprep.subr.mxu0 0.0
    %3233 = vmatpush1.xpose.msra.mxu0 0.0
    %3234 = vmatprep.subr.mxu0 0.0
    %3235 = vmatpush1.xpose.msra.mxu0 0.0
    %3236 = vmatprep.subr.mxu0 0.0
    %3237 = vmatpush1.xpose.msra.mxu0 0.0
    %3238 = vmatprep.subr.mxu0 0.0
    %3239 = vmatpush1.xpose.msra.mxu0 0.0
    %3240 = vmatprep.subr.mxu0 0.0
    %3241 = vmatpush1.xpose.msra.mxu0 %v3208
    %3242 = vmatprep.subr.mxu0 0.0
    %3243 = vmatpush2.xpose.msra.mxu0 0.0
    %3244 = vmatprep.subr.mxu0 0.0
    %3245 = vmatpush2.xpose.msra.mxu0 0.0
    %3246 = vmatprep.subr.mxu0 0.0
    %3247 = vmatpush2.xpose.msra.mxu0 0.0
    %3248 = vmatprep.subr.mxu0 0.0
    %3249 = vmatpush2.xpose.msra.mxu0 0.0
    %3250 = vmatprep.subr.mxu0 0.0
    %3251 = vmatpush2.xpose.msra.mxu0 0.0
    %3252 = vmatprep.subr.mxu0 0.0
    %3253 = vmatpush2.xpose.msra.mxu0 0.0
    %3254 = vmatprep.subr.mxu0 0.0
    %3255 = vmatpush2.xpose.msra.mxu0 0.0
    %3256 = vmatprep.subr.mxu0 0.0
    %3257 = vmatpush2.xpose.msra.mxu0 0.0
    %3258 = vmatprep.subr.mxu0 0.0
    %3259 = vmatpush2.xpose.msra.mxu0 0.0
    %3260 = vmatprep.subr.mxu0 0.0
    %3261 = vmatpush2.xpose.msra.mxu0 0.0
    %3262 = vmatprep.subr.mxu0 0.0
    %3263 = vmatpush2.xpose.msra.mxu0 0.0
    %3264 = vmatprep.subr.mxu0 0.0
    %3265 = vmatpush2.xpose.msra.mxu0 0.0
    %3266 = vmatprep.subr.mxu0 0.0
    %3267 = vmatpush2.xpose.msra.mxu0 0.0
    %3268 = vmatprep.subr.mxu0 0.0
    %3269 = vmatpush2.xpose.msra.mxu0 0.0
    %3270 = vmatprep.subr.mxu0 0.0
    %3271 = vmatpush2.xpose.msra.mxu0 0.0
    %3272 = vmatprep.subr.mxu0 0.0
    %3273 = vmatpush2.xpose.msra.mxu0 0.0
    %3274 = vmatprep.mubr.f32.mxu0 0.0
    %3275 = vmatmul.mubr.f32.gmra.mxu0 %v3206
    %v3276 = vpop.f32.mrf.mxu0
    %v3277 = vadd.f32 0.0, %v3276
    %v3278 = vpop.f32.mrf.mxu0
    %3279 = vdwg.mxu0
    %v3280 = vmul.f32 %v3277, 0.35355338
    %v3281 = vsub.f32 %v3280, %v257
    %v3282 = vsel %vm510, %v3281, -inf
    %3283 = vmax.xlane.f32.xlu0 %v3282
    %v3284 = vpop.xlane.xlu0 %3283
    %v3285 = vsub.f32 %v3281, %v3284
    %v3286 = vmul.f32 %v3285, 1.442695
    %v3287 = vpow.pop %v3286
    %v3288 = vsel %vm510, %v3287, 0.0
    %3289 = vadd.xlane.f32.xlu0 %v3288
    %v3290 = vpop.xlane.xlu0 %3289
    %v3291 = vrcp.pop %v3290
    %v3292 = vmul.f32 %v3287, %v3291
    %3294 = vrot.lane.b32.xlu0 %v3037, 120
    %v3295 = vpop.permute.xlu0 %3294
    %v3298 = vsel %vm510, %v3292, 0
    %3300 = vmatprep.subr.mxu0 0.0
    %3301 = vmatpush1.msra.mxu0 0.0
    %3302 = vmatprep.subr.mxu0 0.0
    %3303 = vmatpush1.msra.mxu0 0.0
    %3304 = vmatprep.subr.mxu0 0.0
    %3305 = vmatpush1.msra.mxu0 0.0
    %3306 = vmatprep.subr.mxu0 0.0
    %3307 = vmatpush1.msra.mxu0 0.0
    %3308 = vmatprep.subr.mxu0 0.0
    %3309 = vmatpush1.msra.mxu0 0.0
    %3310 = vmatprep.subr.mxu0 0.0
    %3311 = vmatpush1.msra.mxu0 0.0
    %3312 = vmatprep.subr.mxu0 0.0
    %3313 = vmatpush1.msra.mxu0 0.0
    %3314 = vmatprep.subr.mxu0 0.0
    %3315 = vmatpush1.msra.mxu0 0.0
    %3316 = vmatprep.subr.mxu0 0.0
    %3317 = vmatpush1.msra.mxu0 0.0
    %3318 = vmatprep.subr.mxu0 0.0
    %3319 = vmatpush1.msra.mxu0 0.0
    %3320 = vmatprep.subr.mxu0 0.0
    %3321 = vmatpush1.msra.mxu0 0.0
    %3322 = vmatprep.subr.mxu0 0.0
    %3323 = vmatpush1.msra.mxu0 0.0
    %3324 = vmatprep.subr.mxu0 0.0
    %3325 = vmatpush1.msra.mxu0 0.0
    %3326 = vmatprep.subr.mxu0 0.0
    %3327 = vmatpush1.msra.mxu0 0.0
    %3328 = vmatprep.subr.mxu0 0.0
    %3329 = vmatpush1.msra.mxu0 0.0
    %3330 = vmatprep.subr.mxu0 0.0
    %3331 = vmatpush1.msra.mxu0 %v3295
    %3332 = vmatprep.subr.mxu0 0.0
    %3333 = vmatpush2.msra.mxu0 0.0
    %3334 = vmatprep.subr.mxu0 0.0
    %3335 = vmatpush2.msra.mxu0 0.0
    %3336 = vmatprep.subr.mxu0 0.0
    %3337 = vmatpush2.msra.mxu0 0.0
    %3338 = vmatprep.subr.mxu0 0.0
    %3339 = vmatpush2.msra.mxu0 0.0
    %3340 = vmatprep.subr.mxu0 0.0
    %3341 = vmatpush2.msra.mxu0 0.0
    %3342 = vmatprep.subr.mxu0 0.0
    %3343 = vmatpush2.msra.mxu0 0.0
    %3344 = vmatprep.subr.mxu0 0.0
    %3345 = vmatpush2.msra.mxu0 0.0
    %3346 = vmatprep.subr.mxu0 0.0
    %3347 = vmatpush2.msra.mxu0 0.0
    %3348 = vmatprep.subr.mxu0 0.0
    %3349 = vmatpush2.msra.mxu0 0.0
    %3350 = vmatprep.subr.mxu0 0.0
    %3351 = vmatpush2.msra.mxu0 0.0
    %3352 = vmatprep.subr.mxu0 0.0
    %3353 = vmatpush2.msra.mxu0 0.0
    %3354 = vmatprep.subr.mxu0 0.0
    %3355 = vmatpush2.msra.mxu0 0.0
    %3356 = vmatprep.subr.mxu0 0.0
    %3357 = vmatpush2.msra.mxu0 0.0
    %3358 = vmatprep.subr.mxu0 0.0
    %3359 = vmatpush2.msra.mxu0 0.0
    %3360 = vmatprep.subr.mxu0 0.0
    %3361 = vmatpush2.msra.mxu0 0.0
    %3362 = vmatprep.subr.mxu0 0.0
    %3363 = vmatpush2.msra.mxu0 0.0
    %3364 = vmatprep.mubr.f32.mxu0 0.0
    %3365 = vmatmul.mubr.f32.gmra.mxu0 %v3298
    %v3366 = vpop.f32.mrf.mxu0
    %v3367 = vadd.f32 0.0, %v3366
    %v3368 = vpop.f32.mrf.mxu0
    %3369 = vdwg.mxu0
    %3370 = vrot.lane.b32.xlu0 %v2885, 112
    %v3371 = vpop.permute.xlu0 %3370
    %3372 = vrot.lane.b32.xlu0 %v2961, 112
    %v3373 = vpop.permute.xlu0 %3372
    %v3374 = vsel %vm510, %v3371, 0
    %v3376 = vsel %vm510, %v3373, 0
    %3378 = vmatprep.subr.mxu0 0.0
    %3379 = vmatpush1.xpose.msra.mxu0 0.0
    %3380 = vmatprep.subr.mxu0 0.0
    %3381 = vmatpush1.xpose.msra.mxu0 0.0
    %3382 = vmatprep.subr.mxu0 0.0
    %3383 = vmatpush1.xpose.msra.mxu0 0.0
    %3384 = vmatprep.subr.mxu0 0.0
    %3385 = vmatpush1.xpose.msra.mxu0 0.0
    %3386 = vmatprep.subr.mxu0 0.0
    %3387 = vmatpush1.xpose.msra.mxu0 0.0
    %3388 = vmatprep.subr.mxu0 0.0
    %3389 = vmatpush1.xpose.msra.mxu0 0.0
    %3390 = vmatprep.subr.mxu0 0.0
    %3391 = vmatpush1.xpose.msra.mxu0 0.0
    %3392 = vmatprep.subr.mxu0 0.0
    %3393 = vmatpush1.xpose.msra.mxu0 0.0
    %3394 = vmatprep.subr.mxu0 0.0
    %3395 = vmatpush1.xpose.msra.mxu0 0.0
    %3396 = vmatprep.subr.mxu0 0.0
    %3397 = vmatpush1.xpose.msra.mxu0 0.0
    %3398 = vmatprep.subr.mxu0 0.0
    %3399 = vmatpush1.xpose.msra.mxu0 0.0
    %3400 = vmatprep.subr.mxu0 0.0
    %3401 = vmatpush1.xpose.msra.mxu0 0.0
    %3402 = vmatprep.subr.mxu0 0.0
    %3403 = vmatpush1.xpose.msra.mxu0 0.0
    %3404 = vmatprep.subr.mxu0 0.0
    %3405 = vmatpush1.xpose.msra.mxu0 0.0
    %3406 = vmatprep.subr.mxu0 0.0
    %3407 = vmatpush1.xpose.msra.mxu0 0.0
    %3408 = vmatprep.subr.mxu0 0.0
    %3409 = vmatpush1.xpose.msra.mxu0 %v3376
    %3410 = vmatprep.subr.mxu0 0.0
    %3411 = vmatpush2.xpose.msra.mxu0 0.0
    %3412 = vmatprep.subr.mxu0 0.0
    %3413 = vmatpush2.xpose.msra.mxu0 0.0
    %3414 = vmatprep.subr.mxu0 0.0
    %3415 = vmatpush2.xpose.msra.mxu0 0.0
    %3416 = vmatprep.subr.mxu0 0.0
    %3417 = vmatpush2.xpose.msra.mxu0 0.0
    %3418 = vmatprep.subr.mxu0 0.0
    %3419 = vmatpush2.xpose.msra.mxu0 0.0
    %3420 = vmatprep.subr.mxu0 0.0
    %3421 = vmatpush2.xpose.msra.mxu0 0.0
    %3422 = vmatprep.subr.mxu0 0.0
    %3423 = vmatpush2.xpose.msra.mxu0 0.0
    %3424 = vmatprep.subr.mxu0 0.0
    %3425 = vmatpush2.xpose.msra.mxu0 0.0
    %3426 = vmatprep.subr.mxu0 0.0
    %3427 = vmatpush2.xpose.msra.mxu0 0.0
    %3428 = vmatprep.subr.mxu0 0.0
    %3429 = vmatpush2.xpose.msra.mxu0 0.0
    %3430 = vmatprep.subr.mxu0 0.0
    %3431 = vmatpush2.xpose.msra.mxu0 0.0
    %3432 = vmatprep.subr.mxu0 0.0
    %3433 = vmatpush2.xpose.msra.mxu0 0.0
    %3434 = vmatprep.subr.mxu0 0.0
    %3435 = vmatpush2.xpose.msra.mxu0 0.0
    %3436 = vmatprep.subr.mxu0 0.0
    %3437 = vmatpush2.xpose.msra.mxu0 0.0
    %3438 = vmatprep.subr.mxu0 0.0
    %3439 = vmatpush2.xpose.msra.mxu0 0.0
    %3440 = vmatprep.subr.mxu0 0.0
    %3441 = vmatpush2.xpose.msra.mxu0 0.0
    %3442 = vmatprep.mubr.f32.mxu0 0.0
    %3443 = vmatmul.mubr.f32.gmra.mxu0 %v3374
    %v3444 = vpop.f32.mrf.mxu0
    %v3445 = vadd.f32 0.0, %v3444
    %v3446 = vpop.f32.mrf.mxu0
    %3447 = vdwg.mxu0
    %v3448 = vmul.f32 %v3445, 0.35355338
    %v3449 = vsub.f32 %v3448, %v257
    %v3450 = vsel %vm510, %v3449, -inf
    %3451 = vmax.xlane.f32.xlu0 %v3450
    %v3452 = vpop.xlane.xlu0 %3451
    %v3453 = vsub.f32 %v3449, %v3452
    %v3454 = vmul.f32 %v3453, 1.442695
    %v3455 = vpow.pop %v3454
    %v3456 = vsel %vm510, %v3455, 0.0
    %3457 = vadd.xlane.f32.xlu0 %v3456
    %v3458 = vpop.xlane.xlu0 %3457
    %v3459 = vrcp.pop %v3458
    %v3460 = vmul.f32 %v3455, %v3459
    %3461 = vrot.lane.b32.xlu0 %v3037, 112
    %v3462 = vpop.permute.xlu0 %3461
    %v3465 = vsel %vm510, %v3460, 0
    %3467 = vmatprep.subr.mxu0 0.0
    %3468 = vmatpush1.msra.mxu0 0.0
    %3469 = vmatprep.subr.mxu0 0.0
    %3470 = vmatpush1.msra.mxu0 0.0
    %3471 = vmatprep.subr.mxu0 0.0
    %3472 = vmatpush1.msra.mxu0 0.0
    %3473 = vmatprep.subr.mxu0 0.0
    %3474 = vmatpush1.msra.mxu0 0.0
    %3475 = vmatprep.subr.mxu0 0.0
    %3476 = vmatpush1.msra.mxu0 0.0
    %3477 = vmatprep.subr.mxu0 0.0
    %3478 = vmatpush1.msra.mxu0 0.0
    %3479 = vmatprep.subr.mxu0 0.0
    %3480 = vmatpush1.msra.mxu0 0.0
    %3481 = vmatprep.subr.mxu0 0.0
    %3482 = vmatpush1.msra.mxu0 0.0
    %3483 = vmatprep.subr.mxu0 0.0
    %3484 = vmatpush1.msra.mxu0 0.0
    %3485 = vmatprep.subr.mxu0 0.0
    %3486 = vmatpush1.msra.mxu0 0.0
    %3487 = vmatprep.subr.mxu0 0.0
    %3488 = vmatpush1.msra.mxu0 0.0
    %3489 = vmatprep.subr.mxu0 0.0
    %3490 = vmatpush1.msra.mxu0 0.0
    %3491 = vmatprep.subr.mxu0 0.0
    %3492 = vmatpush1.msra.mxu0 0.0
    %3493 = vmatprep.subr.mxu0 0.0
    %3494 = vmatpush1.msra.mxu0 0.0
    %3495 = vmatprep.subr.mxu0 0.0
    %3496 = vmatpush1.msra.mxu0 0.0
    %3497 = vmatprep.subr.mxu0 0.0
    %3498 = vmatpush1.msra.mxu0 %v3462
    %3499 = vmatprep.subr.mxu0 0.0
    %3500 = vmatpush2.msra.mxu0 0.0
    %3501 = vmatprep.subr.mxu0 0.0
    %3502 = vmatpush2.msra.mxu0 0.0
    %3503 = vmatprep.subr.mxu0 0.0
    %3504 = vmatpush2.msra.mxu0 0.0
    %3505 = vmatprep.subr.mxu0 0.0
    %3506 = vmatpush2.msra.mxu0 0.0
    %3507 = vmatprep.subr.mxu0 0.0
    %3508 = vmatpush2.msra.mxu0 0.0
    %3509 = vmatprep.subr.mxu0 0.0
    %3510 = vmatpush2.msra.mxu0 0.0
    %3511 = vmatprep.subr.mxu0 0.0
    %3512 = vmatpush2.msra.mxu0 0.0
    %3513 = vmatprep.subr.mxu0 0.0
    %3514 = vmatpush2.msra.mxu0 0.0
    %3515 = vmatprep.subr.mxu0 0.0
    %3516 = vmatpush2.msra.mxu0 0.0
    %3517 = vmatprep.subr.mxu0 0.0
    %3518 = vmatpush2.msra.mxu0 0.0
    %3519 = vmatprep.subr.mxu0 0.0
    %3520 = vmatpush2.msra.mxu0 0.0
    %3521 = vmatprep.subr.mxu0 0.0
    %3522 = vmatpush2.msra.mxu0 0.0
    %3523 = vmatprep.subr.mxu0 0.0
    %3524 = vmatpush2.msra.mxu0 0.0
    %3525 = vmatprep.subr.mxu0 0.0
    %3526 = vmatpush2.msra.mxu0 0.0
    %3527 = vmatprep.subr.mxu0 0.0
    %3528 = vmatpush2.msra.mxu0 0.0
    %3529 = vmatprep.subr.mxu0 0.0
    %3530 = vmatpush2.msra.mxu0 0.0
    %3531 = vmatprep.mubr.f32.mxu0 0.0
    %3532 = vmatmul.mubr.f32.gmra.mxu0 %v3465
    %v3533 = vpop.f32.mrf.mxu0
    %v3534 = vadd.f32 0.0, %v3533
    %v3535 = vpop.f32.mrf.mxu0
    %3536 = vdwg.mxu0
    %3537 = vrot.lane.b32.xlu0 %v2885, 104
    %v3538 = vpop.permute.xlu0 %3537
    %3539 = vrot.lane.b32.xlu0 %v2961, 104
    %v3540 = vpop.permute.xlu0 %3539
    %v3541 = vsel %vm510, %v3538, 0
    %v3543 = vsel %vm510, %v3540, 0
    %3545 = vmatprep.subr.mxu0 0.0
    %3546 = vmatpush1.xpose.msra.mxu0 0.0
    %3547 = vmatprep.subr.mxu0 0.0
    %3548 = vmatpush1.xpose.msra.mxu0 0.0
    %3549 = vmatprep.subr.mxu0 0.0
    %3550 = vmatpush1.xpose.msra.mxu0 0.0
    %3551 = vmatprep.subr.mxu0 0.0
    %3552 = vmatpush1.xpose.msra.mxu0 0.0
    %3553 = vmatprep.subr.mxu0 0.0
    %3554 = vmatpush1.xpose.msra.mxu0 0.0
    %3555 = vmatprep.subr.mxu0 0.0
    %3556 = vmatpush1.xpose.msra.mxu0 0.0
    %3557 = vmatprep.subr.mxu0 0.0
    %3558 = vmatpush1.xpose.msra.mxu0 0.0
    %3559 = vmatprep.subr.mxu0 0.0
    %3560 = vmatpush1.xpose.msra.mxu0 0.0
    %3561 = vmatprep.subr.mxu0 0.0
    %3562 = vmatpush1.xpose.msra.mxu0 0.0
    %3563 = vmatprep.subr.mxu0 0.0
    %3564 = vmatpush1.xpose.msra.mxu0 0.0
    %3565 = vmatprep.subr.mxu0 0.0
    %3566 = vmatpush1.xpose.msra.mxu0 0.0
    %3567 = vmatprep.subr.mxu0 0.0
    %3568 = vmatpush1.xpose.msra.mxu0 0.0
    %3569 = vmatprep.subr.mxu0 0.0
    %3570 = vmatpush1.xpose.msra.mxu0 0.0
    %3571 = vmatprep.subr.mxu0 0.0
    %3572 = vmatpush1.xpose.msra.mxu0 0.0
    %3573 = vmatprep.subr.mxu0 0.0
    %3574 = vmatpush1.xpose.msra.mxu0 0.0
    %3575 = vmatprep.subr.mxu0 0.0
    %3576 = vmatpush1.xpose.msra.mxu0 %v3543
    %3577 = vmatprep.subr.mxu0 0.0
    %3578 = vmatpush2.xpose.msra.mxu0 0.0
    %3579 = vmatprep.subr.mxu0 0.0
    %3580 = vmatpush2.xpose.msra.mxu0 0.0
    %3581 = vmatprep.subr.mxu0 0.0
    %3582 = vmatpush2.xpose.msra.mxu0 0.0
    %3583 = vmatprep.subr.mxu0 0.0
    %3584 = vmatpush2.xpose.msra.mxu0 0.0
    %3585 = vmatprep.subr.mxu0 0.0
    %3586 = vmatpush2.xpose.msra.mxu0 0.0
    %3587 = vmatprep.subr.mxu0 0.0
    %3588 = vmatpush2.xpose.msra.mxu0 0.0
    %3589 = vmatprep.subr.mxu0 0.0
    %3590 = vmatpush2.xpose.msra.mxu0 0.0
    %3591 = vmatprep.subr.mxu0 0.0
    %3592 = vmatpush2.xpose.msra.mxu0 0.0
    %3593 = vmatprep.subr.mxu0 0.0
    %3594 = vmatpush2.xpose.msra.mxu0 0.0
    %3595 = vmatprep.subr.mxu0 0.0
    %3596 = vmatpush2.xpose.msra.mxu0 0.0
    %3597 = vmatprep.subr.mxu0 0.0
    %3598 = vmatpush2.xpose.msra.mxu0 0.0
    %3599 = vmatprep.subr.mxu0 0.0
    %3600 = vmatpush2.xpose.msra.mxu0 0.0
    %3601 = vmatprep.subr.mxu0 0.0
    %3602 = vmatpush2.xpose.msra.mxu0 0.0
    %3603 = vmatprep.subr.mxu0 0.0
    %3604 = vmatpush2.xpose.msra.mxu0 0.0
    %3605 = vmatprep.subr.mxu0 0.0
    %3606 = vmatpush2.xpose.msra.mxu0 0.0
    %3607 = vmatprep.subr.mxu0 0.0
    %3608 = vmatpush2.xpose.msra.mxu0 0.0
    %3609 = vmatprep.mubr.f32.mxu0 0.0
    %3610 = vmatmul.mubr.f32.gmra.mxu0 %v3541
    %v3611 = vpop.f32.mrf.mxu0
    %v3612 = vadd.f32 0.0, %v3611
    %v3613 = vpop.f32.mrf.mxu0
    %3614 = vdwg.mxu0
    %v3615 = vmul.f32 %v3612, 0.35355338
    %v3616 = vsub.f32 %v3615, %v257
    %v3617 = vsel %vm510, %v3616, -inf
    %3618 = vmax.xlane.f32.xlu0 %v3617
    %v3619 = vpop.xlane.xlu0 %3618
    %v3620 = vsub.f32 %v3616, %v3619
    %v3621 = vmul.f32 %v3620, 1.442695
    %v3622 = vpow.pop %v3621
    %v3623 = vsel %vm510, %v3622, 0.0
    %3624 = vadd.xlane.f32.xlu0 %v3623
    %v3625 = vpop.xlane.xlu0 %3624
    %v3626 = vrcp.pop %v3625
    %v3627 = vmul.f32 %v3622, %v3626
    %3628 = vrot.lane.b32.xlu0 %v3037, 104
    %v3629 = vpop.permute.xlu0 %3628
    %v3632 = vsel %vm510, %v3627, 0
    %3634 = vmatprep.subr.mxu0 0.0
    %3635 = vmatpush1.msra.mxu0 0.0
    %3636 = vmatprep.subr.mxu0 0.0
    %3637 = vmatpush1.msra.mxu0 0.0
    %3638 = vmatprep.subr.mxu0 0.0
    %3639 = vmatpush1.msra.mxu0 0.0
    %3640 = vmatprep.subr.mxu0 0.0
    %3641 = vmatpush1.msra.mxu0 0.0
    %3642 = vmatprep.subr.mxu0 0.0
    %3643 = vmatpush1.msra.mxu0 0.0
    %3644 = vmatprep.subr.mxu0 0.0
    %3645 = vmatpush1.msra.mxu0 0.0
    %3646 = vmatprep.subr.mxu0 0.0
    %3647 = vmatpush1.msra.mxu0 0.0
    %3648 = vmatprep.subr.mxu0 0.0
    %3649 = vmatpush1.msra.mxu0 0.0
    %3650 = vmatprep.subr.mxu0 0.0
    %3651 = vmatpush1.msra.mxu0 0.0
    %3652 = vmatprep.subr.mxu0 0.0
    %3653 = vmatpush1.msra.mxu0 0.0
    %3654 = vmatprep.subr.mxu0 0.0
    %3655 = vmatpush1.msra.mxu0 0.0
    %3656 = vmatprep.subr.mxu0 0.0
    %3657 = vmatpush1.msra.mxu0 0.0
    %3658 = vmatprep.subr.mxu0 0.0
    %3659 = vmatpush1.msra.mxu0 0.0
    %3660 = vmatprep.subr.mxu0 0.0
    %3661 = vmatpush1.msra.mxu0 0.0
    %3662 = vmatprep.subr.mxu0 0.0
    %3663 = vmatpush1.msra.mxu0 0.0
    %3664 = vmatprep.subr.mxu0 0.0
    %3665 = vmatpush1.msra.mxu0 %v3629
    %3666 = vmatprep.subr.mxu0 0.0
    %3667 = vmatpush2.msra.mxu0 0.0
    %3668 = vmatprep.subr.mxu0 0.0
    %3669 = vmatpush2.msra.mxu0 0.0
    %3670 = vmatprep.subr.mxu0 0.0
    %3671 = vmatpush2.msra.mxu0 0.0
    %3672 = vmatprep.subr.mxu0 0.0
    %3673 = vmatpush2.msra.mxu0 0.0
    %3674 = vmatprep.subr.mxu0 0.0
    %3675 = vmatpush2.msra.mxu0 0.0
    %3676 = vmatprep.subr.mxu0 0.0
    %3677 = vmatpush2.msra.mxu0 0.0
    %3678 = vmatprep.subr.mxu0 0.0
    %3679 = vmatpush2.msra.mxu0 0.0
    %3680 = vmatprep.subr.mxu0 0.0
    %3681 = vmatpush2.msra.mxu0 0.0
    %3682 = vmatprep.subr.mxu0 0.0
    %3683 = vmatpush2.msra.mxu0 0.0
    %3684 = vmatprep.subr.mxu0 0.0
    %3685 = vmatpush2.msra.mxu0 0.0
    %3686 = vmatprep.subr.mxu0 0.0
    %3687 = vmatpush2.msra.mxu0 0.0
    %3688 = vmatprep.subr.mxu0 0.0
    %3689 = vmatpush2.msra.mxu0 0.0
    %3690 = vmatprep.subr.mxu0 0.0
    %3691 = vmatpush2.msra.mxu0 0.0
    %3692 = vmatprep.subr.mxu0 0.0
    %3693 = vmatpush2.msra.mxu0 0.0
    %3694 = vmatprep.subr.mxu0 0.0
    %3695 = vmatpush2.msra.mxu0 0.0
    %3696 = vmatprep.subr.mxu0 0.0
    %3697 = vmatpush2.msra.mxu0 0.0
    %3698 = vmatprep.mubr.f32.mxu0 0.0
    %3699 = vmatmul.mubr.f32.gmra.mxu0 %v3632
    %v3700 = vpop.f32.mrf.mxu0
    %v3701 = vadd.f32 0.0, %v3700
    %v3702 = vpop.f32.mrf.mxu0
    %3703 = vdwg.mxu0
    %3705 = vrot.lane.b32.xlu0 %v3367, 8
    %v3706 = vpop.permute.xlu0 %3705
    %3709 = vrot.lane.b32.xlu0 %v3534, 16
    %v3710 = vpop.permute.xlu0 %3709
    %3713 = vrot.lane.b32.xlu0 %v3701, 24
    %v3714 = vpop.permute.xlu0 %3713
    %v3716 = vsel %vm510, %v3199, %v3706
    %v3717 = vsel %vm1184, %v3716, %v3710
    %v3718 = vsel %vm1186, %v3717, %v3714
    %v3720 = vlaneseq
    %v3721 = vshrl.u32 %v3720, 7
    %v3722 = vsub.s32 0, %v3721
    %v3723 = vrot.slane %v2811, %v3722
    %v3726 = vsel %vm284, %v3718, 0
    %3728 = vmatprep.subr.mxu0 0.0
    %3729 = vmatpush1.msra.mxu0 0.0
    %3730 = vmatprep.subr.mxu0 0.0
    %3731 = vmatpush1.msra.mxu0 0.0
    %3732 = vmatprep.subr.mxu0 0.0
    %3733 = vmatpush1.msra.mxu0 0.0
    %3734 = vmatprep.subr.mxu0 0.0
    %3735 = vmatpush1.msra.mxu0 0.0
    %3736 = vmatprep.subr.mxu0 0.0
    %3737 = vmatpush1.msra.mxu0 0.0
    %3738 = vmatprep.subr.mxu0 0.0
    %3739 = vmatpush1.msra.mxu0 0.0
    %3740 = vmatprep.subr.mxu0 0.0
    %3741 = vmatpush1.msra.mxu0 0.0
    %3742 = vmatprep.subr.mxu0 0.0
    %3743 = vmatpush1.msra.mxu0 0.0
    %3744 = vmatprep.subr.mxu0 0.0
    %3745 = vmatpush1.msra.mxu0 0.0
    %3746 = vmatprep.subr.mxu0 0.0
    %3747 = vmatpush1.msra.mxu0 0.0
    %3748 = vmatprep.subr.mxu0 0.0
    %3749 = vmatpush1.msra.mxu0 0.0
    %3750 = vmatprep.subr.mxu0 0.0
    %3751 = vmatpush1.msra.mxu0 0.0
    %3752 = vmatprep.subr.mxu0 0.0
    %3753 = vmatpush1.msra.mxu0 %v2809
    %3754 = vmatprep.subr.mxu0 0.0
    %3755 = vmatpush1.msra.mxu0 %v2808
    %3756 = vmatprep.subr.mxu0 0.0
    %3757 = vmatpush1.msra.mxu0 %v2807
    %3758 = vmatprep.subr.mxu0 0.0
    %3759 = vmatpush1.msra.mxu0 %v2806
    %3760 = vmatprep.subr.mxu0 0.0
    %3761 = vmatpush2.msra.mxu0 0.0
    %3762 = vmatprep.subr.mxu0 0.0
    %3763 = vmatpush2.msra.mxu0 0.0
    %3764 = vmatprep.subr.mxu0 0.0
    %3765 = vmatpush2.msra.mxu0 0.0
    %3766 = vmatprep.subr.mxu0 0.0
    %3767 = vmatpush2.msra.mxu0 0.0
    %3768 = vmatprep.subr.mxu0 0.0
    %3769 = vmatpush2.msra.mxu0 0.0
    %3770 = vmatprep.subr.mxu0 0.0
    %3771 = vmatpush2.msra.mxu0 0.0
    %3772 = vmatprep.subr.mxu0 0.0
    %3773 = vmatpush2.msra.mxu0 0.0
    %3774 = vmatprep.subr.mxu0 0.0
    %3775 = vmatpush2.msra.mxu0 0.0
    %3776 = vmatprep.subr.mxu0 0.0
    %3777 = vmatpush2.msra.mxu0 0.0
    %3778 = vmatprep.subr.mxu0 0.0
    %3779 = vmatpush2.msra.mxu0 0.0
    %3780 = vmatprep.subr.mxu0 0.0
    %3781 = vmatpush2.msra.mxu0 0.0
    %3782 = vmatprep.subr.mxu0 0.0
    %3783 = vmatpush2.msra.mxu0 0.0
    %3784 = vmatprep.subr.mxu0 0.0
    %3785 = vmatpush2.msra.mxu0 0.0
    %3786 = vmatprep.subr.mxu0 0.0
    %3787 = vmatpush2.msra.mxu0 0.0
    %3788 = vmatprep.subr.mxu0 0.0
    %3789 = vmatpush2.msra.mxu0 0.0
    %3790 = vmatprep.subr.mxu0 0.0
    %3791 = vmatpush2.msra.mxu0 0.0
    %3792 = vmatprep.mubr.f32.mxu0 0.0
    %3793 = vmatmul.mubr.f32.gmra.mxu0 %v3726
    %v3794 = vpop.f32.mrf.mxu0
    %v3795 = vadd.f32 %v3723, %v3794
    %v3796 = vpop.f32.mrf.mxu0
    %3797 = vdwg.mxu0
    %v3798 = vadd.f32 %v3795, %v250
    %v3799 = vsel %vm284, %v3798, 0.0
    %3800 = vadd.xlane.f32.xlu0 %v3799
    %v3801 = vpop.xlane.xlu0 %3800
    %v3802 = vrot.slane %v3801, 4
    %v3803 = vadd.f32 %v3801, %v3802
    %v3804 = vrot.slane %v3803, 2
    %v3805 = vadd.f32 %v3803, %v3804
    %v3806 = vrot.slane %v3805, 1
    %v3807 = vadd.f32 %v3805, %v3806
    %s3808 = vtos %v3807
    %v3809 = vrcp.pop 256.0
    %s3810 = vtos %v3809
    %s3811 = smul.f32 %s3808, %s3810
    %v3812 = vstv %s3811
    %v3813 = vsub.f32 %v3798, %v3812
    %v3814 = vmul.f32 %v3813, %v3813
    %v3815 = vsel %vm284, %v3814, 0.0
    %3816 = vadd.xlane.f32.xlu0 %v3815
    %v3817 = vpop.xlane.xlu0 %3816
    %v3818 = vrot.slane %v3817, 4
    %v3819 = vadd.f32 %v3817, %v3818
    %v3820 = vrot.slane %v3819, 2
    %v3821 = vadd.f32 %v3819, %v3820
    %v3822 = vrot.slane %v3821, 1
    %v3823 = vadd.f32 %v3821, %v3822
    %s3824 = vtos %v3823
    %v3825 = vrcp.pop 256.0
    %s3826 = vtos %v3825
    %s3827 = smul.f32 %s3824, %s3826
    %s3828 = sadd.f32 %s3827, 1e-05
    %v3829 = vstv %s3828
    %v3830 = vrsqrt.pop %v3829
    %s3831 = vtos %v3830
    %v3832 = vstv %s3831
    %v3833 = vmul.f32 %v3813, %v3832
    %v3835 = vsel %vm284, %v3833, 0
    %3837 = vmatprep.subr.mxu0 0.0
    %3838 = vmatpush1.msra.mxu0 0.0
    %3839 = vmatprep.subr.mxu0 0.0
    %3840 = vmatpush1.msra.mxu0 0.0
    %3841 = vmatprep.subr.mxu0 0.0
    %3842 = vmatpush1.msra.mxu0 0.0
    %3843 = vmatprep.subr.mxu0 0.0
    %3844 = vmatpush1.msra.mxu0 0.0
    %3845 = vmatprep.subr.mxu0 0.0
    %3846 = vmatpush1.msra.mxu0 0.0
    %3847 = vmatprep.subr.mxu0 0.0
    %3848 = vmatpush1.msra.mxu0 0.0
    %3849 = vmatprep.subr.mxu0 0.0
    %3850 = vmatpush1.msra.mxu0 0.0
    %3851 = vmatprep.subr.mxu0 0.0
    %3852 = vmatpush1.msra.mxu0 0.0
    %3853 = vmatprep.subr.mxu0 0.0
    %3854 = vmatpush1.msra.mxu0 0.0
    %3855 = vmatprep.subr.mxu0 0.0
    %3856 = vmatpush1.msra.mxu0 0.0
    %3857 = vmatprep.subr.mxu0 0.0
    %3858 = vmatpush1.msra.mxu0 0.0
    %3859 = vmatprep.subr.mxu0 0.0
    %3860 = vmatpush1.msra.mxu0 0.0
    %3861 = vmatprep.subr.mxu0 0.0
    %3862 = vmatpush1.msra.mxu0 %v2788
    %3863 = vmatprep.subr.mxu0 0.0
    %3864 = vmatpush1.msra.mxu0 %v2787
    %3865 = vmatprep.subr.mxu0 0.0
    %3866 = vmatpush1.msra.mxu0 %v2786
    %3867 = vmatprep.subr.mxu0 0.0
    %3868 = vmatpush1.msra.mxu0 %v2785
    %3869 = vmatprep.subr.mxu0 0.0
    %3870 = vmatpush2.msra.mxu0 0.0
    %3871 = vmatprep.subr.mxu0 0.0
    %3872 = vmatpush2.msra.mxu0 0.0
    %3873 = vmatprep.subr.mxu0 0.0
    %3874 = vmatpush2.msra.mxu0 0.0
    %3875 = vmatprep.subr.mxu0 0.0
    %3876 = vmatpush2.msra.mxu0 0.0
    %3877 = vmatprep.subr.mxu0 0.0
    %3878 = vmatpush2.msra.mxu0 0.0
    %3879 = vmatprep.subr.mxu0 0.0
    %3880 = vmatpush2.msra.mxu0 0.0
    %3881 = vmatprep.subr.mxu0 0.0
    %3882 = vmatpush2.msra.mxu0 0.0
    %3883 = vmatprep.subr.mxu0 0.0
    %3884 = vmatpush2.msra.mxu0 0.0
    %3885 = vmatprep.subr.mxu0 0.0
    %3886 = vmatpush2.msra.mxu0 0.0
    %3887 = vmatprep.subr.mxu0 0.0
    %3888 = vmatpush2.msra.mxu0 0.0
    %3889 = vmatprep.subr.mxu0 0.0
    %3890 = vmatpush2.msra.mxu0 0.0
    %3891 = vmatprep.subr.mxu0 0.0
    %3892 = vmatpush2.msra.mxu0 0.0
    %3893 = vmatprep.subr.mxu0 0.0
    %3894 = vmatpush2.msra.mxu0 0.0
    %3895 = vmatprep.subr.mxu0 0.0
    %3896 = vmatpush2.msra.mxu0 0.0
    %3897 = vmatprep.subr.mxu0 0.0
    %3898 = vmatpush2.msra.mxu0 0.0
    %3899 = vmatprep.subr.mxu0 0.0
    %3900 = vmatpush2.msra.mxu0 0.0
    %3901 = vmatprep.mubr.f32.mxu0 0.0
    %3902 = vmatmul.mubr.f32.gmra.mxu0 %v3835
    %v3903 = vpop.f32.mrf.mxu0
    %v3904 = vadd.f32 %v2816, %v3903
    %v3905 = vpop.f32.mrf.mxu0
    %3906 = vdwg.mxu0
    %v3908 = vsel %vm284, %v2783, 0
    %3910 = vmatprep.subr.mxu0 0.0
    %3911 = vmatpush1.msra.mxu0 0.0
    %3912 = vmatprep.subr.mxu0 0.0
    %3913 = vmatpush1.msra.mxu0 0.0
    %3914 = vmatprep.subr.mxu0 0.0
    %3915 = vmatpush1.msra.mxu0 0.0
    %3916 = vmatprep.subr.mxu0 0.0
    %3917 = vmatpush1.msra.mxu0 0.0
    %3918 = vmatprep.subr.mxu0 0.0
    %3919 = vmatpush1.msra.mxu0 0.0
    %3920 = vmatprep.subr.mxu0 0.0
    %3921 = vmatpush1.msra.mxu0 0.0
    %3922 = vmatprep.subr.mxu0 0.0
    %3923 = vmatpush1.msra.mxu0 0.0
    %3924 = vmatprep.subr.mxu0 0.0
    %3925 = vmatpush1.msra.mxu0 0.0
    %3926 = vmatprep.subr.mxu0 0.0
    %3927 = vmatpush1.msra.mxu0 0.0
    %3928 = vmatprep.subr.mxu0 0.0
    %3929 = vmatpush1.msra.mxu0 0.0
    %3930 = vmatprep.subr.mxu0 0.0
    %3931 = vmatpush1.msra.mxu0 0.0
    %3932 = vmatprep.subr.mxu0 0.0
    %3933 = vmatpush1.msra.mxu0 0.0
    %3934 = vmatprep.subr.mxu0 0.0
    %3935 = vmatpush1.msra.mxu0 %v2795
    %3936 = vmatprep.subr.mxu0 0.0
    %3937 = vmatpush1.msra.mxu0 %v2794
    %3938 = vmatprep.subr.mxu0 0.0
    %3939 = vmatpush1.msra.mxu0 %v2793
    %3940 = vmatprep.subr.mxu0 0.0
    %3941 = vmatpush1.msra.mxu0 %v2792
    %3942 = vmatprep.subr.mxu0 0.0
    %3943 = vmatpush2.msra.mxu0 0.0
    %3944 = vmatprep.subr.mxu0 0.0
    %3945 = vmatpush2.msra.mxu0 0.0
    %3946 = vmatprep.subr.mxu0 0.0
    %3947 = vmatpush2.msra.mxu0 0.0
    %3948 = vmatprep.subr.mxu0 0.0
    %3949 = vmatpush2.msra.mxu0 0.0
    %3950 = vmatprep.subr.mxu0 0.0
    %3951 = vmatpush2.msra.mxu0 0.0
    %3952 = vmatprep.subr.mxu0 0.0
    %3953 = vmatpush2.msra.mxu0 0.0
    %3954 = vmatprep.subr.mxu0 0.0
    %3955 = vmatpush2.msra.mxu0 0.0
    %3956 = vmatprep.subr.mxu0 0.0
    %3957 = vmatpush2.msra.mxu0 0.0
    %3958 = vmatprep.subr.mxu0 0.0
    %3959 = vmatpush2.msra.mxu0 0.0
    %3960 = vmatprep.subr.mxu0 0.0
    %3961 = vmatpush2.msra.mxu0 0.0
    %3962 = vmatprep.subr.mxu0 0.0
    %3963 = vmatpush2.msra.mxu0 0.0
    %3964 = vmatprep.subr.mxu0 0.0
    %3965 = vmatpush2.msra.mxu0 0.0
    %3966 = vmatprep.subr.mxu0 0.0
    %3967 = vmatpush2.msra.mxu0 0.0
    %3968 = vmatprep.subr.mxu0 0.0
    %3969 = vmatpush2.msra.mxu0 0.0
    %3970 = vmatprep.subr.mxu0 0.0
    %3971 = vmatpush2.msra.mxu0 0.0
    %3972 = vmatprep.subr.mxu0 0.0
    %3973 = vmatpush2.msra.mxu0 0.0
    %3974 = vmatprep.mubr.f32.mxu0 0.0
    %3975 = vmatmul.mubr.f32.gmra.mxu0 %v3908
    %v3976 = vpop.f32.mrf.mxu0
    %v3977 = vadd.f32 %v2892, %v3976
    %v3978 = vpop.f32.mrf.mxu0
    %3979 = vdwg.mxu0
    %3980 = vmatprep.subr.mxu0 0.0
    %3981 = vmatpush1.msra.mxu0 0.0
    %3982 = vmatprep.subr.mxu0 0.0
    %3983 = vmatpush1.msra.mxu0 0.0
    %3984 = vmatprep.subr.mxu0 0.0
    %3985 = vmatpush1.msra.mxu0 0.0
    %3986 = vmatprep.subr.mxu0 0.0
    %3987 = vmatpush1.msra.mxu0 0.0
    %3988 = vmatprep.subr.mxu0 0.0
    %3989 = vmatpush1.msra.mxu0 0.0
    %3990 = vmatprep.subr.mxu0 0.0
    %3991 = vmatpush1.msra.mxu0 0.0
    %3992 = vmatprep.subr.mxu0 0.0
    %3993 = vmatpush1.msra.mxu0 0.0
    %3994 = vmatprep.subr.mxu0 0.0
    %3995 = vmatpush1.msra.mxu0 0.0
    %3996 = vmatprep.subr.mxu0 0.0
    %3997 = vmatpush1.msra.mxu0 0.0
    %3998 = vmatprep.subr.mxu0 0.0
    %3999 = vmatpush1.msra.mxu0 0.0
    %4000 = vmatprep.subr.mxu0 0.0
    %4001 = vmatpush1.msra.mxu0 0.0
    %4002 = vmatprep.subr.mxu0 0.0
    %4003 = vmatpush1.msra.mxu0 0.0
    %4004 = vmatprep.subr.mxu0 0.0
    %4005 = vmatpush1.msra.mxu0 %v2802
    %4006 = vmatprep.subr.mxu0 0.0
    %4007 = vmatpush1.msra.mxu0 %v2801
    %4008 = vmatprep.subr.mxu0 0.0
    %4009 = vmatpush1.msra.mxu0 %v2800
    %4010 = vmatprep.subr.mxu0 0.0
    %4011 = vmatpush1.msra.mxu0 %v2799
    %4012 = vmatprep.subr.mxu0 0.0
    %4013 = vmatpush2.msra.mxu0 0.0
    %4014 = vmatprep.subr.mxu0 0.0
    %4015 = vmatpush2.msra.mxu0 0.0
    %4016 = vmatprep.subr.mxu0 0.0
    %4017 = vmatpush2.msra.mxu0 0.0
    %4018 = vmatprep.subr.mxu0 0.0
    %4019 = vmatpush2.msra.mxu0 0.0
    %4020 = vmatprep.subr.mxu0 0.0
    %4021 = vmatpush2.msra.mxu0 0.0
    %4022 = vmatprep.subr.mxu0 0.0
    %4023 = vmatpush2.msra.mxu0 0.0
    %4024 = vmatprep.subr.mxu0 0.0
    %4025 = vmatpush2.msra.mxu0 0.0
    %4026 = vmatprep.subr.mxu0 0.0
    %4027 = vmatpush2.msra.mxu0 0.0
    %4028 = vmatprep.subr.mxu0 0.0
    %4029 = vmatpush2.msra.mxu0 0.0
    %4030 = vmatprep.subr.mxu0 0.0
    %4031 = vmatpush2.msra.mxu0 0.0
    %4032 = vmatprep.subr.mxu0 0.0
    %4033 = vmatpush2.msra.mxu0 0.0
    %4034 = vmatprep.subr.mxu0 0.0
    %4035 = vmatpush2.msra.mxu0 0.0
    %4036 = vmatprep.subr.mxu0 0.0
    %4037 = vmatpush2.msra.mxu0 0.0
    %4038 = vmatprep.subr.mxu0 0.0
    %4039 = vmatpush2.msra.mxu0 0.0
    %4040 = vmatprep.subr.mxu0 0.0
    %4041 = vmatpush2.msra.mxu0 0.0
    %4042 = vmatprep.subr.mxu0 0.0
    %4043 = vmatpush2.msra.mxu0 0.0
    %4044 = vmatprep.mubr.f32.mxu0 0.0
    %4045 = vmatmul.mubr.f32.gmra.mxu0 %v3908
    %v4046 = vpop.f32.mrf.mxu0
    %v4047 = vadd.f32 %v2968, %v4046
    %v4048 = vpop.f32.mrf.mxu0
    %4049 = vdwg.mxu0
    %v4051 = vsel %vm510, %v3904, 0
    %v4054 = vsel %vm510, %v3977, 0
    %4056 = vmatprep.subr.mxu0 0.0
    %4057 = vmatpush1.xpose.msra.mxu0 0.0
    %4058 = vmatprep.subr.mxu0 0.0
    %4059 = vmatpush1.xpose.msra.mxu0 0.0
    %4060 = vmatprep.subr.mxu0 0.0
    %4061 = vmatpush1.xpose.msra.mxu0 0.0
    %4062 = vmatprep.subr.mxu0 0.0
    %4063 = vmatpush1.xpose.msra.mxu0 0.0
    %4064 = vmatprep.subr.mxu0 0.0
    %4065 = vmatpush1.xpose.msra.mxu0 0.0
    %4066 = vmatprep.subr.mxu0 0.0
    %4067 = vmatpush1.xpose.msra.mxu0 0.0
    %4068 = vmatprep.subr.mxu0 0.0
    %4069 = vmatpush1.xpose.msra.mxu0 0.0
    %4070 = vmatprep.subr.mxu0 0.0
    %4071 = vmatpush1.xpose.msra.mxu0 0.0
    %4072 = vmatprep.subr.mxu0 0.0
    %4073 = vmatpush1.xpose.msra.mxu0 0.0
    %4074 = vmatprep.subr.mxu0 0.0
    %4075 = vmatpush1.xpose.msra.mxu0 0.0
    %4076 = vmatprep.subr.mxu0 0.0
    %4077 = vmatpush1.xpose.msra.mxu0 0.0
    %4078 = vmatprep.subr.mxu0 0.0
    %4079 = vmatpush1.xpose.msra.mxu0 0.0
    %4080 = vmatprep.subr.mxu0 0.0
    %4081 = vmatpush1.xpose.msra.mxu0 0.0
    %4082 = vmatprep.subr.mxu0 0.0
    %4083 = vmatpush1.xpose.msra.mxu0 0.0
    %4084 = vmatprep.subr.mxu0 0.0
    %4085 = vmatpush1.xpose.msra.mxu0 0.0
    %4086 = vmatprep.subr.mxu0 0.0
    %4087 = vmatpush1.xpose.msra.mxu0 %v4054
    %4088 = vmatprep.subr.mxu0 0.0
    %4089 = vmatpush2.xpose.msra.mxu0 0.0
    %4090 = vmatprep.subr.mxu0 0.0
    %4091 = vmatpush2.xpose.msra.mxu0 0.0
    %4092 = vmatprep.subr.mxu0 0.0
    %4093 = vmatpush2.xpose.msra.mxu0 0.0
    %4094 = vmatprep.subr.mxu0 0.0
    %4095 = vmatpush2.xpose.msra.mxu0 0.0
    %4096 = vmatprep.subr.mxu0 0.0
    %4097 = vmatpush2.xpose.msra.mxu0 0.0
    %4098 = vmatprep.subr.mxu0 0.0
    %4099 = vmatpush2.xpose.msra.mxu0 0.0
    %4100 = vmatprep.subr.mxu0 0.0
    %4101 = vmatpush2.xpose.msra.mxu0 0.0
    %4102 = vmatprep.subr.mxu0 0.0
    %4103 = vmatpush2.xpose.msra.mxu0 0.0
    %4104 = vmatprep.subr.mxu0 0.0
    %4105 = vmatpush2.xpose.msra.mxu0 0.0
    %4106 = vmatprep.subr.mxu0 0.0
    %4107 = vmatpush2.xpose.msra.mxu0 0.0
    %4108 = vmatprep.subr.mxu0 0.0
    %4109 = vmatpush2.xpose.msra.mxu0 0.0
    %4110 = vmatprep.subr.mxu0 0.0
    %4111 = vmatpush2.xpose.msra.mxu0 0.0
    %4112 = vmatprep.subr.mxu0 0.0
    %4113 = vmatpush2.xpose.msra.mxu0 0.0
    %4114 = vmatprep.subr.mxu0 0.0
    %4115 = vmatpush2.xpose.msra.mxu0 0.0
    %4116 = vmatprep.subr.mxu0 0.0
    %4117 = vmatpush2.xpose.msra.mxu0 0.0
    %4118 = vmatprep.subr.mxu0 0.0
    %4119 = vmatpush2.xpose.msra.mxu0 0.0
    %4120 = vmatprep.mubr.f32.mxu0 0.0
    %4121 = vmatmul.mubr.f32.gmra.mxu0 %v4051
    %v4122 = vpop.f32.mrf.mxu0
    %v4123 = vadd.f32 0.0, %v4122
    %v4124 = vpop.f32.mrf.mxu0
    %4125 = vdwg.mxu0
    %v4126 = vmul.f32 %v4123, 0.35355338
    %v4127 = vsub.f32 %v4126, %v257
    %v4128 = vsel %vm510, %v4127, -inf
    %4129 = vmax.xlane.f32.xlu0 %v4128
    %v4130 = vpop.xlane.xlu0 %4129
    %v4131 = vsub.f32 %v4127, %v4130
    %v4132 = vmul.f32 %v4131, 1.442695
    %v4133 = vpow.pop %v4132
    %v4134 = vsel %vm510, %v4133, 0.0
    %4135 = vadd.xlane.f32.xlu0 %v4134
    %v4136 = vpop.xlane.xlu0 %4135
    %v4137 = vrcp.pop %v4136
    %v4138 = vmul.f32 %v4133, %v4137
    %v4140 = vsel %vm510, %v4138, 0
    %4142 = vmatprep.subr.mxu0 0.0
    %4143 = vmatpush1.msra.mxu0 0.0
    %4144 = vmatprep.subr.mxu0 0.0
    %4145 = vmatpush1.msra.mxu0 0.0
    %4146 = vmatprep.subr.mxu0 0.0
    %4147 = vmatpush1.msra.mxu0 0.0
    %4148 = vmatprep.subr.mxu0 0.0
    %4149 = vmatpush1.msra.mxu0 0.0
    %4150 = vmatprep.subr.mxu0 0.0
    %4151 = vmatpush1.msra.mxu0 0.0
    %4152 = vmatprep.subr.mxu0 0.0
    %4153 = vmatpush1.msra.mxu0 0.0
    %4154 = vmatprep.subr.mxu0 0.0
    %4155 = vmatpush1.msra.mxu0 0.0
    %4156 = vmatprep.subr.mxu0 0.0
    %4157 = vmatpush1.msra.mxu0 0.0
    %4158 = vmatprep.subr.mxu0 0.0
    %4159 = vmatpush1.msra.mxu0 0.0
    %4160 = vmatprep.subr.mxu0 0.0
    %4161 = vmatpush1.msra.mxu0 0.0
    %4162 = vmatprep.subr.mxu0 0.0
    %4163 = vmatpush1.msra.mxu0 0.0
    %4164 = vmatprep.subr.mxu0 0.0
    %4165 = vmatpush1.msra.mxu0 0.0
    %4166 = vmatprep.subr.mxu0 0.0
    %4167 = vmatpush1.msra.mxu0 0.0
    %4168 = vmatprep.subr.mxu0 0.0
    %4169 = vmatpush1.msra.mxu0 0.0
    %4170 = vmatprep.subr.mxu0 0.0
    %4171 = vmatpush1.msra.mxu0 0.0
    %4172 = vmatprep.subr.mxu0 0.0
    %4173 = vmatpush1.msra.mxu0 %v4047
    %4174 = vmatprep.subr.mxu0 0.0
    %4175 = vmatpush2.msra.mxu0 0.0
    %4176 = vmatprep.subr.mxu0 0.0
    %4177 = vmatpush2.msra.mxu0 0.0
    %4178 = vmatprep.subr.mxu0 0.0
    %4179 = vmatpush2.msra.mxu0 0.0
    %4180 = vmatprep.subr.mxu0 0.0
    %4181 = vmatpush2.msra.mxu0 0.0
    %4182 = vmatprep.subr.mxu0 0.0
    %4183 = vmatpush2.msra.mxu0 0.0
    %4184 = vmatprep.subr.mxu0 0.0
    %4185 = vmatpush2.msra.mxu0 0.0
    %4186 = vmatprep.subr.mxu0 0.0
    %4187 = vmatpush2.msra.mxu0 0.0
    %4188 = vmatprep.subr.mxu0 0.0
    %4189 = vmatpush2.msra.mxu0 0.0
    %4190 = vmatprep.subr.mxu0 0.0
    %4191 = vmatpush2.msra.mxu0 0.0
    %4192 = vmatprep.subr.mxu0 0.0
    %4193 = vmatpush2.msra.mxu0 0.0
    %4194 = vmatprep.subr.mxu0 0.0
    %4195 = vmatpush2.msra.mxu0 0.0
    %4196 = vmatprep.subr.mxu0 0.0
    %4197 = vmatpush2.msra.mxu0 0.0
    %4198 = vmatprep.subr.mxu0 0.0
    %4199 = vmatpush2.msra.mxu0 0.0
    %4200 = vmatprep.subr.mxu0 0.0
    %4201 = vmatpush2.msra.mxu0 0.0
    %4202 = vmatprep.subr.mxu0 0.0
    %4203 = vmatpush2.msra.mxu0 0.0
    %4204 = vmatprep.subr.mxu0 0.0
    %4205 = vmatpush2.msra.mxu0 0.0
    %4206 = vmatprep.mubr.f32.mxu0 0.0
    %4207 = vmatmul.mubr.f32.gmra.mxu0 %v4140
    %v4208 = vpop.f32.mrf.mxu0
    %v4209 = vadd.f32 0.0, %v4208
    %v4210 = vpop.f32.mrf.mxu0
    %4211 = vdwg.mxu0
    %4212 = vrot.lane.b32.xlu0 %v3904, 120
    %v4213 = vpop.permute.xlu0 %4212
    %4214 = vrot.lane.b32.xlu0 %v3977, 120
    %v4215 = vpop.permute.xlu0 %4214
    %v4216 = vsel %vm510, %v4213, 0
    %v4218 = vsel %vm510, %v4215, 0
    %4220 = vmatprep.subr.mxu0 0.0
    %4221 = vmatpush1.xpose.msra.mxu0 0.0
    %4222 = vmatprep.subr.mxu0 0.0
    %4223 = vmatpush1.xpose.msra.mxu0 0.0
    %4224 = vmatprep.subr.mxu0 0.0
    %4225 = vmatpush1.xpose.msra.mxu0 0.0
    %4226 = vmatprep.subr.mxu0 0.0
    %4227 = vmatpush1.xpose.msra.mxu0 0.0
    %4228 = vmatprep.subr.mxu0 0.0
    %4229 = vmatpush1.xpose.msra.mxu0 0.0
    %4230 = vmatprep.subr.mxu0 0.0
    %4231 = vmatpush1.xpose.msra.mxu0 0.0
    %4232 = vmatprep.subr.mxu0 0.0
    %4233 = vmatpush1.xpose.msra.mxu0 0.0
    %4234 = vmatprep.subr.mxu0 0.0
    %4235 = vmatpush1.xpose.msra.mxu0 0.0
    %4236 = vmatprep.subr.mxu0 0.0
    %4237 = vmatpush1.xpose.msra.mxu0 0.0
    %4238 = vmatprep.subr.mxu0 0.0
    %4239 = vmatpush1.xpose.msra.mxu0 0.0
    %4240 = vmatprep.subr.mxu0 0.0
    %4241 = vmatpush1.xpose.msra.mxu0 0.0
    %4242 = vmatprep.subr.mxu0 0.0
    %4243 = vmatpush1.xpose.msra.mxu0 0.0
    %4244 = vmatprep.subr.mxu0 0.0
    %4245 = vmatpush1.xpose.msra.mxu0 0.0
    %4246 = vmatprep.subr.mxu0 0.0
    %4247 = vmatpush1.xpose.msra.mxu0 0.0
    %4248 = vmatprep.subr.mxu0 0.0
    %4249 = vmatpush1.xpose.msra.mxu0 0.0
    %4250 = vmatprep.subr.mxu0 0.0
    %4251 = vmatpush1.xpose.msra.mxu0 %v4218
    %4252 = vmatprep.subr.mxu0 0.0
    %4253 = vmatpush2.xpose.msra.mxu0 0.0
    %4254 = vmatprep.subr.mxu0 0.0
    %4255 = vmatpush2.xpose.msra.mxu0 0.0
    %4256 = vmatprep.subr.mxu0 0.0
    %4257 = vmatpush2.xpose.msra.mxu0 0.0
    %4258 = vmatprep.subr.mxu0 0.0
    %4259 = vmatpush2.xpose.msra.mxu0 0.0
    %4260 = vmatprep.subr.mxu0 0.0
    %4261 = vmatpush2.xpose.msra.mxu0 0.0
    %4262 = vmatprep.subr.mxu0 0.0
    %4263 = vmatpush2.xpose.msra.mxu0 0.0
    %4264 = vmatprep.subr.mxu0 0.0
    %4265 = vmatpush2.xpose.msra.mxu0 0.0
    %4266 = vmatprep.subr.mxu0 0.0
    %4267 = vmatpush2.xpose.msra.mxu0 0.0
    %4268 = vmatprep.subr.mxu0 0.0
    %4269 = vmatpush2.xpose.msra.mxu0 0.0
    %4270 = vmatprep.subr.mxu0 0.0
    %4271 = vmatpush2.xpose.msra.mxu0 0.0
    %4272 = vmatprep.subr.mxu0 0.0
    %4273 = vmatpush2.xpose.msra.mxu0 0.0
    %4274 = vmatprep.subr.mxu0 0.0
    %4275 = vmatpush2.xpose.msra.mxu0 0.0
    %4276 = vmatprep.subr.mxu0 0.0
    %4277 = vmatpush2.xpose.msra.mxu0 0.0
    %4278 = vmatprep.subr.mxu0 0.0
    %4279 = vmatpush2.xpose.msra.mxu0 0.0
    %4280 = vmatprep.subr.mxu0 0.0
    %4281 = vmatpush2.xpose.msra.mxu0 0.0
    %4282 = vmatprep.subr.mxu0 0.0
    %4283 = vmatpush2.xpose.msra.mxu0 0.0
    %4284 = vmatprep.mubr.f32.mxu0 0.0
    %4285 = vmatmul.mubr.f32.gmra.mxu0 %v4216
    %v4286 = vpop.f32.mrf.mxu0
    %v4287 = vadd.f32 0.0, %v4286
    %v4288 = vpop.f32.mrf.mxu0
    %4289 = vdwg.mxu0
    %v4290 = vmul.f32 %v4287, 0.35355338
    %v4291 = vsub.f32 %v4290, %v257
    %v4292 = vsel %vm510, %v4291, -inf
    %4293 = vmax.xlane.f32.xlu0 %v4292
    %v4294 = vpop.xlane.xlu0 %4293
    %v4295 = vsub.f32 %v4291, %v4294
    %v4296 = vmul.f32 %v4295, 1.442695
    %v4297 = vpow.pop %v4296
    %v4298 = vsel %vm510, %v4297, 0.0
    %4299 = vadd.xlane.f32.xlu0 %v4298
    %v4300 = vpop.xlane.xlu0 %4299
    %v4301 = vrcp.pop %v4300
    %v4302 = vmul.f32 %v4297, %v4301
    %4304 = vrot.lane.b32.xlu0 %v4047, 120
    %v4305 = vpop.permute.xlu0 %4304
    %v4308 = vsel %vm510, %v4302, 0
    %4310 = vmatprep.subr.mxu0 0.0
    %4311 = vmatpush1.msra.mxu0 0.0
    %4312 = vmatprep.subr.mxu0 0.0
    %4313 = vmatpush1.msra.mxu0 0.0
    %4314 = vmatprep.subr.mxu0 0.0
    %4315 = vmatpush1.msra.mxu0 0.0
    %4316 = vmatprep.subr.mxu0 0.0
    %4317 = vmatpush1.msra.mxu0 0.0
    %4318 = vmatprep.subr.mxu0 0.0
    %4319 = vmatpush1.msra.mxu0 0.0
    %4320 = vmatprep.subr.mxu0 0.0
    %4321 = vmatpush1.msra.mxu0 0.0
    %4322 = vmatprep.subr.mxu0 0.0
    %4323 = vmatpush1.msra.mxu0 0.0
    %4324 = vmatprep.subr.mxu0 0.0
    %4325 = vmatpush1.msra.mxu0 0.0
    %4326 = vmatprep.subr.mxu0 0.0
    %4327 = vmatpush1.msra.mxu0 0.0
    %4328 = vmatprep.subr.mxu0 0.0
    %4329 = vmatpush1.msra.mxu0 0.0
    %4330 = vmatprep.subr.mxu0 0.0
    %4331 = vmatpush1.msra.mxu0 0.0
    %4332 = vmatprep.subr.mxu0 0.0
    %4333 = vmatpush1.msra.mxu0 0.0
    %4334 = vmatprep.subr.mxu0 0.0
    %4335 = vmatpush1.msra.mxu0 0.0
    %4336 = vmatprep.subr.mxu0 0.0
    %4337 = vmatpush1.msra.mxu0 0.0
    %4338 = vmatprep.subr.mxu0 0.0
    %4339 = vmatpush1.msra.mxu0 0.0
    %4340 = vmatprep.subr.mxu0 0.0
    %4341 = vmatpush1.msra.mxu0 %v4305
    %4342 = vmatprep.subr.mxu0 0.0
    %4343 = vmatpush2.msra.mxu0 0.0
    %4344 = vmatprep.subr.mxu0 0.0
    %4345 = vmatpush2.msra.mxu0 0.0
    %4346 = vmatprep.subr.mxu0 0.0
    %4347 = vmatpush2.msra.mxu0 0.0
    %4348 = vmatprep.subr.mxu0 0.0
    %4349 = vmatpush2.msra.mxu0 0.0
    %4350 = vmatprep.subr.mxu0 0.0
    %4351 = vmatpush2.msra.mxu0 0.0
    %4352 = vmatprep.subr.mxu0 0.0
    %4353 = vmatpush2.msra.mxu0 0.0
    %4354 = vmatprep.subr.mxu0 0.0
    %4355 = vmatpush2.msra.mxu0 0.0
    %4356 = vmatprep.subr.mxu0 0.0
    %4357 = vmatpush2.msra.mxu0 0.0
    %4358 = vmatprep.subr.mxu0 0.0
    %4359 = vmatpush2.msra.mxu0 0.0
    %4360 = vmatprep.subr.mxu0 0.0
    %4361 = vmatpush2.msra.mxu0 0.0
    %4362 = vmatprep.subr.mxu0 0.0
    %4363 = vmatpush2.msra.mxu0 0.0
    %4364 = vmatprep.subr.mxu0 0.0
    %4365 = vmatpush2.msra.mxu0 0.0
    %4366 = vmatprep.subr.mxu0 0.0
    %4367 = vmatpush2.msra.mxu0 0.0
    %4368 = vmatprep.subr.mxu0 0.0
    %4369 = vmatpush2.msra.mxu0 0.0
    %4370 = vmatprep.subr.mxu0 0.0
    %4371 = vmatpush2.msra.mxu0 0.0
    %4372 = vmatprep.subr.mxu0 0.0
    %4373 = vmatpush2.msra.mxu0 0.0
    %4374 = vmatprep.mubr.f32.mxu0 0.0
    %4375 = vmatmul.mubr.f32.gmra.mxu0 %v4308
    %v4376 = vpop.f32.mrf.mxu0
    %v4377 = vadd.f32 0.0, %v4376
    %v4378 = vpop.f32.mrf.mxu0
    %4379 = vdwg.mxu0
    %4380 = vrot.lane.b32.xlu0 %v3904, 112
    %v4381 = vpop.permute.xlu0 %4380
    %4382 = vrot.lane.b32.xlu0 %v3977, 112
    %v4383 = vpop.permute.xlu0 %4382
    %v4384 = vsel %vm510, %v4381, 0
    %v4386 = vsel %vm510, %v4383, 0
    %4388 = vmatprep.subr.mxu0 0.0
    %4389 = vmatpush1.xpose.msra.mxu0 0.0
    %4390 = vmatprep.subr.mxu0 0.0
    %4391 = vmatpush1.xpose.msra.mxu0 0.0
    %4392 = vmatprep.subr.mxu0 0.0
    %4393 = vmatpush1.xpose.msra.mxu0 0.0
    %4394 = vmatprep.subr.mxu0 0.0
    %4395 = vmatpush1.xpose.msra.mxu0 0.0
    %4396 = vmatprep.subr.mxu0 0.0
    %4397 = vmatpush1.xpose.msra.mxu0 0.0
    %4398 = vmatprep.subr.mxu0 0.0
    %4399 = vmatpush1.xpose.msra.mxu0 0.0
    %4400 = vmatprep.subr.mxu0 0.0
    %4401 = vmatpush1.xpose.msra.mxu0 0.0
    %4402 = vmatprep.subr.mxu0 0.0
    %4403 = vmatpush1.xpose.msra.mxu0 0.0
    %4404 = vmatprep.subr.mxu0 0.0
    %4405 = vmatpush1.xpose.msra.mxu0 0.0
    %4406 = vmatprep.subr.mxu0 0.0
    %4407 = vmatpush1.xpose.msra.mxu0 0.0
    %4408 = vmatprep.subr.mxu0 0.0
    %4409 = vmatpush1.xpose.msra.mxu0 0.0
    %4410 = vmatprep.subr.mxu0 0.0
    %4411 = vmatpush1.xpose.msra.mxu0 0.0
    %4412 = vmatprep.subr.mxu0 0.0
    %4413 = vmatpush1.xpose.msra.mxu0 0.0
    %4414 = vmatprep.subr.mxu0 0.0
    %4415 = vmatpush1.xpose.msra.mxu0 0.0
    %4416 = vmatprep.subr.mxu0 0.0
    %4417 = vmatpush1.xpose.msra.mxu0 0.0
    %4418 = vmatprep.subr.mxu0 0.0
    %4419 = vmatpush1.xpose.msra.mxu0 %v4386
    %4420 = vmatprep.subr.mxu0 0.0
    %4421 = vmatpush2.xpose.msra.mxu0 0.0
    %4422 = vmatprep.subr.mxu0 0.0
    %4423 = vmatpush2.xpose.msra.mxu0 0.0
    %4424 = vmatprep.subr.mxu0 0.0
    %4425 = vmatpush2.xpose.msra.mxu0 0.0
    %4426 = vmatprep.subr.mxu0 0.0
    %4427 = vmatpush2.xpose.msra.mxu0 0.0
    %4428 = vmatprep.subr.mxu0 0.0
    %4429 = vmatpush2.xpose.msra.mxu0 0.0
    %4430 = vmatprep.subr.mxu0 0.0
    %4431 = vmatpush2.xpose.msra.mxu0 0.0
    %4432 = vmatprep.subr.mxu0 0.0
    %4433 = vmatpush2.xpose.msra.mxu0 0.0
    %4434 = vmatprep.subr.mxu0 0.0
    %4435 = vmatpush2.xpose.msra.mxu0 0.0
    %4436 = vmatprep.subr.mxu0 0.0
    %4437 = vmatpush2.xpose.msra.mxu0 0.0
    %4438 = vmatprep.subr.mxu0 0.0
    %4439 = vmatpush2.xpose.msra.mxu0 0.0
    %4440 = vmatprep.subr.mxu0 0.0
    %4441 = vmatpush2.xpose.msra.mxu0 0.0
    %4442 = vmatprep.subr.mxu0 0.0
    %4443 = vmatpush2.xpose.msra.mxu0 0.0
    %4444 = vmatprep.subr.mxu0 0.0
    %4445 = vmatpush2.xpose.msra.mxu0 0.0
    %4446 = vmatprep.subr.mxu0 0.0
    %4447 = vmatpush2.xpose.msra.mxu0 0.0
    %4448 = vmatprep.subr.mxu0 0.0
    %4449 = vmatpush2.xpose.msra.mxu0 0.0
    %4450 = vmatprep.subr.mxu0 0.0
    %4451 = vmatpush2.xpose.msra.mxu0 0.0
    %4452 = vmatprep.mubr.f32.mxu0 0.0
    %4453 = vmatmul.mubr.f32.gmra.mxu0 %v4384
    %v4454 = vpop.f32.mrf.mxu0
    %v4455 = vadd.f32 0.0, %v4454
    %v4456 = vpop.f32.mrf.mxu0
    %4457 = vdwg.mxu0
    %v4458 = vmul.f32 %v4455, 0.35355338
    %v4459 = vsub.f32 %v4458, %v257
    %v4460 = vsel %vm510, %v4459, -inf
    %4461 = vmax.xlane.f32.xlu0 %v4460
    %v4462 = vpop.xlane.xlu0 %4461
    %v4463 = vsub.f32 %v4459, %v4462
    %v4464 = vmul.f32 %v4463, 1.442695
    %v4465 = vpow.pop %v4464
    %v4466 = vsel %vm510, %v4465, 0.0
    %4467 = vadd.xlane.f32.xlu0 %v4466
    %v4468 = vpop.xlane.xlu0 %4467
    %v4469 = vrcp.pop %v4468
    %v4470 = vmul.f32 %v4465, %v4469
    %4471 = vrot.lane.b32.xlu0 %v4047, 112
    %v4472 = vpop.permute.xlu0 %4471
    %v4475 = vsel %vm510, %v4470, 0
    %4477 = vmatprep.subr.mxu0 0.0
    %4478 = vmatpush1.msra.mxu0 0.0
    %4479 = vmatprep.subr.mxu0 0.0
    %4480 = vmatpush1.msra.mxu0 0.0
    %4481 = vmatprep.subr.mxu0 0.0
    %4482 = vmatpush1.msra.mxu0 0.0
    %4483 = vmatprep.subr.mxu0 0.0
    %4484 = vmatpush1.msra.mxu0 0.0
    %4485 = vmatprep.subr.mxu0 0.0
    %4486 = vmatpush1.msra.mxu0 0.0
    %4487 = vmatprep.subr.mxu0 0.0
    %4488 = vmatpush1.msra.mxu0 0.0
    %4489 = vmatprep.subr.mxu0 0.0
    %4490 = vmatpush1.msra.mxu0 0.0
    %4491 = vmatprep.subr.mxu0 0.0
    %4492 = vmatpush1.msra.mxu0 0.0
    %4493 = vmatprep.subr.mxu0 0.0
    %4494 = vmatpush1.msra.mxu0 0.0
    %4495 = vmatprep.subr.mxu0 0.0
    %4496 = vmatpush1.msra.mxu0 0.0
    %4497 = vmatprep.subr.mxu0 0.0
    %4498 = vmatpush1.msra.mxu0 0.0
    %4499 = vmatprep.subr.mxu0 0.0
    %4500 = vmatpush1.msra.mxu0 0.0
    %4501 = vmatprep.subr.mxu0 0.0
    %4502 = vmatpush1.msra.mxu0 0.0
    %4503 = vmatprep.subr.mxu0 0.0
    %4504 = vmatpush1.msra.mxu0 0.0
    %4505 = vmatprep.subr.mxu0 0.0
    %4506 = vmatpush1.msra.mxu0 0.0
    %4507 = vmatprep.subr.mxu0 0.0
    %4508 = vmatpush1.msra.mxu0 %v4472
    %4509 = vmatprep.subr.mxu0 0.0
    %4510 = vmatpush2.msra.mxu0 0.0
    %4511 = vmatprep.subr.mxu0 0.0
    %4512 = vmatpush2.msra.mxu0 0.0
    %4513 = vmatprep.subr.mxu0 0.0
    %4514 = vmatpush2.msra.mxu0 0.0
    %4515 = vmatprep.subr.mxu0 0.0
    %4516 = vmatpush2.msra.mxu0 0.0
    %4517 = vmatprep.subr.mxu0 0.0
    %4518 = vmatpush2.msra.mxu0 0.0
    %4519 = vmatprep.subr.mxu0 0.0
    %4520 = vmatpush2.msra.mxu0 0.0
    %4521 = vmatprep.subr.mxu0 0.0
    %4522 = vmatpush2.msra.mxu0 0.0
    %4523 = vmatprep.subr.mxu0 0.0
    %4524 = vmatpush2.msra.mxu0 0.0
    %4525 = vmatprep.subr.mxu0 0.0
    %4526 = vmatpush2.msra.mxu0 0.0
    %4527 = vmatprep.subr.mxu0 0.0
    %4528 = vmatpush2.msra.mxu0 0.0
    %4529 = vmatprep.subr.mxu0 0.0
    %4530 = vmatpush2.msra.mxu0 0.0
    %4531 = vmatprep.subr.mxu0 0.0
    %4532 = vmatpush2.msra.mxu0 0.0
    %4533 = vmatprep.subr.mxu0 0.0
    %4534 = vmatpush2.msra.mxu0 0.0
    %4535 = vmatprep.subr.mxu0 0.0
    %4536 = vmatpush2.msra.mxu0 0.0
    %4537 = vmatprep.subr.mxu0 0.0
    %4538 = vmatpush2.msra.mxu0 0.0
    %4539 = vmatprep.subr.mxu0 0.0
    %4540 = vmatpush2.msra.mxu0 0.0
    %4541 = vmatprep.mubr.f32.mxu0 0.0
    %4542 = vmatmul.mubr.f32.gmra.mxu0 %v4475
    %v4543 = vpop.f32.mrf.mxu0
    %v4544 = vadd.f32 0.0, %v4543
    %v4545 = vpop.f32.mrf.mxu0
    %4546 = vdwg.mxu0
    %4547 = vrot.lane.b32.xlu0 %v3904, 104
    %v4548 = vpop.permute.xlu0 %4547
    %4549 = vrot.lane.b32.xlu0 %v3977, 104
    %v4550 = vpop.permute.xlu0 %4549
    %v4551 = vsel %vm510, %v4548, 0
    %v4553 = vsel %vm510, %v4550, 0
    %4555 = vmatprep.subr.mxu0 0.0
    %4556 = vmatpush1.xpose.msra.mxu0 0.0
    %4557 = vmatprep.subr.mxu0 0.0
    %4558 = vmatpush1.xpose.msra.mxu0 0.0
    %4559 = vmatprep.subr.mxu0 0.0
    %4560 = vmatpush1.xpose.msra.mxu0 0.0
    %4561 = vmatprep.subr.mxu0 0.0
    %4562 = vmatpush1.xpose.msra.mxu0 0.0
    %4563 = vmatprep.subr.mxu0 0.0
    %4564 = vmatpush1.xpose.msra.mxu0 0.0
    %4565 = vmatprep.subr.mxu0 0.0
    %4566 = vmatpush1.xpose.msra.mxu0 0.0
    %4567 = vmatprep.subr.mxu0 0.0
    %4568 = vmatpush1.xpose.msra.mxu0 0.0
    %4569 = vmatprep.subr.mxu0 0.0
    %4570 = vmatpush1.xpose.msra.mxu0 0.0
    %4571 = vmatprep.subr.mxu0 0.0
    %4572 = vmatpush1.xpose.msra.mxu0 0.0
    %4573 = vmatprep.subr.mxu0 0.0
    %4574 = vmatpush1.xpose.msra.mxu0 0.0
    %4575 = vmatprep.subr.mxu0 0.0
    %4576 = vmatpush1.xpose.msra.mxu0 0.0
    %4577 = vmatprep.subr.mxu0 0.0
    %4578 = vmatpush1.xpose.msra.mxu0 0.0
    %4579 = vmatprep.subr.mxu0 0.0
    %4580 = vmatpush1.xpose.msra.mxu0 0.0
    %4581 = vmatprep.subr.mxu0 0.0
    %4582 = vmatpush1.xpose.msra.mxu0 0.0
    %4583 = vmatprep.subr.mxu0 0.0
    %4584 = vmatpush1.xpose.msra.mxu0 0.0
    %4585 = vmatprep.subr.mxu0 0.0
    %4586 = vmatpush1.xpose.msra.mxu0 %v4553
    %4587 = vmatprep.subr.mxu0 0.0
    %4588 = vmatpush2.xpose.msra.mxu0 0.0
    %4589 = vmatprep.subr.mxu0 0.0
    %4590 = vmatpush2.xpose.msra.mxu0 0.0
    %4591 = vmatprep.subr.mxu0 0.0
    %4592 = vmatpush2.xpose.msra.mxu0 0.0
    %4593 = vmatprep.subr.mxu0 0.0
    %4594 = vmatpush2.xpose.msra.mxu0 0.0
    %4595 = vmatprep.subr.mxu0 0.0
    %4596 = vmatpush2.xpose.msra.mxu0 0.0
    %4597 = vmatprep.subr.mxu0 0.0
    %4598 = vmatpush2.xpose.msra.mxu0 0.0
    %4599 = vmatprep.subr.mxu0 0.0
    %4600 = vmatpush2.xpose.msra.mxu0 0.0
    %4601 = vmatprep.subr.mxu0 0.0
    %4602 = vmatpush2.xpose.msra.mxu0 0.0
    %4603 = vmatprep.subr.mxu0 0.0
    %4604 = vmatpush2.xpose.msra.mxu0 0.0
    %4605 = vmatprep.subr.mxu0 0.0
    %4606 = vmatpush2.xpose.msra.mxu0 0.0
    %4607 = vmatprep.subr.mxu0 0.0
    %4608 = vmatpush2.xpose.msra.mxu0 0.0
    %4609 = vmatprep.subr.mxu0 0.0
    %4610 = vmatpush2.xpose.msra.mxu0 0.0
    %4611 = vmatprep.subr.mxu0 0.0
    %4612 = vmatpush2.xpose.msra.mxu0 0.0
    %4613 = vmatprep.subr.mxu0 0.0
    %4614 = vmatpush2.xpose.msra.mxu0 0.0
    %4615 = vmatprep.subr.mxu0 0.0
    %4616 = vmatpush2.xpose.msra.mxu0 0.0
    %4617 = vmatprep.subr.mxu0 0.0
    %4618 = vmatpush2.xpose.msra.mxu0 0.0
    %4619 = vmatprep.mubr.f32.mxu0 0.0
    %4620 = vmatmul.mubr.f32.gmra.mxu0 %v4551
    %v4621 = vpop.f32.mrf.mxu0
    %v4622 = vadd.f32 0.0, %v4621
    %v4623 = vpop.f32.mrf.mxu0
    %4624 = vdwg.mxu0
    %v4625 = vmul.f32 %v4622, 0.35355338
    %v4626 = vsub.f32 %v4625, %v257
    %v4627 = vsel %vm510, %v4626, -inf
    %4628 = vmax.xlane.f32.xlu0 %v4627
    %v4629 = vpop.xlane.xlu0 %4628
    %v4630 = vsub.f32 %v4626, %v4629
    %v4631 = vmul.f32 %v4630, 1.442695
    %v4632 = vpow.pop %v4631
    %v4633 = vsel %vm510, %v4632, 0.0
    %4634 = vadd.xlane.f32.xlu0 %v4633
    %v4635 = vpop.xlane.xlu0 %4634
    %v4636 = vrcp.pop %v4635
    %v4637 = vmul.f32 %v4632, %v4636
    %4638 = vrot.lane.b32.xlu0 %v4047, 104
    %v4639 = vpop.permute.xlu0 %4638
    %v4642 = vsel %vm510, %v4637, 0
    %4644 = vmatprep.subr.mxu0 0.0
    %4645 = vmatpush1.msra.mxu0 0.0
    %4646 = vmatprep.subr.mxu0 0.0
    %4647 = vmatpush1.msra.mxu0 0.0
    %4648 = vmatprep.subr.mxu0 0.0
    %4649 = vmatpush1.msra.mxu0 0.0
    %4650 = vmatprep.subr.mxu0 0.0
    %4651 = vmatpush1.msra.mxu0 0.0
    %4652 = vmatprep.subr.mxu0 0.0
    %4653 = vmatpush1.msra.mxu0 0.0
    %4654 = vmatprep.subr.mxu0 0.0
    %4655 = vmatpush1.msra.mxu0 0.0
    %4656 = vmatprep.subr.mxu0 0.0
    %4657 = vmatpush1.msra.mxu0 0.0
    %4658 = vmatprep.subr.mxu0 0.0
    %4659 = vmatpush1.msra.mxu0 0.0
    %4660 = vmatprep.subr.mxu0 0.0
    %4661 = vmatpush1.msra.mxu0 0.0
    %4662 = vmatprep.subr.mxu0 0.0
    %4663 = vmatpush1.msra.mxu0 0.0
    %4664 = vmatprep.subr.mxu0 0.0
    %4665 = vmatpush1.msra.mxu0 0.0
    %4666 = vmatprep.subr.mxu0 0.0
    %4667 = vmatpush1.msra.mxu0 0.0
    %4668 = vmatprep.subr.mxu0 0.0
    %4669 = vmatpush1.msra.mxu0 0.0
    %4670 = vmatprep.subr.mxu0 0.0
    %4671 = vmatpush1.msra.mxu0 0.0
    %4672 = vmatprep.subr.mxu0 0.0
    %4673 = vmatpush1.msra.mxu0 0.0
    %4674 = vmatprep.subr.mxu0 0.0
    %4675 = vmatpush1.msra.mxu0 %v4639
    %4676 = vmatprep.subr.mxu0 0.0
    %4677 = vmatpush2.msra.mxu0 0.0
    %4678 = vmatprep.subr.mxu0 0.0
    %4679 = vmatpush2.msra.mxu0 0.0
    %4680 = vmatprep.subr.mxu0 0.0
    %4681 = vmatpush2.msra.mxu0 0.0
    %4682 = vmatprep.subr.mxu0 0.0
    %4683 = vmatpush2.msra.mxu0 0.0
    %4684 = vmatprep.subr.mxu0 0.0
    %4685 = vmatpush2.msra.mxu0 0.0
    %4686 = vmatprep.subr.mxu0 0.0
    %4687 = vmatpush2.msra.mxu0 0.0
    %4688 = vmatprep.subr.mxu0 0.0
    %4689 = vmatpush2.msra.mxu0 0.0
    %4690 = vmatprep.subr.mxu0 0.0
    %4691 = vmatpush2.msra.mxu0 0.0
    %4692 = vmatprep.subr.mxu0 0.0
    %4693 = vmatpush2.msra.mxu0 0.0
    %4694 = vmatprep.subr.mxu0 0.0
    %4695 = vmatpush2.msra.mxu0 0.0
    %4696 = vmatprep.subr.mxu0 0.0
    %4697 = vmatpush2.msra.mxu0 0.0
    %4698 = vmatprep.subr.mxu0 0.0
    %4699 = vmatpush2.msra.mxu0 0.0
    %4700 = vmatprep.subr.mxu0 0.0
    %4701 = vmatpush2.msra.mxu0 0.0
    %4702 = vmatprep.subr.mxu0 0.0
    %4703 = vmatpush2.msra.mxu0 0.0
    %4704 = vmatprep.subr.mxu0 0.0
    %4705 = vmatpush2.msra.mxu0 0.0
    %4706 = vmatprep.subr.mxu0 0.0
    %4707 = vmatpush2.msra.mxu0 0.0
    %4708 = vmatprep.mubr.f32.mxu0 0.0
    %4709 = vmatmul.mubr.f32.gmra.mxu0 %v4642
    %v4710 = vpop.f32.mrf.mxu0
    %v4711 = vadd.f32 0.0, %v4710
    %v4712 = vpop.f32.mrf.mxu0
    %4713 = vdwg.mxu0
    %4715 = vrot.lane.b32.xlu0 %v4377, 8
    %v4716 = vpop.permute.xlu0 %4715
    %4719 = vrot.lane.b32.xlu0 %v4544, 16
    %v4720 = vpop.permute.xlu0 %4719
    %4723 = vrot.lane.b32.xlu0 %v4711, 24
    %v4724 = vpop.permute.xlu0 %4723
    %v4726 = vsel %vm510, %v4209, %v4716
    %v4727 = vsel %vm1184, %v4726, %v4720
    %v4728 = vsel %vm1186, %v4727, %v4724
    %v4730 = vsel %vm284, %v4728, 0
    %4732 = vmatprep.subr.mxu0 0.0
    %4733 = vmatpush1.msra.mxu0 0.0
    %4734 = vmatprep.subr.mxu0 0.0
    %4735 = vmatpush1.msra.mxu0 0.0
    %4736 = vmatprep.subr.mxu0 0.0
    %4737 = vmatpush1.msra.mxu0 0.0
    %4738 = vmatprep.subr.mxu0 0.0
    %4739 = vmatpush1.msra.mxu0 0.0
    %4740 = vmatprep.subr.mxu0 0.0
    %4741 = vmatpush1.msra.mxu0 0.0
    %4742 = vmatprep.subr.mxu0 0.0
    %4743 = vmatpush1.msra.mxu0 0.0
    %4744 = vmatprep.subr.mxu0 0.0
    %4745 = vmatpush1.msra.mxu0 0.0
    %4746 = vmatprep.subr.mxu0 0.0
    %4747 = vmatpush1.msra.mxu0 0.0
    %4748 = vmatprep.subr.mxu0 0.0
    %4749 = vmatpush1.msra.mxu0 0.0
    %4750 = vmatprep.subr.mxu0 0.0
    %4751 = vmatpush1.msra.mxu0 0.0
    %4752 = vmatprep.subr.mxu0 0.0
    %4753 = vmatpush1.msra.mxu0 0.0
    %4754 = vmatprep.subr.mxu0 0.0
    %4755 = vmatpush1.msra.mxu0 0.0
    %4756 = vmatprep.subr.mxu0 0.0
    %4757 = vmatpush1.msra.mxu0 %v2809
    %4758 = vmatprep.subr.mxu0 0.0
    %4759 = vmatpush1.msra.mxu0 %v2808
    %4760 = vmatprep.subr.mxu0 0.0
    %4761 = vmatpush1.msra.mxu0 %v2807
    %4762 = vmatprep.subr.mxu0 0.0
    %4763 = vmatpush1.msra.mxu0 %v2806
    %4764 = vmatprep.subr.mxu0 0.0
    %4765 = vmatpush2.msra.mxu0 0.0
    %4766 = vmatprep.subr.mxu0 0.0
    %4767 = vmatpush2.msra.mxu0 0.0
    %4768 = vmatprep.subr.mxu0 0.0
    %4769 = vmatpush2.msra.mxu0 0.0
    %4770 = vmatprep.subr.mxu0 0.0
    %4771 = vmatpush2.msra.mxu0 0.0
    %4772 = vmatprep.subr.mxu0 0.0
    %4773 = vmatpush2.msra.mxu0 0.0
    %4774 = vmatprep.subr.mxu0 0.0
    %4775 = vmatpush2.msra.mxu0 0.0
    %4776 = vmatprep.subr.mxu0 0.0
    %4777 = vmatpush2.msra.mxu0 0.0
    %4778 = vmatprep.subr.mxu0 0.0
    %4779 = vmatpush2.msra.mxu0 0.0
    %4780 = vmatprep.subr.mxu0 0.0
    %4781 = vmatpush2.msra.mxu0 0.0
    %4782 = vmatprep.subr.mxu0 0.0
    %4783 = vmatpush2.msra.mxu0 0.0
    %4784 = vmatprep.subr.mxu0 0.0
    %4785 = vmatpush2.msra.mxu0 0.0
    %4786 = vmatprep.subr.mxu0 0.0
    %4787 = vmatpush2.msra.mxu0 0.0
    %4788 = vmatprep.subr.mxu0 0.0
    %4789 = vmatpush2.msra.mxu0 0.0
    %4790 = vmatprep.subr.mxu0 0.0
    %4791 = vmatpush2.msra.mxu0 0.0
    %4792 = vmatprep.subr.mxu0 0.0
    %4793 = vmatpush2.msra.mxu0 0.0
    %4794 = vmatprep.subr.mxu0 0.0
    %4795 = vmatpush2.msra.mxu0 0.0
    %4796 = vmatprep.mubr.f32.mxu0 0.0
    %4797 = vmatmul.mubr.f32.gmra.mxu0 %v4730
    %v4798 = vpop.f32.mrf.mxu0
    %v4799 = vadd.f32 %v3723, %v4798
    %v4800 = vpop.f32.mrf.mxu0
    %4801 = vdwg.mxu0
    %v4802 = vadd.f32 %v4799, %v3833
    %v4803 = vsel %vm284, %v4802, 0.0
    %4804 = vadd.xlane.f32.xlu0 %v4803
    %v4805 = vpop.xlane.xlu0 %4804
    %v4806 = vrot.slane %v4805, 4
    %v4807 = vadd.f32 %v4805, %v4806
    %v4808 = vrot.slane %v4807, 2
    %v4809 = vadd.f32 %v4807, %v4808
    %v4810 = vrot.slane %v4809, 1
    %v4811 = vadd.f32 %v4809, %v4810
    %s4812 = vtos %v4811
    %v4813 = vrcp.pop 256.0
    %s4814 = vtos %v4813
    %s4815 = smul.f32 %s4812, %s4814
    %v4816 = vstv %s4815
    %v4817 = vsub.f32 %v4802, %v4816
    %v4818 = vmul.f32 %v4817, %v4817
    %v4819 = vsel %vm284, %v4818, 0.0
    %4820 = vadd.xlane.f32.xlu0 %v4819
    %v4821 = vpop.xlane.xlu0 %4820
    %v4822 = vrot.slane %v4821, 4
    %v4823 = vadd.f32 %v4821, %v4822
    %v4824 = vrot.slane %v4823, 2
    %v4825 = vadd.f32 %v4823, %v4824
    %v4826 = vrot.slane %v4825, 1
    %v4827 = vadd.f32 %v4825, %v4826
    %s4828 = vtos %v4827
    %v4829 = vrcp.pop 256.0
    %s4830 = vtos %v4829
    %s4831 = smul.f32 %s4828, %s4830
    %s4832 = sadd.f32 %s4831, 1e-05
    %v4833 = vstv %s4832
    %v4834 = vrsqrt.pop %v4833
    %s4835 = vtos %v4834
    %v4836 = vstv %s4835
    %v4837 = vmul.f32 %v4817, %v4836
    %s4838 = scalar_lea.vmem %s21, 32
    %v4839 = vld [vmem:[%s4838] sm:$0xff]
    %v4840 = vld [vmem:[%s4838 + $0x8] sm:$0xff]
    %v4841 = vld [vmem:[%s4838 + $0x10] sm:$0xff]
    %v4842 = vld [vmem:[%s4838 + $0x18] sm:$0xff]
    %s4843 = scalar_lea.vmem [#allocation19], 1
    %v4844 = vld [vmem:[%s4843] sm:$0x1]
    %s4845 = scalar_lea.vmem %s23, 128
    %v4846 = vld [vmem:[%s4845] sm:$0xff]
    %v4847 = vld [vmem:[%s4845 + $0x8] sm:$0xff]
    %v4848 = vld [vmem:[%s4845 + $0x10] sm:$0xff]
    %v4849 = vld [vmem:[%s4845 + $0x18] sm:$0xff]
    %v4850 = vld [vmem:[%s4845 + $0x20] sm:$0xff]
    %v4851 = vld [vmem:[%s4845 + $0x28] sm:$0xff]
    %v4852 = vld [vmem:[%s4845 + $0x30] sm:$0xff]
    %v4853 = vld [vmem:[%s4845 + $0x38] sm:$0xff]
    %v4854 = vld [vmem:[%s4845 + $0x40] sm:$0xff]
    %v4855 = vld [vmem:[%s4845 + $0x48] sm:$0xff]
    %v4856 = vld [vmem:[%s4845 + $0x50] sm:$0xff]
    %v4857 = vld [vmem:[%s4845 + $0x58] sm:$0xff]
    %v4858 = vld [vmem:[%s4845 + $0x60] sm:$0xff]
    %v4859 = vld [vmem:[%s4845 + $0x68] sm:$0xff]
    %v4860 = vld [vmem:[%s4845 + $0x70] sm:$0xff]
    %v4861 = vld [vmem:[%s4845 + $0x78] sm:$0xff]
    %s4862 = scalar_lea.vmem [#allocation20], 1
    %v4863 = vld [vmem:[%s4862] sm:$0x1]
    %v4865 = vlaneseq
    %v4866 = vshrl.u32 %v4865, 7
    %v4867 = vsub.s32 0, %v4866
    %v4868 = vrot.slane %v4844, %v4867
    %v4871 = vsel %vm284, %v4837, 0
    %4873 = vmatprep.subr.mxu0 0.0
    %4874 = vmatpush1.msra.mxu0 0.0
    %4875 = vmatprep.subr.mxu0 0.0
    %4876 = vmatpush1.msra.mxu0 0.0
    %4877 = vmatprep.subr.mxu0 0.0
    %4878 = vmatpush1.msra.mxu0 0.0
    %4879 = vmatprep.subr.mxu0 0.0
    %4880 = vmatpush1.msra.mxu0 0.0
    %4881 = vmatprep.subr.mxu0 0.0
    %4882 = vmatpush1.msra.mxu0 0.0
    %4883 = vmatprep.subr.mxu0 0.0
    %4884 = vmatpush1.msra.mxu0 0.0
    %4885 = vmatprep.subr.mxu0 0.0
    %4886 = vmatpush1.msra.mxu0 0.0
    %4887 = vmatprep.subr.mxu0 0.0
    %4888 = vmatpush1.msra.mxu0 0.0
    %4889 = vmatprep.subr.mxu0 0.0
    %4890 = vmatpush1.msra.mxu0 0.0
    %4891 = vmatprep.subr.mxu0 0.0
    %4892 = vmatpush1.msra.mxu0 0.0
    %4893 = vmatprep.subr.mxu0 0.0
    %4894 = vmatpush1.msra.mxu0 0.0
    %4895 = vmatprep.subr.mxu0 0.0
    %4896 = vmatpush1.msra.mxu0 0.0
    %4897 = vmatprep.subr.mxu0 0.0
    %4898 = vmatpush1.msra.mxu0 %v4842
    %4899 = vmatprep.subr.mxu0 0.0
    %4900 = vmatpush1.msra.mxu0 %v4841
    %4901 = vmatprep.subr.mxu0 0.0
    %4902 = vmatpush1.msra.mxu0 %v4840
    %4903 = vmatprep.subr.mxu0 0.0
    %4904 = vmatpush1.msra.mxu0 %v4839
    %4905 = vmatprep.subr.mxu0 0.0
    %4906 = vmatpush2.msra.mxu0 0.0
    %4907 = vmatprep.subr.mxu0 0.0
    %4908 = vmatpush2.msra.mxu0 0.0
    %4909 = vmatprep.subr.mxu0 0.0
    %4910 = vmatpush2.msra.mxu0 0.0
    %4911 = vmatprep.subr.mxu0 0.0
    %4912 = vmatpush2.msra.mxu0 0.0
    %4913 = vmatprep.subr.mxu0 0.0
    %4914 = vmatpush2.msra.mxu0 0.0
    %4915 = vmatprep.subr.mxu0 0.0
    %4916 = vmatpush2.msra.mxu0 0.0
    %4917 = vmatprep.subr.mxu0 0.0
    %4918 = vmatpush2.msra.mxu0 0.0
    %4919 = vmatprep.subr.mxu0 0.0
    %4920 = vmatpush2.msra.mxu0 0.0
    %4921 = vmatprep.subr.mxu0 0.0
    %4922 = vmatpush2.msra.mxu0 0.0
    %4923 = vmatprep.subr.mxu0 0.0
    %4924 = vmatpush2.msra.mxu0 0.0
    %4925 = vmatprep.subr.mxu0 0.0
    %4926 = vmatpush2.msra.mxu0 0.0
    %4927 = vmatprep.subr.mxu0 0.0
    %4928 = vmatpush2.msra.mxu0 0.0
    %4929 = vmatprep.subr.mxu0 0.0
    %4930 = vmatpush2.msra.mxu0 0.0
    %4931 = vmatprep.subr.mxu0 0.0
    %4932 = vmatpush2.msra.mxu0 0.0
    %4933 = vmatprep.subr.mxu0 0.0
    %4934 = vmatpush2.msra.mxu0 0.0
    %4935 = vmatprep.subr.mxu0 0.0
    %4936 = vmatpush2.msra.mxu0 0.0
    %4937 = vmatprep.mubr.f32.mxu0 0.0
    %4938 = vmatmul.mubr.f32.gmra.mxu0 %v4871
    %v4939 = vpop.f32.mrf.mxu0
    %v4940 = vadd.f32 %v4868, %v4939
    %v4941 = vpop.f32.mrf.mxu0
    %4942 = vdwg.mxu0
    %v4943 = vmax.f32 %v4940, 0.0
    %v4945 = vlaneseq
    %v4946 = vshrl.u32 %v4945, 7
    %v4947 = vsub.s32 0, %v4946
    %v4948 = vrot.slane %v4863, %v4947
    %4950 = vmatprep.subr.mxu0 0.0
    %4951 = vmatpush1.msra.mxu0 %v4861
    %4952 = vmatprep.subr.mxu0 0.0
    %4953 = vmatpush1.msra.mxu0 %v4860
    %4954 = vmatprep.subr.mxu0 0.0
    %4955 = vmatpush1.msra.mxu0 %v4859
    %4956 = vmatprep.subr.mxu0 0.0
    %4957 = vmatpush1.msra.mxu0 %v4858
    %4958 = vmatprep.subr.mxu0 0.0
    %4959 = vmatpush1.msra.mxu0 %v4857
    %4960 = vmatprep.subr.mxu0 0.0
    %4961 = vmatpush1.msra.mxu0 %v4856
    %4962 = vmatprep.subr.mxu0 0.0
    %4963 = vmatpush1.msra.mxu0 %v4855
    %4964 = vmatprep.subr.mxu0 0.0
    %4965 = vmatpush1.msra.mxu0 %v4854
    %4966 = vmatprep.subr.mxu0 0.0
    %4967 = vmatpush1.msra.mxu0 %v4853
    %4968 = vmatprep.subr.mxu0 0.0
    %4969 = vmatpush1.msra.mxu0 %v4852
    %4970 = vmatprep.subr.mxu0 0.0
    %4971 = vmatpush1.msra.mxu0 %v4851
    %4972 = vmatprep.subr.mxu0 0.0
    %4973 = vmatpush1.msra.mxu0 %v4850
    %4974 = vmatprep.subr.mxu0 0.0
    %4975 = vmatpush1.msra.mxu0 %v4849
    %4976 = vmatprep.subr.mxu0 0.0
    %4977 = vmatpush1.msra.mxu0 %v4848
    %4978 = vmatprep.subr.mxu0 0.0
    %4979 = vmatpush1.msra.mxu0 %v4847
    %4980 = vmatprep.subr.mxu0 0.0
    %4981 = vmatpush1.msra.mxu0 %v4846
    %4982 = vmatprep.subr.mxu0 0.0
    %4983 = vmatpush2.msra.mxu0 0.0
    %4984 = vmatprep.subr.mxu0 0.0
    %4985 = vmatpush2.msra.mxu0 0.0
    %4986 = vmatprep.subr.mxu0 0.0
    %4987 = vmatpush2.msra.mxu0 0.0
    %4988 = vmatprep.subr.mxu0 0.0
    %4989 = vmatpush2.msra.mxu0 0.0
    %4990 = vmatprep.subr.mxu0 0.0
    %4991 = vmatpush2.msra.mxu0 0.0
    %4992 = vmatprep.subr.mxu0 0.0
    %4993 = vmatpush2.msra.mxu0 0.0
    %4994 = vmatprep.subr.mxu0 0.0
    %4995 = vmatpush2.msra.mxu0 0.0
    %4996 = vmatprep.subr.mxu0 0.0
    %4997 = vmatpush2.msra.mxu0 0.0
    %4998 = vmatprep.subr.mxu0 0.0
    %4999 = vmatpush2.msra.mxu0 0.0
    %5000 = vmatprep.subr.mxu0 0.0
    %5001 = vmatpush2.msra.mxu0 0.0
    %5002 = vmatprep.subr.mxu0 0.0
    %5003 = vmatpush2.msra.mxu0 0.0
    %5004 = vmatprep.subr.mxu0 0.0
    %5005 = vmatpush2.msra.mxu0 0.0
    %5006 = vmatprep.subr.mxu0 0.0
    %5007 = vmatpush2.msra.mxu0 0.0
    %5008 = vmatprep.subr.mxu0 0.0
    %5009 = vmatpush2.msra.mxu0 0.0
    %5010 = vmatprep.subr.mxu0 0.0
    %5011 = vmatpush2.msra.mxu0 0.0
    %5012 = vmatprep.subr.mxu0 0.0
    %5013 = vmatpush2.msra.mxu0 0.0
    %5014 = vmatprep.mubr.f32.mxu0 0.0
    %5015 = vmatmul.mubr.f32.gmra.mxu0 %v4943
    %v5016 = vpop.f32.mrf.mxu0
    %v5017 = vadd.f32 %v4948, %v5016
    %v5018 = vpop.f32.mrf.mxu0
    %5019 = vdwg.mxu0
    %v5020 = vadd.f32 %v5017, %v4837
    %v5021 = vsel %vm284, %v5020, 0.0
    %5022 = vadd.xlane.f32.xlu0 %v5021
    %v5023 = vpop.xlane.xlu0 %5022
    %v5024 = vrot.slane %v5023, 4
    %v5025 = vadd.f32 %v5023, %v5024
    %v5026 = vrot.slane %v5025, 2
    %v5027 = vadd.f32 %v5025, %v5026
    %v5028 = vrot.slane %v5027, 1
    %v5029 = vadd.f32 %v5027, %v5028
    %s5030 = vtos %v5029
    %v5031 = vrcp.pop 256.0
    %s5032 = vtos %v5031
    %s5033 = smul.f32 %s5030, %s5032
    %v5034 = vstv %s5033
    %v5035 = vsub.f32 %v5020, %v5034
    %v5036 = vmul.f32 %v5035, %v5035
    %v5037 = vsel %vm284, %v5036, 0.0
    %5038 = vadd.xlane.f32.xlu0 %v5037
    %v5039 = vpop.xlane.xlu0 %5038
    %v5040 = vrot.slane %v5039, 4
    %v5041 = vadd.f32 %v5039, %v5040
    %v5042 = vrot.slane %v5041, 2
    %v5043 = vadd.f32 %v5041, %v5042
    %v5044 = vrot.slane %v5043, 1
    %v5045 = vadd.f32 %v5043, %v5044
    %s5046 = vtos %v5045
    %v5047 = vrcp.pop 256.0
    %s5048 = vtos %v5047
    %s5049 = smul.f32 %s5046, %s5048
    %s5050 = sadd.f32 %s5049, 1e-05
    %v5051 = vstv %s5050
    %v5052 = vrsqrt.pop %v5051
    %s5053 = vtos %v5052
    %v5054 = vstv %s5053
    %v5055 = vmul.f32 %v5035, %v5054
    %v5056 = vld [vmem:[%s25] sm:$0xff]
    %v5057 = vld [vmem:[%s25 + $0x8] sm:$0xff]
    %v5058 = vld [vmem:[%s25 + $0x10] sm:$0xff]
    %v5059 = vld [vmem:[%s25 + $0x18] sm:$0xff]
    %v5060 = vld [vmem:[%s26] sm:$0x1]
    %v5062 = vlaneseq
    %v5063 = vshrl.u32 %v5062, 7
    %v5064 = vsub.s32 0, %v5063
    %v5065 = vrot.slane %v5060, %v5064
    %v5068 = vsel %vm284, %v5055, 0
    %5070 = vmatprep.subr.mxu0 0.0
    %5071 = vmatpush1.msra.mxu0 0.0
    %5072 = vmatprep.subr.mxu0 0.0
    %5073 = vmatpush1.msra.mxu0 0.0
    %5074 = vmatprep.subr.mxu0 0.0
    %5075 = vmatpush1.msra.mxu0 0.0
    %5076 = vmatprep.subr.mxu0 0.0
    %5077 = vmatpush1.msra.mxu0 0.0
    %5078 = vmatprep.subr.mxu0 0.0
    %5079 = vmatpush1.msra.mxu0 0.0
    %5080 = vmatprep.subr.mxu0 0.0
    %5081 = vmatpush1.msra.mxu0 0.0
    %5082 = vmatprep.subr.mxu0 0.0
    %5083 = vmatpush1.msra.mxu0 0.0
    %5084 = vmatprep.subr.mxu0 0.0
    %5085 = vmatpush1.msra.mxu0 0.0
    %5086 = vmatprep.subr.mxu0 0.0
    %5087 = vmatpush1.msra.mxu0 0.0
    %5088 = vmatprep.subr.mxu0 0.0
    %5089 = vmatpush1.msra.mxu0 0.0
    %5090 = vmatprep.subr.mxu0 0.0
    %5091 = vmatpush1.msra.mxu0 0.0
    %5092 = vmatprep.subr.mxu0 0.0
    %5093 = vmatpush1.msra.mxu0 0.0
    %5094 = vmatprep.subr.mxu0 0.0
    %5095 = vmatpush1.msra.mxu0 %v5059
    %5096 = vmatprep.subr.mxu0 0.0
    %5097 = vmatpush1.msra.mxu0 %v5058
    %5098 = vmatprep.subr.mxu0 0.0
    %5099 = vmatpush1.msra.mxu0 %v5057
    %5100 = vmatprep.subr.mxu0 0.0
    %5101 = vmatpush1.msra.mxu0 %v5056
    %5102 = vmatprep.subr.mxu0 0.0
    %5103 = vmatpush2.msra.mxu0 0.0
    %5104 = vmatprep.subr.mxu0 0.0
    %5105 = vmatpush2.msra.mxu0 0.0
    %5106 = vmatprep.subr.mxu0 0.0
    %5107 = vmatpush2.msra.mxu0 0.0
    %5108 = vmatprep.subr.mxu0 0.0
    %5109 = vmatpush2.msra.mxu0 0.0
    %5110 = vmatprep.subr.mxu0 0.0
    %5111 = vmatpush2.msra.mxu0 0.0
    %5112 = vmatprep.subr.mxu0 0.0
    %5113 = vmatpush2.msra.mxu0 0.0
    %5114 = vmatprep.subr.mxu0 0.0
    %5115 = vmatpush2.msra.mxu0 0.0
    %5116 = vmatprep.subr.mxu0 0.0
    %5117 = vmatpush2.msra.mxu0 0.0
    %5118 = vmatprep.subr.mxu0 0.0
    %5119 = vmatpush2.msra.mxu0 0.0
    %5120 = vmatprep.subr.mxu0 0.0
    %5121 = vmatpush2.msra.mxu0 0.0
    %5122 = vmatprep.subr.mxu0 0.0
    %5123 = vmatpush2.msra.mxu0 0.0
    %5124 = vmatprep.subr.mxu0 0.0
    %5125 = vmatpush2.msra.mxu0 0.0
    %5126 = vmatprep.subr.mxu0 0.0
    %5127 = vmatpush2.msra.mxu0 0.0
    %5128 = vmatprep.subr.mxu0 0.0
    %5129 = vmatpush2.msra.mxu0 0.0
    %5130 = vmatprep.subr.mxu0 0.0
    %5131 = vmatpush2.msra.mxu0 0.0
    %5132 = vmatprep.subr.mxu0 0.0
    %5133 = vmatpush2.msra.mxu0 0.0
    %5134 = vmatprep.mubr.f32.mxu0 0.0
    %5135 = vmatmul.mubr.f32.gmra.mxu0 %v5068
    %v5136 = vpop.f32.mrf.mxu0
    %v5137 = vadd.f32 %v5065, %v5136
    %v5138 = vpop.f32.mrf.mxu0
    %5139 = vdwg.mxu0
    %v5140 = vsel %vm1184, %v5137, -inf
    %5141 = vmax.xlane.f32.xlu0 %v5140
    %v5142 = vpop.xlane.xlu0 %5141
    %v5143 = vsub.f32 %v5137, %v5142
    %v5144 = vmul.f32 %v5143, 1.442695
    %v5145 = vpow.pop %v5144
    %v5146 = vsel %vm1184, %v5145, 0.0
    %5147 = vadd.xlane.f32.xlu0 %v5146
    %v5148 = vpop.xlane.xlu0 %5147
    %v5149 = vrcp.pop %v5148
    %v5150 = vmul.f32 %v5145, %v5149
    %5151 = vst.msk [vmem:[#allocation22] sm:$0xff] %vm1184, %v5150
    // Predicated region
    $region158: #{transformer.1} parent=1 // pred_check
      _
    $region159: #{transformer.1} parent=1 // pred_check_branch
      %5153 = sbr.rel (0) target = $region161
    $region160: #{transformer.1} parent=1 // pred_region
      %s5155 = ssub.s32 128, 128
      %5156 = vsyncadd [#allocation4], %s5155
      %s5158 = sshll.u32 [#allocation22], 4
      %s5159 = int_to_ptr.vmem [resolvable:$true] %s5158
      %5161 = dma.vmem_to_hbm [thread:$0]  %s5159, 128, %s27, [#allocation4]
    $region161: #{transformer.1} parent=1 // pred_fallthru
      _
    // Predicated region
    $region162: #{transformer.1} parent=1 // pred_check
      _
    $region163: #{transformer.1} parent=1 // pred_check_branch
      %5163 = sbr.rel (0) target = $region165
    $region164: #{transformer.1} parent=1 // pred_region
      %5164 = dma.done [#allocation4], 128
    $region165: #{transformer.1} parent=1 // pred_fallthru
      _
    %5165 = vsyncpa [#allocation3], 1
    %5166 = vsyncpa [#allocation6], 1
    %5167 = vsyncpa [#allocation9], 1
    %5168 = vsyncpa [#allocation12], 1
    %5169 = vsyncpa [#allocation15], 1
    %5170 = vsyncpa [#allocation18], 1
    %5171 = vsyncpa [#allocation21], 1
    %5172 = vsyncpa [#allocation4], 1

</llo_original>
